<compile_context>
chip_gen: v7x
topology: tpu7x:2x2x1
jax: 0.10.0
libtpu: 0.0.40
codegen_flags: <defaults>
</compile_context>

<pallas_src>
import jax
import jax.numpy as jnp
from jax import lax
from jax.experimental import pallas as pl
from jax.experimental.pallas import tpu as pltpu

LANE = 128
SUBLANE = 8


def _round_up(n, m):
    return (n + m - 1) // m * m


_VMEM_LIMIT_CACHE = []


def _vmem_limit_bytes():
    """Generation-aware scoped-VMEM limit (v5e/v6e: 128 MiB, v7x: 64 MiB)."""
    if not _VMEM_LIMIT_CACHE:
        cap = 64 * 1024 * 1024
        try:
            info = pltpu.get_tpu_info()
            cap = int(getattr(info, "vmem_capacity_bytes", cap) or cap)
        except Exception:
            pass
        # leave ~25% headroom for Mosaic-internal scratch, cap at 100 MiB.
        _VMEM_LIMIT_CACHE.append(min(cap * 3 // 4, 100 * 1024 * 1024))
    return _VMEM_LIMIT_CACHE[0]


def _spec(shape, index_map, buffers=None):
    """BlockSpec, optionally with an explicit buffer count (falls back cleanly
    if this jax build does not accept pipeline_mode on pallas_call specs)."""
    if buffers is not None:
        try:
            return pl.BlockSpec(shape, index_map,
                                pipeline_mode=pl.Buffered(buffers))
        except Exception:
            pass
    return pl.BlockSpec(shape, index_map)


# ----------------------------------------------------------------------------
# Pallas kernel: fused 3x3/stride-2 conv (2 MXU pushes per tile over
# channel-concatenated parity planes, dh packed along N) + folded-FrozenBN
# bias + ReLU.
# ----------------------------------------------------------------------------
def _conv3x3s2_bn_relu_kernel(planes_ref, w_ref, b_ref, o_ref):
    # planes_ref: [1, 2, Hc, Wo_pad, 4*Cin] bf16
    #             dw-duplicated, channel-concatenated parity planes; block
    #             p = 2*hp + wp of the channel axis holds
    #             x[2*i + hp - 1, 2*(j + dw) + wp - 1, :].  Resident per
    #             batch element (index does not change along the row axis).
    # w_ref:      [2, 4*Cin, 2*CP] bf16
    #             per dw-shift, the dh=0 / dh=1 weight groups packed
    #             side-by-side along N (FrozenBN scale folded in, Cout
    #             zero-padded to a lane multiple).
    # b_ref:      [1, CP] f32   (FrozenBN bias, zero-padded)
    # o_ref:      [1, tr, Wo_pad, CP] bf16
    _, tr, wop, cp = o_ref.shape
    kc = planes_ref.shape[-1]
    row0 = pl.multiple_of(pl.program_id(1) * tr, tr)

    acc = None
    for dw in range(2):
        # Full-extent leading-dim slice -> contiguous, aligned, reshape-free
        # (wop is a multiple of 8 so merging the two leading dims is free).
        slab = planes_ref[0, dw, pl.ds(row0, tr + 1), :, :]
        res = jnp.dot(slab.reshape((tr + 1) * wop, kc), w_ref[dw],
                      preferred_element_type=jnp.float32)
        res = res.reshape(tr + 1, wop, 2 * cp)
        # dh=0 half uses plane row t, dh=1 half uses plane row t+1: combine
        # with a single row-offset add (offset is a whole sublane tile).
        contrib = res[:tr, :, :cp] + res[1:, :, cp:]
        acc = contrib if acc is None else acc + contrib

    y = jnp.maximum(acc + b_ref[...], 0.0)          # bias + ReLU in f32
    o_ref[...] = y.reshape(1, tr, wop, cp).astype(o_ref.dtype)


# ----------------------------------------------------------------------------
# JAX-side glue: 2x2 space-to-depth into channel-concatenated parity planes,
# duplicated along the dw shift so every kernel slab is reshape-free.
# ----------------------------------------------------------------------------
def _build_planes(x, ho_pad, wo_pad):
    """x: [B, H, W, C] -> planes [B, 2(dw), Hc, Wo_pad, 4*C] bf16."""
    B, H, W, C = x.shape
    hc = ho_pad + 1
    wc = wo_pad + 1
    # conv padding (=1) on top/left + zeros on bottom/right so the 2x2
    # space-to-depth tiles exactly (extra rows/cols only feed garbage outputs
    # that are sliced away).
    xp = jnp.pad(x, ((0, 0), (1, 2 * hc - H - 1), (1, 2 * wc - W - 1), (0, 0)))
    p = xp.reshape(B, hc, 2, wc, 2, C).transpose(0, 1, 3, 2, 4, 5)
    p = p.reshape(B, hc, wc, 4 * C)                      # channel-concat parity
    planes = jnp.stack([p[:, :, 0:wo_pad, :],            # dw = 0
                        p[:, :, 1:wo_pad + 1, :]],       # dw = 1 (W-shifted)
                       axis=1)
    return planes.astype(jnp.bfloat16)


def conv3x3s2_bn_relu(x, w_packed, b_pad, cout, *, target_m=512,
                      vmem_limit=None, single_buffer_resident=True):
    """Fused 3x3/stride-2 conv + FrozenBN + ReLU (one Pallas call).

    x:        [B, H, W, Cin] float (f32 or bf16), NHWC
    w_packed: [2, 4*Cin, 2*CP] bf16 (prepared once by prepare_backbone_params)
    b_pad:    [1, CP] f32
    Returns   [B, Ho, Wo, cout] bf16.
    """
    B, H, W, Cin = x.shape
    KC = w_packed.shape[1]
    CP = b_pad.shape[-1]
    assert KC == 4 * Cin and w_packed.shape[-1] == 2 * CP

    Ho, Wo = (H + 1) // 2, (W + 1) // 2
    Wo_pad = _round_up(Wo, SUBLANE)
    # Row tile: no divisor requirement; target ~target_m MXU rows per tile so
    # the f32 accumulator stays small; tail tile handled by zero padding.
    tr = max(1, min(Ho, target_m // Wo_pad))
    n_tiles = pl.cdiv(Ho, tr)
    Ho_pad = n_tiles * tr
    Hc = Ho_pad + 1

    planes = _build_planes(x, Ho_pad, Wo_pad)

    if vmem_limit is None:
        vmem_limit = _vmem_limit_bytes()
    buf = 1 if single_buffer_resident else None

    out = pl.pallas_call(
        _conv3x3s2_bn_relu_kernel,
        out_shape=jax.ShapeDtypeStruct((B, Ho_pad, Wo_pad, CP), jnp.bfloat16),
        grid=(B, n_tiles),
        in_specs=[
            # parity planes: resident per batch element, single-buffered
            # (block index never changes along the row-tile axis).
            _spec((1, 2, Hc, Wo_pad, KC), lambda b, r: (b, 0, 0, 0, 0),
                  buffers=buf),
            _spec((2, KC, 2 * CP), lambda b, r: (0, 0, 0), buffers=buf),
            _spec((1, CP), lambda b, r: (0, 0), buffers=buf),
        ],
        out_specs=pl.BlockSpec((1, tr, Wo_pad, CP), lambda b, r: (b, r, 0, 0)),
        compiler_params=pltpu.CompilerParams(
            dimension_semantics=("parallel", "parallel"),
            vmem_limit_bytes=vmem_limit),
    )(planes, w_packed, b_pad)

    # Drop padded rows/cols/channels.  The sliced feature is needed as a
    # return value anyway, so feeding it to the next stage adds no extra HBM
    # round trip.
    return out[:, :Ho, :Wo, :cout]


# ----------------------------------------------------------------------------
# Mask nearest-neighbor resize == F.interpolate(mask[None].float(), size).bool()[0]
# (pure index gather; kept as JAX glue -- no arithmetic hot path)
# ----------------------------------------------------------------------------
def interpolate_mask_nearest(mask, h, w):
    B, H, W = mask.shape
    ri = jnp.floor(jnp.arange(h) * (H / h)).astype(jnp.int32)
    ci = jnp.floor(jnp.arange(w) * (W / w)).astype(jnp.int32)
    return mask[:, ri][:, :, ci]


# ----------------------------------------------------------------------------
# Synthetic backbone parameters (deterministic init).
# ----------------------------------------------------------------------------
def init_backbone_params(key):
    # stem(3->16, stride 2) + 4 stages -> feature strides 4, 8, 16, 32.
    # TODO(synk): fuse the Cin=3 stem into stage 1 to avoid the largest
    # intermediate activation's HBM round trip (review item).
    chans = [3, 16, 32, 64, 96, 128]
    eps = 1e-5
    params = []
    for cin, cout in zip(chans[:-1], chans[1:]):
        key, kw, kg, kb, km, kv = jax.random.split(key, 6)
        w = jax.random.normal(kw, (3, 3, cin, cout), jnp.float32)
        w = w * (1.0 / (3 * 3 * cin) ** 0.5)
        gamma = 1.0 + 0.1 * jax.random.normal(kg, (cout,), jnp.float32)
        beta = 0.1 * jax.random.normal(kb, (cout,), jnp.float32)
        rmean = 0.1 * jax.random.normal(km, (cout,), jnp.float32)
        rvar = jnp.abs(1.0 + 0.1 * jax.random.normal(kv, (cout,), jnp.float32))
        # FrozenBatchNorm2d: scale = gamma*rsqrt(var+eps); bias = beta - mean*scale
        scale = gamma * lax.rsqrt(rvar + eps)
        bias = beta - rmean * scale
        params.append({"w": w, "scale": scale, "bias": bias})
    return params


def prepare_backbone_params(params):
    """One-time (outside jit) weight prep: fold the FrozenBN scale, repack the
    nine 3x3 taps into the 4-shift channel-concatenated layout, pack the two
    dh shifts along N, zero-pad Cout to a lane multiple, cast to bf16."""
    stages, couts = [], []
    for p in params:
        w, scale, bias = p["w"], p["scale"], p["bias"]
        _, _, cin, cout = w.shape
        cp = _round_up(cout, LANE)
        wf = w * scale[None, None, None, :]
        # 4x4 tap grid: index 3 along either axis is the zero tap of the
        # (dh, hp) / (dw, wp) decomposition (ki = 2*dh + hp, kj = 2*dw + wp).
        w4 = jnp.zeros((4, 4, cin, cp), jnp.float32).at[:3, :3, :, :cout].set(wf)
        w6 = w4.reshape(2, 2, 2, 2, cin, cp).transpose(0, 2, 1, 3, 4, 5)
        w_shift = w6.reshape(2, 2, 4 * cin, cp)           # [dh, dw, 4*Cin, CP]
        # pack dh=0 / dh=1 side-by-side along N: [dw, 4*Cin, 2*CP]
        w_packed = jnp.concatenate([w_shift[0], w_shift[1]], axis=-1)
        w_packed = w_packed.astype(jnp.bfloat16)
        b_pad = jnp.pad(bias, (0, cp - cout)).reshape(1, cp).astype(jnp.float32)
        stages.append({"w": w_packed, "b": b_pad})
        couts.append(int(cout))
    return stages, tuple(couts)


# ----------------------------------------------------------------------------
# TimmBackbone.forward equivalent.
# ----------------------------------------------------------------------------
def timm_backbone_forward(tensors, mask, stages, couts, *,
                          return_interm_layers=True, main_layer=-1,
                          single_buffer_resident=True):
    """tensors: [B, H, W, 3] float32 (NHWC); mask: [B, H, W] bool."""
    vmem_limit = _vmem_limit_bytes()
    x = tensors
    feats = []
    for i, (st, cout) in enumerate(zip(stages, couts)):
        x = conv3x3s2_bn_relu(x, st["w"], st["b"], cout,
                              vmem_limit=vmem_limit,
                              single_buffer_resident=single_buffer_resident)
        if i >= 1:                               # timm out_indices=(1, 2, 3, 4)
            feats.append(x)

    if not return_interm_layers:
        feats = [feats[main_layer]]

    out = {}
    for i, f in enumerate(feats):
        m = interpolate_mask_nearest(mask, f.shape[1], f.shape[2])
        out[f"layer{i}"] = (f, m)                # == NestedTensor(x, mask)
    return out


# ----------------------------------------------------------------------------
# Plain-JAX reference (same bf16-rounded operands, f32 accumulation) used to
# validate the Pallas path numerically.
# ----------------------------------------------------------------------------
def _reference_forward(tensors, params):
    feats = []
    x = tensors
    for i, p in enumerate(params):
        wf = (p["w"] * p["scale"][None, None, None, :]).astype(jnp.bfloat16)
        xin = x.astype(jnp.bfloat16).astype(jnp.float32)
        y = lax.conv_general_dilated(
            xin, wf.astype(jnp.float32), window_strides=(2, 2),
            padding=((1, 1), (1, 1)),
            dimension_numbers=("NHWC", "HWIO", "NHWC"),
            precision=lax.Precision.HIGHEST)
        y = jnp.maximum(y + p["bias"][None, None, None, :], 0.0)
        x = y.astype(jnp.bfloat16)
        if i >= 1:
            feats.append(x)
    return feats


if __name__ == "__main__":
    key = jax.random.PRNGKey(0)
    k_params, k_x = jax.random.split(key)

    params = init_backbone_params(k_params)
    stages, couts = prepare_backbone_params(params)   # hoisted out of jit

    B, H, W = 2, 32, 32
    tensors = jax.random.normal(k_x, (B, H, W, 3), jnp.float32)
    # Padding mask (True = padded), deterministic: right/bottom quarter padded.
    col = jnp.arange(W) >= (3 * W // 4)
    row = jnp.arange(H) >= (3 * H // 4)
    mask = jnp.broadcast_to(col[None, None, :] | row[None, :, None], (B, H, W))

    fwd = jax.jit(timm_backbone_forward,
                  static_argnames=("couts", "return_interm_layers",
                                   "main_layer", "single_buffer_resident"))
    try:
        out = jax.block_until_ready(
            fwd(tensors, mask, stages, couts=couts, return_interm_layers=True,
                single_buffer_resident=True))
    except Exception:
        # Fall back if this jax build rejects pl.Buffered(1) on pallas_call
        # in_specs (default double-buffering; correctness unchanged).
        out = jax.block_until_ready(
            fwd(tensors, mask, stages, couts=couts, return_interm_layers=True,
                single_buffer_resident=False))

    # Shape sanity: 4 pyramid levels with strides 4, 8, 16, 32 + bool masks.
    expected = {"layer0": (8, 32), "layer1": (4, 64),
                "layer2": (2, 96), "layer3": (1, 128)}
    for name, (sp, ch) in expected.items():
        f, m = out[name]
        assert f.shape == (B, sp, sp, ch), (name, f.shape)
        assert m.shape == (B, sp, sp) and m.dtype == jnp.bool_, (name, m.shape)

    # Numerics: every level against the plain-JAX conv reference.
    ref_feats = _reference_forward(tensors, params)
    for i, rf in enumerate(ref_feats):
        kf = out[f"layer{i}"][0].astype(jnp.float32)
        rf = rf.astype(jnp.float32)
        assert jnp.allclose(kf, rf, rtol=2e-2, atol=2e-2), (
            f"layer{i} mismatch, max|diff|={float(jnp.max(jnp.abs(kf - rf)))}")

    print("KERNEL_OK")
</pallas_src>

<mosaic_0001>
module attributes {stable_mosaic.version = 11 : i64} {
  func.func @_conv3x3s2_bn_relu_kernel(%arg0: i32, %arg1: i32, %arg2: memref<1x2x17x16x12xbf16, #tpu.memory_space<vmem>>, %arg3: memref<2x12x256xbf16, #tpu.memory_space<vmem>>, %arg4: memref<1x128xf32, #tpu.memory_space<vmem>>, %arg5: memref<1x16x16x128xbf16, #tpu.memory_space<vmem>>) attributes {dimension_semantics = [#tpu.dimension_semantics<parallel>, #tpu.dimension_semantics<parallel>], iteration_bounds = array<i64: 2, 1>, scalar_prefetch = 0 : i64, scratch_operands = 0 : i64, tpu.core_type = #tpu.core_type<tc>, window_params = [{pipeline_mode = #tpu.pipeline_mode<synchronous>, transform_indices = @transform_0, window_bounds = array<i64: 1, 2, 17, 16, 12>}, {pipeline_mode = #tpu.pipeline_mode<synchronous>, transform_indices = @transform_1, window_bounds = array<i64: 2, 12, 256>}, {pipeline_mode = #tpu.pipeline_mode<synchronous>, transform_indices = @transform_2, window_bounds = array<i64: 1, 128>}, {transform_indices = @transform_3, window_bounds = array<i64: 1, 16, 16, 128>}]} {
    %c16_i32 = arith.constant 16 : i32
    %0 = arith.muli %arg1, %c16_i32 : i32
    %1 = tpu.assume_multiple %0, 16 : i32
    %c0 = arith.constant 0 : index
    %c0_0 = arith.constant 0 : index
    %2 = arith.index_cast %1 : i32 to index
    %c0_1 = arith.constant 0 : index
    %c0_2 = arith.constant 0 : index
    %3 = vector.load %arg2[%c0, %c0_0, %2, %c0_1, %c0_2] : memref<1x2x17x16x12xbf16, #tpu.memory_space<vmem>>, vector<1x1x17x16x12xbf16>
    %4 = vector.shape_cast %3 : vector<1x1x17x16x12xbf16> to vector<17x16x12xbf16>
    %5 = vector.shape_cast %4 : vector<17x16x12xbf16> to vector<272x12xbf16>
    %c0_3 = arith.constant 0 : index
    %c0_4 = arith.constant 0 : index
    %c0_5 = arith.constant 0 : index
    %6 = vector.load %arg3[%c0_3, %c0_4, %c0_5] : memref<2x12x256xbf16, #tpu.memory_space<vmem>>, vector<1x12x256xbf16>
    %7 = vector.shape_cast %6 : vector<1x12x256xbf16> to vector<12x256xbf16>
    %cst = arith.constant dense<0.000000e+00> : vector<272x256xf32>
    %8 = tpu.matmul %5, %7, %cst {dimension_numbers = #tpu.dot_dimension_numbers<[1], [0], [0], [1], [0, 0, 1, 1], [], []>} : vector<272x12xbf16>, vector<12x256xbf16>, vector<272x256xf32> -> vector<272x256xf32>
    %9 = vector.shape_cast %8 : vector<272x256xf32> to vector<17x16x256xf32>
    %10 = vector.extract_strided_slice %9 {offsets = [0, 0, 0], sizes = [16, 16, 128], strides = [1, 1, 1]} : vector<17x16x256xf32> to vector<16x16x128xf32>
    %11 = vector.extract_strided_slice %9 {offsets = [1, 0, 128], sizes = [16, 16, 128], strides = [1, 1, 1]} : vector<17x16x256xf32> to vector<16x16x128xf32>
    %12 = arith.addf %10, %11 : vector<16x16x128xf32>
    %c0_6 = arith.constant 0 : index
    %c1 = arith.constant 1 : index
    %13 = arith.index_cast %1 : i32 to index
    %c0_7 = arith.constant 0 : index
    %c0_8 = arith.constant 0 : index
    %14 = vector.load %arg2[%c0_6, %c1, %13, %c0_7, %c0_8] : memref<1x2x17x16x12xbf16, #tpu.memory_space<vmem>>, vector<1x1x17x16x12xbf16>
    %15 = vector.shape_cast %14 : vector<1x1x17x16x12xbf16> to vector<17x16x12xbf16>
    %16 = vector.shape_cast %15 : vector<17x16x12xbf16> to vector<272x12xbf16>
    %c1_9 = arith.constant 1 : index
    %c0_10 = arith.constant 0 : index
    %c0_11 = arith.constant 0 : index
    %17 = vector.load %arg3[%c1_9, %c0_10, %c0_11] : memref<2x12x256xbf16, #tpu.memory_space<vmem>>, vector<1x12x256xbf16>
    %18 = vector.shape_cast %17 : vector<1x12x256xbf16> to vector<12x256xbf16>
    %cst_12 = arith.constant dense<0.000000e+00> : vector<272x256xf32>
    %19 = tpu.matmul %16, %18, %cst_12 {dimension_numbers = #tpu.dot_dimension_numbers<[1], [0], [0], [1], [0, 0, 1, 1], [], []>} : vector<272x12xbf16>, vector<12x256xbf16>, vector<272x256xf32> -> vector<272x256xf32>
    %20 = vector.shape_cast %19 : vector<272x256xf32> to vector<17x16x256xf32>
    %21 = vector.extract_strided_slice %20 {offsets = [0, 0, 0], sizes = [16, 16, 128], strides = [1, 1, 1]} : vector<17x16x256xf32> to vector<16x16x128xf32>
    %22 = vector.extract_strided_slice %20 {offsets = [1, 0, 128], sizes = [16, 16, 128], strides = [1, 1, 1]} : vector<17x16x256xf32> to vector<16x16x128xf32>
    %23 = arith.addf %21, %22 : vector<16x16x128xf32>
    %24 = arith.addf %12, %23 : vector<16x16x128xf32>
    %c0_13 = arith.constant 0 : index
    %c0_14 = arith.constant 0 : index
    %25 = vector.load %arg4[%c0_13, %c0_14] : memref<1x128xf32, #tpu.memory_space<vmem>>, vector<1x128xf32>
    %26 = vector.shape_cast %25 : vector<1x128xf32> to vector<1x1x128xf32>
    %27 = vector.broadcast %26 : vector<1x1x128xf32> to vector<16x16x128xf32>
    %28 = arith.addf %24, %27 : vector<16x16x128xf32>
    %cst_15 = arith.constant 0.000000e+00 : f32
    %29 = vector.broadcast %cst_15 : f32 to vector<16x16x128xf32>
    %30 = arith.maximumf %28, %29 : vector<16x16x128xf32>
    %31 = vector.shape_cast %30 : vector<16x16x128xf32> to vector<1x16x16x128xf32>
    %32 = arith.truncf %31 : vector<1x16x16x128xf32> to vector<1x16x16x128xbf16>
    %c0_16 = arith.constant 0 : index
    %c0_17 = arith.constant 0 : index
    %c0_18 = arith.constant 0 : index
    %c0_19 = arith.constant 0 : index
    %33 = vector.load %arg5[%c0_16, %c0_17, %c0_18, %c0_19] : memref<1x16x16x128xbf16, #tpu.memory_space<vmem>>, vector<1x16x16x128xbf16>
    tpu.vector_store %arg5[%c0_16, %c0_17, %c0_18, %c0_19], %32 {strides = array<i32>} : memref<1x16x16x128xbf16, #tpu.memory_space<vmem>>, vector<1x16x16x128xbf16>,
    return
  }
  func.func @transform_0(%arg0: i32, %arg1: i32) -> (i32, i32, i32, i32, i32) {
    %c0_i32 = arith.constant 0 : i32
    %c0_i32_0 = arith.constant 0 : i32
    %c0_i32_1 = arith.constant 0 : i32
    %c0_i32_2 = arith.constant 0 : i32
    %c0_i32_3 = arith.constant 0 : i32
    return %arg0, %c0_i32, %c0_i32_0, %c0_i32_1, %c0_i32_2 : i32, i32, i32, i32, i32
  }
  func.func @transform_1(%arg0: i32, %arg1: i32) -> (i32, i32, i32) {
    %c0_i32 = arith.constant 0 : i32
    %c0_i32_0 = arith.constant 0 : i32
    %c0_i32_1 = arith.constant 0 : i32
    %c0_i32_2 = arith.constant 0 : i32
    return %c0_i32, %c0_i32_0, %c0_i32_1 : i32, i32, i32
  }
  func.func @transform_2(%arg0: i32, %arg1: i32) -> (i32, i32) {
    %c0_i32 = arith.constant 0 : i32
    %c0_i32_0 = arith.constant 0 : i32
    %c0_i32_1 = arith.constant 0 : i32
    return %c0_i32, %c0_i32_0 : i32, i32
  }
  func.func @transform_3(%arg0: i32, %arg1: i32) -> (i32, i32, i32, i32) {
    %c0_i32 = arith.constant 0 : i32
    %c0_i32_0 = arith.constant 0 : i32
    %c0_i32_1 = arith.constant 0 : i32
    return %arg0, %arg1, %c0_i32, %c0_i32_0 : i32, i32, i32, i32
  }
}

module attributes {stable_mosaic.version = 11 : i64} {
  func.func @_conv3x3s2_bn_relu_kernel(%arg0: i32, %arg1: i32, %arg2: memref<1x2x9x8x64xbf16, #tpu.memory_space<vmem>>, %arg3: memref<2x64x256xbf16, #tpu.memory_space<vmem>>, %arg4: memref<1x128xf32, #tpu.memory_space<vmem>>, %arg5: memref<1x8x8x128xbf16, #tpu.memory_space<vmem>>) attributes {dimension_semantics = [#tpu.dimension_semantics<parallel>, #tpu.dimension_semantics<parallel>], iteration_bounds = array<i64: 2, 1>, scalar_prefetch = 0 : i64, scratch_operands = 0 : i64, tpu.core_type = #tpu.core_type<tc>, window_params = [{pipeline_mode = #tpu.pipeline_mode<synchronous>, transform_indices = @transform_0, window_bounds = array<i64: 1, 2, 9, 8, 64>}, {pipeline_mode = #tpu.pipeline_mode<synchronous>, transform_indices = @transform_1, window_bounds = array<i64: 2, 64, 256>}, {pipeline_mode = #tpu.pipeline_mode<synchronous>, transform_indices = @transform_2, window_bounds = array<i64: 1, 128>}, {transform_indices = @transform_3, window_bounds = array<i64: 1, 8, 8, 128>}]} {
    %c8_i32 = arith.constant 8 : i32
    %0 = arith.muli %arg1, %c8_i32 : i32
    %1 = tpu.assume_multiple %0, 8 : i32
    %c0 = arith.constant 0 : index
    %c0_0 = arith.constant 0 : index
    %2 = arith.index_cast %1 : i32 to index
    %c0_1 = arith.constant 0 : index
    %c0_2 = arith.constant 0 : index
    %3 = vector.load %arg2[%c0, %c0_0, %2, %c0_1, %c0_2] : memref<1x2x9x8x64xbf16, #tpu.memory_space<vmem>>, vector<1x1x9x8x64xbf16>
    %4 = vector.shape_cast %3 : vector<1x1x9x8x64xbf16> to vector<9x8x64xbf16>
    %5 = vector.shape_cast %4 : vector<9x8x64xbf16> to vector<72x64xbf16>
    %c0_3 = arith.constant 0 : index
    %c0_4 = arith.constant 0 : index
    %c0_5 = arith.constant 0 : index
    %6 = vector.load %arg3[%c0_3, %c0_4, %c0_5] : memref<2x64x256xbf16, #tpu.memory_space<vmem>>, vector<1x64x256xbf16>
    %7 = vector.shape_cast %6 : vector<1x64x256xbf16> to vector<64x256xbf16>
    %cst = arith.constant dense<0.000000e+00> : vector<72x256xf32>
    %8 = tpu.matmul %5, %7, %cst {dimension_numbers = #tpu.dot_dimension_numbers<[1], [0], [0], [1], [0, 0, 1, 1], [], []>} : vector<72x64xbf16>, vector<64x256xbf16>, vector<72x256xf32> -> vector<72x256xf32>
    %9 = vector.shape_cast %8 : vector<72x256xf32> to vector<9x8x256xf32>
    %10 = vector.extract_strided_slice %9 {offsets = [0, 0, 0], sizes = [8, 8, 128], strides = [1, 1, 1]} : vector<9x8x256xf32> to vector<8x8x128xf32>
    %11 = vector.extract_strided_slice %9 {offsets = [1, 0, 128], sizes = [8, 8, 128], strides = [1, 1, 1]} : vector<9x8x256xf32> to vector<8x8x128xf32>
    %12 = arith.addf %10, %11 : vector<8x8x128xf32>
    %c0_6 = arith.constant 0 : index
    %c1 = arith.constant 1 : index
    %13 = arith.index_cast %1 : i32 to index
    %c0_7 = arith.constant 0 : index
    %c0_8 = arith.constant 0 : index
    %14 = vector.load %arg2[%c0_6, %c1, %13, %c0_7, %c0_8] : memref<1x2x9x8x64xbf16, #tpu.memory_space<vmem>>, vector<1x1x9x8x64xbf16>
    %15 = vector.shape_cast %14 : vector<1x1x9x8x64xbf16> to vector<9x8x64xbf16>
    %16 = vector.shape_cast %15 : vector<9x8x64xbf16> to vector<72x64xbf16>
    %c1_9 = arith.constant 1 : index
    %c0_10 = arith.constant 0 : index
    %c0_11 = arith.constant 0 : index
    %17 = vector.load %arg3[%c1_9, %c0_10, %c0_11] : memref<2x64x256xbf16, #tpu.memory_space<vmem>>, vector<1x64x256xbf16>
    %18 = vector.shape_cast %17 : vector<1x64x256xbf16> to vector<64x256xbf16>
    %cst_12 = arith.constant dense<0.000000e+00> : vector<72x256xf32>
    %19 = tpu.matmul %16, %18, %cst_12 {dimension_numbers = #tpu.dot_dimension_numbers<[1], [0], [0], [1], [0, 0, 1, 1], [], []>} : vector<72x64xbf16>, vector<64x256xbf16>, vector<72x256xf32> -> vector<72x256xf32>
    %20 = vector.shape_cast %19 : vector<72x256xf32> to vector<9x8x256xf32>
    %21 = vector.extract_strided_slice %20 {offsets = [0, 0, 0], sizes = [8, 8, 128], strides = [1, 1, 1]} : vector<9x8x256xf32> to vector<8x8x128xf32>
    %22 = vector.extract_strided_slice %20 {offsets = [1, 0, 128], sizes = [8, 8, 128], strides = [1, 1, 1]} : vector<9x8x256xf32> to vector<8x8x128xf32>
    %23 = arith.addf %21, %22 : vector<8x8x128xf32>
    %24 = arith.addf %12, %23 : vector<8x8x128xf32>
    %c0_13 = arith.constant 0 : index
    %c0_14 = arith.constant 0 : index
    %25 = vector.load %arg4[%c0_13, %c0_14] : memref<1x128xf32, #tpu.memory_space<vmem>>, vector<1x128xf32>
    %26 = vector.shape_cast %25 : vector<1x128xf32> to vector<1x1x128xf32>
    %27 = vector.broadcast %26 : vector<1x1x128xf32> to vector<8x8x128xf32>
    %28 = arith.addf %24, %27 : vector<8x8x128xf32>
    %cst_15 = arith.constant 0.000000e+00 : f32
    %29 = vector.broadcast %cst_15 : f32 to vector<8x8x128xf32>
    %30 = arith.maximumf %28, %29 : vector<8x8x128xf32>
    %31 = vector.shape_cast %30 : vector<8x8x128xf32> to vector<1x8x8x128xf32>
    %32 = arith.truncf %31 : vector<1x8x8x128xf32> to vector<1x8x8x128xbf16>
    %c0_16 = arith.constant 0 : index
    %c0_17 = arith.constant 0 : index
    %c0_18 = arith.constant 0 : index
    %c0_19 = arith.constant 0 : index
    %33 = vector.load %arg5[%c0_16, %c0_17, %c0_18, %c0_19] : memref<1x8x8x128xbf16, #tpu.memory_space<vmem>>, vector<1x8x8x128xbf16>
    tpu.vector_store %arg5[%c0_16, %c0_17, %c0_18, %c0_19], %32 {strides = array<i32>} : memref<1x8x8x128xbf16, #tpu.memory_space<vmem>>, vector<1x8x8x128xbf16>,
    return
  }
  func.func @transform_0(%arg0: i32, %arg1: i32) -> (i32, i32, i32, i32, i32) {
    %c0_i32 = arith.constant 0 : i32
    %c0_i32_0 = arith.constant 0 : i32
    %c0_i32_1 = arith.constant 0 : i32
    %c0_i32_2 = arith.constant 0 : i32
    %c0_i32_3 = arith.constant 0 : i32
    return %arg0, %c0_i32, %c0_i32_0, %c0_i32_1, %c0_i32_2 : i32, i32, i32, i32, i32
  }
  func.func @transform_1(%arg0: i32, %arg1: i32) -> (i32, i32, i32) {
    %c0_i32 = arith.constant 0 : i32
    %c0_i32_0 = arith.constant 0 : i32
    %c0_i32_1 = arith.constant 0 : i32
    %c0_i32_2 = arith.constant 0 : i32
    return %c0_i32, %c0_i32_0, %c0_i32_1 : i32, i32, i32
  }
  func.func @transform_2(%arg0: i32, %arg1: i32) -> (i32, i32) {
    %c0_i32 = arith.constant 0 : i32
    %c0_i32_0 = arith.constant 0 : i32
    %c0_i32_1 = arith.constant 0 : i32
    return %c0_i32, %c0_i32_0 : i32, i32
  }
  func.func @transform_3(%arg0: i32, %arg1: i32) -> (i32, i32, i32, i32) {
    %c0_i32 = arith.constant 0 : i32
    %c0_i32_0 = arith.constant 0 : i32
    %c0_i32_1 = arith.constant 0 : i32
    return %arg0, %arg1, %c0_i32, %c0_i32_0 : i32, i32, i32, i32
  }
}

module attributes {stable_mosaic.version = 11 : i64} {
  func.func @_conv3x3s2_bn_relu_kernel(%arg0: i32, %arg1: i32, %arg2: memref<1x2x5x8x128xbf16, #tpu.memory_space<vmem>>, %arg3: memref<2x128x256xbf16, #tpu.memory_space<vmem>>, %arg4: memref<1x128xf32, #tpu.memory_space<vmem>>, %arg5: memref<1x4x8x128xbf16, #tpu.memory_space<vmem>>) attributes {dimension_semantics = [#tpu.dimension_semantics<parallel>, #tpu.dimension_semantics<parallel>], iteration_bounds = array<i64: 2, 1>, scalar_prefetch = 0 : i64, scratch_operands = 0 : i64, tpu.core_type = #tpu.core_type<tc>, window_params = [{pipeline_mode = #tpu.pipeline_mode<synchronous>, transform_indices = @transform_0, window_bounds = array<i64: 1, 2, 5, 8, 128>}, {pipeline_mode = #tpu.pipeline_mode<synchronous>, transform_indices = @transform_1, window_bounds = array<i64: 2, 128, 256>}, {pipeline_mode = #tpu.pipeline_mode<synchronous>, transform_indices = @transform_2, window_bounds = array<i64: 1, 128>}, {transform_indices = @transform_3, window_bounds = array<i64: 1, 4, 8, 128>}]} {
    %c4_i32 = arith.constant 4 : i32
    %0 = arith.muli %arg1, %c4_i32 : i32
    %1 = tpu.assume_multiple %0, 4 : i32
    %c0 = arith.constant 0 : index
    %c0_0 = arith.constant 0 : index
    %2 = arith.index_cast %1 : i32 to index
    %c0_1 = arith.constant 0 : index
    %c0_2 = arith.constant 0 : index
    %3 = vector.load %arg2[%c0, %c0_0, %2, %c0_1, %c0_2] : memref<1x2x5x8x128xbf16, #tpu.memory_space<vmem>>, vector<1x1x5x8x128xbf16>
    %4 = vector.shape_cast %3 : vector<1x1x5x8x128xbf16> to vector<5x8x128xbf16>
    %5 = vector.shape_cast %4 : vector<5x8x128xbf16> to vector<40x128xbf16>
    %c0_3 = arith.constant 0 : index
    %c0_4 = arith.constant 0 : index
    %c0_5 = arith.constant 0 : index
    %6 = vector.load %arg3[%c0_3, %c0_4, %c0_5] : memref<2x128x256xbf16, #tpu.memory_space<vmem>>, vector<1x128x256xbf16>
    %7 = vector.shape_cast %6 : vector<1x128x256xbf16> to vector<128x256xbf16>
    %cst = arith.constant dense<0.000000e+00> : vector<40x256xf32>
    %8 = tpu.matmul %5, %7, %cst {dimension_numbers = #tpu.dot_dimension_numbers<[1], [0], [0], [1], [0, 0, 1, 1], [], []>} : vector<40x128xbf16>, vector<128x256xbf16>, vector<40x256xf32> -> vector<40x256xf32>
    %9 = vector.shape_cast %8 : vector<40x256xf32> to vector<5x8x256xf32>
    %10 = vector.extract_strided_slice %9 {offsets = [0, 0, 0], sizes = [4, 8, 128], strides = [1, 1, 1]} : vector<5x8x256xf32> to vector<4x8x128xf32>
    %11 = vector.extract_strided_slice %9 {offsets = [1, 0, 128], sizes = [4, 8, 128], strides = [1, 1, 1]} : vector<5x8x256xf32> to vector<4x8x128xf32>
    %12 = arith.addf %10, %11 : vector<4x8x128xf32>
    %c0_6 = arith.constant 0 : index
    %c1 = arith.constant 1 : index
    %13 = arith.index_cast %1 : i32 to index
    %c0_7 = arith.constant 0 : index
    %c0_8 = arith.constant 0 : index
    %14 = vector.load %arg2[%c0_6, %c1, %13, %c0_7, %c0_8] : memref<1x2x5x8x128xbf16, #tpu.memory_space<vmem>>, vector<1x1x5x8x128xbf16>
    %15 = vector.shape_cast %14 : vector<1x1x5x8x128xbf16> to vector<5x8x128xbf16>
    %16 = vector.shape_cast %15 : vector<5x8x128xbf16> to vector<40x128xbf16>
    %c1_9 = arith.constant 1 : index
    %c0_10 = arith.constant 0 : index
    %c0_11 = arith.constant 0 : index
    %17 = vector.load %arg3[%c1_9, %c0_10, %c0_11] : memref<2x128x256xbf16, #tpu.memory_space<vmem>>, vector<1x128x256xbf16>
    %18 = vector.shape_cast %17 : vector<1x128x256xbf16> to vector<128x256xbf16>
    %cst_12 = arith.constant dense<0.000000e+00> : vector<40x256xf32>
    %19 = tpu.matmul %16, %18, %cst_12 {dimension_numbers = #tpu.dot_dimension_numbers<[1], [0], [0], [1], [0, 0, 1, 1], [], []>} : vector<40x128xbf16>, vector<128x256xbf16>, vector<40x256xf32> -> vector<40x256xf32>
    %20 = vector.shape_cast %19 : vector<40x256xf32> to vector<5x8x256xf32>
    %21 = vector.extract_strided_slice %20 {offsets = [0, 0, 0], sizes = [4, 8, 128], strides = [1, 1, 1]} : vector<5x8x256xf32> to vector<4x8x128xf32>
    %22 = vector.extract_strided_slice %20 {offsets = [1, 0, 128], sizes = [4, 8, 128], strides = [1, 1, 1]} : vector<5x8x256xf32> to vector<4x8x128xf32>
    %23 = arith.addf %21, %22 : vector<4x8x128xf32>
    %24 = arith.addf %12, %23 : vector<4x8x128xf32>
    %c0_13 = arith.constant 0 : index
    %c0_14 = arith.constant 0 : index
    %25 = vector.load %arg4[%c0_13, %c0_14] : memref<1x128xf32, #tpu.memory_space<vmem>>, vector<1x128xf32>
    %26 = vector.shape_cast %25 : vector<1x128xf32> to vector<1x1x128xf32>
    %27 = vector.broadcast %26 : vector<1x1x128xf32> to vector<4x8x128xf32>
    %28 = arith.addf %24, %27 : vector<4x8x128xf32>
    %cst_15 = arith.constant 0.000000e+00 : f32
    %29 = vector.broadcast %cst_15 : f32 to vector<4x8x128xf32>
    %30 = arith.maximumf %28, %29 : vector<4x8x128xf32>
    %31 = vector.shape_cast %30 : vector<4x8x128xf32> to vector<1x4x8x128xf32>
    %32 = arith.truncf %31 : vector<1x4x8x128xf32> to vector<1x4x8x128xbf16>
    %c0_16 = arith.constant 0 : index
    %c0_17 = arith.constant 0 : index
    %c0_18 = arith.constant 0 : index
    %c0_19 = arith.constant 0 : index
    %33 = vector.load %arg5[%c0_16, %c0_17, %c0_18, %c0_19] : memref<1x4x8x128xbf16, #tpu.memory_space<vmem>>, vector<1x4x8x128xbf16>
    tpu.vector_store %arg5[%c0_16, %c0_17, %c0_18, %c0_19], %32 {strides = array<i32>} : memref<1x4x8x128xbf16, #tpu.memory_space<vmem>>, vector<1x4x8x128xbf16>,
    return
  }
  func.func @transform_0(%arg0: i32, %arg1: i32) -> (i32, i32, i32, i32, i32) {
    %c0_i32 = arith.constant 0 : i32
    %c0_i32_0 = arith.constant 0 : i32
    %c0_i32_1 = arith.constant 0 : i32
    %c0_i32_2 = arith.constant 0 : i32
    %c0_i32_3 = arith.constant 0 : i32
    return %arg0, %c0_i32, %c0_i32_0, %c0_i32_1, %c0_i32_2 : i32, i32, i32, i32, i32
  }
  func.func @transform_1(%arg0: i32, %arg1: i32) -> (i32, i32, i32) {
    %c0_i32 = arith.constant 0 : i32
    %c0_i32_0 = arith.constant 0 : i32
    %c0_i32_1 = arith.constant 0 : i32
    %c0_i32_2 = arith.constant 0 : i32
    return %c0_i32, %c0_i32_0, %c0_i32_1 : i32, i32, i32
  }
  func.func @transform_2(%arg0: i32, %arg1: i32) -> (i32, i32) {
    %c0_i32 = arith.constant 0 : i32
    %c0_i32_0 = arith.constant 0 : i32
    %c0_i32_1 = arith.constant 0 : i32
    return %c0_i32, %c0_i32_0 : i32, i32
  }
  func.func @transform_3(%arg0: i32, %arg1: i32) -> (i32, i32, i32, i32) {
    %c0_i32 = arith.constant 0 : i32
    %c0_i32_0 = arith.constant 0 : i32
    %c0_i32_1 = arith.constant 0 : i32
    return %arg0, %arg1, %c0_i32, %c0_i32_0 : i32, i32, i32, i32
  }
}

module attributes {stable_mosaic.version = 11 : i64} {
  func.func @_conv3x3s2_bn_relu_kernel(%arg0: i32, %arg1: i32, %arg2: memref<1x2x3x8x256xbf16, #tpu.memory_space<vmem>>, %arg3: memref<2x256x256xbf16, #tpu.memory_space<vmem>>, %arg4: memref<1x128xf32, #tpu.memory_space<vmem>>, %arg5: memref<1x2x8x128xbf16, #tpu.memory_space<vmem>>) attributes {dimension_semantics = [#tpu.dimension_semantics<parallel>, #tpu.dimension_semantics<parallel>], iteration_bounds = array<i64: 2, 1>, scalar_prefetch = 0 : i64, scratch_operands = 0 : i64, tpu.core_type = #tpu.core_type<tc>, window_params = [{pipeline_mode = #tpu.pipeline_mode<synchronous>, transform_indices = @transform_0, window_bounds = array<i64: 1, 2, 3, 8, 256>}, {pipeline_mode = #tpu.pipeline_mode<synchronous>, transform_indices = @transform_1, window_bounds = array<i64: 2, 256, 256>}, {pipeline_mode = #tpu.pipeline_mode<synchronous>, transform_indices = @transform_2, window_bounds = array<i64: 1, 128>}, {transform_indices = @transform_3, window_bounds = array<i64: 1, 2, 8, 128>}]} {
    %c2_i32 = arith.constant 2 : i32
    %0 = arith.muli %arg1, %c2_i32 : i32
    %1 = tpu.assume_multiple %0, 2 : i32
    %c0 = arith.constant 0 : index
    %c0_0 = arith.constant 0 : index
    %2 = arith.index_cast %1 : i32 to index
    %c0_1 = arith.constant 0 : index
    %c0_2 = arith.constant 0 : index
    %3 = vector.load %arg2[%c0, %c0_0, %2, %c0_1, %c0_2] : memref<1x2x3x8x256xbf16, #tpu.memory_space<vmem>>, vector<1x1x3x8x256xbf16>
    %4 = vector.shape_cast %3 : vector<1x1x3x8x256xbf16> to vector<3x8x256xbf16>
    %5 = vector.shape_cast %4 : vector<3x8x256xbf16> to vector<24x256xbf16>
    %c0_3 = arith.constant 0 : index
    %c0_4 = arith.constant 0 : index
    %c0_5 = arith.constant 0 : index
    %6 = vector.load %arg3[%c0_3, %c0_4, %c0_5] : memref<2x256x256xbf16, #tpu.memory_space<vmem>>, vector<1x256x256xbf16>
    %7 = vector.shape_cast %6 : vector<1x256x256xbf16> to vector<256x256xbf16>
    %cst = arith.constant dense<0.000000e+00> : vector<24x256xf32>
    %8 = tpu.matmul %5, %7, %cst {dimension_numbers = #tpu.dot_dimension_numbers<[1], [0], [0], [1], [0, 0, 1, 1], [], []>} : vector<24x256xbf16>, vector<256x256xbf16>, vector<24x256xf32> -> vector<24x256xf32>
    %9 = vector.shape_cast %8 : vector<24x256xf32> to vector<3x8x256xf32>
    %10 = vector.extract_strided_slice %9 {offsets = [0, 0, 0], sizes = [2, 8, 128], strides = [1, 1, 1]} : vector<3x8x256xf32> to vector<2x8x128xf32>
    %11 = vector.extract_strided_slice %9 {offsets = [1, 0, 128], sizes = [2, 8, 128], strides = [1, 1, 1]} : vector<3x8x256xf32> to vector<2x8x128xf32>
    %12 = arith.addf %10, %11 : vector<2x8x128xf32>
    %c0_6 = arith.constant 0 : index
    %c1 = arith.constant 1 : index
    %13 = arith.index_cast %1 : i32 to index
    %c0_7 = arith.constant 0 : index
    %c0_8 = arith.constant 0 : index
    %14 = vector.load %arg2[%c0_6, %c1, %13, %c0_7, %c0_8] : memref<1x2x3x8x256xbf16, #tpu.memory_space<vmem>>, vector<1x1x3x8x256xbf16>
    %15 = vector.shape_cast %14 : vector<1x1x3x8x256xbf16> to vector<3x8x256xbf16>
    %16 = vector.shape_cast %15 : vector<3x8x256xbf16> to vector<24x256xbf16>
    %c1_9 = arith.constant 1 : index
    %c0_10 = arith.constant 0 : index
    %c0_11 = arith.constant 0 : index
    %17 = vector.load %arg3[%c1_9, %c0_10, %c0_11] : memref<2x256x256xbf16, #tpu.memory_space<vmem>>, vector<1x256x256xbf16>
    %18 = vector.shape_cast %17 : vector<1x256x256xbf16> to vector<256x256xbf16>
    %cst_12 = arith.constant dense<0.000000e+00> : vector<24x256xf32>
    %19 = tpu.matmul %16, %18, %cst_12 {dimension_numbers = #tpu.dot_dimension_numbers<[1], [0], [0], [1], [0, 0, 1, 1], [], []>} : vector<24x256xbf16>, vector<256x256xbf16>, vector<24x256xf32> -> vector<24x256xf32>
    %20 = vector.shape_cast %19 : vector<24x256xf32> to vector<3x8x256xf32>
    %21 = vector.extract_strided_slice %20 {offsets = [0, 0, 0], sizes = [2, 8, 128], strides = [1, 1, 1]} : vector<3x8x256xf32> to vector<2x8x128xf32>
    %22 = vector.extract_strided_slice %20 {offsets = [1, 0, 128], sizes = [2, 8, 128], strides = [1, 1, 1]} : vector<3x8x256xf32> to vector<2x8x128xf32>
    %23 = arith.addf %21, %22 : vector<2x8x128xf32>
    %24 = arith.addf %12, %23 : vector<2x8x128xf32>
    %c0_13 = arith.constant 0 : index
    %c0_14 = arith.constant 0 : index
    %25 = vector.load %arg4[%c0_13, %c0_14] : memref<1x128xf32, #tpu.memory_space<vmem>>, vector<1x128xf32>
    %26 = vector.shape_cast %25 : vector<1x128xf32> to vector<1x1x128xf32>
    %27 = vector.broadcast %26 : vector<1x1x128xf32> to vector<2x8x128xf32>
    %28 = arith.addf %24, %27 : vector<2x8x128xf32>
    %cst_15 = arith.constant 0.000000e+00 : f32
    %29 = vector.broadcast %cst_15 : f32 to vector<2x8x128xf32>
    %30 = arith.maximumf %28, %29 : vector<2x8x128xf32>
    %31 = vector.shape_cast %30 : vector<2x8x128xf32> to vector<1x2x8x128xf32>
    %32 = arith.truncf %31 : vector<1x2x8x128xf32> to vector<1x2x8x128xbf16>
    %c0_16 = arith.constant 0 : index
    %c0_17 = arith.constant 0 : index
    %c0_18 = arith.constant 0 : index
    %c0_19 = arith.constant 0 : index
    %33 = vector.load %arg5[%c0_16, %c0_17, %c0_18, %c0_19] : memref<1x2x8x128xbf16, #tpu.memory_space<vmem>>, vector<1x2x8x128xbf16>
    tpu.vector_store %arg5[%c0_16, %c0_17, %c0_18, %c0_19], %32 {strides = array<i32>} : memref<1x2x8x128xbf16, #tpu.memory_space<vmem>>, vector<1x2x8x128xbf16>,
    return
  }
  func.func @transform_0(%arg0: i32, %arg1: i32) -> (i32, i32, i32, i32, i32) {
    %c0_i32 = arith.constant 0 : i32
    %c0_i32_0 = arith.constant 0 : i32
    %c0_i32_1 = arith.constant 0 : i32
    %c0_i32_2 = arith.constant 0 : i32
    %c0_i32_3 = arith.constant 0 : i32
    return %arg0, %c0_i32, %c0_i32_0, %c0_i32_1, %c0_i32_2 : i32, i32, i32, i32, i32
  }
  func.func @transform_1(%arg0: i32, %arg1: i32) -> (i32, i32, i32) {
    %c0_i32 = arith.constant 0 : i32
    %c0_i32_0 = arith.constant 0 : i32
    %c0_i32_1 = arith.constant 0 : i32
    %c0_i32_2 = arith.constant 0 : i32
    return %c0_i32, %c0_i32_0, %c0_i32_1 : i32, i32, i32
  }
  func.func @transform_2(%arg0: i32, %arg1: i32) -> (i32, i32) {
    %c0_i32 = arith.constant 0 : i32
    %c0_i32_0 = arith.constant 0 : i32
    %c0_i32_1 = arith.constant 0 : i32
    return %c0_i32, %c0_i32_0 : i32, i32
  }
  func.func @transform_3(%arg0: i32, %arg1: i32) -> (i32, i32, i32, i32) {
    %c0_i32 = arith.constant 0 : i32
    %c0_i32_0 = arith.constant 0 : i32
    %c0_i32_1 = arith.constant 0 : i32
    return %arg0, %arg1, %c0_i32, %c0_i32_0 : i32, i32, i32, i32
  }
}

module attributes {stable_mosaic.version = 11 : i64} {
  func.func @_conv3x3s2_bn_relu_kernel(%arg0: i32, %arg1: i32, %arg2: memref<1x2x2x8x384xbf16, #tpu.memory_space<vmem>>, %arg3: memref<2x384x256xbf16, #tpu.memory_space<vmem>>, %arg4: memref<1x128xf32, #tpu.memory_space<vmem>>, %arg5: memref<1x1x8x128xbf16, #tpu.memory_space<vmem>>) attributes {dimension_semantics = [#tpu.dimension_semantics<parallel>, #tpu.dimension_semantics<parallel>], iteration_bounds = array<i64: 2, 1>, scalar_prefetch = 0 : i64, scratch_operands = 0 : i64, tpu.core_type = #tpu.core_type<tc>, window_params = [{pipeline_mode = #tpu.pipeline_mode<synchronous>, transform_indices = @transform_0, window_bounds = array<i64: 1, 2, 2, 8, 384>}, {pipeline_mode = #tpu.pipeline_mode<synchronous>, transform_indices = @transform_1, window_bounds = array<i64: 2, 384, 256>}, {pipeline_mode = #tpu.pipeline_mode<synchronous>, transform_indices = @transform_2, window_bounds = array<i64: 1, 128>}, {transform_indices = @transform_3, window_bounds = array<i64: 1, 1, 8, 128>}]} {
    %c1_i32 = arith.constant 1 : i32
    %0 = arith.muli %arg1, %c1_i32 : i32
    %1 = tpu.assume_multiple %0, 1 : i32
    %c0 = arith.constant 0 : index
    %c0_0 = arith.constant 0 : index
    %2 = arith.index_cast %1 : i32 to index
    %c0_1 = arith.constant 0 : index
    %c0_2 = arith.constant 0 : index
    %3 = vector.load %arg2[%c0, %c0_0, %2, %c0_1, %c0_2] : memref<1x2x2x8x384xbf16, #tpu.memory_space<vmem>>, vector<1x1x2x8x384xbf16>
    %4 = vector.shape_cast %3 : vector<1x1x2x8x384xbf16> to vector<2x8x384xbf16>
    %5 = vector.shape_cast %4 : vector<2x8x384xbf16> to vector<16x384xbf16>
    %c0_3 = arith.constant 0 : index
    %c0_4 = arith.constant 0 : index
    %c0_5 = arith.constant 0 : index
    %6 = vector.load %arg3[%c0_3, %c0_4, %c0_5] : memref<2x384x256xbf16, #tpu.memory_space<vmem>>, vector<1x384x256xbf16>
    %7 = vector.shape_cast %6 : vector<1x384x256xbf16> to vector<384x256xbf16>
    %cst = arith.constant dense<0.000000e+00> : vector<16x256xf32>
    %8 = tpu.matmul %5, %7, %cst {dimension_numbers = #tpu.dot_dimension_numbers<[1], [0], [0], [1], [0, 0, 1, 1], [], []>} : vector<16x384xbf16>, vector<384x256xbf16>, vector<16x256xf32> -> vector<16x256xf32>
    %9 = vector.shape_cast %8 : vector<16x256xf32> to vector<2x8x256xf32>
    %10 = vector.extract_strided_slice %9 {offsets = [0, 0, 0], sizes = [1, 8, 128], strides = [1, 1, 1]} : vector<2x8x256xf32> to vector<1x8x128xf32>
    %11 = vector.extract_strided_slice %9 {offsets = [1, 0, 128], sizes = [1, 8, 128], strides = [1, 1, 1]} : vector<2x8x256xf32> to vector<1x8x128xf32>
    %12 = arith.addf %10, %11 : vector<1x8x128xf32>
    %c0_6 = arith.constant 0 : index
    %c1 = arith.constant 1 : index
    %13 = arith.index_cast %1 : i32 to index
    %c0_7 = arith.constant 0 : index
    %c0_8 = arith.constant 0 : index
    %14 = vector.load %arg2[%c0_6, %c1, %13, %c0_7, %c0_8] : memref<1x2x2x8x384xbf16, #tpu.memory_space<vmem>>, vector<1x1x2x8x384xbf16>
    %15 = vector.shape_cast %14 : vector<1x1x2x8x384xbf16> to vector<2x8x384xbf16>
    %16 = vector.shape_cast %15 : vector<2x8x384xbf16> to vector<16x384xbf16>
    %c1_9 = arith.constant 1 : index
    %c0_10 = arith.constant 0 : index
    %c0_11 = arith.constant 0 : index
    %17 = vector.load %arg3[%c1_9, %c0_10, %c0_11] : memref<2x384x256xbf16, #tpu.memory_space<vmem>>, vector<1x384x256xbf16>
    %18 = vector.shape_cast %17 : vector<1x384x256xbf16> to vector<384x256xbf16>
    %cst_12 = arith.constant dense<0.000000e+00> : vector<16x256xf32>
    %19 = tpu.matmul %16, %18, %cst_12 {dimension_numbers = #tpu.dot_dimension_numbers<[1], [0], [0], [1], [0, 0, 1, 1], [], []>} : vector<16x384xbf16>, vector<384x256xbf16>, vector<16x256xf32> -> vector<16x256xf32>
    %20 = vector.shape_cast %19 : vector<16x256xf32> to vector<2x8x256xf32>
    %21 = vector.extract_strided_slice %20 {offsets = [0, 0, 0], sizes = [1, 8, 128], strides = [1, 1, 1]} : vector<2x8x256xf32> to vector<1x8x128xf32>
    %22 = vector.extract_strided_slice %20 {offsets = [1, 0, 128], sizes = [1, 8, 128], strides = [1, 1, 1]} : vector<2x8x256xf32> to vector<1x8x128xf32>
    %23 = arith.addf %21, %22 : vector<1x8x128xf32>
    %24 = arith.addf %12, %23 : vector<1x8x128xf32>
    %c0_13 = arith.constant 0 : index
    %c0_14 = arith.constant 0 : index
    %25 = vector.load %arg4[%c0_13, %c0_14] : memref<1x128xf32, #tpu.memory_space<vmem>>, vector<1x128xf32>
    %26 = vector.shape_cast %25 : vector<1x128xf32> to vector<1x1x128xf32>
    %27 = vector.broadcast %26 : vector<1x1x128xf32> to vector<1x8x128xf32>
    %28 = arith.addf %24, %27 : vector<1x8x128xf32>
    %cst_15 = arith.constant 0.000000e+00 : f32
    %29 = vector.broadcast %cst_15 : f32 to vector<1x8x128xf32>
    %30 = arith.maximumf %28, %29 : vector<1x8x128xf32>
    %31 = vector.shape_cast %30 : vector<1x8x128xf32> to vector<1x1x8x128xf32>
    %32 = arith.truncf %31 : vector<1x1x8x128xf32> to vector<1x1x8x128xbf16>
    %c0_16 = arith.constant 0 : index
    %c0_17 = arith.constant 0 : index
    %c0_18 = arith.constant 0 : index
    %c0_19 = arith.constant 0 : index
    %33 = vector.load %arg5[%c0_16, %c0_17, %c0_18, %c0_19] : memref<1x1x8x128xbf16, #tpu.memory_space<vmem>>, vector<1x1x8x128xbf16>
    tpu.vector_store %arg5[%c0_16, %c0_17, %c0_18, %c0_19], %32 {strides = array<i32>} : memref<1x1x8x128xbf16, #tpu.memory_space<vmem>>, vector<1x1x8x128xbf16>,
    return
  }
  func.func @transform_0(%arg0: i32, %arg1: i32) -> (i32, i32, i32, i32, i32) {
    %c0_i32 = arith.constant 0 : i32
    %c0_i32_0 = arith.constant 0 : i32
    %c0_i32_1 = arith.constant 0 : i32
    %c0_i32_2 = arith.constant 0 : i32
    %c0_i32_3 = arith.constant 0 : i32
    return %arg0, %c0_i32, %c0_i32_0, %c0_i32_1, %c0_i32_2 : i32, i32, i32, i32, i32
  }
  func.func @transform_1(%arg0: i32, %arg1: i32) -> (i32, i32, i32) {
    %c0_i32 = arith.constant 0 : i32
    %c0_i32_0 = arith.constant 0 : i32
    %c0_i32_1 = arith.constant 0 : i32
    %c0_i32_2 = arith.constant 0 : i32
    return %c0_i32, %c0_i32_0, %c0_i32_1 : i32, i32, i32
  }
  func.func @transform_2(%arg0: i32, %arg1: i32) -> (i32, i32) {
    %c0_i32 = arith.constant 0 : i32
    %c0_i32_0 = arith.constant 0 : i32
    %c0_i32_1 = arith.constant 0 : i32
    return %c0_i32, %c0_i32_0 : i32, i32
  }
  func.func @transform_3(%arg0: i32, %arg1: i32) -> (i32, i32, i32, i32) {
    %c0_i32 = arith.constant 0 : i32
    %c0_i32_0 = arith.constant 0 : i32
    %c0_i32_1 = arith.constant 0 : i32
    return %arg0, %arg1, %c0_i32, %c0_i32_0 : i32, i32, i32, i32
  }
}

module attributes {stable_mosaic.version = 11 : i64} {
  func.func @_conv3x3s2_bn_relu_kernel(%arg0: i32, %arg1: i32, %arg2: memref<1x2x17x16x12xbf16, #tpu.memory_space<vmem>>, %arg3: memref<2x12x256xbf16, #tpu.memory_space<vmem>>, %arg4: memref<1x128xf32, #tpu.memory_space<vmem>>, %arg5: memref<1x16x16x128xbf16, #tpu.memory_space<vmem>>) attributes {dimension_semantics = [#tpu.dimension_semantics<parallel>, #tpu.dimension_semantics<parallel>], iteration_bounds = array<i64: 2, 1>, scalar_prefetch = 0 : i64, scratch_operands = 0 : i64, tpu.core_type = #tpu.core_type<tc>, window_params = [{transform_indices = @transform_0, window_bounds = array<i64: 1, 2, 17, 16, 12>}, {pipeline_mode = #tpu.pipeline_mode<synchronous>, transform_indices = @transform_1, window_bounds = array<i64: 2, 12, 256>}, {pipeline_mode = #tpu.pipeline_mode<synchronous>, transform_indices = @transform_2, window_bounds = array<i64: 1, 128>}, {transform_indices = @transform_3, window_bounds = array<i64: 1, 16, 16, 128>}]} {
    %c16_i32 = arith.constant 16 : i32
    %0 = arith.muli %arg1, %c16_i32 : i32
    %1 = tpu.assume_multiple %0, 16 : i32
    %c0 = arith.constant 0 : index
    %c0_0 = arith.constant 0 : index
    %2 = arith.index_cast %1 : i32 to index
    %c0_1 = arith.constant 0 : index
    %c0_2 = arith.constant 0 : index
    %3 = vector.load %arg2[%c0, %c0_0, %2, %c0_1, %c0_2] : memref<1x2x17x16x12xbf16, #tpu.memory_space<vmem>>, vector<1x1x17x16x12xbf16>
    %4 = vector.shape_cast %3 : vector<1x1x17x16x12xbf16> to vector<17x16x12xbf16>
    %5 = vector.shape_cast %4 : vector<17x16x12xbf16> to vector<272x12xbf16>
    %c0_3 = arith.constant 0 : index
    %c0_4 = arith.constant 0 : index
    %c0_5 = arith.constant 0 : index
    %6 = vector.load %arg3[%c0_3, %c0_4, %c0_5] : memref<2x12x256xbf16, #tpu.memory_space<vmem>>, vector<1x12x256xbf16>
    %7 = vector.shape_cast %6 : vector<1x12x256xbf16> to vector<12x256xbf16>
    %cst = arith.constant dense<0.000000e+00> : vector<272x256xf32>
    %8 = tpu.matmul %5, %7, %cst {dimension_numbers = #tpu.dot_dimension_numbers<[1], [0], [0], [1], [0, 0, 1, 1], [], []>} : vector<272x12xbf16>, vector<12x256xbf16>, vector<272x256xf32> -> vector<272x256xf32>
    %9 = vector.shape_cast %8 : vector<272x256xf32> to vector<17x16x256xf32>
    %10 = vector.extract_strided_slice %9 {offsets = [0, 0, 0], sizes = [16, 16, 128], strides = [1, 1, 1]} : vector<17x16x256xf32> to vector<16x16x128xf32>
    %11 = vector.extract_strided_slice %9 {offsets = [1, 0, 128], sizes = [16, 16, 128], strides = [1, 1, 1]} : vector<17x16x256xf32> to vector<16x16x128xf32>
    %12 = arith.addf %10, %11 : vector<16x16x128xf32>
    %c0_6 = arith.constant 0 : index
    %c1 = arith.constant 1 : index
    %13 = arith.index_cast %1 : i32 to index
    %c0_7 = arith.constant 0 : index
    %c0_8 = arith.constant 0 : index
    %14 = vector.load %arg2[%c0_6, %c1, %13, %c0_7, %c0_8] : memref<1x2x17x16x12xbf16, #tpu.memory_space<vmem>>, vector<1x1x17x16x12xbf16>
    %15 = vector.shape_cast %14 : vector<1x1x17x16x12xbf16> to vector<17x16x12xbf16>
    %16 = vector.shape_cast %15 : vector<17x16x12xbf16> to vector<272x12xbf16>
    %c1_9 = arith.constant 1 : index
    %c0_10 = arith.constant 0 : index
    %c0_11 = arith.constant 0 : index
    %17 = vector.load %arg3[%c1_9, %c0_10, %c0_11] : memref<2x12x256xbf16, #tpu.memory_space<vmem>>, vector<1x12x256xbf16>
    %18 = vector.shape_cast %17 : vector<1x12x256xbf16> to vector<12x256xbf16>
    %cst_12 = arith.constant dense<0.000000e+00> : vector<272x256xf32>
    %19 = tpu.matmul %16, %18, %cst_12 {dimension_numbers = #tpu.dot_dimension_numbers<[1], [0], [0], [1], [0, 0, 1, 1], [], []>} : vector<272x12xbf16>, vector<12x256xbf16>, vector<272x256xf32> -> vector<272x256xf32>
    %20 = vector.shape_cast %19 : vector<272x256xf32> to vector<17x16x256xf32>
    %21 = vector.extract_strided_slice %20 {offsets = [0, 0, 0], sizes = [16, 16, 128], strides = [1, 1, 1]} : vector<17x16x256xf32> to vector<16x16x128xf32>
    %22 = vector.extract_strided_slice %20 {offsets = [1, 0, 128], sizes = [16, 16, 128], strides = [1, 1, 1]} : vector<17x16x256xf32> to vector<16x16x128xf32>
    %23 = arith.addf %21, %22 : vector<16x16x128xf32>
    %24 = arith.addf %12, %23 : vector<16x16x128xf32>
    %c0_13 = arith.constant 0 : index
    %c0_14 = arith.constant 0 : index
    %25 = vector.load %arg4[%c0_13, %c0_14] : memref<1x128xf32, #tpu.memory_space<vmem>>, vector<1x128xf32>
    %26 = vector.shape_cast %25 : vector<1x128xf32> to vector<1x1x128xf32>
    %27 = vector.broadcast %26 : vector<1x1x128xf32> to vector<16x16x128xf32>
    %28 = arith.addf %24, %27 : vector<16x16x128xf32>
    %cst_15 = arith.constant 0.000000e+00 : f32
    %29 = vector.broadcast %cst_15 : f32 to vector<16x16x128xf32>
    %30 = arith.maximumf %28, %29 : vector<16x16x128xf32>
    %31 = vector.shape_cast %30 : vector<16x16x128xf32> to vector<1x16x16x128xf32>
    %32 = arith.truncf %31 : vector<1x16x16x128xf32> to vector<1x16x16x128xbf16>
    %c0_16 = arith.constant 0 : index
    %c0_17 = arith.constant 0 : index
    %c0_18 = arith.constant 0 : index
    %c0_19 = arith.constant 0 : index
    %33 = vector.load %arg5[%c0_16, %c0_17, %c0_18, %c0_19] : memref<1x16x16x128xbf16, #tpu.memory_space<vmem>>, vector<1x16x16x128xbf16>
    tpu.vector_store %arg5[%c0_16, %c0_17, %c0_18, %c0_19], %32 {strides = array<i32>} : memref<1x16x16x128xbf16, #tpu.memory_space<vmem>>, vector<1x16x16x128xbf16>,
    return
  }
  func.func @transform_0(%arg0: i32, %arg1: i32) -> (i32, i32, i32, i32, i32) {
    %c0_i32 = arith.constant 0 : i32
    %c0_i32_0 = arith.constant 0 : i32
    %c0_i32_1 = arith.constant 0 : i32
    %c0_i32_2 = arith.constant 0 : i32
    %c0_i32_3 = arith.constant 0 : i32
    return %arg0, %c0_i32, %c0_i32_0, %c0_i32_1, %c0_i32_2 : i32, i32, i32, i32, i32
  }
  func.func @transform_1(%arg0: i32, %arg1: i32) -> (i32, i32, i32) {
    %c0_i32 = arith.constant 0 : i32
    %c0_i32_0 = arith.constant 0 : i32
    %c0_i32_1 = arith.constant 0 : i32
    %c0_i32_2 = arith.constant 0 : i32
    return %c0_i32, %c0_i32_0, %c0_i32_1 : i32, i32, i32
  }
  func.func @transform_2(%arg0: i32, %arg1: i32) -> (i32, i32) {
    %c0_i32 = arith.constant 0 : i32
    %c0_i32_0 = arith.constant 0 : i32
    %c0_i32_1 = arith.constant 0 : i32
    return %c0_i32, %c0_i32_0 : i32, i32
  }
  func.func @transform_3(%arg0: i32, %arg1: i32) -> (i32, i32, i32, i32) {
    %c0_i32 = arith.constant 0 : i32
    %c0_i32_0 = arith.constant 0 : i32
    %c0_i32_1 = arith.constant 0 : i32
    return %arg0, %arg1, %c0_i32, %c0_i32_0 : i32, i32, i32, i32
  }
}

module attributes {stable_mosaic.version = 11 : i64} {
  func.func @_conv3x3s2_bn_relu_kernel(%arg0: i32, %arg1: i32, %arg2: memref<1x2x9x8x64xbf16, #tpu.memory_space<vmem>>, %arg3: memref<2x64x256xbf16, #tpu.memory_space<vmem>>, %arg4: memref<1x128xf32, #tpu.memory_space<vmem>>, %arg5: memref<1x8x8x128xbf16, #tpu.memory_space<vmem>>) attributes {dimension_semantics = [#tpu.dimension_semantics<parallel>, #tpu.dimension_semantics<parallel>], iteration_bounds = array<i64: 2, 1>, scalar_prefetch = 0 : i64, scratch_operands = 0 : i64, tpu.core_type = #tpu.core_type<tc>, window_params = [{transform_indices = @transform_0, window_bounds = array<i64: 1, 2, 9, 8, 64>}, {pipeline_mode = #tpu.pipeline_mode<synchronous>, transform_indices = @transform_1, window_bounds = array<i64: 2, 64, 256>}, {pipeline_mode = #tpu.pipeline_mode<synchronous>, transform_indices = @transform_2, window_bounds = array<i64: 1, 128>}, {transform_indices = @transform_3, window_bounds = array<i64: 1, 8, 8, 128>}]} {
    %c8_i32 = arith.constant 8 : i32
    %0 = arith.muli %arg1, %c8_i32 : i32
    %1 = tpu.assume_multiple %0, 8 : i32
    %c0 = arith.constant 0 : index
    %c0_0 = arith.constant 0 : index
    %2 = arith.index_cast %1 : i32 to index
    %c0_1 = arith.constant 0 : index
    %c0_2 = arith.constant 0 : index
    %3 = vector.load %arg2[%c0, %c0_0, %2, %c0_1, %c0_2] : memref<1x2x9x8x64xbf16, #tpu.memory_space<vmem>>, vector<1x1x9x8x64xbf16>
    %4 = vector.shape_cast %3 : vector<1x1x9x8x64xbf16> to vector<9x8x64xbf16>
    %5 = vector.shape_cast %4 : vector<9x8x64xbf16> to vector<72x64xbf16>
    %c0_3 = arith.constant 0 : index
    %c0_4 = arith.constant 0 : index
    %c0_5 = arith.constant 0 : index
    %6 = vector.load %arg3[%c0_3, %c0_4, %c0_5] : memref<2x64x256xbf16, #tpu.memory_space<vmem>>, vector<1x64x256xbf16>
    %7 = vector.shape_cast %6 : vector<1x64x256xbf16> to vector<64x256xbf16>
    %cst = arith.constant dense<0.000000e+00> : vector<72x256xf32>
    %8 = tpu.matmul %5, %7, %cst {dimension_numbers = #tpu.dot_dimension_numbers<[1], [0], [0], [1], [0, 0, 1, 1], [], []>} : vector<72x64xbf16>, vector<64x256xbf16>, vector<72x256xf32> -> vector<72x256xf32>
    %9 = vector.shape_cast %8 : vector<72x256xf32> to vector<9x8x256xf32>
    %10 = vector.extract_strided_slice %9 {offsets = [0, 0, 0], sizes = [8, 8, 128], strides = [1, 1, 1]} : vector<9x8x256xf32> to vector<8x8x128xf32>
    %11 = vector.extract_strided_slice %9 {offsets = [1, 0, 128], sizes = [8, 8, 128], strides = [1, 1, 1]} : vector<9x8x256xf32> to vector<8x8x128xf32>
    %12 = arith.addf %10, %11 : vector<8x8x128xf32>
    %c0_6 = arith.constant 0 : index
    %c1 = arith.constant 1 : index
    %13 = arith.index_cast %1 : i32 to index
    %c0_7 = arith.constant 0 : index
    %c0_8 = arith.constant 0 : index
    %14 = vector.load %arg2[%c0_6, %c1, %13, %c0_7, %c0_8] : memref<1x2x9x8x64xbf16, #tpu.memory_space<vmem>>, vector<1x1x9x8x64xbf16>
    %15 = vector.shape_cast %14 : vector<1x1x9x8x64xbf16> to vector<9x8x64xbf16>
    %16 = vector.shape_cast %15 : vector<9x8x64xbf16> to vector<72x64xbf16>
    %c1_9 = arith.constant 1 : index
    %c0_10 = arith.constant 0 : index
    %c0_11 = arith.constant 0 : index
    %17 = vector.load %arg3[%c1_9, %c0_10, %c0_11] : memref<2x64x256xbf16, #tpu.memory_space<vmem>>, vector<1x64x256xbf16>
    %18 = vector.shape_cast %17 : vector<1x64x256xbf16> to vector<64x256xbf16>
    %cst_12 = arith.constant dense<0.000000e+00> : vector<72x256xf32>
    %19 = tpu.matmul %16, %18, %cst_12 {dimension_numbers = #tpu.dot_dimension_numbers<[1], [0], [0], [1], [0, 0, 1, 1], [], []>} : vector<72x64xbf16>, vector<64x256xbf16>, vector<72x256xf32> -> vector<72x256xf32>
    %20 = vector.shape_cast %19 : vector<72x256xf32> to vector<9x8x256xf32>
    %21 = vector.extract_strided_slice %20 {offsets = [0, 0, 0], sizes = [8, 8, 128], strides = [1, 1, 1]} : vector<9x8x256xf32> to vector<8x8x128xf32>
    %22 = vector.extract_strided_slice %20 {offsets = [1, 0, 128], sizes = [8, 8, 128], strides = [1, 1, 1]} : vector<9x8x256xf32> to vector<8x8x128xf32>
    %23 = arith.addf %21, %22 : vector<8x8x128xf32>
    %24 = arith.addf %12, %23 : vector<8x8x128xf32>
    %c0_13 = arith.constant 0 : index
    %c0_14 = arith.constant 0 : index
    %25 = vector.load %arg4[%c0_13, %c0_14] : memref<1x128xf32, #tpu.memory_space<vmem>>, vector<1x128xf32>
    %26 = vector.shape_cast %25 : vector<1x128xf32> to vector<1x1x128xf32>
    %27 = vector.broadcast %26 : vector<1x1x128xf32> to vector<8x8x128xf32>
    %28 = arith.addf %24, %27 : vector<8x8x128xf32>
    %cst_15 = arith.constant 0.000000e+00 : f32
    %29 = vector.broadcast %cst_15 : f32 to vector<8x8x128xf32>
    %30 = arith.maximumf %28, %29 : vector<8x8x128xf32>
    %31 = vector.shape_cast %30 : vector<8x8x128xf32> to vector<1x8x8x128xf32>
    %32 = arith.truncf %31 : vector<1x8x8x128xf32> to vector<1x8x8x128xbf16>
    %c0_16 = arith.constant 0 : index
    %c0_17 = arith.constant 0 : index
    %c0_18 = arith.constant 0 : index
    %c0_19 = arith.constant 0 : index
    %33 = vector.load %arg5[%c0_16, %c0_17, %c0_18, %c0_19] : memref<1x8x8x128xbf16, #tpu.memory_space<vmem>>, vector<1x8x8x128xbf16>
    tpu.vector_store %arg5[%c0_16, %c0_17, %c0_18, %c0_19], %32 {strides = array<i32>} : memref<1x8x8x128xbf16, #tpu.memory_space<vmem>>, vector<1x8x8x128xbf16>,
    return
  }
  func.func @transform_0(%arg0: i32, %arg1: i32) -> (i32, i32, i32, i32, i32) {
    %c0_i32 = arith.constant 0 : i32
    %c0_i32_0 = arith.constant 0 : i32
    %c0_i32_1 = arith.constant 0 : i32
    %c0_i32_2 = arith.constant 0 : i32
    %c0_i32_3 = arith.constant 0 : i32
    return %arg0, %c0_i32, %c0_i32_0, %c0_i32_1, %c0_i32_2 : i32, i32, i32, i32, i32
  }
  func.func @transform_1(%arg0: i32, %arg1: i32) -> (i32, i32, i32) {
    %c0_i32 = arith.constant 0 : i32
    %c0_i32_0 = arith.constant 0 : i32
    %c0_i32_1 = arith.constant 0 : i32
    %c0_i32_2 = arith.constant 0 : i32
    return %c0_i32, %c0_i32_0, %c0_i32_1 : i32, i32, i32
  }
  func.func @transform_2(%arg0: i32, %arg1: i32) -> (i32, i32) {
    %c0_i32 = arith.constant 0 : i32
    %c0_i32_0 = arith.constant 0 : i32
    %c0_i32_1 = arith.constant 0 : i32
    return %c0_i32, %c0_i32_0 : i32, i32
  }
  func.func @transform_3(%arg0: i32, %arg1: i32) -> (i32, i32, i32, i32) {
    %c0_i32 = arith.constant 0 : i32
    %c0_i32_0 = arith.constant 0 : i32
    %c0_i32_1 = arith.constant 0 : i32
    return %arg0, %arg1, %c0_i32, %c0_i32_0 : i32, i32, i32, i32
  }
}

module attributes {stable_mosaic.version = 11 : i64} {
  func.func @_conv3x3s2_bn_relu_kernel(%arg0: i32, %arg1: i32, %arg2: memref<1x2x5x8x128xbf16, #tpu.memory_space<vmem>>, %arg3: memref<2x128x256xbf16, #tpu.memory_space<vmem>>, %arg4: memref<1x128xf32, #tpu.memory_space<vmem>>, %arg5: memref<1x4x8x128xbf16, #tpu.memory_space<vmem>>) attributes {dimension_semantics = [#tpu.dimension_semantics<parallel>, #tpu.dimension_semantics<parallel>], iteration_bounds = array<i64: 2, 1>, scalar_prefetch = 0 : i64, scratch_operands = 0 : i64, tpu.core_type = #tpu.core_type<tc>, window_params = [{transform_indices = @transform_0, window_bounds = array<i64: 1, 2, 5, 8, 128>}, {pipeline_mode = #tpu.pipeline_mode<synchronous>, transform_indices = @transform_1, window_bounds = array<i64: 2, 128, 256>}, {pipeline_mode = #tpu.pipeline_mode<synchronous>, transform_indices = @transform_2, window_bounds = array<i64: 1, 128>}, {transform_indices = @transform_3, window_bounds = array<i64: 1, 4, 8, 128>}]} {
    %c4_i32 = arith.constant 4 : i32
    %0 = arith.muli %arg1, %c4_i32 : i32
    %1 = tpu.assume_multiple %0, 4 : i32
    %c0 = arith.constant 0 : index
    %c0_0 = arith.constant 0 : index
    %2 = arith.index_cast %1 : i32 to index
    %c0_1 = arith.constant 0 : index
    %c0_2 = arith.constant 0 : index
    %3 = vector.load %arg2[%c0, %c0_0, %2, %c0_1, %c0_2] : memref<1x2x5x8x128xbf16, #tpu.memory_space<vmem>>, vector<1x1x5x8x128xbf16>
    %4 = vector.shape_cast %3 : vector<1x1x5x8x128xbf16> to vector<5x8x128xbf16>
    %5 = vector.shape_cast %4 : vector<5x8x128xbf16> to vector<40x128xbf16>
    %c0_3 = arith.constant 0 : index
    %c0_4 = arith.constant 0 : index
    %c0_5 = arith.constant 0 : index
    %6 = vector.load %arg3[%c0_3, %c0_4, %c0_5] : memref<2x128x256xbf16, #tpu.memory_space<vmem>>, vector<1x128x256xbf16>
    %7 = vector.shape_cast %6 : vector<1x128x256xbf16> to vector<128x256xbf16>
    %cst = arith.constant dense<0.000000e+00> : vector<40x256xf32>
    %8 = tpu.matmul %5, %7, %cst {dimension_numbers = #tpu.dot_dimension_numbers<[1], [0], [0], [1], [0, 0, 1, 1], [], []>} : vector<40x128xbf16>, vector<128x256xbf16>, vector<40x256xf32> -> vector<40x256xf32>
    %9 = vector.shape_cast %8 : vector<40x256xf32> to vector<5x8x256xf32>
    %10 = vector.extract_strided_slice %9 {offsets = [0, 0, 0], sizes = [4, 8, 128], strides = [1, 1, 1]} : vector<5x8x256xf32> to vector<4x8x128xf32>
    %11 = vector.extract_strided_slice %9 {offsets = [1, 0, 128], sizes = [4, 8, 128], strides = [1, 1, 1]} : vector<5x8x256xf32> to vector<4x8x128xf32>
    %12 = arith.addf %10, %11 : vector<4x8x128xf32>
    %c0_6 = arith.constant 0 : index
    %c1 = arith.constant 1 : index
    %13 = arith.index_cast %1 : i32 to index
    %c0_7 = arith.constant 0 : index
    %c0_8 = arith.constant 0 : index
    %14 = vector.load %arg2[%c0_6, %c1, %13, %c0_7, %c0_8] : memref<1x2x5x8x128xbf16, #tpu.memory_space<vmem>>, vector<1x1x5x8x128xbf16>
    %15 = vector.shape_cast %14 : vector<1x1x5x8x128xbf16> to vector<5x8x128xbf16>
    %16 = vector.shape_cast %15 : vector<5x8x128xbf16> to vector<40x128xbf16>
    %c1_9 = arith.constant 1 : index
    %c0_10 = arith.constant 0 : index
    %c0_11 = arith.constant 0 : index
    %17 = vector.load %arg3[%c1_9, %c0_10, %c0_11] : memref<2x128x256xbf16, #tpu.memory_space<vmem>>, vector<1x128x256xbf16>
    %18 = vector.shape_cast %17 : vector<1x128x256xbf16> to vector<128x256xbf16>
    %cst_12 = arith.constant dense<0.000000e+00> : vector<40x256xf32>
    %19 = tpu.matmul %16, %18, %cst_12 {dimension_numbers = #tpu.dot_dimension_numbers<[1], [0], [0], [1], [0, 0, 1, 1], [], []>} : vector<40x128xbf16>, vector<128x256xbf16>, vector<40x256xf32> -> vector<40x256xf32>
    %20 = vector.shape_cast %19 : vector<40x256xf32> to vector<5x8x256xf32>
    %21 = vector.extract_strided_slice %20 {offsets = [0, 0, 0], sizes = [4, 8, 128], strides = [1, 1, 1]} : vector<5x8x256xf32> to vector<4x8x128xf32>
    %22 = vector.extract_strided_slice %20 {offsets = [1, 0, 128], sizes = [4, 8, 128], strides = [1, 1, 1]} : vector<5x8x256xf32> to vector<4x8x128xf32>
    %23 = arith.addf %21, %22 : vector<4x8x128xf32>
    %24 = arith.addf %12, %23 : vector<4x8x128xf32>
    %c0_13 = arith.constant 0 : index
    %c0_14 = arith.constant 0 : index
    %25 = vector.load %arg4[%c0_13, %c0_14] : memref<1x128xf32, #tpu.memory_space<vmem>>, vector<1x128xf32>
    %26 = vector.shape_cast %25 : vector<1x128xf32> to vector<1x1x128xf32>
    %27 = vector.broadcast %26 : vector<1x1x128xf32> to vector<4x8x128xf32>
    %28 = arith.addf %24, %27 : vector<4x8x128xf32>
    %cst_15 = arith.constant 0.000000e+00 : f32
    %29 = vector.broadcast %cst_15 : f32 to vector<4x8x128xf32>
    %30 = arith.maximumf %28, %29 : vector<4x8x128xf32>
    %31 = vector.shape_cast %30 : vector<4x8x128xf32> to vector<1x4x8x128xf32>
    %32 = arith.truncf %31 : vector<1x4x8x128xf32> to vector<1x4x8x128xbf16>
    %c0_16 = arith.constant 0 : index
    %c0_17 = arith.constant 0 : index
    %c0_18 = arith.constant 0 : index
    %c0_19 = arith.constant 0 : index
    %33 = vector.load %arg5[%c0_16, %c0_17, %c0_18, %c0_19] : memref<1x4x8x128xbf16, #tpu.memory_space<vmem>>, vector<1x4x8x128xbf16>
    tpu.vector_store %arg5[%c0_16, %c0_17, %c0_18, %c0_19], %32 {strides = array<i32>} : memref<1x4x8x128xbf16, #tpu.memory_space<vmem>>, vector<1x4x8x128xbf16>,
    return
  }
  func.func @transform_0(%arg0: i32, %arg1: i32) -> (i32, i32, i32, i32, i32) {
    %c0_i32 = arith.constant 0 : i32
    %c0_i32_0 = arith.constant 0 : i32
    %c0_i32_1 = arith.constant 0 : i32
    %c0_i32_2 = arith.constant 0 : i32
    %c0_i32_3 = arith.constant 0 : i32
    return %arg0, %c0_i32, %c0_i32_0, %c0_i32_1, %c0_i32_2 : i32, i32, i32, i32, i32
  }
  func.func @transform_1(%arg0: i32, %arg1: i32) -> (i32, i32, i32) {
    %c0_i32 = arith.constant 0 : i32
    %c0_i32_0 = arith.constant 0 : i32
    %c0_i32_1 = arith.constant 0 : i32
    %c0_i32_2 = arith.constant 0 : i32
    return %c0_i32, %c0_i32_0, %c0_i32_1 : i32, i32, i32
  }
  func.func @transform_2(%arg0: i32, %arg1: i32) -> (i32, i32) {
    %c0_i32 = arith.constant 0 : i32
    %c0_i32_0 = arith.constant 0 : i32
    %c0_i32_1 = arith.constant 0 : i32
    return %c0_i32, %c0_i32_0 : i32, i32
  }
  func.func @transform_3(%arg0: i32, %arg1: i32) -> (i32, i32, i32, i32) {
    %c0_i32 = arith.constant 0 : i32
    %c0_i32_0 = arith.constant 0 : i32
    %c0_i32_1 = arith.constant 0 : i32
    return %arg0, %arg1, %c0_i32, %c0_i32_0 : i32, i32, i32, i32
  }
}

module attributes {stable_mosaic.version = 11 : i64} {
  func.func @_conv3x3s2_bn_relu_kernel(%arg0: i32, %arg1: i32, %arg2: memref<1x2x3x8x256xbf16, #tpu.memory_space<vmem>>, %arg3: memref<2x256x256xbf16, #tpu.memory_space<vmem>>, %arg4: memref<1x128xf32, #tpu.memory_space<vmem>>, %arg5: memref<1x2x8x128xbf16, #tpu.memory_space<vmem>>) attributes {dimension_semantics = [#tpu.dimension_semantics<parallel>, #tpu.dimension_semantics<parallel>], iteration_bounds = array<i64: 2, 1>, scalar_prefetch = 0 : i64, scratch_operands = 0 : i64, tpu.core_type = #tpu.core_type<tc>, window_params = [{transform_indices = @transform_0, window_bounds = array<i64: 1, 2, 3, 8, 256>}, {pipeline_mode = #tpu.pipeline_mode<synchronous>, transform_indices = @transform_1, window_bounds = array<i64: 2, 256, 256>}, {pipeline_mode = #tpu.pipeline_mode<synchronous>, transform_indices = @transform_2, window_bounds = array<i64: 1, 128>}, {transform_indices = @transform_3, window_bounds = array<i64: 1, 2, 8, 128>}]} {
    %c2_i32 = arith.constant 2 : i32
    %0 = arith.muli %arg1, %c2_i32 : i32
    %1 = tpu.assume_multiple %0, 2 : i32
    %c0 = arith.constant 0 : index
    %c0_0 = arith.constant 0 : index
    %2 = arith.index_cast %1 : i32 to index
    %c0_1 = arith.constant 0 : index
    %c0_2 = arith.constant 0 : index
    %3 = vector.load %arg2[%c0, %c0_0, %2, %c0_1, %c0_2] : memref<1x2x3x8x256xbf16, #tpu.memory_space<vmem>>, vector<1x1x3x8x256xbf16>
    %4 = vector.shape_cast %3 : vector<1x1x3x8x256xbf16> to vector<3x8x256xbf16>
    %5 = vector.shape_cast %4 : vector<3x8x256xbf16> to vector<24x256xbf16>
    %c0_3 = arith.constant 0 : index
    %c0_4 = arith.constant 0 : index
    %c0_5 = arith.constant 0 : index
    %6 = vector.load %arg3[%c0_3, %c0_4, %c0_5] : memref<2x256x256xbf16, #tpu.memory_space<vmem>>, vector<1x256x256xbf16>
    %7 = vector.shape_cast %6 : vector<1x256x256xbf16> to vector<256x256xbf16>
    %cst = arith.constant dense<0.000000e+00> : vector<24x256xf32>
    %8 = tpu.matmul %5, %7, %cst {dimension_numbers = #tpu.dot_dimension_numbers<[1], [0], [0], [1], [0, 0, 1, 1], [], []>} : vector<24x256xbf16>, vector<256x256xbf16>, vector<24x256xf32> -> vector<24x256xf32>
    %9 = vector.shape_cast %8 : vector<24x256xf32> to vector<3x8x256xf32>
    %10 = vector.extract_strided_slice %9 {offsets = [0, 0, 0], sizes = [2, 8, 128], strides = [1, 1, 1]} : vector<3x8x256xf32> to vector<2x8x128xf32>
    %11 = vector.extract_strided_slice %9 {offsets = [1, 0, 128], sizes = [2, 8, 128], strides = [1, 1, 1]} : vector<3x8x256xf32> to vector<2x8x128xf32>
    %12 = arith.addf %10, %11 : vector<2x8x128xf32>
    %c0_6 = arith.constant 0 : index
    %c1 = arith.constant 1 : index
    %13 = arith.index_cast %1 : i32 to index
    %c0_7 = arith.constant 0 : index
    %c0_8 = arith.constant 0 : index
    %14 = vector.load %arg2[%c0_6, %c1, %13, %c0_7, %c0_8] : memref<1x2x3x8x256xbf16, #tpu.memory_space<vmem>>, vector<1x1x3x8x256xbf16>
    %15 = vector.shape_cast %14 : vector<1x1x3x8x256xbf16> to vector<3x8x256xbf16>
    %16 = vector.shape_cast %15 : vector<3x8x256xbf16> to vector<24x256xbf16>
    %c1_9 = arith.constant 1 : index
    %c0_10 = arith.constant 0 : index
    %c0_11 = arith.constant 0 : index
    %17 = vector.load %arg3[%c1_9, %c0_10, %c0_11] : memref<2x256x256xbf16, #tpu.memory_space<vmem>>, vector<1x256x256xbf16>
    %18 = vector.shape_cast %17 : vector<1x256x256xbf16> to vector<256x256xbf16>
    %cst_12 = arith.constant dense<0.000000e+00> : vector<24x256xf32>
    %19 = tpu.matmul %16, %18, %cst_12 {dimension_numbers = #tpu.dot_dimension_numbers<[1], [0], [0], [1], [0, 0, 1, 1], [], []>} : vector<24x256xbf16>, vector<256x256xbf16>, vector<24x256xf32> -> vector<24x256xf32>
    %20 = vector.shape_cast %19 : vector<24x256xf32> to vector<3x8x256xf32>
    %21 = vector.extract_strided_slice %20 {offsets = [0, 0, 0], sizes = [2, 8, 128], strides = [1, 1, 1]} : vector<3x8x256xf32> to vector<2x8x128xf32>
    %22 = vector.extract_strided_slice %20 {offsets = [1, 0, 128], sizes = [2, 8, 128], strides = [1, 1, 1]} : vector<3x8x256xf32> to vector<2x8x128xf32>
    %23 = arith.addf %21, %22 : vector<2x8x128xf32>
    %24 = arith.addf %12, %23 : vector<2x8x128xf32>
    %c0_13 = arith.constant 0 : index
    %c0_14 = arith.constant 0 : index
    %25 = vector.load %arg4[%c0_13, %c0_14] : memref<1x128xf32, #tpu.memory_space<vmem>>, vector<1x128xf32>
    %26 = vector.shape_cast %25 : vector<1x128xf32> to vector<1x1x128xf32>
    %27 = vector.broadcast %26 : vector<1x1x128xf32> to vector<2x8x128xf32>
    %28 = arith.addf %24, %27 : vector<2x8x128xf32>
    %cst_15 = arith.constant 0.000000e+00 : f32
    %29 = vector.broadcast %cst_15 : f32 to vector<2x8x128xf32>
    %30 = arith.maximumf %28, %29 : vector<2x8x128xf32>
    %31 = vector.shape_cast %30 : vector<2x8x128xf32> to vector<1x2x8x128xf32>
    %32 = arith.truncf %31 : vector<1x2x8x128xf32> to vector<1x2x8x128xbf16>
    %c0_16 = arith.constant 0 : index
    %c0_17 = arith.constant 0 : index
    %c0_18 = arith.constant 0 : index
    %c0_19 = arith.constant 0 : index
    %33 = vector.load %arg5[%c0_16, %c0_17, %c0_18, %c0_19] : memref<1x2x8x128xbf16, #tpu.memory_space<vmem>>, vector<1x2x8x128xbf16>
    tpu.vector_store %arg5[%c0_16, %c0_17, %c0_18, %c0_19], %32 {strides = array<i32>} : memref<1x2x8x128xbf16, #tpu.memory_space<vmem>>, vector<1x2x8x128xbf16>,
    return
  }
  func.func @transform_0(%arg0: i32, %arg1: i32) -> (i32, i32, i32, i32, i32) {
    %c0_i32 = arith.constant 0 : i32
    %c0_i32_0 = arith.constant 0 : i32
    %c0_i32_1 = arith.constant 0 : i32
    %c0_i32_2 = arith.constant 0 : i32
    %c0_i32_3 = arith.constant 0 : i32
    return %arg0, %c0_i32, %c0_i32_0, %c0_i32_1, %c0_i32_2 : i32, i32, i32, i32, i32
  }
  func.func @transform_1(%arg0: i32, %arg1: i32) -> (i32, i32, i32) {
    %c0_i32 = arith.constant 0 : i32
    %c0_i32_0 = arith.constant 0 : i32
    %c0_i32_1 = arith.constant 0 : i32
    %c0_i32_2 = arith.constant 0 : i32
    return %c0_i32, %c0_i32_0, %c0_i32_1 : i32, i32, i32
  }
  func.func @transform_2(%arg0: i32, %arg1: i32) -> (i32, i32) {
    %c0_i32 = arith.constant 0 : i32
    %c0_i32_0 = arith.constant 0 : i32
    %c0_i32_1 = arith.constant 0 : i32
    return %c0_i32, %c0_i32_0 : i32, i32
  }
  func.func @transform_3(%arg0: i32, %arg1: i32) -> (i32, i32, i32, i32) {
    %c0_i32 = arith.constant 0 : i32
    %c0_i32_0 = arith.constant 0 : i32
    %c0_i32_1 = arith.constant 0 : i32
    return %arg0, %arg1, %c0_i32, %c0_i32_0 : i32, i32, i32, i32
  }
}

module attributes {stable_mosaic.version = 11 : i64} {
  func.func @_conv3x3s2_bn_relu_kernel(%arg0: i32, %arg1: i32, %arg2: memref<1x2x2x8x384xbf16, #tpu.memory_space<vmem>>, %arg3: memref<2x384x256xbf16, #tpu.memory_space<vmem>>, %arg4: memref<1x128xf32, #tpu.memory_space<vmem>>, %arg5: memref<1x1x8x128xbf16, #tpu.memory_space<vmem>>) attributes {dimension_semantics = [#tpu.dimension_semantics<parallel>, #tpu.dimension_semantics<parallel>], iteration_bounds = array<i64: 2, 1>, scalar_prefetch = 0 : i64, scratch_operands = 0 : i64, tpu.core_type = #tpu.core_type<tc>, window_params = [{transform_indices = @transform_0, window_bounds = array<i64: 1, 2, 2, 8, 384>}, {pipeline_mode = #tpu.pipeline_mode<synchronous>, transform_indices = @transform_1, window_bounds = array<i64: 2, 384, 256>}, {pipeline_mode = #tpu.pipeline_mode<synchronous>, transform_indices = @transform_2, window_bounds = array<i64: 1, 128>}, {transform_indices = @transform_3, window_bounds = array<i64: 1, 1, 8, 128>}]} {
    %c1_i32 = arith.constant 1 : i32
    %0 = arith.muli %arg1, %c1_i32 : i32
    %1 = tpu.assume_multiple %0, 1 : i32
    %c0 = arith.constant 0 : index
    %c0_0 = arith.constant 0 : index
    %2 = arith.index_cast %1 : i32 to index
    %c0_1 = arith.constant 0 : index
    %c0_2 = arith.constant 0 : index
    %3 = vector.load %arg2[%c0, %c0_0, %2, %c0_1, %c0_2] : memref<1x2x2x8x384xbf16, #tpu.memory_space<vmem>>, vector<1x1x2x8x384xbf16>
    %4 = vector.shape_cast %3 : vector<1x1x2x8x384xbf16> to vector<2x8x384xbf16>
    %5 = vector.shape_cast %4 : vector<2x8x384xbf16> to vector<16x384xbf16>
    %c0_3 = arith.constant 0 : index
    %c0_4 = arith.constant 0 : index
    %c0_5 = arith.constant 0 : index
    %6 = vector.load %arg3[%c0_3, %c0_4, %c0_5] : memref<2x384x256xbf16, #tpu.memory_space<vmem>>, vector<1x384x256xbf16>
    %7 = vector.shape_cast %6 : vector<1x384x256xbf16> to vector<384x256xbf16>
    %cst = arith.constant dense<0.000000e+00> : vector<16x256xf32>
    %8 = tpu.matmul %5, %7, %cst {dimension_numbers = #tpu.dot_dimension_numbers<[1], [0], [0], [1], [0, 0, 1, 1], [], []>} : vector<16x384xbf16>, vector<384x256xbf16>, vector<16x256xf32> -> vector<16x256xf32>
    %9 = vector.shape_cast %8 : vector<16x256xf32> to vector<2x8x256xf32>
    %10 = vector.extract_strided_slice %9 {offsets = [0, 0, 0], sizes = [1, 8, 128], strides = [1, 1, 1]} : vector<2x8x256xf32> to vector<1x8x128xf32>
    %11 = vector.extract_strided_slice %9 {offsets = [1, 0, 128], sizes = [1, 8, 128], strides = [1, 1, 1]} : vector<2x8x256xf32> to vector<1x8x128xf32>
    %12 = arith.addf %10, %11 : vector<1x8x128xf32>
    %c0_6 = arith.constant 0 : index
    %c1 = arith.constant 1 : index
    %13 = arith.index_cast %1 : i32 to index
    %c0_7 = arith.constant 0 : index
    %c0_8 = arith.constant 0 : index
    %14 = vector.load %arg2[%c0_6, %c1, %13, %c0_7, %c0_8] : memref<1x2x2x8x384xbf16, #tpu.memory_space<vmem>>, vector<1x1x2x8x384xbf16>
    %15 = vector.shape_cast %14 : vector<1x1x2x8x384xbf16> to vector<2x8x384xbf16>
    %16 = vector.shape_cast %15 : vector<2x8x384xbf16> to vector<16x384xbf16>
    %c1_9 = arith.constant 1 : index
    %c0_10 = arith.constant 0 : index
    %c0_11 = arith.constant 0 : index
    %17 = vector.load %arg3[%c1_9, %c0_10, %c0_11] : memref<2x384x256xbf16, #tpu.memory_space<vmem>>, vector<1x384x256xbf16>
    %18 = vector.shape_cast %17 : vector<1x384x256xbf16> to vector<384x256xbf16>
    %cst_12 = arith.constant dense<0.000000e+00> : vector<16x256xf32>
    %19 = tpu.matmul %16, %18, %cst_12 {dimension_numbers = #tpu.dot_dimension_numbers<[1], [0], [0], [1], [0, 0, 1, 1], [], []>} : vector<16x384xbf16>, vector<384x256xbf16>, vector<16x256xf32> -> vector<16x256xf32>
    %20 = vector.shape_cast %19 : vector<16x256xf32> to vector<2x8x256xf32>
    %21 = vector.extract_strided_slice %20 {offsets = [0, 0, 0], sizes = [1, 8, 128], strides = [1, 1, 1]} : vector<2x8x256xf32> to vector<1x8x128xf32>
    %22 = vector.extract_strided_slice %20 {offsets = [1, 0, 128], sizes = [1, 8, 128], strides = [1, 1, 1]} : vector<2x8x256xf32> to vector<1x8x128xf32>
    %23 = arith.addf %21, %22 : vector<1x8x128xf32>
    %24 = arith.addf %12, %23 : vector<1x8x128xf32>
    %c0_13 = arith.constant 0 : index
    %c0_14 = arith.constant 0 : index
    %25 = vector.load %arg4[%c0_13, %c0_14] : memref<1x128xf32, #tpu.memory_space<vmem>>, vector<1x128xf32>
    %26 = vector.shape_cast %25 : vector<1x128xf32> to vector<1x1x128xf32>
    %27 = vector.broadcast %26 : vector<1x1x128xf32> to vector<1x8x128xf32>
    %28 = arith.addf %24, %27 : vector<1x8x128xf32>
    %cst_15 = arith.constant 0.000000e+00 : f32
    %29 = vector.broadcast %cst_15 : f32 to vector<1x8x128xf32>
    %30 = arith.maximumf %28, %29 : vector<1x8x128xf32>
    %31 = vector.shape_cast %30 : vector<1x8x128xf32> to vector<1x1x8x128xf32>
    %32 = arith.truncf %31 : vector<1x1x8x128xf32> to vector<1x1x8x128xbf16>
    %c0_16 = arith.constant 0 : index
    %c0_17 = arith.constant 0 : index
    %c0_18 = arith.constant 0 : index
    %c0_19 = arith.constant 0 : index
    %33 = vector.load %arg5[%c0_16, %c0_17, %c0_18, %c0_19] : memref<1x1x8x128xbf16, #tpu.memory_space<vmem>>, vector<1x1x8x128xbf16>
    tpu.vector_store %arg5[%c0_16, %c0_17, %c0_18, %c0_19], %32 {strides = array<i32>} : memref<1x1x8x128xbf16, #tpu.memory_space<vmem>>, vector<1x1x8x128xbf16>,
    return
  }
  func.func @transform_0(%arg0: i32, %arg1: i32) -> (i32, i32, i32, i32, i32) {
    %c0_i32 = arith.constant 0 : i32
    %c0_i32_0 = arith.constant 0 : i32
    %c0_i32_1 = arith.constant 0 : i32
    %c0_i32_2 = arith.constant 0 : i32
    %c0_i32_3 = arith.constant 0 : i32
    return %arg0, %c0_i32, %c0_i32_0, %c0_i32_1, %c0_i32_2 : i32, i32, i32, i32, i32
  }
  func.func @transform_1(%arg0: i32, %arg1: i32) -> (i32, i32, i32) {
    %c0_i32 = arith.constant 0 : i32
    %c0_i32_0 = arith.constant 0 : i32
    %c0_i32_1 = arith.constant 0 : i32
    %c0_i32_2 = arith.constant 0 : i32
    return %c0_i32, %c0_i32_0, %c0_i32_1 : i32, i32, i32
  }
  func.func @transform_2(%arg0: i32, %arg1: i32) -> (i32, i32) {
    %c0_i32 = arith.constant 0 : i32
    %c0_i32_0 = arith.constant 0 : i32
    %c0_i32_1 = arith.constant 0 : i32
    return %c0_i32, %c0_i32_0 : i32, i32
  }
  func.func @transform_3(%arg0: i32, %arg1: i32) -> (i32, i32, i32, i32) {
    %c0_i32 = arith.constant 0 : i32
    %c0_i32_0 = arith.constant 0 : i32
    %c0_i32_1 = arith.constant 0 : i32
    return %arg0, %arg1, %c0_i32, %c0_i32_0 : i32, i32, i32, i32
  }
}

</mosaic_0001>

<llo_original>
// kernel: timm_backbone_forward.5
$region0: #{timm_backbone_forward.5}
  #allocation0 [shape = 'u32[]', space=smem, size = 0x4, offset = 0x4, fixed_abs, tag = 'smem constant byte address 0x4 - core index']
  #allocation1 [shape = 'u32[144,128]{1,0:T(1,128)}', space=vmem, size = 0x12000, scoped, tag = 'internal scratch']
  %s0 = inlined_call_operand.vmem [shape: bf16[2,2,17,16,12], index: 0, kind: input, shape index: {}]
  %s1 = inlined_call_operand.vmem [shape: bf16[2,12,256], index: 1, kind: input, shape index: {}]
  %s2 = inlined_call_operand.vmem [shape: f32[1,128], index: 2, kind: input, shape index: {}]
  %s3 = inlined_call_operand.vmem [shape: bf16[2,16,16,128], index: 3, kind: output, shape index: {}]
  %s4 = sld [smem:[#allocation0]]
  $region45: #{timm_backbone_forward.5} parent=0
    _
  %s6 = ssub.s32 1, %s4
  %s7 = scalar_select 0, %s6, %s4
  loop: start=0, step=1, limit=4
  $region2: #{timm_backbone_forward.5} parent=0 // loop_pre_header
    _
  $region3: #{timm_backbone_forward.5} parent=0 // loop_header
    %s9 = sphi 0, %s13
    %p10 = scmp.ge.s32.totalorder %s9, 4
    %s16 = sphi 0, %s28
    %s17 = sphi 0, %s24
    %s18 = sphi 0, %s16
    %s19 = sphi 0, %s17
    %s20 = sphi 0, %s18
    %s21 = sphi 0, %s19
    %s31 = sphi 0, %s33
    %s34 = sphi 0, %s31
    %s35 = sphi 0, %s34
    %s51 = sphi 0, %s35
    %s55 = sphi 0, %s55
    %s57 = sphi 0, %s55
    %s58 = sphi 0, %s57
    %s72 = sphi 0, %s58
    %s76 = sphi 0, %s76
    %s78 = sphi 0, %s76
    %s79 = sphi 0, %s78
    %s93 = sphi 0, %s79
    %s101 = sphi 0, %s103
    %s104 = sphi 0, %s101
    %s105 = sphi 0, %s104
    %s121 = sphi 0, %s105
  $region4: #{timm_backbone_forward.5} parent=0 // loop_header_branch
    %12 = sbr.rel (%p10) target = $region8
  $region5: #{timm_backbone_forward.5} parent=0 // loop_body
    %s14 = ssub.s32 %s9, 1
    %s15 = ssub.s32 %s9, 2
    %s22 = sadd.s32 1, %s17
    %p23 = scmp.ge.s32.totalorder %s22, 1
    %s24 = scalar_select %p23, 0, %s22
    %s25 = sadd.s32 1, %s16
    %s26 = scalar_select %p23, %s25, %s16
    %p27 = scmp.ge.s32.totalorder %s26, 2
    %s28 = scalar_select %p27, 0, %s26
    %s29 = ssub.s32 %s16, %s28
    %p30 = scmp.eq.s32.totalorder %s29, 0
    %s32 = sadd.s32 %s31, 1
    %s33 = scalar_select %p30, %s31, %s32
    %p36 = pneg %p30
    %p37 = scmp.eq.s32.totalorder %s9, 1
    %p38 = por %p36, %p37
    %p39 = scmp.ne.s32.totalorder %s31, %s34
    %p40 = scmp.eq.s32.totalorder %s9, 0
    %p41 = por %p39, %p40
    %p42 = scmp.ne.s32.totalorder %s31, %s34
    %p43 = scmp.eq.s32.totalorder %s14, 1
    %p44 = por %p42, %p43
    %p45 = scmp.ne.s32.totalorder %s34, %s35
    %p46 = scmp.eq.s32.totalorder %s14, 0
    %p47 = por %p45, %p46
    %p48 = scmp.ne.s32.totalorder %s34, %s35
    %p49 = scmp.eq.s32.totalorder %s15, 1
    %p50 = por %p48, %p49
    %p52 = scmp.ne.s32.totalorder %s35, %s51
    %p53 = scmp.eq.s32.totalorder %s15, 0
    %p54 = por %p52, %p53
    %s56 = sadd.s32 %s55, 1
    %p59 = scmp.eq.s32.totalorder %s9, 1
    %p60 = scmp.ne.s32.totalorder %s55, %s57
    %p61 = scmp.eq.s32.totalorder %s9, 0
    %p62 = por %p60, %p61
    %p63 = scmp.ne.s32.totalorder %s55, %s57
    %p64 = scmp.eq.s32.totalorder %s14, 1
    %p65 = por %p63, %p64
    %p66 = scmp.ne.s32.totalorder %s57, %s58
    %p67 = scmp.eq.s32.totalorder %s14, 0
    %p68 = por %p66, %p67
    %p69 = scmp.ne.s32.totalorder %s57, %s58
    %p70 = scmp.eq.s32.totalorder %s15, 1
    %p71 = por %p69, %p70
    %p73 = scmp.ne.s32.totalorder %s58, %s72
    %p74 = scmp.eq.s32.totalorder %s15, 0
    %p75 = por %p73, %p74
    %s77 = sadd.s32 %s76, 1
    %p80 = scmp.eq.s32.totalorder %s9, 1
    %p81 = scmp.ne.s32.totalorder %s76, %s78
    %p82 = scmp.eq.s32.totalorder %s9, 0
    %p83 = por %p81, %p82
    %p84 = scmp.ne.s32.totalorder %s76, %s78
    %p85 = scmp.eq.s32.totalorder %s14, 1
    %p86 = por %p84, %p85
    %p87 = scmp.ne.s32.totalorder %s78, %s79
    %p88 = scmp.eq.s32.totalorder %s14, 0
    %p89 = por %p87, %p88
    %p90 = scmp.ne.s32.totalorder %s78, %s79
    %p91 = scmp.eq.s32.totalorder %s15, 1
    %p92 = por %p90, %p91
    %p94 = scmp.ne.s32.totalorder %s79, %s93
    %p95 = scmp.eq.s32.totalorder %s15, 0
    %p96 = por %p94, %p95
    %s97 = ssub.s32 %s16, %s28
    %s98 = ssub.s32 %s17, %s24
    %s99 = sor.u32 %s97, %s98
    %p100 = scmp.eq.s32.totalorder %s99, 0
    %s102 = sadd.s32 %s101, 1
    %s103 = scalar_select %p100, %s101, %s102
    %p106 = pneg %p100
    %p107 = scmp.eq.s32.totalorder %s9, 1
    %p108 = por %p106, %p107
    %p109 = scmp.ne.s32.totalorder %s101, %s104
    %p110 = scmp.eq.s32.totalorder %s9, 0
    %p111 = por %p109, %p110
    %p112 = scmp.ne.s32.totalorder %s101, %s104
    %p113 = scmp.eq.s32.totalorder %s14, 1
    %p114 = por %p112, %p113
    %p115 = scmp.ne.s32.totalorder %s104, %s105
    %p116 = scmp.eq.s32.totalorder %s14, 0
    %p117 = por %p115, %p116
    %p118 = scmp.ne.s32.totalorder %s104, %s105
    %p119 = scmp.eq.s32.totalorder %s15, 1
    %p120 = por %p118, %p119
    %p122 = scmp.ne.s32.totalorder %s105, %s121
    %p123 = scmp.eq.s32.totalorder %s15, 0
    %p124 = por %p122, %p123
    %p125 = scmp.le.s32.totalorder 1, %s9
    %p126 = scmp.lt.s32.totalorder %s9, 3
    %p127 = pnand %p125, %p126
    %p128 = pneg %p127
    // Predicated region
    $region9: #{timm_backbone_forward.5} parent=5 // pred_check
      _
    $region10: #{timm_backbone_forward.5} parent=5 // pred_check_branch
      %130 = sbr.rel (%p127) target = $region12
    $region11: #{timm_backbone_forward.5} parent=5 // pred_region
      %s131 = ssub.s32 %s9, 1
      // Predicated region
      $region13: #{timm_backbone_forward.5} parent=11 // pred_check
        %p132 = pneg %p47
      $region14: #{timm_backbone_forward.5} parent=11 // pred_check_branch
        %134 = sbr.rel (%p132) target = $region16
      $region15: #{timm_backbone_forward.5} parent=11 // pred_region
        %p135 = scmp.lt.s32.totalorder %s18, 1
        %s136 = scalar_select %p135, %s18, 1
        %s137 = smul.addr %s136, 68
        %s138 = smul.addr %s137, 4
        %s139 = scalar_lea.vmem %s0, %s138
      $region16: #{timm_backbone_forward.5} parent=11 // pred_fallthru
        _
      // Predicated region
      $region17: #{timm_backbone_forward.5} parent=11 // pred_check
        %p140 = pneg %p68
      $region18: #{timm_backbone_forward.5} parent=11 // pred_check_branch
        %142 = sbr.rel (%p140) target = $region20
      $region19: #{timm_backbone_forward.5} parent=11 // pred_region
        _
      $region20: #{timm_backbone_forward.5} parent=11 // pred_fallthru
        _
      // Predicated region
      $region21: #{timm_backbone_forward.5} parent=11 // pred_check
        %p143 = pneg %p89
      $region22: #{timm_backbone_forward.5} parent=11 // pred_check_branch
        %145 = sbr.rel (%p143) target = $region24
      $region23: #{timm_backbone_forward.5} parent=11 // pred_region
        _
      $region24: #{timm_backbone_forward.5} parent=11 // pred_fallthru
        _
    $region12: #{timm_backbone_forward.5} parent=5 // pred_fallthru
      _
    %p146 = scmp.lt.s32.totalorder %s9, 2
    // Predicated region
    $region25: #{timm_backbone_forward.5} parent=5 // pred_check
      %p147 = pneg %p146
    $region26: #{timm_backbone_forward.5} parent=5 // pred_check_branch
      %149 = sbr.rel (%p147) target = $region28
    $region27: #{timm_backbone_forward.5} parent=5 // pred_region
      _
    $region28: #{timm_backbone_forward.5} parent=5 // pred_fallthru
      _
    %p150 = scmp.le.s32.totalorder 1, %s9
    %p151 = scmp.lt.s32.totalorder %s9, 3
    %p152 = pnand %p150, %p151
    %p153 = pneg %p152
    // Predicated region
    $region29: #{timm_backbone_forward.5} parent=5 // pred_check
      _
    $region30: #{timm_backbone_forward.5} parent=5 // pred_check_branch
      %155 = sbr.rel (%p152) target = $region32
    $region31: #{timm_backbone_forward.5} parent=5 // pred_region
      %s156 = ssub.s32 %s9, 1
      %p157 = scmp.lt.s32.totalorder %s18, 1
      %s158 = scalar_select %p157, %s18, 1
      %s159 = smul.addr %s158, 68
      %s160 = smul.addr %s159, 4
      %s161 = scalar_lea.vmem %s0, %s160
      %p162 = pneg %p47
      %p163 = pneg %p44
      %p164 = pneg %p68
      %p165 = pneg %p65
      %p166 = pneg %p89
      %p167 = pneg %p86
      %p168 = pneg %p117
      %p169 = pneg %p114
      %s170 = smul.u32 16, %s19
      %p171 = scmp.lt.s32.totalorder %s18, 1
      %s172 = scalar_select %p171, %s18, 1
      %p173 = scmp.lt.s32.totalorder %s170, 15
      %s174 = scalar_select %p173, %s170, 15
      %s175 = smul.addr %s174, 2
      %s176 = smul.addr %s172, 32
      %s177 = sadd.s32 %s175, %s176
      %s178 = smul.addr %s177, 4
      %s179 = scalar_lea.vmem %s3, %s178
      %p180 = scmp.lt.s32.totalorder %s18, 1
      %s181 = scalar_select %p180, %s18, 1
      %s182 = smul.addr %s181, 68
      %s183 = smul.addr %s182, 4
      %s184 = scalar_lea.vmem %s0, %s183
      %s185 = smul.u32 16, %s19
      %p186 = scmp.lt.s32.totalorder %s18, 1
      %s187 = scalar_select %p186, %s18, 1
      %p188 = scmp.lt.s32.totalorder %s185, 15
      %s189 = scalar_select %p188, %s185, 15
      %s190 = smul.addr %s189, 2
      %s191 = smul.addr %s187, 32
      %s192 = sadd.s32 %s190, %s191
      %s193 = smul.addr %s192, 4
      %s194 = scalar_lea.vmem %s3, %s193
      %s195 = smul.u32 16, %s19
      %s197 = smul.u32 %s19, 16
      %s198 = smul.u32 %s197, 2
      %s199 = smul.addr %s198, 4
      %s200 = scalar_lea.vmem %s184, %s199
      %v201 = vld [vmem:[%s200] sm:$0xf]
      %v202 = vld [vmem:[%s200 + $0x4] sm:$0xf]
      %v203 = vld [vmem:[%s200 + $0x8] sm:$0xf]
      %v204 = vld [vmem:[%s200 + $0xc] sm:$0xf]
      %v205 = vld [vmem:[%s200 + $0x10] sm:$0xf]
      %v206 = vld [vmem:[%s200 + $0x14] sm:$0xf]
      %v207 = vld [vmem:[%s200 + $0x18] sm:$0xf]
      %v208 = vld [vmem:[%s200 + $0x1c] sm:$0xf]
      %v209 = vld [vmem:[%s200 + $0x20] sm:$0xf]
      %v210 = vld [vmem:[%s200 + $0x24] sm:$0xf]
      %v211 = vld [vmem:[%s200 + $0x28] sm:$0xf]
      %v212 = vld [vmem:[%s200 + $0x2c] sm:$0xf]
      %v213 = vld [vmem:[%s200 + $0x30] sm:$0xf]
      %v214 = vld [vmem:[%s200 + $0x34] sm:$0xf]
      %v215 = vld [vmem:[%s200 + $0x38] sm:$0xf]
      %v216 = vld [vmem:[%s200 + $0x3c] sm:$0xf]
      %v217 = vld [vmem:[%s200 + $0x40] sm:$0xf]
      %v218 = vld [vmem:[%s200 + $0x44] sm:$0xf]
      %v219 = vld [vmem:[%s200 + $0x48] sm:$0xf]
      %v220 = vld [vmem:[%s200 + $0x4c] sm:$0xf]
      %v221 = vld [vmem:[%s200 + $0x50] sm:$0xf]
      %v222 = vld [vmem:[%s200 + $0x54] sm:$0xf]
      %v223 = vld [vmem:[%s200 + $0x58] sm:$0xf]
      %v224 = vld [vmem:[%s200 + $0x5c] sm:$0xf]
      %v225 = vld [vmem:[%s200 + $0x60] sm:$0xf]
      %v226 = vld [vmem:[%s200 + $0x64] sm:$0xf]
      %v227 = vld [vmem:[%s200 + $0x68] sm:$0xf]
      %v228 = vld [vmem:[%s200 + $0x6c] sm:$0xf]
      %v229 = vld [vmem:[%s200 + $0x70] sm:$0xf]
      %v230 = vld [vmem:[%s200 + $0x74] sm:$0xf]
      %v231 = vld [vmem:[%s200 + $0x78] sm:$0xf]
      %v232 = vld [vmem:[%s200 + $0x7c] sm:$0xf]
      %v233 = vld [vmem:[%s200 + $0x80] sm:$0xf]
      %v234 = vld [vmem:[%s200 + $0x84] sm:$0xf]
      %v235 = vld [vmem:[%s1] sm:$0xff]
      %v236 = vld [vmem:[%s1 + $0x8] sm:$0x33]
      %v271 = vunpack.c.l.b16 %v201
      %v272 = vunpack.c.l.b16 %v202
      %v273 = vunpack.c.l.b16 %v203
      %v274 = vunpack.c.l.b16 %v204
      %v275 = vunpack.c.l.b16 %v205
      %v276 = vunpack.c.l.b16 %v206
      %v277 = vunpack.c.l.b16 %v207
      %v278 = vunpack.c.l.b16 %v208
      %v279 = vunpack.c.l.b16 %v209
      %v280 = vunpack.c.l.b16 %v210
      %v281 = vunpack.c.l.b16 %v211
      %v282 = vunpack.c.l.b16 %v212
      %v283 = vunpack.c.l.b16 %v213
      %v284 = vunpack.c.l.b16 %v214
      %v285 = vunpack.c.l.b16 %v215
      %v286 = vunpack.c.l.b16 %v216
      %v287 = vunpack.c.l.b16 %v217
      %v288 = vunpack.c.l.b16 %v218
      %v289 = vunpack.c.l.b16 %v219
      %v290 = vunpack.c.l.b16 %v220
      %v291 = vunpack.c.l.b16 %v221
      %v292 = vunpack.c.l.b16 %v222
      %v293 = vunpack.c.l.b16 %v223
      %v294 = vunpack.c.l.b16 %v224
      %v295 = vunpack.c.l.b16 %v225
      %v296 = vunpack.c.l.b16 %v226
      %v297 = vunpack.c.l.b16 %v227
      %v298 = vunpack.c.l.b16 %v228
      %v299 = vunpack.c.l.b16 %v229
      %v300 = vunpack.c.l.b16 %v230
      %v301 = vunpack.c.l.b16 %v231
      %v302 = vunpack.c.l.b16 %v232
      %v303 = vunpack.c.l.b16 %v233
      %v304 = vunpack.c.l.b16 %v234
      %v305 = vpack.c.b16 %v272, %v271
      %v306 = vpack.c.b16 %v274, %v273
      %v307 = vpack.c.b16 %v276, %v275
      %v308 = vpack.c.b16 %v278, %v277
      %v309 = vpack.c.b16 %v280, %v279
      %v310 = vpack.c.b16 %v282, %v281
      %v311 = vpack.c.b16 %v284, %v283
      %v312 = vpack.c.b16 %v286, %v285
      %v313 = vpack.c.b16 %v288, %v287
      %v314 = vpack.c.b16 %v290, %v289
      %v315 = vpack.c.b16 %v292, %v291
      %v316 = vpack.c.b16 %v294, %v293
      %v317 = vpack.c.b16 %v296, %v295
      %v318 = vpack.c.b16 %v298, %v297
      %v319 = vpack.c.b16 %v300, %v299
      %v320 = vpack.c.b16 %v302, %v301
      %v321 = vpack.c.b16 %v304, %v303
      %v324 = vunpack.c.l.b16 %v235
      %v325 = vunpack.c.h.b16 %v235
      %v326 = vunpack.c.l.b16 %v236
      %v327 = vunpack.c.h.b16 %v236
      %v328 = vpack.c.b16 %v326, %v324
      %v329 = vpack.c.b16 %v327, %v325
      %vm330 = vcmask 97280
      %v332 = vsel %vm330, %v305, 0
      %v335 = vsel %vm330, %v306, 0
      %v338 = vsel %vm330, %v307, 0
      %v341 = vsel %vm330, %v308, 0
      %v344 = vsel %vm330, %v309, 0
      %v347 = vsel %vm330, %v310, 0
      %v350 = vsel %vm330, %v311, 0
      %v353 = vsel %vm330, %v312, 0
      %v356 = vsel %vm330, %v313, 0
      %v359 = vsel %vm330, %v314, 0
      %v362 = vsel %vm330, %v315, 0
      %v365 = vsel %vm330, %v316, 0
      %v368 = vsel %vm330, %v317, 0
      %v371 = vsel %vm330, %v318, 0
      %v374 = vsel %vm330, %v319, 0
      %v377 = vsel %vm330, %v320, 0
      %v380 = vsel %vm330, %v321, 0
      %vm382 = vcmask 1045504
      %v384 = vsel %vm382, %v328, 0
      %v387 = vsel %vm382, %v329, 0
      %389 = vmatprep.subr.bf16.mxu0 %v387
      %390 = vmatpush1.bf16.msra.mxu0 %v384
      %391 = vmatprep.subr.bf16.mxu0 0
      %392 = vmatpush1.bf16.msra.mxu0 0
      %393 = vmatprep.subr.bf16.mxu0 0
      %394 = vmatpush1.bf16.msra.mxu0 0
      %395 = vmatprep.subr.bf16.mxu0 0
      %396 = vmatpush1.bf16.msra.mxu0 0
      %397 = vmatprep.subr.bf16.mxu0 0
      %398 = vmatpush1.bf16.msra.mxu0 0
      %399 = vmatprep.subr.bf16.mxu0 0
      %400 = vmatpush1.bf16.msra.mxu0 0
      %401 = vmatprep.subr.bf16.mxu0 0
      %402 = vmatpush1.bf16.msra.mxu0 0
      %403 = vmatprep.subr.bf16.mxu0 0
      %404 = vmatpush1.bf16.msra.mxu0 0
      %405 = vmatprep.subr.bf16.mxu0 0
      %406 = vmatpush1.bf16.msra.mxu0 0
      %407 = vmatprep.subr.bf16.mxu0 0
      %408 = vmatpush1.bf16.msra.mxu0 0
      %409 = vmatprep.subr.bf16.mxu0 0
      %410 = vmatpush1.bf16.msra.mxu0 0
      %411 = vmatprep.subr.bf16.mxu0 0
      %412 = vmatpush1.bf16.msra.mxu0 0
      %413 = vmatprep.subr.bf16.mxu0 0
      %414 = vmatpush1.bf16.msra.mxu0 0
      %415 = vmatprep.subr.bf16.mxu0 0
      %416 = vmatpush1.bf16.msra.mxu0 0
      %417 = vmatprep.subr.bf16.mxu0 0
      %418 = vmatpush1.bf16.msra.mxu0 0
      %419 = vmatprep.subr.bf16.mxu0 0
      %420 = vmatpush1.bf16.msra.mxu0 0
      %421 = vmatprep.mubr.bf16.mxu0 0
      %422 = vmatmul.mubr.bf16.gmra.mrb[0].mxu0 %v332
      %v423 = vpop.f32.mrb[0].mxu0
      %v424 = vadd.f32 0.0, %v423
      %v425 = vpop.f32.mrb[0].mxu0
      %v426 = vpop.f32.mrb[0].mxu0
      %v427 = vadd.f32 0.0, %v426
      %v428 = vpop.f32.mrb[0].mxu0
      %429 = vmatprep.mubr.bf16.mxu0 0
      %430 = vmatmul.mubr.bf16.gmra.mrb[0].mxu0 %v335
      %v431 = vpop.f32.mrb[0].mxu0
      %v432 = vadd.f32 0.0, %v431
      %v433 = vpop.f32.mrb[0].mxu0
      %v434 = vadd.f32 0.0, %v433
      %v435 = vpop.f32.mrb[0].mxu0
      %v436 = vadd.f32 0.0, %v435
      %v437 = vpop.f32.mrb[0].mxu0
      %v438 = vadd.f32 0.0, %v437
      %439 = vmatprep.mubr.bf16.mxu0 0
      %440 = vmatmul.mubr.bf16.gmra.mrb[0].mxu0 %v338
      %v441 = vpop.f32.mrb[0].mxu0
      %v442 = vadd.f32 0.0, %v441
      %v443 = vpop.f32.mrb[0].mxu0
      %v444 = vadd.f32 0.0, %v443
      %v445 = vpop.f32.mrb[0].mxu0
      %v446 = vadd.f32 0.0, %v445
      %v447 = vpop.f32.mrb[0].mxu0
      %v448 = vadd.f32 0.0, %v447
      %449 = vmatprep.mubr.bf16.mxu0 0
      %450 = vmatmul.mubr.bf16.gmra.mrb[0].mxu0 %v341
      %v451 = vpop.f32.mrb[0].mxu0
      %v452 = vadd.f32 0.0, %v451
      %v453 = vpop.f32.mrb[0].mxu0
      %v454 = vadd.f32 0.0, %v453
      %v455 = vpop.f32.mrb[0].mxu0
      %v456 = vadd.f32 0.0, %v455
      %v457 = vpop.f32.mrb[0].mxu0
      %v458 = vadd.f32 0.0, %v457
      %459 = vmatprep.mubr.bf16.mxu0 0
      %460 = vmatmul.mubr.bf16.gmra.mrb[0].mxu0 %v344
      %v461 = vpop.f32.mrb[0].mxu0
      %v462 = vadd.f32 0.0, %v461
      %v463 = vpop.f32.mrb[0].mxu0
      %v464 = vadd.f32 0.0, %v463
      %v465 = vpop.f32.mrb[0].mxu0
      %v466 = vadd.f32 0.0, %v465
      %v467 = vpop.f32.mrb[0].mxu0
      %v468 = vadd.f32 0.0, %v467
      %469 = vmatprep.mubr.bf16.mxu0 0
      %470 = vmatmul.mubr.bf16.gmra.mrb[0].mxu0 %v347
      %v471 = vpop.f32.mrb[0].mxu0
      %v472 = vadd.f32 0.0, %v471
      %v473 = vpop.f32.mrb[0].mxu0
      %v474 = vadd.f32 0.0, %v473
      %v475 = vpop.f32.mrb[0].mxu0
      %v476 = vadd.f32 0.0, %v475
      %v477 = vpop.f32.mrb[0].mxu0
      %v478 = vadd.f32 0.0, %v477
      %479 = vmatprep.mubr.bf16.mxu0 0
      %480 = vmatmul.mubr.bf16.gmra.mrb[0].mxu0 %v350
      %v481 = vpop.f32.mrb[0].mxu0
      %v482 = vadd.f32 0.0, %v481
      %v483 = vpop.f32.mrb[0].mxu0
      %v484 = vadd.f32 0.0, %v483
      %v485 = vpop.f32.mrb[0].mxu0
      %v486 = vadd.f32 0.0, %v485
      %v487 = vpop.f32.mrb[0].mxu0
      %v488 = vadd.f32 0.0, %v487
      %489 = vmatprep.mubr.bf16.mxu0 0
      %490 = vmatmul.mubr.bf16.gmra.mrb[0].mxu0 %v353
      %v491 = vpop.f32.mrb[0].mxu0
      %v492 = vadd.f32 0.0, %v491
      %v493 = vpop.f32.mrb[0].mxu0
      %v494 = vadd.f32 0.0, %v493
      %v495 = vpop.f32.mrb[0].mxu0
      %v496 = vadd.f32 0.0, %v495
      %v497 = vpop.f32.mrb[0].mxu0
      %v498 = vadd.f32 0.0, %v497
      %499 = vmatprep.mubr.bf16.mxu0 0
      %500 = vmatmul.mubr.bf16.gmra.mrb[0].mxu0 %v356
      %v501 = vpop.f32.mrb[0].mxu0
      %v502 = vadd.f32 0.0, %v501
      %v503 = vpop.f32.mrb[0].mxu0
      %v504 = vadd.f32 0.0, %v503
      %v505 = vpop.f32.mrb[0].mxu0
      %v506 = vadd.f32 0.0, %v505
      %v507 = vpop.f32.mrb[0].mxu0
      %v508 = vadd.f32 0.0, %v507
      %509 = vmatprep.mubr.bf16.mxu0 0
      %510 = vmatmul.mubr.bf16.gmra.mrb[0].mxu0 %v359
      %v511 = vpop.f32.mrb[0].mxu0
      %v512 = vadd.f32 0.0, %v511
      %v513 = vpop.f32.mrb[0].mxu0
      %v514 = vadd.f32 0.0, %v513
      %v515 = vpop.f32.mrb[0].mxu0
      %v516 = vadd.f32 0.0, %v515
      %v517 = vpop.f32.mrb[0].mxu0
      %v518 = vadd.f32 0.0, %v517
      %519 = vmatprep.mubr.bf16.mxu0 0
      %520 = vmatmul.mubr.bf16.gmra.mrb[0].mxu0 %v362
      %v521 = vpop.f32.mrb[0].mxu0
      %v522 = vadd.f32 0.0, %v521
      %v523 = vpop.f32.mrb[0].mxu0
      %v524 = vadd.f32 0.0, %v523
      %v525 = vpop.f32.mrb[0].mxu0
      %v526 = vadd.f32 0.0, %v525
      %v527 = vpop.f32.mrb[0].mxu0
      %v528 = vadd.f32 0.0, %v527
      %529 = vmatprep.mubr.bf16.mxu0 0
      %530 = vmatmul.mubr.bf16.gmra.mrb[0].mxu0 %v365
      %v531 = vpop.f32.mrb[0].mxu0
      %v532 = vadd.f32 0.0, %v531
      %v533 = vpop.f32.mrb[0].mxu0
      %v534 = vadd.f32 0.0, %v533
      %v535 = vpop.f32.mrb[0].mxu0
      %v536 = vadd.f32 0.0, %v535
      %v537 = vpop.f32.mrb[0].mxu0
      %v538 = vadd.f32 0.0, %v537
      %539 = vmatprep.mubr.bf16.mxu0 0
      %540 = vmatmul.mubr.bf16.gmra.mrb[0].mxu0 %v368
      %v541 = vpop.f32.mrb[0].mxu0
      %v542 = vadd.f32 0.0, %v541
      %v543 = vpop.f32.mrb[0].mxu0
      %v544 = vadd.f32 0.0, %v543
      %v545 = vpop.f32.mrb[0].mxu0
      %v546 = vadd.f32 0.0, %v545
      %v547 = vpop.f32.mrb[0].mxu0
      %v548 = vadd.f32 0.0, %v547
      %549 = vmatprep.mubr.bf16.mxu0 0
      %550 = vmatmul.mubr.bf16.gmra.mrb[0].mxu0 %v371
      %v551 = vpop.f32.mrb[0].mxu0
      %v552 = vadd.f32 0.0, %v551
      %v553 = vpop.f32.mrb[0].mxu0
      %v554 = vadd.f32 0.0, %v553
      %v555 = vpop.f32.mrb[0].mxu0
      %v556 = vadd.f32 0.0, %v555
      %v557 = vpop.f32.mrb[0].mxu0
      %v558 = vadd.f32 0.0, %v557
      %559 = vmatprep.mubr.bf16.mxu0 0
      %560 = vmatmul.mubr.bf16.gmra.mrb[0].mxu0 %v374
      %v561 = vpop.f32.mrb[0].mxu0
      %v562 = vadd.f32 0.0, %v561
      %v563 = vpop.f32.mrb[0].mxu0
      %v564 = vadd.f32 0.0, %v563
      %v565 = vpop.f32.mrb[0].mxu0
      %v566 = vadd.f32 0.0, %v565
      %v567 = vpop.f32.mrb[0].mxu0
      %v568 = vadd.f32 0.0, %v567
      %569 = vmatprep.mubr.bf16.mxu0 0
      %570 = vmatmul.mubr.bf16.gmra.mrb[0].mxu0 %v377
      %v571 = vpop.f32.mrb[0].mxu0
      %v572 = vadd.f32 0.0, %v571
      %v573 = vpop.f32.mrb[0].mxu0
      %v574 = vadd.f32 0.0, %v573
      %v575 = vpop.f32.mrb[0].mxu0
      %v576 = vadd.f32 0.0, %v575
      %v577 = vpop.f32.mrb[0].mxu0
      %v578 = vadd.f32 0.0, %v577
      %579 = vmatprep.mubr.bf16.mxu0 0
      %580 = vmatmul.mubr.bf16.gmra.mrb[0].mxu0 %v380
      %v581 = vpop.f32.mrb[0].mxu0
      %v582 = vpop.f32.mrb[0].mxu0
      %v583 = vadd.f32 0.0, %v582
      %v584 = vpop.f32.mrb[0].mxu0
      %v585 = vpop.f32.mrb[0].mxu0
      %v586 = vadd.f32 0.0, %v585
      %587 = vdwg.mxu0
      %v588 = vadd.f32 %v424, %v434
      %v589 = vadd.f32 %v427, %v438
      %v590 = vadd.f32 %v432, %v444
      %v591 = vadd.f32 %v436, %v448
      %v592 = vadd.f32 %v442, %v454
      %v593 = vadd.f32 %v446, %v458
      %v594 = vadd.f32 %v452, %v464
      %v595 = vadd.f32 %v456, %v468
      %v596 = vadd.f32 %v462, %v474
      %v597 = vadd.f32 %v466, %v478
      %v598 = vadd.f32 %v472, %v484
      %v599 = vadd.f32 %v476, %v488
      %v600 = vadd.f32 %v482, %v494
      %v601 = vadd.f32 %v486, %v498
      %v602 = vadd.f32 %v492, %v504
      %v603 = vadd.f32 %v496, %v508
      %v604 = vadd.f32 %v502, %v514
      %v605 = vadd.f32 %v506, %v518
      %v606 = vadd.f32 %v512, %v524
      %v607 = vadd.f32 %v516, %v528
      %v608 = vadd.f32 %v522, %v534
      %v609 = vadd.f32 %v526, %v538
      %v610 = vadd.f32 %v532, %v544
      %v611 = vadd.f32 %v536, %v548
      %v612 = vadd.f32 %v542, %v554
      %v613 = vadd.f32 %v546, %v558
      %v614 = vadd.f32 %v552, %v564
      %v615 = vadd.f32 %v556, %v568
      %v616 = vadd.f32 %v562, %v574
      %v617 = vadd.f32 %v566, %v578
      %v618 = vadd.f32 %v572, %v583
      %v619 = vadd.f32 %v576, %v586
      %s620 = sadd.s32 %s198, 34
      %s621 = smul.addr %s620, 4
      %s622 = scalar_lea.vmem %s184, %s621
      %v623 = vld [vmem:[%s622] sm:$0xf]
      %v624 = vld [vmem:[%s622 + $0x4] sm:$0xf]
      %v625 = vld [vmem:[%s622 + $0x8] sm:$0xf]
      %v626 = vld [vmem:[%s622 + $0xc] sm:$0xf]
      %v627 = vld [vmem:[%s622 + $0x10] sm:$0xf]
      %v628 = vld [vmem:[%s622 + $0x14] sm:$0xf]
      %v629 = vld [vmem:[%s622 + $0x18] sm:$0xf]
      %v630 = vld [vmem:[%s622 + $0x1c] sm:$0xf]
      %v631 = vld [vmem:[%s622 + $0x20] sm:$0xf]
      %v632 = vld [vmem:[%s622 + $0x24] sm:$0xf]
      %v633 = vld [vmem:[%s622 + $0x28] sm:$0xf]
      %v634 = vld [vmem:[%s622 + $0x2c] sm:$0xf]
      %v635 = vld [vmem:[%s622 + $0x30] sm:$0xf]
      %v636 = vld [vmem:[%s622 + $0x34] sm:$0xf]
      %v637 = vld [vmem:[%s622 + $0x38] sm:$0xf]
      %v638 = vld [vmem:[%s622 + $0x3c] sm:$0xf]
      %v639 = vld [vmem:[%s622 + $0x40] sm:$0xf]
      %v640 = vld [vmem:[%s622 + $0x44] sm:$0xf]
      %v641 = vld [vmem:[%s622 + $0x48] sm:$0xf]
      %v642 = vld [vmem:[%s622 + $0x4c] sm:$0xf]
      %v643 = vld [vmem:[%s622 + $0x50] sm:$0xf]
      %v644 = vld [vmem:[%s622 + $0x54] sm:$0xf]
      %v645 = vld [vmem:[%s622 + $0x58] sm:$0xf]
      %v646 = vld [vmem:[%s622 + $0x5c] sm:$0xf]
      %v647 = vld [vmem:[%s622 + $0x60] sm:$0xf]
      %v648 = vld [vmem:[%s622 + $0x64] sm:$0xf]
      %v649 = vld [vmem:[%s622 + $0x68] sm:$0xf]
      %v650 = vld [vmem:[%s622 + $0x6c] sm:$0xf]
      %v651 = vld [vmem:[%s622 + $0x70] sm:$0xf]
      %v652 = vld [vmem:[%s622 + $0x74] sm:$0xf]
      %v653 = vld [vmem:[%s622 + $0x78] sm:$0xf]
      %v654 = vld [vmem:[%s622 + $0x7c] sm:$0xf]
      %v655 = vld [vmem:[%s622 + $0x80] sm:$0xf]
      %v656 = vld [vmem:[%s622 + $0x84] sm:$0xf]
      %s657 = scalar_lea.vmem %s1, 16
      %v658 = vld [vmem:[%s657] sm:$0xff]
      %v659 = vld [vmem:[%s657 + $0x8] sm:$0x33]
      %v694 = vunpack.c.l.b16 %v623
      %v695 = vunpack.c.l.b16 %v624
      %v696 = vunpack.c.l.b16 %v625
      %v697 = vunpack.c.l.b16 %v626
      %v698 = vunpack.c.l.b16 %v627
      %v699 = vunpack.c.l.b16 %v628
      %v700 = vunpack.c.l.b16 %v629
      %v701 = vunpack.c.l.b16 %v630
      %v702 = vunpack.c.l.b16 %v631
      %v703 = vunpack.c.l.b16 %v632
      %v704 = vunpack.c.l.b16 %v633
      %v705 = vunpack.c.l.b16 %v634
      %v706 = vunpack.c.l.b16 %v635
      %v707 = vunpack.c.l.b16 %v636
      %v708 = vunpack.c.l.b16 %v637
      %v709 = vunpack.c.l.b16 %v638
      %v710 = vunpack.c.l.b16 %v639
      %v711 = vunpack.c.l.b16 %v640
      %v712 = vunpack.c.l.b16 %v641
      %v713 = vunpack.c.l.b16 %v642
      %v714 = vunpack.c.l.b16 %v643
      %v715 = vunpack.c.l.b16 %v644
      %v716 = vunpack.c.l.b16 %v645
      %v717 = vunpack.c.l.b16 %v646
      %v718 = vunpack.c.l.b16 %v647
      %v719 = vunpack.c.l.b16 %v648
      %v720 = vunpack.c.l.b16 %v649
      %v721 = vunpack.c.l.b16 %v650
      %v722 = vunpack.c.l.b16 %v651
      %v723 = vunpack.c.l.b16 %v652
      %v724 = vunpack.c.l.b16 %v653
      %v725 = vunpack.c.l.b16 %v654
      %v726 = vunpack.c.l.b16 %v655
      %v727 = vunpack.c.l.b16 %v656
      %v728 = vpack.c.b16 %v695, %v694
      %v729 = vpack.c.b16 %v697, %v696
      %v730 = vpack.c.b16 %v699, %v698
      %v731 = vpack.c.b16 %v701, %v700
      %v732 = vpack.c.b16 %v703, %v702
      %v733 = vpack.c.b16 %v705, %v704
      %v734 = vpack.c.b16 %v707, %v706
      %v735 = vpack.c.b16 %v709, %v708
      %v736 = vpack.c.b16 %v711, %v710
      %v737 = vpack.c.b16 %v713, %v712
      %v738 = vpack.c.b16 %v715, %v714
      %v739 = vpack.c.b16 %v717, %v716
      %v740 = vpack.c.b16 %v719, %v718
      %v741 = vpack.c.b16 %v721, %v720
      %v742 = vpack.c.b16 %v723, %v722
      %v743 = vpack.c.b16 %v725, %v724
      %v744 = vpack.c.b16 %v727, %v726
      %v747 = vunpack.c.l.b16 %v658
      %v748 = vunpack.c.h.b16 %v658
      %v749 = vunpack.c.l.b16 %v659
      %v750 = vunpack.c.h.b16 %v659
      %v751 = vpack.c.b16 %v749, %v747
      %v752 = vpack.c.b16 %v750, %v748
      %v754 = vsel %vm330, %v728, 0
      %v757 = vsel %vm330, %v729, 0
      %v760 = vsel %vm330, %v730, 0
      %v763 = vsel %vm330, %v731, 0
      %v766 = vsel %vm330, %v732, 0
      %v769 = vsel %vm330, %v733, 0
      %v772 = vsel %vm330, %v734, 0
      %v775 = vsel %vm330, %v735, 0
      %v778 = vsel %vm330, %v736, 0
      %v781 = vsel %vm330, %v737, 0
      %v784 = vsel %vm330, %v738, 0
      %v787 = vsel %vm330, %v739, 0
      %v790 = vsel %vm330, %v740, 0
      %v793 = vsel %vm330, %v741, 0
      %v796 = vsel %vm330, %v742, 0
      %v799 = vsel %vm330, %v743, 0
      %v802 = vsel %vm330, %v744, 0
      %v805 = vsel %vm382, %v751, 0
      %v808 = vsel %vm382, %v752, 0
      %810 = vmatprep.subr.bf16.mxu0 %v808
      %811 = vmatpush1.bf16.msra.mxu0 %v805
      %812 = vmatprep.subr.bf16.mxu0 0
      %813 = vmatpush1.bf16.msra.mxu0 0
      %814 = vmatprep.subr.bf16.mxu0 0
      %815 = vmatpush1.bf16.msra.mxu0 0
      %816 = vmatprep.subr.bf16.mxu0 0
      %817 = vmatpush1.bf16.msra.mxu0 0
      %818 = vmatprep.subr.bf16.mxu0 0
      %819 = vmatpush1.bf16.msra.mxu0 0
      %820 = vmatprep.subr.bf16.mxu0 0
      %821 = vmatpush1.bf16.msra.mxu0 0
      %822 = vmatprep.subr.bf16.mxu0 0
      %823 = vmatpush1.bf16.msra.mxu0 0
      %824 = vmatprep.subr.bf16.mxu0 0
      %825 = vmatpush1.bf16.msra.mxu0 0
      %826 = vmatprep.subr.bf16.mxu0 0
      %827 = vmatpush1.bf16.msra.mxu0 0
      %828 = vmatprep.subr.bf16.mxu0 0
      %829 = vmatpush1.bf16.msra.mxu0 0
      %830 = vmatprep.subr.bf16.mxu0 0
      %831 = vmatpush1.bf16.msra.mxu0 0
      %832 = vmatprep.subr.bf16.mxu0 0
      %833 = vmatpush1.bf16.msra.mxu0 0
      %834 = vmatprep.subr.bf16.mxu0 0
      %835 = vmatpush1.bf16.msra.mxu0 0
      %836 = vmatprep.subr.bf16.mxu0 0
      %837 = vmatpush1.bf16.msra.mxu0 0
      %838 = vmatprep.subr.bf16.mxu0 0
      %839 = vmatpush1.bf16.msra.mxu0 0
      %840 = vmatprep.subr.bf16.mxu0 0
      %841 = vmatpush1.bf16.msra.mxu0 0
      %842 = vmatprep.mubr.bf16.mxu0 0
      %843 = vmatmul.mubr.bf16.gmra.mrb[0].mxu0 %v754
      %v844 = vpop.f32.mrb[0].mxu0
      %v845 = vadd.f32 0.0, %v844
      %v846 = vpop.f32.mrb[0].mxu0
      %v847 = vpop.f32.mrb[0].mxu0
      %v848 = vadd.f32 0.0, %v847
      %v849 = vpop.f32.mrb[0].mxu0
      %850 = vmatprep.mubr.bf16.mxu0 0
      %851 = vmatmul.mubr.bf16.gmra.mrb[0].mxu0 %v757
      %v852 = vpop.f32.mrb[0].mxu0
      %v853 = vadd.f32 0.0, %v852
      %v854 = vpop.f32.mrb[0].mxu0
      %v855 = vadd.f32 0.0, %v854
      %v856 = vpop.f32.mrb[0].mxu0
      %v857 = vadd.f32 0.0, %v856
      %v858 = vpop.f32.mrb[0].mxu0
      %v859 = vadd.f32 0.0, %v858
      %860 = vmatprep.mubr.bf16.mxu0 0
      %861 = vmatmul.mubr.bf16.gmra.mrb[0].mxu0 %v760
      %v862 = vpop.f32.mrb[0].mxu0
      %v863 = vadd.f32 0.0, %v862
      %v864 = vpop.f32.mrb[0].mxu0
      %v865 = vadd.f32 0.0, %v864
      %v866 = vpop.f32.mrb[0].mxu0
      %v867 = vadd.f32 0.0, %v866
      %v868 = vpop.f32.mrb[0].mxu0
      %v869 = vadd.f32 0.0, %v868
      %870 = vmatprep.mubr.bf16.mxu0 0
      %871 = vmatmul.mubr.bf16.gmra.mrb[0].mxu0 %v763
      %v872 = vpop.f32.mrb[0].mxu0
      %v873 = vadd.f32 0.0, %v872
      %v874 = vpop.f32.mrb[0].mxu0
      %v875 = vadd.f32 0.0, %v874
      %v876 = vpop.f32.mrb[0].mxu0
      %v877 = vadd.f32 0.0, %v876
      %v878 = vpop.f32.mrb[0].mxu0
      %v879 = vadd.f32 0.0, %v878
      %880 = vmatprep.mubr.bf16.mxu0 0
      %881 = vmatmul.mubr.bf16.gmra.mrb[0].mxu0 %v766
      %v882 = vpop.f32.mrb[0].mxu0
      %v883 = vadd.f32 0.0, %v882
      %v884 = vpop.f32.mrb[0].mxu0
      %v885 = vadd.f32 0.0, %v884
      %v886 = vpop.f32.mrb[0].mxu0
      %v887 = vadd.f32 0.0, %v886
      %v888 = vpop.f32.mrb[0].mxu0
      %v889 = vadd.f32 0.0, %v888
      %890 = vmatprep.mubr.bf16.mxu0 0
      %891 = vmatmul.mubr.bf16.gmra.mrb[0].mxu0 %v769
      %v892 = vpop.f32.mrb[0].mxu0
      %v893 = vadd.f32 0.0, %v892
      %v894 = vpop.f32.mrb[0].mxu0
      %v895 = vadd.f32 0.0, %v894
      %v896 = vpop.f32.mrb[0].mxu0
      %v897 = vadd.f32 0.0, %v896
      %v898 = vpop.f32.mrb[0].mxu0
      %v899 = vadd.f32 0.0, %v898
      %900 = vmatprep.mubr.bf16.mxu0 0
      %901 = vmatmul.mubr.bf16.gmra.mrb[0].mxu0 %v772
      %v902 = vpop.f32.mrb[0].mxu0
      %v903 = vadd.f32 0.0, %v902
      %v904 = vpop.f32.mrb[0].mxu0
      %v905 = vadd.f32 0.0, %v904
      %v906 = vpop.f32.mrb[0].mxu0
      %v907 = vadd.f32 0.0, %v906
      %v908 = vpop.f32.mrb[0].mxu0
      %v909 = vadd.f32 0.0, %v908
      %910 = vmatprep.mubr.bf16.mxu0 0
      %911 = vmatmul.mubr.bf16.gmra.mrb[0].mxu0 %v775
      %v912 = vpop.f32.mrb[0].mxu0
      %v913 = vadd.f32 0.0, %v912
      %v914 = vpop.f32.mrb[0].mxu0
      %v915 = vadd.f32 0.0, %v914
      %v916 = vpop.f32.mrb[0].mxu0
      %v917 = vadd.f32 0.0, %v916
      %v918 = vpop.f32.mrb[0].mxu0
      %v919 = vadd.f32 0.0, %v918
      %920 = vmatprep.mubr.bf16.mxu0 0
      %921 = vmatmul.mubr.bf16.gmra.mrb[0].mxu0 %v778
      %v922 = vpop.f32.mrb[0].mxu0
      %v923 = vadd.f32 0.0, %v922
      %v924 = vpop.f32.mrb[0].mxu0
      %v925 = vadd.f32 0.0, %v924
      %v926 = vpop.f32.mrb[0].mxu0
      %v927 = vadd.f32 0.0, %v926
      %v928 = vpop.f32.mrb[0].mxu0
      %v929 = vadd.f32 0.0, %v928
      %930 = vmatprep.mubr.bf16.mxu0 0
      %931 = vmatmul.mubr.bf16.gmra.mrb[0].mxu0 %v781
      %v932 = vpop.f32.mrb[0].mxu0
      %v933 = vadd.f32 0.0, %v932
      %v934 = vpop.f32.mrb[0].mxu0
      %v935 = vadd.f32 0.0, %v934
      %v936 = vpop.f32.mrb[0].mxu0
      %v937 = vadd.f32 0.0, %v936
      %v938 = vpop.f32.mrb[0].mxu0
      %v939 = vadd.f32 0.0, %v938
      %940 = vmatprep.mubr.bf16.mxu0 0
      %941 = vmatmul.mubr.bf16.gmra.mrb[0].mxu0 %v784
      %v942 = vpop.f32.mrb[0].mxu0
      %v943 = vadd.f32 0.0, %v942
      %v944 = vpop.f32.mrb[0].mxu0
      %v945 = vadd.f32 0.0, %v944
      %v946 = vpop.f32.mrb[0].mxu0
      %v947 = vadd.f32 0.0, %v946
      %v948 = vpop.f32.mrb[0].mxu0
      %v949 = vadd.f32 0.0, %v948
      %950 = vmatprep.mubr.bf16.mxu0 0
      %951 = vmatmul.mubr.bf16.gmra.mrb[0].mxu0 %v787
      %v952 = vpop.f32.mrb[0].mxu0
      %v953 = vadd.f32 0.0, %v952
      %v954 = vpop.f32.mrb[0].mxu0
      %v955 = vadd.f32 0.0, %v954
      %v956 = vpop.f32.mrb[0].mxu0
      %v957 = vadd.f32 0.0, %v956
      %v958 = vpop.f32.mrb[0].mxu0
      %v959 = vadd.f32 0.0, %v958
      %960 = vmatprep.mubr.bf16.mxu0 0
      %961 = vmatmul.mubr.bf16.gmra.mrb[0].mxu0 %v790
      %v962 = vpop.f32.mrb[0].mxu0
      %v963 = vadd.f32 0.0, %v962
      %v964 = vpop.f32.mrb[0].mxu0
      %v965 = vadd.f32 0.0, %v964
      %v966 = vpop.f32.mrb[0].mxu0
      %v967 = vadd.f32 0.0, %v966
      %v968 = vpop.f32.mrb[0].mxu0
      %v969 = vadd.f32 0.0, %v968
      %970 = vmatprep.mubr.bf16.mxu0 0
      %971 = vmatmul.mubr.bf16.gmra.mrb[0].mxu0 %v793
      %v972 = vpop.f32.mrb[0].mxu0
      %v973 = vadd.f32 0.0, %v972
      %v974 = vpop.f32.mrb[0].mxu0
      %v975 = vadd.f32 0.0, %v974
      %v976 = vpop.f32.mrb[0].mxu0
      %v977 = vadd.f32 0.0, %v976
      %v978 = vpop.f32.mrb[0].mxu0
      %v979 = vadd.f32 0.0, %v978
      %980 = vmatprep.mubr.bf16.mxu0 0
      %981 = vmatmul.mubr.bf16.gmra.mrb[0].mxu0 %v796
      %v982 = vpop.f32.mrb[0].mxu0
      %v983 = vadd.f32 0.0, %v982
      %v984 = vpop.f32.mrb[0].mxu0
      %v985 = vadd.f32 0.0, %v984
      %v986 = vpop.f32.mrb[0].mxu0
      %v987 = vadd.f32 0.0, %v986
      %v988 = vpop.f32.mrb[0].mxu0
      %v989 = vadd.f32 0.0, %v988
      %990 = vmatprep.mubr.bf16.mxu0 0
      %991 = vmatmul.mubr.bf16.gmra.mrb[0].mxu0 %v799
      %v992 = vpop.f32.mrb[0].mxu0
      %v993 = vadd.f32 0.0, %v992
      %v994 = vpop.f32.mrb[0].mxu0
      %v995 = vadd.f32 0.0, %v994
      %v996 = vpop.f32.mrb[0].mxu0
      %v997 = vadd.f32 0.0, %v996
      %v998 = vpop.f32.mrb[0].mxu0
      %v999 = vadd.f32 0.0, %v998
      %1000 = vmatprep.mubr.bf16.mxu0 0
      %1001 = vmatmul.mubr.bf16.gmra.mrb[0].mxu0 %v802
      %v1002 = vpop.f32.mrb[0].mxu0
      %v1003 = vpop.f32.mrb[0].mxu0
      %v1004 = vadd.f32 0.0, %v1003
      %v1005 = vpop.f32.mrb[0].mxu0
      %v1006 = vpop.f32.mrb[0].mxu0
      %v1007 = vadd.f32 0.0, %v1006
      %1008 = vdwg.mxu0
      %v1009 = vadd.f32 %v845, %v855
      %v1010 = vadd.f32 %v848, %v859
      %v1011 = vadd.f32 %v853, %v865
      %v1012 = vadd.f32 %v857, %v869
      %v1013 = vadd.f32 %v863, %v875
      %v1014 = vadd.f32 %v867, %v879
      %v1015 = vadd.f32 %v873, %v885
      %v1016 = vadd.f32 %v877, %v889
      %v1017 = vadd.f32 %v883, %v895
      %v1018 = vadd.f32 %v887, %v899
      %v1019 = vadd.f32 %v893, %v905
      %v1020 = vadd.f32 %v897, %v909
      %v1021 = vadd.f32 %v903, %v915
      %v1022 = vadd.f32 %v907, %v919
      %v1023 = vadd.f32 %v913, %v925
      %v1024 = vadd.f32 %v917, %v929
      %v1025 = vadd.f32 %v923, %v935
      %v1026 = vadd.f32 %v927, %v939
      %v1027 = vadd.f32 %v933, %v945
      %v1028 = vadd.f32 %v937, %v949
      %v1029 = vadd.f32 %v943, %v955
      %v1030 = vadd.f32 %v947, %v959
      %v1031 = vadd.f32 %v953, %v965
      %v1032 = vadd.f32 %v957, %v969
      %v1033 = vadd.f32 %v963, %v975
      %v1034 = vadd.f32 %v967, %v979
      %v1035 = vadd.f32 %v973, %v985
      %v1036 = vadd.f32 %v977, %v989
      %v1037 = vadd.f32 %v983, %v995
      %v1038 = vadd.f32 %v987, %v999
      %v1039 = vadd.f32 %v993, %v1004
      %v1040 = vadd.f32 %v997, %v1007
      %v1041 = vadd.f32 %v588, %v1009
      %v1042 = vadd.f32 %v589, %v1010
      %v1043 = vadd.f32 %v590, %v1011
      %v1044 = vadd.f32 %v591, %v1012
      %v1045 = vadd.f32 %v592, %v1013
      %v1046 = vadd.f32 %v593, %v1014
      %v1047 = vadd.f32 %v594, %v1015
      %v1048 = vadd.f32 %v595, %v1016
      %v1049 = vadd.f32 %v596, %v1017
      %v1050 = vadd.f32 %v597, %v1018
      %v1051 = vadd.f32 %v598, %v1019
      %v1052 = vadd.f32 %v599, %v1020
      %v1053 = vadd.f32 %v600, %v1021
      %v1054 = vadd.f32 %v601, %v1022
      %v1055 = vadd.f32 %v602, %v1023
      %v1056 = vadd.f32 %v603, %v1024
      %v1057 = vadd.f32 %v604, %v1025
      %v1058 = vadd.f32 %v605, %v1026
      %v1059 = vadd.f32 %v606, %v1027
      %v1060 = vadd.f32 %v607, %v1028
      %v1061 = vadd.f32 %v608, %v1029
      %v1062 = vadd.f32 %v609, %v1030
      %v1063 = vadd.f32 %v610, %v1031
      %v1064 = vadd.f32 %v611, %v1032
      %v1065 = vadd.f32 %v612, %v1033
      %v1066 = vadd.f32 %v613, %v1034
      %v1067 = vadd.f32 %v614, %v1035
      %v1068 = vadd.f32 %v615, %v1036
      %v1069 = vadd.f32 %v616, %v1037
      %v1070 = vadd.f32 %v617, %v1038
      %v1071 = vadd.f32 %v618, %v1039
      %v1072 = vadd.f32 %v619, %v1040
      %v1073 = vld [vmem:[%s2] sm:$0x1]
      %v1075 = vlaneseq
      %v1076 = vshrl.u32 %v1075, 7
      %v1077 = vsub.s32 0, %v1076
      %v1078 = vrot.slane %v1073, %v1077
      %v1080 = vadd.f32 %v1041, %v1078
      %v1081 = vadd.f32 %v1042, %v1078
      %v1082 = vadd.f32 %v1043, %v1078
      %v1083 = vadd.f32 %v1044, %v1078
      %v1084 = vadd.f32 %v1045, %v1078
      %v1085 = vadd.f32 %v1046, %v1078
      %v1086 = vadd.f32 %v1047, %v1078
      %v1087 = vadd.f32 %v1048, %v1078
      %v1088 = vadd.f32 %v1049, %v1078
      %v1089 = vadd.f32 %v1050, %v1078
      %v1090 = vadd.f32 %v1051, %v1078
      %v1091 = vadd.f32 %v1052, %v1078
      %v1092 = vadd.f32 %v1053, %v1078
      %v1093 = vadd.f32 %v1054, %v1078
      %v1094 = vadd.f32 %v1055, %v1078
      %v1095 = vadd.f32 %v1056, %v1078
      %v1096 = vadd.f32 %v1057, %v1078
      %v1097 = vadd.f32 %v1058, %v1078
      %v1098 = vadd.f32 %v1059, %v1078
      %v1099 = vadd.f32 %v1060, %v1078
      %v1100 = vadd.f32 %v1061, %v1078
      %v1101 = vadd.f32 %v1062, %v1078
      %v1102 = vadd.f32 %v1063, %v1078
      %v1103 = vadd.f32 %v1064, %v1078
      %v1104 = vadd.f32 %v1065, %v1078
      %v1105 = vadd.f32 %v1066, %v1078
      %v1106 = vadd.f32 %v1067, %v1078
      %v1107 = vadd.f32 %v1068, %v1078
      %v1108 = vadd.f32 %v1069, %v1078
      %v1109 = vadd.f32 %v1070, %v1078
      %v1110 = vadd.f32 %v1071, %v1078
      %v1111 = vadd.f32 %v1072, %v1078
      %v1112 = vmax.f32 %v1080, 0.0
      %v1113 = vmax.f32 %v1081, 0.0
      %v1114 = vmax.f32 %v1082, 0.0
      %v1115 = vmax.f32 %v1083, 0.0
      %v1116 = vmax.f32 %v1084, 0.0
      %v1117 = vmax.f32 %v1085, 0.0
      %v1118 = vmax.f32 %v1086, 0.0
      %v1119 = vmax.f32 %v1087, 0.0
      %v1120 = vmax.f32 %v1088, 0.0
      %v1121 = vmax.f32 %v1089, 0.0
      %v1122 = vmax.f32 %v1090, 0.0
      %v1123 = vmax.f32 %v1091, 0.0
      %v1124 = vmax.f32 %v1092, 0.0
      %v1125 = vmax.f32 %v1093, 0.0
      %v1126 = vmax.f32 %v1094, 0.0
      %v1127 = vmax.f32 %v1095, 0.0
      %v1128 = vmax.f32 %v1096, 0.0
      %v1129 = vmax.f32 %v1097, 0.0
      %v1130 = vmax.f32 %v1098, 0.0
      %v1131 = vmax.f32 %v1099, 0.0
      %v1132 = vmax.f32 %v1100, 0.0
      %v1133 = vmax.f32 %v1101, 0.0
      %v1134 = vmax.f32 %v1102, 0.0
      %v1135 = vmax.f32 %v1103, 0.0
      %v1136 = vmax.f32 %v1104, 0.0
      %v1137 = vmax.f32 %v1105, 0.0
      %v1138 = vmax.f32 %v1106, 0.0
      %v1139 = vmax.f32 %v1107, 0.0
      %v1140 = vmax.f32 %v1108, 0.0
      %v1141 = vmax.f32 %v1109, 0.0
      %v1142 = vmax.f32 %v1110, 0.0
      %v1143 = vmax.f32 %v1111, 0.0
      %v1144 = vpack.c.bf16 %v1113, %v1112
      %v1145 = vpack.c.bf16 %v1115, %v1114
      %v1146 = vpack.c.bf16 %v1117, %v1116
      %v1147 = vpack.c.bf16 %v1119, %v1118
      %v1148 = vpack.c.bf16 %v1121, %v1120
      %v1149 = vpack.c.bf16 %v1123, %v1122
      %v1150 = vpack.c.bf16 %v1125, %v1124
      %v1151 = vpack.c.bf16 %v1127, %v1126
      %v1152 = vpack.c.bf16 %v1129, %v1128
      %v1153 = vpack.c.bf16 %v1131, %v1130
      %v1154 = vpack.c.bf16 %v1133, %v1132
      %v1155 = vpack.c.bf16 %v1135, %v1134
      %v1156 = vpack.c.bf16 %v1137, %v1136
      %v1157 = vpack.c.bf16 %v1139, %v1138
      %v1158 = vpack.c.bf16 %v1141, %v1140
      %v1159 = vpack.c.bf16 %v1143, %v1142
      %v1176 = vunpack.c.l.b16 %v1144
      %v1177 = vunpack.c.h.b16 %v1144
      %v1178 = vunpack.c.l.b16 %v1145
      %v1179 = vunpack.c.h.b16 %v1145
      %v1180 = vunpack.c.l.b16 %v1146
      %v1181 = vunpack.c.h.b16 %v1146
      %v1182 = vunpack.c.l.b16 %v1147
      %v1183 = vunpack.c.h.b16 %v1147
      %v1184 = vunpack.c.l.b16 %v1148
      %v1185 = vunpack.c.h.b16 %v1148
      %v1186 = vunpack.c.l.b16 %v1149
      %v1187 = vunpack.c.h.b16 %v1149
      %v1188 = vunpack.c.l.b16 %v1150
      %v1189 = vunpack.c.h.b16 %v1150
      %v1190 = vunpack.c.l.b16 %v1151
      %v1191 = vunpack.c.h.b16 %v1151
      %v1192 = vunpack.c.l.b16 %v1152
      %v1193 = vunpack.c.h.b16 %v1152
      %v1194 = vunpack.c.l.b16 %v1153
      %v1195 = vunpack.c.h.b16 %v1153
      %v1196 = vunpack.c.l.b16 %v1154
      %v1197 = vunpack.c.h.b16 %v1154
      %v1198 = vunpack.c.l.b16 %v1155
      %v1199 = vunpack.c.h.b16 %v1155
      %v1200 = vunpack.c.l.b16 %v1156
      %v1201 = vunpack.c.h.b16 %v1156
      %v1202 = vunpack.c.l.b16 %v1157
      %v1203 = vunpack.c.h.b16 %v1157
      %v1204 = vunpack.c.l.b16 %v1158
      %v1205 = vunpack.c.h.b16 %v1158
      %v1206 = vunpack.c.l.b16 %v1159
      %v1207 = vunpack.c.h.b16 %v1159
      %v1208 = vpack.c.b16 %v1176, %v1176
      %v1209 = vpack.c.b16 %v1177, %v1177
      %v1210 = vpack.c.b16 %v1178, %v1178
      %v1211 = vpack.c.b16 %v1179, %v1179
      %v1212 = vpack.c.b16 %v1180, %v1180
      %v1213 = vpack.c.b16 %v1181, %v1181
      %v1214 = vpack.c.b16 %v1182, %v1182
      %v1215 = vpack.c.b16 %v1183, %v1183
      %v1216 = vpack.c.b16 %v1184, %v1184
      %v1217 = vpack.c.b16 %v1185, %v1185
      %v1218 = vpack.c.b16 %v1186, %v1186
      %v1219 = vpack.c.b16 %v1187, %v1187
      %v1220 = vpack.c.b16 %v1188, %v1188
      %v1221 = vpack.c.b16 %v1189, %v1189
      %v1222 = vpack.c.b16 %v1190, %v1190
      %v1223 = vpack.c.b16 %v1191, %v1191
      %v1224 = vpack.c.b16 %v1192, %v1192
      %v1225 = vpack.c.b16 %v1193, %v1193
      %v1226 = vpack.c.b16 %v1194, %v1194
      %v1227 = vpack.c.b16 %v1195, %v1195
      %v1228 = vpack.c.b16 %v1196, %v1196
      %v1229 = vpack.c.b16 %v1197, %v1197
      %v1230 = vpack.c.b16 %v1198, %v1198
      %v1231 = vpack.c.b16 %v1199, %v1199
      %v1232 = vpack.c.b16 %v1200, %v1200
      %v1233 = vpack.c.b16 %v1201, %v1201
      %v1234 = vpack.c.b16 %v1202, %v1202
      %v1235 = vpack.c.b16 %v1203, %v1203
      %v1236 = vpack.c.b16 %v1204, %v1204
      %v1237 = vpack.c.b16 %v1205, %v1205
      %v1238 = vpack.c.b16 %v1206, %v1206
      %v1239 = vpack.c.b16 %v1207, %v1207
      %1272 = vst [vmem:[%s194] sm:$0xf] %v1208
      %1273 = vst [vmem:[%s194 + $0x4] sm:$0xf] %v1209
      %1274 = vst [vmem:[%s194 + $0x8] sm:$0xf] %v1210
      %1275 = vst [vmem:[%s194 + $0xc] sm:$0xf] %v1211
      %1276 = vst [vmem:[%s194 + $0x10] sm:$0xf] %v1212
      %1277 = vst [vmem:[%s194 + $0x14] sm:$0xf] %v1213
      %1278 = vst [vmem:[%s194 + $0x18] sm:$0xf] %v1214
      %1279 = vst [vmem:[%s194 + $0x1c] sm:$0xf] %v1215
      %1280 = vst [vmem:[%s194 + $0x20] sm:$0xf] %v1216
      %1281 = vst [vmem:[%s194 + $0x24] sm:$0xf] %v1217
      %1282 = vst [vmem:[%s194 + $0x28] sm:$0xf] %v1218
      %1283 = vst [vmem:[%s194 + $0x2c] sm:$0xf] %v1219
      %1284 = vst [vmem:[%s194 + $0x30] sm:$0xf] %v1220
      %1285 = vst [vmem:[%s194 + $0x34] sm:$0xf] %v1221
      %1286 = vst [vmem:[%s194 + $0x38] sm:$0xf] %v1222
      %1287 = vst [vmem:[%s194 + $0x3c] sm:$0xf] %v1223
      %1288 = vst [vmem:[%s194 + $0x40] sm:$0xf] %v1224
      %1289 = vst [vmem:[%s194 + $0x44] sm:$0xf] %v1225
      %1290 = vst [vmem:[%s194 + $0x48] sm:$0xf] %v1226
      %1291 = vst [vmem:[%s194 + $0x4c] sm:$0xf] %v1227
      %1292 = vst [vmem:[%s194 + $0x50] sm:$0xf] %v1228
      %1293 = vst [vmem:[%s194 + $0x54] sm:$0xf] %v1229
      %1294 = vst [vmem:[%s194 + $0x58] sm:$0xf] %v1230
      %1295 = vst [vmem:[%s194 + $0x5c] sm:$0xf] %v1231
      %1296 = vst [vmem:[%s194 + $0x60] sm:$0xf] %v1232
      %1297 = vst [vmem:[%s194 + $0x64] sm:$0xf] %v1233
      %1298 = vst [vmem:[%s194 + $0x68] sm:$0xf] %v1234
      %1299 = vst [vmem:[%s194 + $0x6c] sm:$0xf] %v1235
      %1300 = vst [vmem:[%s194 + $0x70] sm:$0xf] %v1236
      %1301 = vst [vmem:[%s194 + $0x74] sm:$0xf] %v1237
      %1302 = vst [vmem:[%s194 + $0x78] sm:$0xf] %v1238
      %1303 = vst [vmem:[%s194 + $0x7c] sm:$0xf] %v1239
      %s1304 = smul.u32 16, %s19
      %p1305 = scmp.lt.s32.totalorder %s18, 1
      %s1306 = scalar_select %p1305, %s18, 1
      %p1307 = scmp.lt.s32.totalorder %s1304, 15
      %s1308 = scalar_select %p1307, %s1304, 15
      %s1309 = smul.addr %s1308, 2
      %s1310 = smul.addr %s1306, 32
      %s1311 = sadd.s32 %s1309, %s1310
      %s1312 = smul.addr %s1311, 4
      %s1313 = scalar_lea.vmem %s3, %s1312
      // Predicated region
      $region33: #{timm_backbone_forward.5} parent=31 // pred_check
        %p1314 = pneg %p114
      $region34: #{timm_backbone_forward.5} parent=31 // pred_check_branch
        %1316 = sbr.rel (%p1314) target = $region36
      $region35: #{timm_backbone_forward.5} parent=31 // pred_region
        %s1317 = smul.u32 16, %s19
      $region36: #{timm_backbone_forward.5} parent=31 // pred_fallthru
        _
    $region32: #{timm_backbone_forward.5} parent=5 // pred_fallthru
      _
    %p1318 = scmp.le.s32.totalorder 2, %s9
    // Predicated region
    $region37: #{timm_backbone_forward.5} parent=5 // pred_check
      %p1319 = pneg %p1318
    $region38: #{timm_backbone_forward.5} parent=5 // pred_check_branch
      %1321 = sbr.rel (%p1319) target = $region40
    $region39: #{timm_backbone_forward.5} parent=5 // pred_region
      %s1322 = ssub.s32 %s9, 2
      // Predicated region
      $region41: #{timm_backbone_forward.5} parent=39 // pred_check
        %p1323 = pneg %p120
      $region42: #{timm_backbone_forward.5} parent=39 // pred_check_branch
        %1325 = sbr.rel (%p1323) target = $region44
      $region43: #{timm_backbone_forward.5} parent=39 // pred_region
        %s1326 = smul.u32 16, %s21
        %p1327 = scmp.lt.s32.totalorder %s20, 1
        %s1328 = scalar_select %p1327, %s20, 1
        %p1329 = scmp.lt.s32.totalorder %s1326, 15
        %s1330 = scalar_select %p1329, %s1326, 15
        %s1331 = smul.addr %s1330, 2
        %s1332 = smul.addr %s1328, 32
        %s1333 = sadd.s32 %s1331, %s1332
        %s1334 = smul.addr %s1333, 4
        %s1335 = scalar_lea.vmem %s3, %s1334
      $region44: #{timm_backbone_forward.5} parent=39 // pred_fallthru
        _
    $region40: #{timm_backbone_forward.5} parent=5 // pred_fallthru
      _
  $region6: #{timm_backbone_forward.5} parent=0 // loop_footer
    %s13 = sadd.s32 1, %s9
  $region7: #{timm_backbone_forward.5} parent=0 // loop_footer_branch
    %8 = sbr.rel target = $region3
  $region8: #{timm_backbone_forward.5} parent=0 // loop_exit
    _

// kernel: timm_backbone_forward.6
$region0: #{timm_backbone_forward.6}
  #allocation0 [shape = 'u32[]', space=smem, size = 0x4, offset = 0x4, fixed_abs, tag = 'smem constant byte address 0x4 - core index']
  #allocation1 [shape = 'u32[144,128]{1,0:T(1,128)}', space=vmem, size = 0x12000, scoped, tag = 'internal scratch']
  %s0 = inlined_call_operand.vmem [shape: bf16[2,2,9,8,64], index: 0, kind: input, shape index: {}]
  %s1 = inlined_call_operand.vmem [shape: bf16[2,64,256], index: 1, kind: input, shape index: {}]
  %s2 = inlined_call_operand.vmem [shape: f32[1,128], index: 2, kind: input, shape index: {}]
  %s3 = inlined_call_operand.vmem [shape: bf16[2,8,8,128], index: 3, kind: output, shape index: {}]
  %s4 = sld [smem:[#allocation0]]
  $region45: #{timm_backbone_forward.6} parent=0
    _
  %s6 = ssub.s32 1, %s4
  %s7 = scalar_select 0, %s6, %s4
  loop: start=0, step=1, limit=4
  $region2: #{timm_backbone_forward.6} parent=0 // loop_pre_header
    _
  $region3: #{timm_backbone_forward.6} parent=0 // loop_header
    %s9 = sphi 0, %s13
    %p10 = scmp.ge.s32.totalorder %s9, 4
    %s16 = sphi 0, %s28
    %s17 = sphi 0, %s24
    %s18 = sphi 0, %s16
    %s19 = sphi 0, %s17
    %s20 = sphi 0, %s18
    %s21 = sphi 0, %s19
    %s31 = sphi 0, %s33
    %s34 = sphi 0, %s31
    %s35 = sphi 0, %s34
    %s51 = sphi 0, %s35
    %s55 = sphi 0, %s55
    %s57 = sphi 0, %s55
    %s58 = sphi 0, %s57
    %s72 = sphi 0, %s58
    %s76 = sphi 0, %s76
    %s78 = sphi 0, %s76
    %s79 = sphi 0, %s78
    %s93 = sphi 0, %s79
    %s101 = sphi 0, %s103
    %s104 = sphi 0, %s101
    %s105 = sphi 0, %s104
    %s121 = sphi 0, %s105
  $region4: #{timm_backbone_forward.6} parent=0 // loop_header_branch
    %12 = sbr.rel (%p10) target = $region8
  $region5: #{timm_backbone_forward.6} parent=0 // loop_body
    %s14 = ssub.s32 %s9, 1
    %s15 = ssub.s32 %s9, 2
    %s22 = sadd.s32 1, %s17
    %p23 = scmp.ge.s32.totalorder %s22, 1
    %s24 = scalar_select %p23, 0, %s22
    %s25 = sadd.s32 1, %s16
    %s26 = scalar_select %p23, %s25, %s16
    %p27 = scmp.ge.s32.totalorder %s26, 2
    %s28 = scalar_select %p27, 0, %s26
    %s29 = ssub.s32 %s16, %s28
    %p30 = scmp.eq.s32.totalorder %s29, 0
    %s32 = sadd.s32 %s31, 1
    %s33 = scalar_select %p30, %s31, %s32
    %p36 = pneg %p30
    %p37 = scmp.eq.s32.totalorder %s9, 1
    %p38 = por %p36, %p37
    %p39 = scmp.ne.s32.totalorder %s31, %s34
    %p40 = scmp.eq.s32.totalorder %s9, 0
    %p41 = por %p39, %p40
    %p42 = scmp.ne.s32.totalorder %s31, %s34
    %p43 = scmp.eq.s32.totalorder %s14, 1
    %p44 = por %p42, %p43
    %p45 = scmp.ne.s32.totalorder %s34, %s35
    %p46 = scmp.eq.s32.totalorder %s14, 0
    %p47 = por %p45, %p46
    %p48 = scmp.ne.s32.totalorder %s34, %s35
    %p49 = scmp.eq.s32.totalorder %s15, 1
    %p50 = por %p48, %p49
    %p52 = scmp.ne.s32.totalorder %s35, %s51
    %p53 = scmp.eq.s32.totalorder %s15, 0
    %p54 = por %p52, %p53
    %s56 = sadd.s32 %s55, 1
    %p59 = scmp.eq.s32.totalorder %s9, 1
    %p60 = scmp.ne.s32.totalorder %s55, %s57
    %p61 = scmp.eq.s32.totalorder %s9, 0
    %p62 = por %p60, %p61
    %p63 = scmp.ne.s32.totalorder %s55, %s57
    %p64 = scmp.eq.s32.totalorder %s14, 1
    %p65 = por %p63, %p64
    %p66 = scmp.ne.s32.totalorder %s57, %s58
    %p67 = scmp.eq.s32.totalorder %s14, 0
    %p68 = por %p66, %p67
    %p69 = scmp.ne.s32.totalorder %s57, %s58
    %p70 = scmp.eq.s32.totalorder %s15, 1
    %p71 = por %p69, %p70
    %p73 = scmp.ne.s32.totalorder %s58, %s72
    %p74 = scmp.eq.s32.totalorder %s15, 0
    %p75 = por %p73, %p74
    %s77 = sadd.s32 %s76, 1
    %p80 = scmp.eq.s32.totalorder %s9, 1
    %p81 = scmp.ne.s32.totalorder %s76, %s78
    %p82 = scmp.eq.s32.totalorder %s9, 0
    %p83 = por %p81, %p82
    %p84 = scmp.ne.s32.totalorder %s76, %s78
    %p85 = scmp.eq.s32.totalorder %s14, 1
    %p86 = por %p84, %p85
    %p87 = scmp.ne.s32.totalorder %s78, %s79
    %p88 = scmp.eq.s32.totalorder %s14, 0
    %p89 = por %p87, %p88
    %p90 = scmp.ne.s32.totalorder %s78, %s79
    %p91 = scmp.eq.s32.totalorder %s15, 1
    %p92 = por %p90, %p91
    %p94 = scmp.ne.s32.totalorder %s79, %s93
    %p95 = scmp.eq.s32.totalorder %s15, 0
    %p96 = por %p94, %p95
    %s97 = ssub.s32 %s16, %s28
    %s98 = ssub.s32 %s17, %s24
    %s99 = sor.u32 %s97, %s98
    %p100 = scmp.eq.s32.totalorder %s99, 0
    %s102 = sadd.s32 %s101, 1
    %s103 = scalar_select %p100, %s101, %s102
    %p106 = pneg %p100
    %p107 = scmp.eq.s32.totalorder %s9, 1
    %p108 = por %p106, %p107
    %p109 = scmp.ne.s32.totalorder %s101, %s104
    %p110 = scmp.eq.s32.totalorder %s9, 0
    %p111 = por %p109, %p110
    %p112 = scmp.ne.s32.totalorder %s101, %s104
    %p113 = scmp.eq.s32.totalorder %s14, 1
    %p114 = por %p112, %p113
    %p115 = scmp.ne.s32.totalorder %s104, %s105
    %p116 = scmp.eq.s32.totalorder %s14, 0
    %p117 = por %p115, %p116
    %p118 = scmp.ne.s32.totalorder %s104, %s105
    %p119 = scmp.eq.s32.totalorder %s15, 1
    %p120 = por %p118, %p119
    %p122 = scmp.ne.s32.totalorder %s105, %s121
    %p123 = scmp.eq.s32.totalorder %s15, 0
    %p124 = por %p122, %p123
    %p125 = scmp.le.s32.totalorder 1, %s9
    %p126 = scmp.lt.s32.totalorder %s9, 3
    %p127 = pnand %p125, %p126
    %p128 = pneg %p127
    // Predicated region
    $region9: #{timm_backbone_forward.6} parent=5 // pred_check
      _
    $region10: #{timm_backbone_forward.6} parent=5 // pred_check_branch
      %130 = sbr.rel (%p127) target = $region12
    $region11: #{timm_backbone_forward.6} parent=5 // pred_region
      %s131 = ssub.s32 %s9, 1
      // Predicated region
      $region13: #{timm_backbone_forward.6} parent=11 // pred_check
        %p132 = pneg %p47
      $region14: #{timm_backbone_forward.6} parent=11 // pred_check_branch
        %134 = sbr.rel (%p132) target = $region16
      $region15: #{timm_backbone_forward.6} parent=11 // pred_region
        %p135 = scmp.lt.s32.totalorder %s18, 1
        %s136 = scalar_select %p135, %s18, 1
        %s137 = smul.addr %s136, 18
        %s138 = smul.addr %s137, 4
        %s139 = scalar_lea.vmem %s0, %s138
      $region16: #{timm_backbone_forward.6} parent=11 // pred_fallthru
        _
      // Predicated region
      $region17: #{timm_backbone_forward.6} parent=11 // pred_check
        %p140 = pneg %p68
      $region18: #{timm_backbone_forward.6} parent=11 // pred_check_branch
        %142 = sbr.rel (%p140) target = $region20
      $region19: #{timm_backbone_forward.6} parent=11 // pred_region
        _
      $region20: #{timm_backbone_forward.6} parent=11 // pred_fallthru
        _
      // Predicated region
      $region21: #{timm_backbone_forward.6} parent=11 // pred_check
        %p143 = pneg %p89
      $region22: #{timm_backbone_forward.6} parent=11 // pred_check_branch
        %145 = sbr.rel (%p143) target = $region24
      $region23: #{timm_backbone_forward.6} parent=11 // pred_region
        _
      $region24: #{timm_backbone_forward.6} parent=11 // pred_fallthru
        _
    $region12: #{timm_backbone_forward.6} parent=5 // pred_fallthru
      _
    %p146 = scmp.lt.s32.totalorder %s9, 2
    // Predicated region
    $region25: #{timm_backbone_forward.6} parent=5 // pred_check
      %p147 = pneg %p146
    $region26: #{timm_backbone_forward.6} parent=5 // pred_check_branch
      %149 = sbr.rel (%p147) target = $region28
    $region27: #{timm_backbone_forward.6} parent=5 // pred_region
      _
    $region28: #{timm_backbone_forward.6} parent=5 // pred_fallthru
      _
    %p150 = scmp.le.s32.totalorder 1, %s9
    %p151 = scmp.lt.s32.totalorder %s9, 3
    %p152 = pnand %p150, %p151
    %p153 = pneg %p152
    // Predicated region
    $region29: #{timm_backbone_forward.6} parent=5 // pred_check
      _
    $region30: #{timm_backbone_forward.6} parent=5 // pred_check_branch
      %155 = sbr.rel (%p152) target = $region32
    $region31: #{timm_backbone_forward.6} parent=5 // pred_region
      %s156 = ssub.s32 %s9, 1
      %p157 = scmp.lt.s32.totalorder %s18, 1
      %s158 = scalar_select %p157, %s18, 1
      %s159 = smul.addr %s158, 18
      %s160 = smul.addr %s159, 4
      %s161 = scalar_lea.vmem %s0, %s160
      %p162 = pneg %p47
      %p163 = pneg %p44
      %p164 = pneg %p68
      %p165 = pneg %p65
      %p166 = pneg %p89
      %p167 = pneg %p86
      %p168 = pneg %p117
      %p169 = pneg %p114
      %s170 = smul.u32 8, %s19
      %p171 = scmp.lt.s32.totalorder %s18, 1
      %s172 = scalar_select %p171, %s18, 1
      %p173 = scmp.lt.s32.totalorder %s170, 7
      %s174 = scalar_select %p173, %s170, 7
      %s175 = smul.addr %s172, 8
      %s176 = sadd.s32 %s174, %s175
      %s177 = smul.addr %s176, 4
      %s178 = scalar_lea.vmem %s3, %s177
      %p179 = scmp.lt.s32.totalorder %s18, 1
      %s180 = scalar_select %p179, %s18, 1
      %s181 = smul.addr %s180, 18
      %s182 = smul.addr %s181, 4
      %s183 = scalar_lea.vmem %s0, %s182
      %s184 = smul.u32 8, %s19
      %p185 = scmp.lt.s32.totalorder %s18, 1
      %s186 = scalar_select %p185, %s18, 1
      %p187 = scmp.lt.s32.totalorder %s184, 7
      %s188 = scalar_select %p187, %s184, 7
      %s189 = smul.addr %s186, 8
      %s190 = sadd.s32 %s188, %s189
      %s191 = smul.addr %s190, 4
      %s192 = scalar_lea.vmem %s3, %s191
      %s193 = smul.u32 8, %s19
      %s195 = smul.u32 %s19, 8
      %s196 = smul.addr %s195, 4
      %s197 = scalar_lea.vmem %s183, %s196
      %v198 = vld [vmem:[%s197] sm:$0xf]
      %v199 = vld [vmem:[%s197 + $0x4] sm:$0xf]
      %v200 = vld [vmem:[%s197 + $0x8] sm:$0xf]
      %v201 = vld [vmem:[%s197 + $0xc] sm:$0xf]
      %v202 = vld [vmem:[%s197 + $0x10] sm:$0xf]
      %v203 = vld [vmem:[%s197 + $0x14] sm:$0xf]
      %v204 = vld [vmem:[%s197 + $0x18] sm:$0xf]
      %v205 = vld [vmem:[%s197 + $0x1c] sm:$0xf]
      %v206 = vld [vmem:[%s197 + $0x20] sm:$0xf]
      %v207 = vld [vmem:[%s1] sm:$0xff]
      %v208 = vld [vmem:[%s1 + $0x8] sm:$0xff]
      %v209 = vld [vmem:[%s1 + $0x10] sm:$0xff]
      %v210 = vld [vmem:[%s1 + $0x18] sm:$0xff]
      %v211 = vld [vmem:[%s1 + $0x20] sm:$0xff]
      %v212 = vld [vmem:[%s1 + $0x28] sm:$0xff]
      %v213 = vld [vmem:[%s1 + $0x30] sm:$0xff]
      %v214 = vld [vmem:[%s1 + $0x38] sm:$0xff]
      %v224 = vunpack.c.l.b16 %v198
      %v225 = vunpack.c.l.b16 %v199
      %v226 = vunpack.c.l.b16 %v200
      %v227 = vunpack.c.l.b16 %v201
      %v228 = vunpack.c.l.b16 %v202
      %v229 = vunpack.c.l.b16 %v203
      %v230 = vunpack.c.l.b16 %v204
      %v231 = vunpack.c.l.b16 %v205
      %v232 = vunpack.c.l.b16 %v206
      %v233 = vpack.c.b16 %v225, %v224
      %v234 = vpack.c.b16 %v227, %v226
      %v235 = vpack.c.b16 %v229, %v228
      %v236 = vpack.c.b16 %v231, %v230
      %v237 = vpack.c.b16 %v232, %v232
      %v246 = vunpack.c.l.b16 %v207
      %v247 = vunpack.c.h.b16 %v207
      %v248 = vunpack.c.l.b16 %v208
      %v249 = vunpack.c.h.b16 %v208
      %v250 = vunpack.c.l.b16 %v209
      %v251 = vunpack.c.h.b16 %v209
      %v252 = vunpack.c.l.b16 %v210
      %v253 = vunpack.c.h.b16 %v210
      %v254 = vunpack.c.l.b16 %v211
      %v255 = vunpack.c.h.b16 %v211
      %v256 = vunpack.c.l.b16 %v212
      %v257 = vunpack.c.h.b16 %v212
      %v258 = vunpack.c.l.b16 %v213
      %v259 = vunpack.c.h.b16 %v213
      %v260 = vunpack.c.l.b16 %v214
      %v261 = vunpack.c.h.b16 %v214
      %v262 = vpack.c.b16 %v248, %v246
      %v263 = vpack.c.b16 %v249, %v247
      %v264 = vpack.c.b16 %v252, %v250
      %v265 = vpack.c.b16 %v253, %v251
      %v266 = vpack.c.b16 %v256, %v254
      %v267 = vpack.c.b16 %v257, %v255
      %v268 = vpack.c.b16 %v260, %v258
      %v269 = vpack.c.b16 %v261, %v259
      %vm278 = vcmask 523264
      %v280 = vsel %vm278, %v233, 0
      %v283 = vsel %vm278, %v234, 0
      %v286 = vsel %vm278, %v235, 0
      %v289 = vsel %vm278, %v236, 0
      %v292 = vsel %vm278, %v237, 0
      %294 = vmatprep.subr.bf16.mxu0 %v263
      %295 = vmatpush1.bf16.msra.mxu0 %v262
      %296 = vmatprep.subr.bf16.mxu0 %v265
      %297 = vmatpush1.bf16.msra.mxu0 %v264
      %298 = vmatprep.subr.bf16.mxu0 %v267
      %299 = vmatpush1.bf16.msra.mxu0 %v266
      %300 = vmatprep.subr.bf16.mxu0 %v269
      %301 = vmatpush1.bf16.msra.mxu0 %v268
      %302 = vmatprep.subr.bf16.mxu0 0
      %303 = vmatpush1.bf16.msra.mxu0 0
      %304 = vmatprep.subr.bf16.mxu0 0
      %305 = vmatpush1.bf16.msra.mxu0 0
      %306 = vmatprep.subr.bf16.mxu0 0
      %307 = vmatpush1.bf16.msra.mxu0 0
      %308 = vmatprep.subr.bf16.mxu0 0
      %309 = vmatpush1.bf16.msra.mxu0 0
      %310 = vmatprep.subr.bf16.mxu0 0
      %311 = vmatpush1.bf16.msra.mxu0 0
      %312 = vmatprep.subr.bf16.mxu0 0
      %313 = vmatpush1.bf16.msra.mxu0 0
      %314 = vmatprep.subr.bf16.mxu0 0
      %315 = vmatpush1.bf16.msra.mxu0 0
      %316 = vmatprep.subr.bf16.mxu0 0
      %317 = vmatpush1.bf16.msra.mxu0 0
      %318 = vmatprep.subr.bf16.mxu0 0
      %319 = vmatpush1.bf16.msra.mxu0 0
      %320 = vmatprep.subr.bf16.mxu0 0
      %321 = vmatpush1.bf16.msra.mxu0 0
      %322 = vmatprep.subr.bf16.mxu0 0
      %323 = vmatpush1.bf16.msra.mxu0 0
      %324 = vmatprep.subr.bf16.mxu0 0
      %325 = vmatpush1.bf16.msra.mxu0 0
      %326 = vmatprep.mubr.bf16.mxu0 0
      %327 = vmatmul.mubr.bf16.gmra.mrb[0].mxu0 %v280
      %v328 = vpop.f32.mrb[0].mxu0
      %v329 = vadd.f32 0.0, %v328
      %v330 = vpop.f32.mrb[0].mxu0
      %v331 = vpop.f32.mrb[0].mxu0
      %v332 = vadd.f32 0.0, %v331
      %v333 = vpop.f32.mrb[0].mxu0
      %v334 = vadd.f32 0.0, %v333
      %335 = vmatprep.mubr.bf16.mxu0 0
      %336 = vmatmul.mubr.bf16.gmra.mrb[0].mxu0 %v283
      %v337 = vpop.f32.mrb[0].mxu0
      %v338 = vadd.f32 0.0, %v337
      %v339 = vpop.f32.mrb[0].mxu0
      %v340 = vadd.f32 0.0, %v339
      %v341 = vpop.f32.mrb[0].mxu0
      %v342 = vadd.f32 0.0, %v341
      %v343 = vpop.f32.mrb[0].mxu0
      %v344 = vadd.f32 0.0, %v343
      %345 = vmatprep.mubr.bf16.mxu0 0
      %346 = vmatmul.mubr.bf16.gmra.mrb[0].mxu0 %v286
      %v347 = vpop.f32.mrb[0].mxu0
      %v348 = vadd.f32 0.0, %v347
      %v349 = vpop.f32.mrb[0].mxu0
      %v350 = vadd.f32 0.0, %v349
      %v351 = vpop.f32.mrb[0].mxu0
      %v352 = vadd.f32 0.0, %v351
      %v353 = vpop.f32.mrb[0].mxu0
      %v354 = vadd.f32 0.0, %v353
      %355 = vmatprep.mubr.bf16.mxu0 0
      %356 = vmatmul.mubr.bf16.gmra.mrb[0].mxu0 %v289
      %v357 = vpop.f32.mrb[0].mxu0
      %v358 = vadd.f32 0.0, %v357
      %v359 = vpop.f32.mrb[0].mxu0
      %v360 = vadd.f32 0.0, %v359
      %v361 = vpop.f32.mrb[0].mxu0
      %v362 = vadd.f32 0.0, %v361
      %v363 = vpop.f32.mrb[0].mxu0
      %v364 = vadd.f32 0.0, %v363
      %365 = vmatprep.mubr.bf16.mxu0 0
      %366 = vmatmul.mubr.bf16.gmra.mrb[0].mxu0 %v292
      %v367 = vpop.f32.mrb[0].mxu0
      %v368 = vpop.f32.mrb[0].mxu0
      %v369 = vadd.f32 0.0, %v368
      %v370 = vpop.f32.mrb[0].mxu0
      %v371 = vpop.f32.mrb[0].mxu0
      %372 = vdwg.mxu0
      %v373 = vadd.f32 %v329, %v334
      %v374 = vadd.f32 %v332, %v340
      %v375 = vadd.f32 %v338, %v344
      %v376 = vadd.f32 %v342, %v350
      %v377 = vadd.f32 %v348, %v354
      %v378 = vadd.f32 %v352, %v360
      %v379 = vadd.f32 %v358, %v364
      %v380 = vadd.f32 %v362, %v369
      %s381 = sadd.s32 %s195, 9
      %s382 = smul.addr %s381, 4
      %s383 = scalar_lea.vmem %s183, %s382
      %v384 = vld [vmem:[%s383] sm:$0xf]
      %v385 = vld [vmem:[%s383 + $0x4] sm:$0xf]
      %v386 = vld [vmem:[%s383 + $0x8] sm:$0xf]
      %v387 = vld [vmem:[%s383 + $0xc] sm:$0xf]
      %v388 = vld [vmem:[%s383 + $0x10] sm:$0xf]
      %v389 = vld [vmem:[%s383 + $0x14] sm:$0xf]
      %v390 = vld [vmem:[%s383 + $0x18] sm:$0xf]
      %v391 = vld [vmem:[%s383 + $0x1c] sm:$0xf]
      %v392 = vld [vmem:[%s383 + $0x20] sm:$0xf]
      %s393 = scalar_lea.vmem %s1, 64
      %v394 = vld [vmem:[%s393] sm:$0xff]
      %v395 = vld [vmem:[%s393 + $0x8] sm:$0xff]
      %v396 = vld [vmem:[%s393 + $0x10] sm:$0xff]
      %v397 = vld [vmem:[%s393 + $0x18] sm:$0xff]
      %v398 = vld [vmem:[%s393 + $0x20] sm:$0xff]
      %v399 = vld [vmem:[%s393 + $0x28] sm:$0xff]
      %v400 = vld [vmem:[%s393 + $0x30] sm:$0xff]
      %v401 = vld [vmem:[%s393 + $0x38] sm:$0xff]
      %v411 = vunpack.c.l.b16 %v384
      %v412 = vunpack.c.l.b16 %v385
      %v413 = vunpack.c.l.b16 %v386
      %v414 = vunpack.c.l.b16 %v387
      %v415 = vunpack.c.l.b16 %v388
      %v416 = vunpack.c.l.b16 %v389
      %v417 = vunpack.c.l.b16 %v390
      %v418 = vunpack.c.l.b16 %v391
      %v419 = vunpack.c.l.b16 %v392
      %v420 = vpack.c.b16 %v412, %v411
      %v421 = vpack.c.b16 %v414, %v413
      %v422 = vpack.c.b16 %v416, %v415
      %v423 = vpack.c.b16 %v418, %v417
      %v424 = vpack.c.b16 %v419, %v419
      %v433 = vunpack.c.l.b16 %v394
      %v434 = vunpack.c.h.b16 %v394
      %v435 = vunpack.c.l.b16 %v395
      %v436 = vunpack.c.h.b16 %v395
      %v437 = vunpack.c.l.b16 %v396
      %v438 = vunpack.c.h.b16 %v396
      %v439 = vunpack.c.l.b16 %v397
      %v440 = vunpack.c.h.b16 %v397
      %v441 = vunpack.c.l.b16 %v398
      %v442 = vunpack.c.h.b16 %v398
      %v443 = vunpack.c.l.b16 %v399
      %v444 = vunpack.c.h.b16 %v399
      %v445 = vunpack.c.l.b16 %v400
      %v446 = vunpack.c.h.b16 %v400
      %v447 = vunpack.c.l.b16 %v401
      %v448 = vunpack.c.h.b16 %v401
      %v449 = vpack.c.b16 %v435, %v433
      %v450 = vpack.c.b16 %v436, %v434
      %v451 = vpack.c.b16 %v439, %v437
      %v452 = vpack.c.b16 %v440, %v438
      %v453 = vpack.c.b16 %v443, %v441
      %v454 = vpack.c.b16 %v444, %v442
      %v455 = vpack.c.b16 %v447, %v445
      %v456 = vpack.c.b16 %v448, %v446
      %v466 = vsel %vm278, %v420, 0
      %v469 = vsel %vm278, %v421, 0
      %v472 = vsel %vm278, %v422, 0
      %v475 = vsel %vm278, %v423, 0
      %v478 = vsel %vm278, %v424, 0
      %480 = vmatprep.subr.bf16.mxu0 %v450
      %481 = vmatpush1.bf16.msra.mxu0 %v449
      %482 = vmatprep.subr.bf16.mxu0 %v452
      %483 = vmatpush1.bf16.msra.mxu0 %v451
      %484 = vmatprep.subr.bf16.mxu0 %v454
      %485 = vmatpush1.bf16.msra.mxu0 %v453
      %486 = vmatprep.subr.bf16.mxu0 %v456
      %487 = vmatpush1.bf16.msra.mxu0 %v455
      %488 = vmatprep.subr.bf16.mxu0 0
      %489 = vmatpush1.bf16.msra.mxu0 0
      %490 = vmatprep.subr.bf16.mxu0 0
      %491 = vmatpush1.bf16.msra.mxu0 0
      %492 = vmatprep.subr.bf16.mxu0 0
      %493 = vmatpush1.bf16.msra.mxu0 0
      %494 = vmatprep.subr.bf16.mxu0 0
      %495 = vmatpush1.bf16.msra.mxu0 0
      %496 = vmatprep.subr.bf16.mxu0 0
      %497 = vmatpush1.bf16.msra.mxu0 0
      %498 = vmatprep.subr.bf16.mxu0 0
      %499 = vmatpush1.bf16.msra.mxu0 0
      %500 = vmatprep.subr.bf16.mxu0 0
      %501 = vmatpush1.bf16.msra.mxu0 0
      %502 = vmatprep.subr.bf16.mxu0 0
      %503 = vmatpush1.bf16.msra.mxu0 0
      %504 = vmatprep.subr.bf16.mxu0 0
      %505 = vmatpush1.bf16.msra.mxu0 0
      %506 = vmatprep.subr.bf16.mxu0 0
      %507 = vmatpush1.bf16.msra.mxu0 0
      %508 = vmatprep.subr.bf16.mxu0 0
      %509 = vmatpush1.bf16.msra.mxu0 0
      %510 = vmatprep.subr.bf16.mxu0 0
      %511 = vmatpush1.bf16.msra.mxu0 0
      %512 = vmatprep.mubr.bf16.mxu0 0
      %513 = vmatmul.mubr.bf16.gmra.mrb[0].mxu0 %v466
      %v514 = vpop.f32.mrb[0].mxu0
      %v515 = vadd.f32 0.0, %v514
      %v516 = vpop.f32.mrb[0].mxu0
      %v517 = vpop.f32.mrb[0].mxu0
      %v518 = vadd.f32 0.0, %v517
      %v519 = vpop.f32.mrb[0].mxu0
      %v520 = vadd.f32 0.0, %v519
      %521 = vmatprep.mubr.bf16.mxu0 0
      %522 = vmatmul.mubr.bf16.gmra.mrb[0].mxu0 %v469
      %v523 = vpop.f32.mrb[0].mxu0
      %v524 = vadd.f32 0.0, %v523
      %v525 = vpop.f32.mrb[0].mxu0
      %v526 = vadd.f32 0.0, %v525
      %v527 = vpop.f32.mrb[0].mxu0
      %v528 = vadd.f32 0.0, %v527
      %v529 = vpop.f32.mrb[0].mxu0
      %v530 = vadd.f32 0.0, %v529
      %531 = vmatprep.mubr.bf16.mxu0 0
      %532 = vmatmul.mubr.bf16.gmra.mrb[0].mxu0 %v472
      %v533 = vpop.f32.mrb[0].mxu0
      %v534 = vadd.f32 0.0, %v533
      %v535 = vpop.f32.mrb[0].mxu0
      %v536 = vadd.f32 0.0, %v535
      %v537 = vpop.f32.mrb[0].mxu0
      %v538 = vadd.f32 0.0, %v537
      %v539 = vpop.f32.mrb[0].mxu0
      %v540 = vadd.f32 0.0, %v539
      %541 = vmatprep.mubr.bf16.mxu0 0
      %542 = vmatmul.mubr.bf16.gmra.mrb[0].mxu0 %v475
      %v543 = vpop.f32.mrb[0].mxu0
      %v544 = vadd.f32 0.0, %v543
      %v545 = vpop.f32.mrb[0].mxu0
      %v546 = vadd.f32 0.0, %v545
      %v547 = vpop.f32.mrb[0].mxu0
      %v548 = vadd.f32 0.0, %v547
      %v549 = vpop.f32.mrb[0].mxu0
      %v550 = vadd.f32 0.0, %v549
      %551 = vmatprep.mubr.bf16.mxu0 0
      %552 = vmatmul.mubr.bf16.gmra.mrb[0].mxu0 %v478
      %v553 = vpop.f32.mrb[0].mxu0
      %v554 = vpop.f32.mrb[0].mxu0
      %v555 = vadd.f32 0.0, %v554
      %v556 = vpop.f32.mrb[0].mxu0
      %v557 = vpop.f32.mrb[0].mxu0
      %558 = vdwg.mxu0
      %v559 = vadd.f32 %v515, %v520
      %v560 = vadd.f32 %v518, %v526
      %v561 = vadd.f32 %v524, %v530
      %v562 = vadd.f32 %v528, %v536
      %v563 = vadd.f32 %v534, %v540
      %v564 = vadd.f32 %v538, %v546
      %v565 = vadd.f32 %v544, %v550
      %v566 = vadd.f32 %v548, %v555
      %v567 = vadd.f32 %v373, %v559
      %v568 = vadd.f32 %v374, %v560
      %v569 = vadd.f32 %v375, %v561
      %v570 = vadd.f32 %v376, %v562
      %v571 = vadd.f32 %v377, %v563
      %v572 = vadd.f32 %v378, %v564
      %v573 = vadd.f32 %v379, %v565
      %v574 = vadd.f32 %v380, %v566
      %v575 = vld [vmem:[%s2] sm:$0x1]
      %v577 = vlaneseq
      %v578 = vshrl.u32 %v577, 7
      %v579 = vsub.s32 0, %v578
      %v580 = vrot.slane %v575, %v579
      %v582 = vadd.f32 %v567, %v580
      %v583 = vadd.f32 %v568, %v580
      %v584 = vadd.f32 %v569, %v580
      %v585 = vadd.f32 %v570, %v580
      %v586 = vadd.f32 %v571, %v580
      %v587 = vadd.f32 %v572, %v580
      %v588 = vadd.f32 %v573, %v580
      %v589 = vadd.f32 %v574, %v580
      %v590 = vmax.f32 %v582, 0.0
      %v591 = vmax.f32 %v583, 0.0
      %v592 = vmax.f32 %v584, 0.0
      %v593 = vmax.f32 %v585, 0.0
      %v594 = vmax.f32 %v586, 0.0
      %v595 = vmax.f32 %v587, 0.0
      %v596 = vmax.f32 %v588, 0.0
      %v597 = vmax.f32 %v589, 0.0
      %v598 = vpack.c.bf16 %v590, %v590
      %v599 = vpack.c.bf16 %v591, %v591
      %v600 = vpack.c.bf16 %v592, %v592
      %v601 = vpack.c.bf16 %v593, %v593
      %v602 = vpack.c.bf16 %v594, %v594
      %v603 = vpack.c.bf16 %v595, %v595
      %v604 = vpack.c.bf16 %v596, %v596
      %v605 = vpack.c.bf16 %v597, %v597
      %606 = vst [vmem:[%s192] sm:$0xf] %v598
      %607 = vst [vmem:[%s192 + $0x4] sm:$0xf] %v599
      %608 = vst [vmem:[%s192 + $0x8] sm:$0xf] %v600
      %609 = vst [vmem:[%s192 + $0xc] sm:$0xf] %v601
      %610 = vst [vmem:[%s192 + $0x10] sm:$0xf] %v602
      %611 = vst [vmem:[%s192 + $0x14] sm:$0xf] %v603
      %612 = vst [vmem:[%s192 + $0x18] sm:$0xf] %v604
      %613 = vst [vmem:[%s192 + $0x1c] sm:$0xf] %v605
      %s614 = smul.u32 8, %s19
      %p615 = scmp.lt.s32.totalorder %s18, 1
      %s616 = scalar_select %p615, %s18, 1
      %p617 = scmp.lt.s32.totalorder %s614, 7
      %s618 = scalar_select %p617, %s614, 7
      %s619 = smul.addr %s616, 8
      %s620 = sadd.s32 %s618, %s619
      %s621 = smul.addr %s620, 4
      %s622 = scalar_lea.vmem %s3, %s621
      // Predicated region
      $region33: #{timm_backbone_forward.6} parent=31 // pred_check
        %p623 = pneg %p114
      $region34: #{timm_backbone_forward.6} parent=31 // pred_check_branch
        %625 = sbr.rel (%p623) target = $region36
      $region35: #{timm_backbone_forward.6} parent=31 // pred_region
        %s626 = smul.u32 8, %s19
      $region36: #{timm_backbone_forward.6} parent=31 // pred_fallthru
        _
    $region32: #{timm_backbone_forward.6} parent=5 // pred_fallthru
      _
    %p627 = scmp.le.s32.totalorder 2, %s9
    // Predicated region
    $region37: #{timm_backbone_forward.6} parent=5 // pred_check
      %p628 = pneg %p627
    $region38: #{timm_backbone_forward.6} parent=5 // pred_check_branch
      %630 = sbr.rel (%p628) target = $region40
    $region39: #{timm_backbone_forward.6} parent=5 // pred_region
      %s631 = ssub.s32 %s9, 2
      // Predicated region
      $region41: #{timm_backbone_forward.6} parent=39 // pred_check
        %p632 = pneg %p120
      $region42: #{timm_backbone_forward.6} parent=39 // pred_check_branch
        %634 = sbr.rel (%p632) target = $region44
      $region43: #{timm_backbone_forward.6} parent=39 // pred_region
        %s635 = smul.u32 8, %s21
        %p636 = scmp.lt.s32.totalorder %s20, 1
        %s637 = scalar_select %p636, %s20, 1
        %p638 = scmp.lt.s32.totalorder %s635, 7
        %s639 = scalar_select %p638, %s635, 7
        %s640 = smul.addr %s637, 8
        %s641 = sadd.s32 %s639, %s640
        %s642 = smul.addr %s641, 4
        %s643 = scalar_lea.vmem %s3, %s642
      $region44: #{timm_backbone_forward.6} parent=39 // pred_fallthru
        _
    $region40: #{timm_backbone_forward.6} parent=5 // pred_fallthru
      _
  $region6: #{timm_backbone_forward.6} parent=0 // loop_footer
    %s13 = sadd.s32 1, %s9
  $region7: #{timm_backbone_forward.6} parent=0 // loop_footer_branch
    %8 = sbr.rel target = $region3
  $region8: #{timm_backbone_forward.6} parent=0 // loop_exit
    _

// kernel: timm_backbone_forward.7
$region0: #{timm_backbone_forward.7}
  #allocation0 [shape = 'u32[]', space=smem, size = 0x4, offset = 0x4, fixed_abs, tag = 'smem constant byte address 0x4 - core index']
  #allocation1 [shape = 'u32[144,128]{1,0:T(1,128)}', space=vmem, size = 0x12000, scoped, tag = 'internal scratch']
  %s0 = inlined_call_operand.vmem [shape: bf16[2,2,5,8,128], index: 0, kind: input, shape index: {}]
  %s1 = inlined_call_operand.vmem [shape: bf16[2,128,256], index: 1, kind: input, shape index: {}]
  %s2 = inlined_call_operand.vmem [shape: f32[1,128], index: 2, kind: input, shape index: {}]
  %s3 = inlined_call_operand.vmem [shape: bf16[2,4,8,128], index: 3, kind: output, shape index: {}]
  %s4 = sld [smem:[#allocation0]]
  $region45: #{timm_backbone_forward.7} parent=0
    _
  %s6 = ssub.s32 1, %s4
  %s7 = scalar_select 0, %s6, %s4
  loop: start=0, step=1, limit=4
  $region2: #{timm_backbone_forward.7} parent=0 // loop_pre_header
    _
  $region3: #{timm_backbone_forward.7} parent=0 // loop_header
    %s9 = sphi 0, %s13
    %p10 = scmp.ge.s32.totalorder %s9, 4
    %s16 = sphi 0, %s28
    %s17 = sphi 0, %s24
    %s18 = sphi 0, %s16
    %s19 = sphi 0, %s17
    %s20 = sphi 0, %s18
    %s21 = sphi 0, %s19
    %s31 = sphi 0, %s33
    %s34 = sphi 0, %s31
    %s35 = sphi 0, %s34
    %s51 = sphi 0, %s35
    %s55 = sphi 0, %s55
    %s57 = sphi 0, %s55
    %s58 = sphi 0, %s57
    %s72 = sphi 0, %s58
    %s76 = sphi 0, %s76
    %s78 = sphi 0, %s76
    %s79 = sphi 0, %s78
    %s93 = sphi 0, %s79
    %s101 = sphi 0, %s103
    %s104 = sphi 0, %s101
    %s105 = sphi 0, %s104
    %s121 = sphi 0, %s105
  $region4: #{timm_backbone_forward.7} parent=0 // loop_header_branch
    %12 = sbr.rel (%p10) target = $region8
  $region5: #{timm_backbone_forward.7} parent=0 // loop_body
    %s14 = ssub.s32 %s9, 1
    %s15 = ssub.s32 %s9, 2
    %s22 = sadd.s32 1, %s17
    %p23 = scmp.ge.s32.totalorder %s22, 1
    %s24 = scalar_select %p23, 0, %s22
    %s25 = sadd.s32 1, %s16
    %s26 = scalar_select %p23, %s25, %s16
    %p27 = scmp.ge.s32.totalorder %s26, 2
    %s28 = scalar_select %p27, 0, %s26
    %s29 = ssub.s32 %s16, %s28
    %p30 = scmp.eq.s32.totalorder %s29, 0
    %s32 = sadd.s32 %s31, 1
    %s33 = scalar_select %p30, %s31, %s32
    %p36 = pneg %p30
    %p37 = scmp.eq.s32.totalorder %s9, 1
    %p38 = por %p36, %p37
    %p39 = scmp.ne.s32.totalorder %s31, %s34
    %p40 = scmp.eq.s32.totalorder %s9, 0
    %p41 = por %p39, %p40
    %p42 = scmp.ne.s32.totalorder %s31, %s34
    %p43 = scmp.eq.s32.totalorder %s14, 1
    %p44 = por %p42, %p43
    %p45 = scmp.ne.s32.totalorder %s34, %s35
    %p46 = scmp.eq.s32.totalorder %s14, 0
    %p47 = por %p45, %p46
    %p48 = scmp.ne.s32.totalorder %s34, %s35
    %p49 = scmp.eq.s32.totalorder %s15, 1
    %p50 = por %p48, %p49
    %p52 = scmp.ne.s32.totalorder %s35, %s51
    %p53 = scmp.eq.s32.totalorder %s15, 0
    %p54 = por %p52, %p53
    %s56 = sadd.s32 %s55, 1
    %p59 = scmp.eq.s32.totalorder %s9, 1
    %p60 = scmp.ne.s32.totalorder %s55, %s57
    %p61 = scmp.eq.s32.totalorder %s9, 0
    %p62 = por %p60, %p61
    %p63 = scmp.ne.s32.totalorder %s55, %s57
    %p64 = scmp.eq.s32.totalorder %s14, 1
    %p65 = por %p63, %p64
    %p66 = scmp.ne.s32.totalorder %s57, %s58
    %p67 = scmp.eq.s32.totalorder %s14, 0
    %p68 = por %p66, %p67
    %p69 = scmp.ne.s32.totalorder %s57, %s58
    %p70 = scmp.eq.s32.totalorder %s15, 1
    %p71 = por %p69, %p70
    %p73 = scmp.ne.s32.totalorder %s58, %s72
    %p74 = scmp.eq.s32.totalorder %s15, 0
    %p75 = por %p73, %p74
    %s77 = sadd.s32 %s76, 1
    %p80 = scmp.eq.s32.totalorder %s9, 1
    %p81 = scmp.ne.s32.totalorder %s76, %s78
    %p82 = scmp.eq.s32.totalorder %s9, 0
    %p83 = por %p81, %p82
    %p84 = scmp.ne.s32.totalorder %s76, %s78
    %p85 = scmp.eq.s32.totalorder %s14, 1
    %p86 = por %p84, %p85
    %p87 = scmp.ne.s32.totalorder %s78, %s79
    %p88 = scmp.eq.s32.totalorder %s14, 0
    %p89 = por %p87, %p88
    %p90 = scmp.ne.s32.totalorder %s78, %s79
    %p91 = scmp.eq.s32.totalorder %s15, 1
    %p92 = por %p90, %p91
    %p94 = scmp.ne.s32.totalorder %s79, %s93
    %p95 = scmp.eq.s32.totalorder %s15, 0
    %p96 = por %p94, %p95
    %s97 = ssub.s32 %s16, %s28
    %s98 = ssub.s32 %s17, %s24
    %s99 = sor.u32 %s97, %s98
    %p100 = scmp.eq.s32.totalorder %s99, 0
    %s102 = sadd.s32 %s101, 1
    %s103 = scalar_select %p100, %s101, %s102
    %p106 = pneg %p100
    %p107 = scmp.eq.s32.totalorder %s9, 1
    %p108 = por %p106, %p107
    %p109 = scmp.ne.s32.totalorder %s101, %s104
    %p110 = scmp.eq.s32.totalorder %s9, 0
    %p111 = por %p109, %p110
    %p112 = scmp.ne.s32.totalorder %s101, %s104
    %p113 = scmp.eq.s32.totalorder %s14, 1
    %p114 = por %p112, %p113
    %p115 = scmp.ne.s32.totalorder %s104, %s105
    %p116 = scmp.eq.s32.totalorder %s14, 0
    %p117 = por %p115, %p116
    %p118 = scmp.ne.s32.totalorder %s104, %s105
    %p119 = scmp.eq.s32.totalorder %s15, 1
    %p120 = por %p118, %p119
    %p122 = scmp.ne.s32.totalorder %s105, %s121
    %p123 = scmp.eq.s32.totalorder %s15, 0
    %p124 = por %p122, %p123
    %p125 = scmp.le.s32.totalorder 1, %s9
    %p126 = scmp.lt.s32.totalorder %s9, 3
    %p127 = pnand %p125, %p126
    %p128 = pneg %p127
    // Predicated region
    $region9: #{timm_backbone_forward.7} parent=5 // pred_check
      _
    $region10: #{timm_backbone_forward.7} parent=5 // pred_check_branch
      %130 = sbr.rel (%p127) target = $region12
    $region11: #{timm_backbone_forward.7} parent=5 // pred_region
      %s131 = ssub.s32 %s9, 1
      // Predicated region
      $region13: #{timm_backbone_forward.7} parent=11 // pred_check
        %p132 = pneg %p47
      $region14: #{timm_backbone_forward.7} parent=11 // pred_check_branch
        %134 = sbr.rel (%p132) target = $region16
      $region15: #{timm_backbone_forward.7} parent=11 // pred_region
        %p135 = scmp.lt.s32.totalorder %s18, 1
        %s136 = scalar_select %p135, %s18, 1
        %s137 = smul.addr %s136, 10
        %s138 = smul.addr %s137, 4
        %s139 = scalar_lea.vmem %s0, %s138
      $region16: #{timm_backbone_forward.7} parent=11 // pred_fallthru
        _
      // Predicated region
      $region17: #{timm_backbone_forward.7} parent=11 // pred_check
        %p140 = pneg %p68
      $region18: #{timm_backbone_forward.7} parent=11 // pred_check_branch
        %142 = sbr.rel (%p140) target = $region20
      $region19: #{timm_backbone_forward.7} parent=11 // pred_region
        _
      $region20: #{timm_backbone_forward.7} parent=11 // pred_fallthru
        _
      // Predicated region
      $region21: #{timm_backbone_forward.7} parent=11 // pred_check
        %p143 = pneg %p89
      $region22: #{timm_backbone_forward.7} parent=11 // pred_check_branch
        %145 = sbr.rel (%p143) target = $region24
      $region23: #{timm_backbone_forward.7} parent=11 // pred_region
        _
      $region24: #{timm_backbone_forward.7} parent=11 // pred_fallthru
        _
    $region12: #{timm_backbone_forward.7} parent=5 // pred_fallthru
      _
    %p146 = scmp.lt.s32.totalorder %s9, 2
    // Predicated region
    $region25: #{timm_backbone_forward.7} parent=5 // pred_check
      %p147 = pneg %p146
    $region26: #{timm_backbone_forward.7} parent=5 // pred_check_branch
      %149 = sbr.rel (%p147) target = $region28
    $region27: #{timm_backbone_forward.7} parent=5 // pred_region
      _
    $region28: #{timm_backbone_forward.7} parent=5 // pred_fallthru
      _
    %p150 = scmp.le.s32.totalorder 1, %s9
    %p151 = scmp.lt.s32.totalorder %s9, 3
    %p152 = pnand %p150, %p151
    %p153 = pneg %p152
    // Predicated region
    $region29: #{timm_backbone_forward.7} parent=5 // pred_check
      _
    $region30: #{timm_backbone_forward.7} parent=5 // pred_check_branch
      %155 = sbr.rel (%p152) target = $region32
    $region31: #{timm_backbone_forward.7} parent=5 // pred_region
      %s156 = ssub.s32 %s9, 1
      %p157 = scmp.lt.s32.totalorder %s18, 1
      %s158 = scalar_select %p157, %s18, 1
      %s159 = smul.addr %s158, 10
      %s160 = smul.addr %s159, 4
      %s161 = scalar_lea.vmem %s0, %s160
      %p162 = pneg %p47
      %p163 = pneg %p44
      %p164 = pneg %p68
      %p165 = pneg %p65
      %p166 = pneg %p89
      %p167 = pneg %p86
      %p168 = pneg %p117
      %p169 = pneg %p114
      %s170 = smul.u32 4, %s19
      %p171 = scmp.lt.s32.totalorder %s18, 1
      %s172 = scalar_select %p171, %s18, 1
      %p173 = scmp.lt.s32.totalorder %s170, 3
      %s174 = scalar_select %p173, %s170, 3
      %s175 = smul.addr %s172, 4
      %s176 = sadd.s32 %s174, %s175
      %s177 = smul.addr %s176, 4
      %s178 = scalar_lea.vmem %s3, %s177
      %p179 = scmp.lt.s32.totalorder %s18, 1
      %s180 = scalar_select %p179, %s18, 1
      %s181 = smul.addr %s180, 10
      %s182 = smul.addr %s181, 4
      %s183 = scalar_lea.vmem %s0, %s182
      %s184 = smul.u32 4, %s19
      %p185 = scmp.lt.s32.totalorder %s18, 1
      %s186 = scalar_select %p185, %s18, 1
      %p187 = scmp.lt.s32.totalorder %s184, 3
      %s188 = scalar_select %p187, %s184, 3
      %s189 = smul.addr %s186, 4
      %s190 = sadd.s32 %s188, %s189
      %s191 = smul.addr %s190, 4
      %s192 = scalar_lea.vmem %s3, %s191
      %s193 = smul.u32 4, %s19
      %s195 = smul.u32 %s19, 4
      %s196 = smul.addr %s195, 4
      %s197 = scalar_lea.vmem %s183, %s196
      %v198 = vld [vmem:[%s197] sm:$0xf]
      %v199 = vld [vmem:[%s197 + $0x4] sm:$0xf]
      %v200 = vld [vmem:[%s197 + $0x8] sm:$0xf]
      %v201 = vld [vmem:[%s197 + $0xc] sm:$0xf]
      %v202 = vld [vmem:[%s197 + $0x10] sm:$0xf]
      %v203 = vld [vmem:[%s1] sm:$0xff]
      %v204 = vld [vmem:[%s1 + $0x8] sm:$0xff]
      %v205 = vld [vmem:[%s1 + $0x10] sm:$0xff]
      %v206 = vld [vmem:[%s1 + $0x18] sm:$0xff]
      %v207 = vld [vmem:[%s1 + $0x20] sm:$0xff]
      %v208 = vld [vmem:[%s1 + $0x28] sm:$0xff]
      %v209 = vld [vmem:[%s1 + $0x30] sm:$0xff]
      %v210 = vld [vmem:[%s1 + $0x38] sm:$0xff]
      %v211 = vld [vmem:[%s1 + $0x40] sm:$0xff]
      %v212 = vld [vmem:[%s1 + $0x48] sm:$0xff]
      %v213 = vld [vmem:[%s1 + $0x50] sm:$0xff]
      %v214 = vld [vmem:[%s1 + $0x58] sm:$0xff]
      %v215 = vld [vmem:[%s1 + $0x60] sm:$0xff]
      %v216 = vld [vmem:[%s1 + $0x68] sm:$0xff]
      %v217 = vld [vmem:[%s1 + $0x70] sm:$0xff]
      %v218 = vld [vmem:[%s1 + $0x78] sm:$0xff]
      %v224 = vunpack.c.l.b16 %v198
      %v225 = vunpack.c.l.b16 %v199
      %v226 = vunpack.c.l.b16 %v200
      %v227 = vunpack.c.l.b16 %v201
      %v228 = vunpack.c.l.b16 %v202
      %v229 = vpack.c.b16 %v225, %v224
      %v230 = vpack.c.b16 %v227, %v226
      %v231 = vpack.c.b16 %v228, %v228
      %v251 = vunpack.c.l.b16 %v203
      %v252 = vunpack.c.h.b16 %v203
      %v253 = vunpack.c.l.b16 %v204
      %v254 = vunpack.c.h.b16 %v204
      %v255 = vunpack.c.l.b16 %v205
      %v256 = vunpack.c.h.b16 %v205
      %v257 = vunpack.c.l.b16 %v206
      %v258 = vunpack.c.h.b16 %v206
      %v259 = vunpack.c.l.b16 %v207
      %v260 = vunpack.c.h.b16 %v207
      %v261 = vunpack.c.l.b16 %v208
      %v262 = vunpack.c.h.b16 %v208
      %v263 = vunpack.c.l.b16 %v209
      %v264 = vunpack.c.h.b16 %v209
      %v265 = vunpack.c.l.b16 %v210
      %v266 = vunpack.c.h.b16 %v210
      %v267 = vunpack.c.l.b16 %v211
      %v268 = vunpack.c.h.b16 %v211
      %v269 = vunpack.c.l.b16 %v212
      %v270 = vunpack.c.h.b16 %v212
      %v271 = vunpack.c.l.b16 %v213
      %v272 = vunpack.c.h.b16 %v213
      %v273 = vunpack.c.l.b16 %v214
      %v274 = vunpack.c.h.b16 %v214
      %v275 = vunpack.c.l.b16 %v215
      %v276 = vunpack.c.h.b16 %v215
      %v277 = vunpack.c.l.b16 %v216
      %v278 = vunpack.c.h.b16 %v216
      %v279 = vunpack.c.l.b16 %v217
      %v280 = vunpack.c.h.b16 %v217
      %v281 = vunpack.c.l.b16 %v218
      %v282 = vunpack.c.h.b16 %v218
      %v283 = vpack.c.b16 %v253, %v251
      %v284 = vpack.c.b16 %v254, %v252
      %v285 = vpack.c.b16 %v257, %v255
      %v286 = vpack.c.b16 %v258, %v256
      %v287 = vpack.c.b16 %v261, %v259
      %v288 = vpack.c.b16 %v262, %v260
      %v289 = vpack.c.b16 %v265, %v263
      %v290 = vpack.c.b16 %v266, %v264
      %v291 = vpack.c.b16 %v269, %v267
      %v292 = vpack.c.b16 %v270, %v268
      %v293 = vpack.c.b16 %v273, %v271
      %v294 = vpack.c.b16 %v274, %v272
      %v295 = vpack.c.b16 %v277, %v275
      %v296 = vpack.c.b16 %v278, %v276
      %v297 = vpack.c.b16 %v281, %v279
      %v298 = vpack.c.b16 %v282, %v280
      %315 = vmatprep.subr.bf16.mxu0 %v284
      %316 = vmatpush1.bf16.msra.mxu0 %v283
      %317 = vmatprep.subr.bf16.mxu0 %v286
      %318 = vmatpush1.bf16.msra.mxu0 %v285
      %319 = vmatprep.subr.bf16.mxu0 %v288
      %320 = vmatpush1.bf16.msra.mxu0 %v287
      %321 = vmatprep.subr.bf16.mxu0 %v290
      %322 = vmatpush1.bf16.msra.mxu0 %v289
      %323 = vmatprep.subr.bf16.mxu0 %v292
      %324 = vmatpush1.bf16.msra.mxu0 %v291
      %325 = vmatprep.subr.bf16.mxu0 %v294
      %326 = vmatpush1.bf16.msra.mxu0 %v293
      %327 = vmatprep.subr.bf16.mxu0 %v296
      %328 = vmatpush1.bf16.msra.mxu0 %v295
      %329 = vmatprep.subr.bf16.mxu0 %v298
      %330 = vmatpush1.bf16.msra.mxu0 %v297
      %331 = vmatprep.subr.bf16.mxu0 0
      %332 = vmatpush1.bf16.msra.mxu0 0
      %333 = vmatprep.subr.bf16.mxu0 0
      %334 = vmatpush1.bf16.msra.mxu0 0
      %335 = vmatprep.subr.bf16.mxu0 0
      %336 = vmatpush1.bf16.msra.mxu0 0
      %337 = vmatprep.subr.bf16.mxu0 0
      %338 = vmatpush1.bf16.msra.mxu0 0
      %339 = vmatprep.subr.bf16.mxu0 0
      %340 = vmatpush1.bf16.msra.mxu0 0
      %341 = vmatprep.subr.bf16.mxu0 0
      %342 = vmatpush1.bf16.msra.mxu0 0
      %343 = vmatprep.subr.bf16.mxu0 0
      %344 = vmatpush1.bf16.msra.mxu0 0
      %345 = vmatprep.subr.bf16.mxu0 0
      %346 = vmatpush1.bf16.msra.mxu0 0
      %347 = vmatprep.mubr.bf16.mxu0 0
      %348 = vmatmul.mubr.bf16.gmra.mrb[0].mxu0 %v229
      %v349 = vpop.f32.mrb[0].mxu0
      %v350 = vadd.f32 0.0, %v349
      %v351 = vpop.f32.mrb[0].mxu0
      %v352 = vpop.f32.mrb[0].mxu0
      %v353 = vadd.f32 0.0, %v352
      %v354 = vpop.f32.mrb[0].mxu0
      %v355 = vadd.f32 0.0, %v354
      %356 = vmatprep.mubr.bf16.mxu0 0
      %357 = vmatmul.mubr.bf16.gmra.mrb[0].mxu0 %v230
      %v358 = vpop.f32.mrb[0].mxu0
      %v359 = vadd.f32 0.0, %v358
      %v360 = vpop.f32.mrb[0].mxu0
      %v361 = vadd.f32 0.0, %v360
      %v362 = vpop.f32.mrb[0].mxu0
      %v363 = vadd.f32 0.0, %v362
      %v364 = vpop.f32.mrb[0].mxu0
      %v365 = vadd.f32 0.0, %v364
      %366 = vmatprep.mubr.bf16.mxu0 0
      %367 = vmatmul.mubr.bf16.gmra.mrb[0].mxu0 %v231
      %v368 = vpop.f32.mrb[0].mxu0
      %v369 = vpop.f32.mrb[0].mxu0
      %v370 = vadd.f32 0.0, %v369
      %v371 = vpop.f32.mrb[0].mxu0
      %v372 = vpop.f32.mrb[0].mxu0
      %373 = vdwg.mxu0
      %v374 = vadd.f32 %v350, %v355
      %v375 = vadd.f32 %v353, %v361
      %v376 = vadd.f32 %v359, %v365
      %v377 = vadd.f32 %v363, %v370
      %s378 = sadd.s32 %s195, 5
      %s379 = smul.addr %s378, 4
      %s380 = scalar_lea.vmem %s183, %s379
      %v381 = vld [vmem:[%s380] sm:$0xf]
      %v382 = vld [vmem:[%s380 + $0x4] sm:$0xf]
      %v383 = vld [vmem:[%s380 + $0x8] sm:$0xf]
      %v384 = vld [vmem:[%s380 + $0xc] sm:$0xf]
      %v385 = vld [vmem:[%s380 + $0x10] sm:$0xf]
      %s386 = scalar_lea.vmem %s1, 128
      %v387 = vld [vmem:[%s386] sm:$0xff]
      %v388 = vld [vmem:[%s386 + $0x8] sm:$0xff]
      %v389 = vld [vmem:[%s386 + $0x10] sm:$0xff]
      %v390 = vld [vmem:[%s386 + $0x18] sm:$0xff]
      %v391 = vld [vmem:[%s386 + $0x20] sm:$0xff]
      %v392 = vld [vmem:[%s386 + $0x28] sm:$0xff]
      %v393 = vld [vmem:[%s386 + $0x30] sm:$0xff]
      %v394 = vld [vmem:[%s386 + $0x38] sm:$0xff]
      %v395 = vld [vmem:[%s386 + $0x40] sm:$0xff]
      %v396 = vld [vmem:[%s386 + $0x48] sm:$0xff]
      %v397 = vld [vmem:[%s386 + $0x50] sm:$0xff]
      %v398 = vld [vmem:[%s386 + $0x58] sm:$0xff]
      %v399 = vld [vmem:[%s386 + $0x60] sm:$0xff]
      %v400 = vld [vmem:[%s386 + $0x68] sm:$0xff]
      %v401 = vld [vmem:[%s386 + $0x70] sm:$0xff]
      %v402 = vld [vmem:[%s386 + $0x78] sm:$0xff]
      %v408 = vunpack.c.l.b16 %v381
      %v409 = vunpack.c.l.b16 %v382
      %v410 = vunpack.c.l.b16 %v383
      %v411 = vunpack.c.l.b16 %v384
      %v412 = vunpack.c.l.b16 %v385
      %v413 = vpack.c.b16 %v409, %v408
      %v414 = vpack.c.b16 %v411, %v410
      %v415 = vpack.c.b16 %v412, %v412
      %v435 = vunpack.c.l.b16 %v387
      %v436 = vunpack.c.h.b16 %v387
      %v437 = vunpack.c.l.b16 %v388
      %v438 = vunpack.c.h.b16 %v388
      %v439 = vunpack.c.l.b16 %v389
      %v440 = vunpack.c.h.b16 %v389
      %v441 = vunpack.c.l.b16 %v390
      %v442 = vunpack.c.h.b16 %v390
      %v443 = vunpack.c.l.b16 %v391
      %v444 = vunpack.c.h.b16 %v391
      %v445 = vunpack.c.l.b16 %v392
      %v446 = vunpack.c.h.b16 %v392
      %v447 = vunpack.c.l.b16 %v393
      %v448 = vunpack.c.h.b16 %v393
      %v449 = vunpack.c.l.b16 %v394
      %v450 = vunpack.c.h.b16 %v394
      %v451 = vunpack.c.l.b16 %v395
      %v452 = vunpack.c.h.b16 %v395
      %v453 = vunpack.c.l.b16 %v396
      %v454 = vunpack.c.h.b16 %v396
      %v455 = vunpack.c.l.b16 %v397
      %v456 = vunpack.c.h.b16 %v397
      %v457 = vunpack.c.l.b16 %v398
      %v458 = vunpack.c.h.b16 %v398
      %v459 = vunpack.c.l.b16 %v399
      %v460 = vunpack.c.h.b16 %v399
      %v461 = vunpack.c.l.b16 %v400
      %v462 = vunpack.c.h.b16 %v400
      %v463 = vunpack.c.l.b16 %v401
      %v464 = vunpack.c.h.b16 %v401
      %v465 = vunpack.c.l.b16 %v402
      %v466 = vunpack.c.h.b16 %v402
      %v467 = vpack.c.b16 %v437, %v435
      %v468 = vpack.c.b16 %v438, %v436
      %v469 = vpack.c.b16 %v441, %v439
      %v470 = vpack.c.b16 %v442, %v440
      %v471 = vpack.c.b16 %v445, %v443
      %v472 = vpack.c.b16 %v446, %v444
      %v473 = vpack.c.b16 %v449, %v447
      %v474 = vpack.c.b16 %v450, %v448
      %v475 = vpack.c.b16 %v453, %v451
      %v476 = vpack.c.b16 %v454, %v452
      %v477 = vpack.c.b16 %v457, %v455
      %v478 = vpack.c.b16 %v458, %v456
      %v479 = vpack.c.b16 %v461, %v459
      %v480 = vpack.c.b16 %v462, %v460
      %v481 = vpack.c.b16 %v465, %v463
      %v482 = vpack.c.b16 %v466, %v464
      %499 = vmatprep.subr.bf16.mxu0 %v468
      %500 = vmatpush1.bf16.msra.mxu0 %v467
      %501 = vmatprep.subr.bf16.mxu0 %v470
      %502 = vmatpush1.bf16.msra.mxu0 %v469
      %503 = vmatprep.subr.bf16.mxu0 %v472
      %504 = vmatpush1.bf16.msra.mxu0 %v471
      %505 = vmatprep.subr.bf16.mxu0 %v474
      %506 = vmatpush1.bf16.msra.mxu0 %v473
      %507 = vmatprep.subr.bf16.mxu0 %v476
      %508 = vmatpush1.bf16.msra.mxu0 %v475
      %509 = vmatprep.subr.bf16.mxu0 %v478
      %510 = vmatpush1.bf16.msra.mxu0 %v477
      %511 = vmatprep.subr.bf16.mxu0 %v480
      %512 = vmatpush1.bf16.msra.mxu0 %v479
      %513 = vmatprep.subr.bf16.mxu0 %v482
      %514 = vmatpush1.bf16.msra.mxu0 %v481
      %515 = vmatprep.subr.bf16.mxu0 0
      %516 = vmatpush1.bf16.msra.mxu0 0
      %517 = vmatprep.subr.bf16.mxu0 0
      %518 = vmatpush1.bf16.msra.mxu0 0
      %519 = vmatprep.subr.bf16.mxu0 0
      %520 = vmatpush1.bf16.msra.mxu0 0
      %521 = vmatprep.subr.bf16.mxu0 0
      %522 = vmatpush1.bf16.msra.mxu0 0
      %523 = vmatprep.subr.bf16.mxu0 0
      %524 = vmatpush1.bf16.msra.mxu0 0
      %525 = vmatprep.subr.bf16.mxu0 0
      %526 = vmatpush1.bf16.msra.mxu0 0
      %527 = vmatprep.subr.bf16.mxu0 0
      %528 = vmatpush1.bf16.msra.mxu0 0
      %529 = vmatprep.subr.bf16.mxu0 0
      %530 = vmatpush1.bf16.msra.mxu0 0
      %531 = vmatprep.mubr.bf16.mxu0 0
      %532 = vmatmul.mubr.bf16.gmra.mrb[0].mxu0 %v413
      %v533 = vpop.f32.mrb[0].mxu0
      %v534 = vadd.f32 0.0, %v533
      %v535 = vpop.f32.mrb[0].mxu0
      %v536 = vpop.f32.mrb[0].mxu0
      %v537 = vadd.f32 0.0, %v536
      %v538 = vpop.f32.mrb[0].mxu0
      %v539 = vadd.f32 0.0, %v538
      %540 = vmatprep.mubr.bf16.mxu0 0
      %541 = vmatmul.mubr.bf16.gmra.mrb[0].mxu0 %v414
      %v542 = vpop.f32.mrb[0].mxu0
      %v543 = vadd.f32 0.0, %v542
      %v544 = vpop.f32.mrb[0].mxu0
      %v545 = vadd.f32 0.0, %v544
      %v546 = vpop.f32.mrb[0].mxu0
      %v547 = vadd.f32 0.0, %v546
      %v548 = vpop.f32.mrb[0].mxu0
      %v549 = vadd.f32 0.0, %v548
      %550 = vmatprep.mubr.bf16.mxu0 0
      %551 = vmatmul.mubr.bf16.gmra.mrb[0].mxu0 %v415
      %v552 = vpop.f32.mrb[0].mxu0
      %v553 = vpop.f32.mrb[0].mxu0
      %v554 = vadd.f32 0.0, %v553
      %v555 = vpop.f32.mrb[0].mxu0
      %v556 = vpop.f32.mrb[0].mxu0
      %557 = vdwg.mxu0
      %v558 = vadd.f32 %v534, %v539
      %v559 = vadd.f32 %v537, %v545
      %v560 = vadd.f32 %v543, %v549
      %v561 = vadd.f32 %v547, %v554
      %v562 = vadd.f32 %v374, %v558
      %v563 = vadd.f32 %v375, %v559
      %v564 = vadd.f32 %v376, %v560
      %v565 = vadd.f32 %v377, %v561
      %v566 = vld [vmem:[%s2] sm:$0x1]
      %v568 = vlaneseq
      %v569 = vshrl.u32 %v568, 7
      %v570 = vsub.s32 0, %v569
      %v571 = vrot.slane %v566, %v570
      %v573 = vadd.f32 %v562, %v571
      %v574 = vadd.f32 %v563, %v571
      %v575 = vadd.f32 %v564, %v571
      %v576 = vadd.f32 %v565, %v571
      %v577 = vmax.f32 %v573, 0.0
      %v578 = vmax.f32 %v574, 0.0
      %v579 = vmax.f32 %v575, 0.0
      %v580 = vmax.f32 %v576, 0.0
      %v581 = vpack.c.bf16 %v577, %v577
      %v582 = vpack.c.bf16 %v578, %v578
      %v583 = vpack.c.bf16 %v579, %v579
      %v584 = vpack.c.bf16 %v580, %v580
      %585 = vst [vmem:[%s192] sm:$0xf] %v581
      %586 = vst [vmem:[%s192 + $0x4] sm:$0xf] %v582
      %587 = vst [vmem:[%s192 + $0x8] sm:$0xf] %v583
      %588 = vst [vmem:[%s192 + $0xc] sm:$0xf] %v584
      %s589 = smul.u32 4, %s19
      %p590 = scmp.lt.s32.totalorder %s18, 1
      %s591 = scalar_select %p590, %s18, 1
      %p592 = scmp.lt.s32.totalorder %s589, 3
      %s593 = scalar_select %p592, %s589, 3
      %s594 = smul.addr %s591, 4
      %s595 = sadd.s32 %s593, %s594
      %s596 = smul.addr %s595, 4
      %s597 = scalar_lea.vmem %s3, %s596
      // Predicated region
      $region33: #{timm_backbone_forward.7} parent=31 // pred_check
        %p598 = pneg %p114
      $region34: #{timm_backbone_forward.7} parent=31 // pred_check_branch
        %600 = sbr.rel (%p598) target = $region36
      $region35: #{timm_backbone_forward.7} parent=31 // pred_region
        %s601 = smul.u32 4, %s19
      $region36: #{timm_backbone_forward.7} parent=31 // pred_fallthru
        _
    $region32: #{timm_backbone_forward.7} parent=5 // pred_fallthru
      _
    %p602 = scmp.le.s32.totalorder 2, %s9
    // Predicated region
    $region37: #{timm_backbone_forward.7} parent=5 // pred_check
      %p603 = pneg %p602
    $region38: #{timm_backbone_forward.7} parent=5 // pred_check_branch
      %605 = sbr.rel (%p603) target = $region40
    $region39: #{timm_backbone_forward.7} parent=5 // pred_region
      %s606 = ssub.s32 %s9, 2
      // Predicated region
      $region41: #{timm_backbone_forward.7} parent=39 // pred_check
        %p607 = pneg %p120
      $region42: #{timm_backbone_forward.7} parent=39 // pred_check_branch
        %609 = sbr.rel (%p607) target = $region44
      $region43: #{timm_backbone_forward.7} parent=39 // pred_region
        %s610 = smul.u32 4, %s21
        %p611 = scmp.lt.s32.totalorder %s20, 1
        %s612 = scalar_select %p611, %s20, 1
        %p613 = scmp.lt.s32.totalorder %s610, 3
        %s614 = scalar_select %p613, %s610, 3
        %s615 = smul.addr %s612, 4
        %s616 = sadd.s32 %s614, %s615
        %s617 = smul.addr %s616, 4
        %s618 = scalar_lea.vmem %s3, %s617
      $region44: #{timm_backbone_forward.7} parent=39 // pred_fallthru
        _
    $region40: #{timm_backbone_forward.7} parent=5 // pred_fallthru
      _
  $region6: #{timm_backbone_forward.7} parent=0 // loop_footer
    %s13 = sadd.s32 1, %s9
  $region7: #{timm_backbone_forward.7} parent=0 // loop_footer_branch
    %8 = sbr.rel target = $region3
  $region8: #{timm_backbone_forward.7} parent=0 // loop_exit
    _

// kernel: timm_backbone_forward.8
$region0: #{timm_backbone_forward.8}
  #allocation0 [shape = 'u32[]', space=smem, size = 0x4, offset = 0x4, fixed_abs, tag = 'smem constant byte address 0x4 - core index']
  #allocation1 [shape = 'u32[144,128]{1,0:T(1,128)}', space=vmem, size = 0x12000, scoped, tag = 'internal scratch']
  %s0 = inlined_call_operand.vmem [shape: bf16[2,2,3,8,256], index: 0, kind: input, shape index: {}]
  %s1 = inlined_call_operand.vmem [shape: bf16[2,256,256], index: 1, kind: input, shape index: {}]
  %s2 = inlined_call_operand.vmem [shape: f32[1,128], index: 2, kind: input, shape index: {}]
  %s3 = inlined_call_operand.vmem [shape: bf16[2,2,8,128], index: 3, kind: output, shape index: {}]
  %s4 = sld [smem:[#allocation0]]
  $region45: #{timm_backbone_forward.8} parent=0
    _
  %s6 = ssub.s32 1, %s4
  %s7 = scalar_select 0, %s6, %s4
  loop: start=0, step=1, limit=4
  $region2: #{timm_backbone_forward.8} parent=0 // loop_pre_header
    _
  $region3: #{timm_backbone_forward.8} parent=0 // loop_header
    %s9 = sphi 0, %s13
    %p10 = scmp.ge.s32.totalorder %s9, 4
    %s16 = sphi 0, %s28
    %s17 = sphi 0, %s24
    %s18 = sphi 0, %s16
    %s19 = sphi 0, %s17
    %s20 = sphi 0, %s18
    %s21 = sphi 0, %s19
    %s31 = sphi 0, %s33
    %s34 = sphi 0, %s31
    %s35 = sphi 0, %s34
    %s51 = sphi 0, %s35
    %s55 = sphi 0, %s55
    %s57 = sphi 0, %s55
    %s58 = sphi 0, %s57
    %s72 = sphi 0, %s58
    %s76 = sphi 0, %s76
    %s78 = sphi 0, %s76
    %s79 = sphi 0, %s78
    %s93 = sphi 0, %s79
    %s101 = sphi 0, %s103
    %s104 = sphi 0, %s101
    %s105 = sphi 0, %s104
    %s121 = sphi 0, %s105
  $region4: #{timm_backbone_forward.8} parent=0 // loop_header_branch
    %12 = sbr.rel (%p10) target = $region8
  $region5: #{timm_backbone_forward.8} parent=0 // loop_body
    %s14 = ssub.s32 %s9, 1
    %s15 = ssub.s32 %s9, 2
    %s22 = sadd.s32 1, %s17
    %p23 = scmp.ge.s32.totalorder %s22, 1
    %s24 = scalar_select %p23, 0, %s22
    %s25 = sadd.s32 1, %s16
    %s26 = scalar_select %p23, %s25, %s16
    %p27 = scmp.ge.s32.totalorder %s26, 2
    %s28 = scalar_select %p27, 0, %s26
    %s29 = ssub.s32 %s16, %s28
    %p30 = scmp.eq.s32.totalorder %s29, 0
    %s32 = sadd.s32 %s31, 1
    %s33 = scalar_select %p30, %s31, %s32
    %p36 = pneg %p30
    %p37 = scmp.eq.s32.totalorder %s9, 1
    %p38 = por %p36, %p37
    %p39 = scmp.ne.s32.totalorder %s31, %s34
    %p40 = scmp.eq.s32.totalorder %s9, 0
    %p41 = por %p39, %p40
    %p42 = scmp.ne.s32.totalorder %s31, %s34
    %p43 = scmp.eq.s32.totalorder %s14, 1
    %p44 = por %p42, %p43
    %p45 = scmp.ne.s32.totalorder %s34, %s35
    %p46 = scmp.eq.s32.totalorder %s14, 0
    %p47 = por %p45, %p46
    %p48 = scmp.ne.s32.totalorder %s34, %s35
    %p49 = scmp.eq.s32.totalorder %s15, 1
    %p50 = por %p48, %p49
    %p52 = scmp.ne.s32.totalorder %s35, %s51
    %p53 = scmp.eq.s32.totalorder %s15, 0
    %p54 = por %p52, %p53
    %s56 = sadd.s32 %s55, 1
    %p59 = scmp.eq.s32.totalorder %s9, 1
    %p60 = scmp.ne.s32.totalorder %s55, %s57
    %p61 = scmp.eq.s32.totalorder %s9, 0
    %p62 = por %p60, %p61
    %p63 = scmp.ne.s32.totalorder %s55, %s57
    %p64 = scmp.eq.s32.totalorder %s14, 1
    %p65 = por %p63, %p64
    %p66 = scmp.ne.s32.totalorder %s57, %s58
    %p67 = scmp.eq.s32.totalorder %s14, 0
    %p68 = por %p66, %p67
    %p69 = scmp.ne.s32.totalorder %s57, %s58
    %p70 = scmp.eq.s32.totalorder %s15, 1
    %p71 = por %p69, %p70
    %p73 = scmp.ne.s32.totalorder %s58, %s72
    %p74 = scmp.eq.s32.totalorder %s15, 0
    %p75 = por %p73, %p74
    %s77 = sadd.s32 %s76, 1
    %p80 = scmp.eq.s32.totalorder %s9, 1
    %p81 = scmp.ne.s32.totalorder %s76, %s78
    %p82 = scmp.eq.s32.totalorder %s9, 0
    %p83 = por %p81, %p82
    %p84 = scmp.ne.s32.totalorder %s76, %s78
    %p85 = scmp.eq.s32.totalorder %s14, 1
    %p86 = por %p84, %p85
    %p87 = scmp.ne.s32.totalorder %s78, %s79
    %p88 = scmp.eq.s32.totalorder %s14, 0
    %p89 = por %p87, %p88
    %p90 = scmp.ne.s32.totalorder %s78, %s79
    %p91 = scmp.eq.s32.totalorder %s15, 1
    %p92 = por %p90, %p91
    %p94 = scmp.ne.s32.totalorder %s79, %s93
    %p95 = scmp.eq.s32.totalorder %s15, 0
    %p96 = por %p94, %p95
    %s97 = ssub.s32 %s16, %s28
    %s98 = ssub.s32 %s17, %s24
    %s99 = sor.u32 %s97, %s98
    %p100 = scmp.eq.s32.totalorder %s99, 0
    %s102 = sadd.s32 %s101, 1
    %s103 = scalar_select %p100, %s101, %s102
    %p106 = pneg %p100
    %p107 = scmp.eq.s32.totalorder %s9, 1
    %p108 = por %p106, %p107
    %p109 = scmp.ne.s32.totalorder %s101, %s104
    %p110 = scmp.eq.s32.totalorder %s9, 0
    %p111 = por %p109, %p110
    %p112 = scmp.ne.s32.totalorder %s101, %s104
    %p113 = scmp.eq.s32.totalorder %s14, 1
    %p114 = por %p112, %p113
    %p115 = scmp.ne.s32.totalorder %s104, %s105
    %p116 = scmp.eq.s32.totalorder %s14, 0
    %p117 = por %p115, %p116
    %p118 = scmp.ne.s32.totalorder %s104, %s105
    %p119 = scmp.eq.s32.totalorder %s15, 1
    %p120 = por %p118, %p119
    %p122 = scmp.ne.s32.totalorder %s105, %s121
    %p123 = scmp.eq.s32.totalorder %s15, 0
    %p124 = por %p122, %p123
    %p125 = scmp.le.s32.totalorder 1, %s9
    %p126 = scmp.lt.s32.totalorder %s9, 3
    %p127 = pnand %p125, %p126
    %p128 = pneg %p127
    // Predicated region
    $region9: #{timm_backbone_forward.8} parent=5 // pred_check
      _
    $region10: #{timm_backbone_forward.8} parent=5 // pred_check_branch
      %130 = sbr.rel (%p127) target = $region12
    $region11: #{timm_backbone_forward.8} parent=5 // pred_region
      %s131 = ssub.s32 %s9, 1
      // Predicated region
      $region13: #{timm_backbone_forward.8} parent=11 // pred_check
        %p132 = pneg %p47
      $region14: #{timm_backbone_forward.8} parent=11 // pred_check_branch
        %134 = sbr.rel (%p132) target = $region16
      $region15: #{timm_backbone_forward.8} parent=11 // pred_region
        %p135 = scmp.lt.s32.totalorder %s18, 1
        %s136 = scalar_select %p135, %s18, 1
        %s137 = smul.addr %s136, 12
        %s138 = smul.addr %s137, 4
        %s139 = scalar_lea.vmem %s0, %s138
      $region16: #{timm_backbone_forward.8} parent=11 // pred_fallthru
        _
      // Predicated region
      $region17: #{timm_backbone_forward.8} parent=11 // pred_check
        %p140 = pneg %p68
      $region18: #{timm_backbone_forward.8} parent=11 // pred_check_branch
        %142 = sbr.rel (%p140) target = $region20
      $region19: #{timm_backbone_forward.8} parent=11 // pred_region
        _
      $region20: #{timm_backbone_forward.8} parent=11 // pred_fallthru
        _
      // Predicated region
      $region21: #{timm_backbone_forward.8} parent=11 // pred_check
        %p143 = pneg %p89
      $region22: #{timm_backbone_forward.8} parent=11 // pred_check_branch
        %145 = sbr.rel (%p143) target = $region24
      $region23: #{timm_backbone_forward.8} parent=11 // pred_region
        _
      $region24: #{timm_backbone_forward.8} parent=11 // pred_fallthru
        _
    $region12: #{timm_backbone_forward.8} parent=5 // pred_fallthru
      _
    %p146 = scmp.lt.s32.totalorder %s9, 2
    // Predicated region
    $region25: #{timm_backbone_forward.8} parent=5 // pred_check
      %p147 = pneg %p146
    $region26: #{timm_backbone_forward.8} parent=5 // pred_check_branch
      %149 = sbr.rel (%p147) target = $region28
    $region27: #{timm_backbone_forward.8} parent=5 // pred_region
      _
    $region28: #{timm_backbone_forward.8} parent=5 // pred_fallthru
      _
    %p150 = scmp.le.s32.totalorder 1, %s9
    %p151 = scmp.lt.s32.totalorder %s9, 3
    %p152 = pnand %p150, %p151
    %p153 = pneg %p152
    // Predicated region
    $region29: #{timm_backbone_forward.8} parent=5 // pred_check
      _
    $region30: #{timm_backbone_forward.8} parent=5 // pred_check_branch
      %155 = sbr.rel (%p152) target = $region32
    $region31: #{timm_backbone_forward.8} parent=5 // pred_region
      %s156 = ssub.s32 %s9, 1
      %p157 = scmp.lt.s32.totalorder %s18, 1
      %s158 = scalar_select %p157, %s18, 1
      %s159 = smul.addr %s158, 12
      %s160 = smul.addr %s159, 4
      %s161 = scalar_lea.vmem %s0, %s160
      %p162 = pneg %p47
      %p163 = pneg %p44
      %p164 = pneg %p68
      %p165 = pneg %p65
      %p166 = pneg %p89
      %p167 = pneg %p86
      %p168 = pneg %p117
      %p169 = pneg %p114
      %s170 = smul.u32 2, %s19
      %p171 = scmp.lt.s32.totalorder %s18, 1
      %s172 = scalar_select %p171, %s18, 1
      %p173 = scmp.lt.s32.totalorder %s170, 1
      %s174 = scalar_select %p173, %s170, 1
      %s175 = smul.addr %s172, 2
      %s176 = sadd.s32 %s174, %s175
      %s177 = smul.addr %s176, 4
      %s178 = scalar_lea.vmem %s3, %s177
      %p179 = scmp.lt.s32.totalorder %s18, 1
      %s180 = scalar_select %p179, %s18, 1
      %s181 = smul.addr %s180, 12
      %s182 = smul.addr %s181, 4
      %s183 = scalar_lea.vmem %s0, %s182
      %s184 = smul.u32 2, %s19
      %p185 = scmp.lt.s32.totalorder %s18, 1
      %s186 = scalar_select %p185, %s18, 1
      %p187 = scmp.lt.s32.totalorder %s184, 1
      %s188 = scalar_select %p187, %s184, 1
      %s189 = smul.addr %s186, 2
      %s190 = sadd.s32 %s188, %s189
      %s191 = smul.addr %s190, 4
      %s192 = scalar_lea.vmem %s3, %s191
      %s193 = smul.u32 2, %s19
      %s194 = smul.u32 %s19, 2
      %s195 = smul.u32 %s194, 2
      %s196 = smul.addr %s195, 4
      %s197 = scalar_lea.vmem %s183, %s196
      %v198 = vld [vmem:[%s197] sm:$0xff]
      %v199 = vld [vmem:[%s197 + $0x8] sm:$0xff]
      %v200 = vld [vmem:[%s197 + $0x10] sm:$0xff]
      %v201 = vld [vmem:[%s1] sm:$0xff]
      %v202 = vld [vmem:[%s1 + $0x8] sm:$0xff]
      %v203 = vld [vmem:[%s1 + $0x10] sm:$0xff]
      %v204 = vld [vmem:[%s1 + $0x18] sm:$0xff]
      %v205 = vld [vmem:[%s1 + $0x20] sm:$0xff]
      %v206 = vld [vmem:[%s1 + $0x28] sm:$0xff]
      %v207 = vld [vmem:[%s1 + $0x30] sm:$0xff]
      %v208 = vld [vmem:[%s1 + $0x38] sm:$0xff]
      %v209 = vld [vmem:[%s1 + $0x40] sm:$0xff]
      %v210 = vld [vmem:[%s1 + $0x48] sm:$0xff]
      %v211 = vld [vmem:[%s1 + $0x50] sm:$0xff]
      %v212 = vld [vmem:[%s1 + $0x58] sm:$0xff]
      %v213 = vld [vmem:[%s1 + $0x60] sm:$0xff]
      %v214 = vld [vmem:[%s1 + $0x68] sm:$0xff]
      %v215 = vld [vmem:[%s1 + $0x70] sm:$0xff]
      %v216 = vld [vmem:[%s1 + $0x78] sm:$0xff]
      %v217 = vld [vmem:[%s1 + $0x80] sm:$0xff]
      %v218 = vld [vmem:[%s1 + $0x88] sm:$0xff]
      %v219 = vld [vmem:[%s1 + $0x90] sm:$0xff]
      %v220 = vld [vmem:[%s1 + $0x98] sm:$0xff]
      %v221 = vld [vmem:[%s1 + $0xa0] sm:$0xff]
      %v222 = vld [vmem:[%s1 + $0xa8] sm:$0xff]
      %v223 = vld [vmem:[%s1 + $0xb0] sm:$0xff]
      %v224 = vld [vmem:[%s1 + $0xb8] sm:$0xff]
      %v225 = vld [vmem:[%s1 + $0xc0] sm:$0xff]
      %v226 = vld [vmem:[%s1 + $0xc8] sm:$0xff]
      %v227 = vld [vmem:[%s1 + $0xd0] sm:$0xff]
      %v228 = vld [vmem:[%s1 + $0xd8] sm:$0xff]
      %v229 = vld [vmem:[%s1 + $0xe0] sm:$0xff]
      %v230 = vld [vmem:[%s1 + $0xe8] sm:$0xff]
      %v231 = vld [vmem:[%s1 + $0xf0] sm:$0xff]
      %v232 = vld [vmem:[%s1 + $0xf8] sm:$0xff]
      %v236 = vunpack.c.l.b16 %v198
      %v237 = vunpack.c.h.b16 %v198
      %v238 = vunpack.c.l.b16 %v199
      %v239 = vunpack.c.h.b16 %v199
      %v240 = vunpack.c.l.b16 %v200
      %v241 = vunpack.c.h.b16 %v200
      %v242 = vpack.c.b16 %v238, %v236
      %v243 = vpack.c.b16 %v239, %v237
      %v244 = vpack.c.b16 %v240, %v240
      %v245 = vpack.c.b16 %v241, %v241
      %v282 = vunpack.c.l.b16 %v201
      %v283 = vunpack.c.h.b16 %v201
      %v284 = vunpack.c.l.b16 %v202
      %v285 = vunpack.c.h.b16 %v202
      %v286 = vunpack.c.l.b16 %v203
      %v287 = vunpack.c.h.b16 %v203
      %v288 = vunpack.c.l.b16 %v204
      %v289 = vunpack.c.h.b16 %v204
      %v290 = vunpack.c.l.b16 %v205
      %v291 = vunpack.c.h.b16 %v205
      %v292 = vunpack.c.l.b16 %v206
      %v293 = vunpack.c.h.b16 %v206
      %v294 = vunpack.c.l.b16 %v207
      %v295 = vunpack.c.h.b16 %v207
      %v296 = vunpack.c.l.b16 %v208
      %v297 = vunpack.c.h.b16 %v208
      %v298 = vunpack.c.l.b16 %v209
      %v299 = vunpack.c.h.b16 %v209
      %v300 = vunpack.c.l.b16 %v210
      %v301 = vunpack.c.h.b16 %v210
      %v302 = vunpack.c.l.b16 %v211
      %v303 = vunpack.c.h.b16 %v211
      %v304 = vunpack.c.l.b16 %v212
      %v305 = vunpack.c.h.b16 %v212
      %v306 = vunpack.c.l.b16 %v213
      %v307 = vunpack.c.h.b16 %v213
      %v308 = vunpack.c.l.b16 %v214
      %v309 = vunpack.c.h.b16 %v214
      %v310 = vunpack.c.l.b16 %v215
      %v311 = vunpack.c.h.b16 %v215
      %v312 = vunpack.c.l.b16 %v216
      %v313 = vunpack.c.h.b16 %v216
      %v314 = vunpack.c.l.b16 %v217
      %v315 = vunpack.c.h.b16 %v217
      %v316 = vunpack.c.l.b16 %v218
      %v317 = vunpack.c.h.b16 %v218
      %v318 = vunpack.c.l.b16 %v219
      %v319 = vunpack.c.h.b16 %v219
      %v320 = vunpack.c.l.b16 %v220
      %v321 = vunpack.c.h.b16 %v220
      %v322 = vunpack.c.l.b16 %v221
      %v323 = vunpack.c.h.b16 %v221
      %v324 = vunpack.c.l.b16 %v222
      %v325 = vunpack.c.h.b16 %v222
      %v326 = vunpack.c.l.b16 %v223
      %v327 = vunpack.c.h.b16 %v223
      %v328 = vunpack.c.l.b16 %v224
      %v329 = vunpack.c.h.b16 %v224
      %v330 = vunpack.c.l.b16 %v225
      %v331 = vunpack.c.h.b16 %v225
      %v332 = vunpack.c.l.b16 %v226
      %v333 = vunpack.c.h.b16 %v226
      %v334 = vunpack.c.l.b16 %v227
      %v335 = vunpack.c.h.b16 %v227
      %v336 = vunpack.c.l.b16 %v228
      %v337 = vunpack.c.h.b16 %v228
      %v338 = vunpack.c.l.b16 %v229
      %v339 = vunpack.c.h.b16 %v229
      %v340 = vunpack.c.l.b16 %v230
      %v341 = vunpack.c.h.b16 %v230
      %v342 = vunpack.c.l.b16 %v231
      %v343 = vunpack.c.h.b16 %v231
      %v344 = vunpack.c.l.b16 %v232
      %v345 = vunpack.c.h.b16 %v232
      %v346 = vpack.c.b16 %v284, %v282
      %v347 = vpack.c.b16 %v285, %v283
      %v348 = vpack.c.b16 %v288, %v286
      %v349 = vpack.c.b16 %v289, %v287
      %v350 = vpack.c.b16 %v292, %v290
      %v351 = vpack.c.b16 %v293, %v291
      %v352 = vpack.c.b16 %v296, %v294
      %v353 = vpack.c.b16 %v297, %v295
      %v354 = vpack.c.b16 %v300, %v298
      %v355 = vpack.c.b16 %v301, %v299
      %v356 = vpack.c.b16 %v304, %v302
      %v357 = vpack.c.b16 %v305, %v303
      %v358 = vpack.c.b16 %v308, %v306
      %v359 = vpack.c.b16 %v309, %v307
      %v360 = vpack.c.b16 %v312, %v310
      %v361 = vpack.c.b16 %v313, %v311
      %v362 = vpack.c.b16 %v316, %v314
      %v363 = vpack.c.b16 %v317, %v315
      %v364 = vpack.c.b16 %v320, %v318
      %v365 = vpack.c.b16 %v321, %v319
      %v366 = vpack.c.b16 %v324, %v322
      %v367 = vpack.c.b16 %v325, %v323
      %v368 = vpack.c.b16 %v328, %v326
      %v369 = vpack.c.b16 %v329, %v327
      %v370 = vpack.c.b16 %v332, %v330
      %v371 = vpack.c.b16 %v333, %v331
      %v372 = vpack.c.b16 %v336, %v334
      %v373 = vpack.c.b16 %v337, %v335
      %v374 = vpack.c.b16 %v340, %v338
      %v375 = vpack.c.b16 %v341, %v339
      %v376 = vpack.c.b16 %v344, %v342
      %v377 = vpack.c.b16 %v345, %v343
      %410 = vmatprep.subr.bf16.mxu0 %v347
      %411 = vmatpush1.bf16.msra.mxu0 %v346
      %412 = vmatprep.subr.bf16.mxu0 %v349
      %413 = vmatpush1.bf16.msra.mxu0 %v348
      %414 = vmatprep.subr.bf16.mxu0 %v351
      %415 = vmatpush1.bf16.msra.mxu0 %v350
      %416 = vmatprep.subr.bf16.mxu0 %v353
      %417 = vmatpush1.bf16.msra.mxu0 %v352
      %418 = vmatprep.subr.bf16.mxu0 %v355
      %419 = vmatpush1.bf16.msra.mxu0 %v354
      %420 = vmatprep.subr.bf16.mxu0 %v357
      %421 = vmatpush1.bf16.msra.mxu0 %v356
      %422 = vmatprep.subr.bf16.mxu0 %v359
      %423 = vmatpush1.bf16.msra.mxu0 %v358
      %424 = vmatprep.subr.bf16.mxu0 %v361
      %425 = vmatpush1.bf16.msra.mxu0 %v360
      %426 = vmatprep.subr.bf16.mxu0 %v363
      %427 = vmatpush1.bf16.msra.mxu0 %v362
      %428 = vmatprep.subr.bf16.mxu0 %v365
      %429 = vmatpush1.bf16.msra.mxu0 %v364
      %430 = vmatprep.subr.bf16.mxu0 %v367
      %431 = vmatpush1.bf16.msra.mxu0 %v366
      %432 = vmatprep.subr.bf16.mxu0 %v369
      %433 = vmatpush1.bf16.msra.mxu0 %v368
      %434 = vmatprep.subr.bf16.mxu0 %v371
      %435 = vmatpush1.bf16.msra.mxu0 %v370
      %436 = vmatprep.subr.bf16.mxu0 %v373
      %437 = vmatpush1.bf16.msra.mxu0 %v372
      %438 = vmatprep.subr.bf16.mxu0 %v375
      %439 = vmatpush1.bf16.msra.mxu0 %v374
      %440 = vmatprep.subr.bf16.mxu0 %v377
      %441 = vmatpush1.bf16.msra.mxu0 %v376
      %442 = vmatprep.mubr.bf16.mxu0 %v243
      %443 = vmatmul.mubr.bf16.gmra.mrb[0].mxu0 %v242
      %v444 = vpop.f32.mrb[0].mxu0
      %v445 = vadd.f32 0.0, %v444
      %v446 = vpop.f32.mrb[0].mxu0
      %v447 = vpop.f32.mrb[0].mxu0
      %v448 = vadd.f32 0.0, %v447
      %v449 = vpop.f32.mrb[0].mxu0
      %v450 = vadd.f32 0.0, %v449
      %451 = vmatprep.mubr.bf16.mxu0 %v245
      %452 = vmatmul.mubr.bf16.gmra.mrb[0].mxu0 %v244
      %v453 = vpop.f32.mrb[0].mxu0
      %v454 = vpop.f32.mrb[0].mxu0
      %v455 = vadd.f32 0.0, %v454
      %v456 = vpop.f32.mrb[0].mxu0
      %v457 = vpop.f32.mrb[0].mxu0
      %458 = vdwg.mxu0
      %v459 = vadd.f32 %v445, %v450
      %v460 = vadd.f32 %v448, %v455
      %s461 = sadd.s32 %s195, 6
      %s462 = smul.addr %s461, 4
      %s463 = scalar_lea.vmem %s183, %s462
      %v464 = vld [vmem:[%s463] sm:$0xff]
      %v465 = vld [vmem:[%s463 + $0x8] sm:$0xff]
      %v466 = vld [vmem:[%s463 + $0x10] sm:$0xff]
      %s467 = scalar_lea.vmem %s1, 256
      %v468 = vld [vmem:[%s467] sm:$0xff]
      %v469 = vld [vmem:[%s467 + $0x8] sm:$0xff]
      %v470 = vld [vmem:[%s467 + $0x10] sm:$0xff]
      %v471 = vld [vmem:[%s467 + $0x18] sm:$0xff]
      %v472 = vld [vmem:[%s467 + $0x20] sm:$0xff]
      %v473 = vld [vmem:[%s467 + $0x28] sm:$0xff]
      %v474 = vld [vmem:[%s467 + $0x30] sm:$0xff]
      %v475 = vld [vmem:[%s467 + $0x38] sm:$0xff]
      %v476 = vld [vmem:[%s467 + $0x40] sm:$0xff]
      %v477 = vld [vmem:[%s467 + $0x48] sm:$0xff]
      %v478 = vld [vmem:[%s467 + $0x50] sm:$0xff]
      %v479 = vld [vmem:[%s467 + $0x58] sm:$0xff]
      %v480 = vld [vmem:[%s467 + $0x60] sm:$0xff]
      %v481 = vld [vmem:[%s467 + $0x68] sm:$0xff]
      %v482 = vld [vmem:[%s467 + $0x70] sm:$0xff]
      %v483 = vld [vmem:[%s467 + $0x78] sm:$0xff]
      %v484 = vld [vmem:[%s467 + $0x80] sm:$0xff]
      %v485 = vld [vmem:[%s467 + $0x88] sm:$0xff]
      %v486 = vld [vmem:[%s467 + $0x90] sm:$0xff]
      %v487 = vld [vmem:[%s467 + $0x98] sm:$0xff]
      %v488 = vld [vmem:[%s467 + $0xa0] sm:$0xff]
      %v489 = vld [vmem:[%s467 + $0xa8] sm:$0xff]
      %v490 = vld [vmem:[%s467 + $0xb0] sm:$0xff]
      %v491 = vld [vmem:[%s467 + $0xb8] sm:$0xff]
      %v492 = vld [vmem:[%s467 + $0xc0] sm:$0xff]
      %v493 = vld [vmem:[%s467 + $0xc8] sm:$0xff]
      %v494 = vld [vmem:[%s467 + $0xd0] sm:$0xff]
      %v495 = vld [vmem:[%s467 + $0xd8] sm:$0xff]
      %v496 = vld [vmem:[%s467 + $0xe0] sm:$0xff]
      %v497 = vld [vmem:[%s467 + $0xe8] sm:$0xff]
      %v498 = vld [vmem:[%s467 + $0xf0] sm:$0xff]
      %v499 = vld [vmem:[%s467 + $0xf8] sm:$0xff]
      %v503 = vunpack.c.l.b16 %v464
      %v504 = vunpack.c.h.b16 %v464
      %v505 = vunpack.c.l.b16 %v465
      %v506 = vunpack.c.h.b16 %v465
      %v507 = vunpack.c.l.b16 %v466
      %v508 = vunpack.c.h.b16 %v466
      %v509 = vpack.c.b16 %v505, %v503
      %v510 = vpack.c.b16 %v506, %v504
      %v511 = vpack.c.b16 %v507, %v507
      %v512 = vpack.c.b16 %v508, %v508
      %v549 = vunpack.c.l.b16 %v468
      %v550 = vunpack.c.h.b16 %v468
      %v551 = vunpack.c.l.b16 %v469
      %v552 = vunpack.c.h.b16 %v469
      %v553 = vunpack.c.l.b16 %v470
      %v554 = vunpack.c.h.b16 %v470
      %v555 = vunpack.c.l.b16 %v471
      %v556 = vunpack.c.h.b16 %v471
      %v557 = vunpack.c.l.b16 %v472
      %v558 = vunpack.c.h.b16 %v472
      %v559 = vunpack.c.l.b16 %v473
      %v560 = vunpack.c.h.b16 %v473
      %v561 = vunpack.c.l.b16 %v474
      %v562 = vunpack.c.h.b16 %v474
      %v563 = vunpack.c.l.b16 %v475
      %v564 = vunpack.c.h.b16 %v475
      %v565 = vunpack.c.l.b16 %v476
      %v566 = vunpack.c.h.b16 %v476
      %v567 = vunpack.c.l.b16 %v477
      %v568 = vunpack.c.h.b16 %v477
      %v569 = vunpack.c.l.b16 %v478
      %v570 = vunpack.c.h.b16 %v478
      %v571 = vunpack.c.l.b16 %v479
      %v572 = vunpack.c.h.b16 %v479
      %v573 = vunpack.c.l.b16 %v480
      %v574 = vunpack.c.h.b16 %v480
      %v575 = vunpack.c.l.b16 %v481
      %v576 = vunpack.c.h.b16 %v481
      %v577 = vunpack.c.l.b16 %v482
      %v578 = vunpack.c.h.b16 %v482
      %v579 = vunpack.c.l.b16 %v483
      %v580 = vunpack.c.h.b16 %v483
      %v581 = vunpack.c.l.b16 %v484
      %v582 = vunpack.c.h.b16 %v484
      %v583 = vunpack.c.l.b16 %v485
      %v584 = vunpack.c.h.b16 %v485
      %v585 = vunpack.c.l.b16 %v486
      %v586 = vunpack.c.h.b16 %v486
      %v587 = vunpack.c.l.b16 %v487
      %v588 = vunpack.c.h.b16 %v487
      %v589 = vunpack.c.l.b16 %v488
      %v590 = vunpack.c.h.b16 %v488
      %v591 = vunpack.c.l.b16 %v489
      %v592 = vunpack.c.h.b16 %v489
      %v593 = vunpack.c.l.b16 %v490
      %v594 = vunpack.c.h.b16 %v490
      %v595 = vunpack.c.l.b16 %v491
      %v596 = vunpack.c.h.b16 %v491
      %v597 = vunpack.c.l.b16 %v492
      %v598 = vunpack.c.h.b16 %v492
      %v599 = vunpack.c.l.b16 %v493
      %v600 = vunpack.c.h.b16 %v493
      %v601 = vunpack.c.l.b16 %v494
      %v602 = vunpack.c.h.b16 %v494
      %v603 = vunpack.c.l.b16 %v495
      %v604 = vunpack.c.h.b16 %v495
      %v605 = vunpack.c.l.b16 %v496
      %v606 = vunpack.c.h.b16 %v496
      %v607 = vunpack.c.l.b16 %v497
      %v608 = vunpack.c.h.b16 %v497
      %v609 = vunpack.c.l.b16 %v498
      %v610 = vunpack.c.h.b16 %v498
      %v611 = vunpack.c.l.b16 %v499
      %v612 = vunpack.c.h.b16 %v499
      %v613 = vpack.c.b16 %v551, %v549
      %v614 = vpack.c.b16 %v552, %v550
      %v615 = vpack.c.b16 %v555, %v553
      %v616 = vpack.c.b16 %v556, %v554
      %v617 = vpack.c.b16 %v559, %v557
      %v618 = vpack.c.b16 %v560, %v558
      %v619 = vpack.c.b16 %v563, %v561
      %v620 = vpack.c.b16 %v564, %v562
      %v621 = vpack.c.b16 %v567, %v565
      %v622 = vpack.c.b16 %v568, %v566
      %v623 = vpack.c.b16 %v571, %v569
      %v624 = vpack.c.b16 %v572, %v570
      %v625 = vpack.c.b16 %v575, %v573
      %v626 = vpack.c.b16 %v576, %v574
      %v627 = vpack.c.b16 %v579, %v577
      %v628 = vpack.c.b16 %v580, %v578
      %v629 = vpack.c.b16 %v583, %v581
      %v630 = vpack.c.b16 %v584, %v582
      %v631 = vpack.c.b16 %v587, %v585
      %v632 = vpack.c.b16 %v588, %v586
      %v633 = vpack.c.b16 %v591, %v589
      %v634 = vpack.c.b16 %v592, %v590
      %v635 = vpack.c.b16 %v595, %v593
      %v636 = vpack.c.b16 %v596, %v594
      %v637 = vpack.c.b16 %v599, %v597
      %v638 = vpack.c.b16 %v600, %v598
      %v639 = vpack.c.b16 %v603, %v601
      %v640 = vpack.c.b16 %v604, %v602
      %v641 = vpack.c.b16 %v607, %v605
      %v642 = vpack.c.b16 %v608, %v606
      %v643 = vpack.c.b16 %v611, %v609
      %v644 = vpack.c.b16 %v612, %v610
      %677 = vmatprep.subr.bf16.mxu0 %v614
      %678 = vmatpush1.bf16.msra.mxu0 %v613
      %679 = vmatprep.subr.bf16.mxu0 %v616
      %680 = vmatpush1.bf16.msra.mxu0 %v615
      %681 = vmatprep.subr.bf16.mxu0 %v618
      %682 = vmatpush1.bf16.msra.mxu0 %v617
      %683 = vmatprep.subr.bf16.mxu0 %v620
      %684 = vmatpush1.bf16.msra.mxu0 %v619
      %685 = vmatprep.subr.bf16.mxu0 %v622
      %686 = vmatpush1.bf16.msra.mxu0 %v621
      %687 = vmatprep.subr.bf16.mxu0 %v624
      %688 = vmatpush1.bf16.msra.mxu0 %v623
      %689 = vmatprep.subr.bf16.mxu0 %v626
      %690 = vmatpush1.bf16.msra.mxu0 %v625
      %691 = vmatprep.subr.bf16.mxu0 %v628
      %692 = vmatpush1.bf16.msra.mxu0 %v627
      %693 = vmatprep.subr.bf16.mxu0 %v630
      %694 = vmatpush1.bf16.msra.mxu0 %v629
      %695 = vmatprep.subr.bf16.mxu0 %v632
      %696 = vmatpush1.bf16.msra.mxu0 %v631
      %697 = vmatprep.subr.bf16.mxu0 %v634
      %698 = vmatpush1.bf16.msra.mxu0 %v633
      %699 = vmatprep.subr.bf16.mxu0 %v636
      %700 = vmatpush1.bf16.msra.mxu0 %v635
      %701 = vmatprep.subr.bf16.mxu0 %v638
      %702 = vmatpush1.bf16.msra.mxu0 %v637
      %703 = vmatprep.subr.bf16.mxu0 %v640
      %704 = vmatpush1.bf16.msra.mxu0 %v639
      %705 = vmatprep.subr.bf16.mxu0 %v642
      %706 = vmatpush1.bf16.msra.mxu0 %v641
      %707 = vmatprep.subr.bf16.mxu0 %v644
      %708 = vmatpush1.bf16.msra.mxu0 %v643
      %709 = vmatprep.mubr.bf16.mxu0 %v510
      %710 = vmatmul.mubr.bf16.gmra.mrb[0].mxu0 %v509
      %v711 = vpop.f32.mrb[0].mxu0
      %v712 = vadd.f32 0.0, %v711
      %v713 = vpop.f32.mrb[0].mxu0
      %v714 = vpop.f32.mrb[0].mxu0
      %v715 = vadd.f32 0.0, %v714
      %v716 = vpop.f32.mrb[0].mxu0
      %v717 = vadd.f32 0.0, %v716
      %718 = vmatprep.mubr.bf16.mxu0 %v512
      %719 = vmatmul.mubr.bf16.gmra.mrb[0].mxu0 %v511
      %v720 = vpop.f32.mrb[0].mxu0
      %v721 = vpop.f32.mrb[0].mxu0
      %v722 = vadd.f32 0.0, %v721
      %v723 = vpop.f32.mrb[0].mxu0
      %v724 = vpop.f32.mrb[0].mxu0
      %725 = vdwg.mxu0
      %v726 = vadd.f32 %v712, %v717
      %v727 = vadd.f32 %v715, %v722
      %v728 = vadd.f32 %v459, %v726
      %v729 = vadd.f32 %v460, %v727
      %v730 = vld [vmem:[%s2] sm:$0x1]
      %v732 = vlaneseq
      %v733 = vshrl.u32 %v732, 7
      %v734 = vsub.s32 0, %v733
      %v735 = vrot.slane %v730, %v734
      %v737 = vadd.f32 %v728, %v735
      %v738 = vadd.f32 %v729, %v735
      %v739 = vmax.f32 %v737, 0.0
      %v740 = vmax.f32 %v738, 0.0
      %v741 = vpack.c.bf16 %v739, %v739
      %v742 = vpack.c.bf16 %v740, %v740
      %743 = vst [vmem:[%s192] sm:$0xf] %v741
      %744 = vst [vmem:[%s192 + $0x4] sm:$0xf] %v742
      %s745 = smul.u32 2, %s19
      %p746 = scmp.lt.s32.totalorder %s18, 1
      %s747 = scalar_select %p746, %s18, 1
      %p748 = scmp.lt.s32.totalorder %s745, 1
      %s749 = scalar_select %p748, %s745, 1
      %s750 = smul.addr %s747, 2
      %s751 = sadd.s32 %s749, %s750
      %s752 = smul.addr %s751, 4
      %s753 = scalar_lea.vmem %s3, %s752
      // Predicated region
      $region33: #{timm_backbone_forward.8} parent=31 // pred_check
        %p754 = pneg %p114
      $region34: #{timm_backbone_forward.8} parent=31 // pred_check_branch
        %756 = sbr.rel (%p754) target = $region36
      $region35: #{timm_backbone_forward.8} parent=31 // pred_region
        %s757 = smul.u32 2, %s19
      $region36: #{timm_backbone_forward.8} parent=31 // pred_fallthru
        _
    $region32: #{timm_backbone_forward.8} parent=5 // pred_fallthru
      _
    %p758 = scmp.le.s32.totalorder 2, %s9
    // Predicated region
    $region37: #{timm_backbone_forward.8} parent=5 // pred_check
      %p759 = pneg %p758
    $region38: #{timm_backbone_forward.8} parent=5 // pred_check_branch
      %761 = sbr.rel (%p759) target = $region40
    $region39: #{timm_backbone_forward.8} parent=5 // pred_region
      %s762 = ssub.s32 %s9, 2
      // Predicated region
      $region41: #{timm_backbone_forward.8} parent=39 // pred_check
        %p763 = pneg %p120
      $region42: #{timm_backbone_forward.8} parent=39 // pred_check_branch
        %765 = sbr.rel (%p763) target = $region44
      $region43: #{timm_backbone_forward.8} parent=39 // pred_region
        %s766 = smul.u32 2, %s21
        %p767 = scmp.lt.s32.totalorder %s20, 1
        %s768 = scalar_select %p767, %s20, 1
        %p769 = scmp.lt.s32.totalorder %s766, 1
        %s770 = scalar_select %p769, %s766, 1
        %s771 = smul.addr %s768, 2
        %s772 = sadd.s32 %s770, %s771
        %s773 = smul.addr %s772, 4
        %s774 = scalar_lea.vmem %s3, %s773
      $region44: #{timm_backbone_forward.8} parent=39 // pred_fallthru
        _
    $region40: #{timm_backbone_forward.8} parent=5 // pred_fallthru
      _
  $region6: #{timm_backbone_forward.8} parent=0 // loop_footer
    %s13 = sadd.s32 1, %s9
  $region7: #{timm_backbone_forward.8} parent=0 // loop_footer_branch
    %8 = sbr.rel target = $region3
  $region8: #{timm_backbone_forward.8} parent=0 // loop_exit
    _

// kernel: timm_backbone_forward.9
$region0: #{timm_backbone_forward.9}
  #allocation0 [shape = 'u32[]', space=smem, size = 0x4, offset = 0x4, fixed_abs, tag = 'smem constant byte address 0x4 - core index']
  #allocation1 [shape = 'u32[144,128]{1,0:T(1,128)}', space=vmem, size = 0x12000, scoped, tag = 'internal scratch']
  %s0 = inlined_call_operand.vmem [shape: bf16[2,2,2,8,384], index: 0, kind: input, shape index: {}]
  %s1 = inlined_call_operand.vmem [shape: bf16[2,384,256], index: 1, kind: input, shape index: {}]
  %s2 = inlined_call_operand.vmem [shape: f32[1,128], index: 2, kind: input, shape index: {}]
  %s3 = inlined_call_operand.vmem [shape: bf16[2,1,8,128], index: 3, kind: output, shape index: {}]
  %s4 = sld [smem:[#allocation0]]
  $region45: #{timm_backbone_forward.9} parent=0
    _
  %s6 = ssub.s32 1, %s4
  %s7 = scalar_select 0, %s6, %s4
  loop: start=0, step=1, limit=4
  $region2: #{timm_backbone_forward.9} parent=0 // loop_pre_header
    _
  $region3: #{timm_backbone_forward.9} parent=0 // loop_header
    %s9 = sphi 0, %s13
    %p10 = scmp.ge.s32.totalorder %s9, 4
    %s16 = sphi 0, %s28
    %s17 = sphi 0, %s24
    %s18 = sphi 0, %s16
    %s19 = sphi 0, %s17
    %s20 = sphi 0, %s18
    %s21 = sphi 0, %s19
    %s31 = sphi 0, %s33
    %s34 = sphi 0, %s31
    %s35 = sphi 0, %s34
    %s51 = sphi 0, %s35
    %s55 = sphi 0, %s55
    %s57 = sphi 0, %s55
    %s58 = sphi 0, %s57
    %s72 = sphi 0, %s58
    %s76 = sphi 0, %s76
    %s78 = sphi 0, %s76
    %s79 = sphi 0, %s78
    %s93 = sphi 0, %s79
    %s101 = sphi 0, %s103
    %s104 = sphi 0, %s101
    %s105 = sphi 0, %s104
    %s121 = sphi 0, %s105
  $region4: #{timm_backbone_forward.9} parent=0 // loop_header_branch
    %12 = sbr.rel (%p10) target = $region8
  $region5: #{timm_backbone_forward.9} parent=0 // loop_body
    %s14 = ssub.s32 %s9, 1
    %s15 = ssub.s32 %s9, 2
    %s22 = sadd.s32 1, %s17
    %p23 = scmp.ge.s32.totalorder %s22, 1
    %s24 = scalar_select %p23, 0, %s22
    %s25 = sadd.s32 1, %s16
    %s26 = scalar_select %p23, %s25, %s16
    %p27 = scmp.ge.s32.totalorder %s26, 2
    %s28 = scalar_select %p27, 0, %s26
    %s29 = ssub.s32 %s16, %s28
    %p30 = scmp.eq.s32.totalorder %s29, 0
    %s32 = sadd.s32 %s31, 1
    %s33 = scalar_select %p30, %s31, %s32
    %p36 = pneg %p30
    %p37 = scmp.eq.s32.totalorder %s9, 1
    %p38 = por %p36, %p37
    %p39 = scmp.ne.s32.totalorder %s31, %s34
    %p40 = scmp.eq.s32.totalorder %s9, 0
    %p41 = por %p39, %p40
    %p42 = scmp.ne.s32.totalorder %s31, %s34
    %p43 = scmp.eq.s32.totalorder %s14, 1
    %p44 = por %p42, %p43
    %p45 = scmp.ne.s32.totalorder %s34, %s35
    %p46 = scmp.eq.s32.totalorder %s14, 0
    %p47 = por %p45, %p46
    %p48 = scmp.ne.s32.totalorder %s34, %s35
    %p49 = scmp.eq.s32.totalorder %s15, 1
    %p50 = por %p48, %p49
    %p52 = scmp.ne.s32.totalorder %s35, %s51
    %p53 = scmp.eq.s32.totalorder %s15, 0
    %p54 = por %p52, %p53
    %s56 = sadd.s32 %s55, 1
    %p59 = scmp.eq.s32.totalorder %s9, 1
    %p60 = scmp.ne.s32.totalorder %s55, %s57
    %p61 = scmp.eq.s32.totalorder %s9, 0
    %p62 = por %p60, %p61
    %p63 = scmp.ne.s32.totalorder %s55, %s57
    %p64 = scmp.eq.s32.totalorder %s14, 1
    %p65 = por %p63, %p64
    %p66 = scmp.ne.s32.totalorder %s57, %s58
    %p67 = scmp.eq.s32.totalorder %s14, 0
    %p68 = por %p66, %p67
    %p69 = scmp.ne.s32.totalorder %s57, %s58
    %p70 = scmp.eq.s32.totalorder %s15, 1
    %p71 = por %p69, %p70
    %p73 = scmp.ne.s32.totalorder %s58, %s72
    %p74 = scmp.eq.s32.totalorder %s15, 0
    %p75 = por %p73, %p74
    %s77 = sadd.s32 %s76, 1
    %p80 = scmp.eq.s32.totalorder %s9, 1
    %p81 = scmp.ne.s32.totalorder %s76, %s78
    %p82 = scmp.eq.s32.totalorder %s9, 0
    %p83 = por %p81, %p82
    %p84 = scmp.ne.s32.totalorder %s76, %s78
    %p85 = scmp.eq.s32.totalorder %s14, 1
    %p86 = por %p84, %p85
    %p87 = scmp.ne.s32.totalorder %s78, %s79
    %p88 = scmp.eq.s32.totalorder %s14, 0
    %p89 = por %p87, %p88
    %p90 = scmp.ne.s32.totalorder %s78, %s79
    %p91 = scmp.eq.s32.totalorder %s15, 1
    %p92 = por %p90, %p91
    %p94 = scmp.ne.s32.totalorder %s79, %s93
    %p95 = scmp.eq.s32.totalorder %s15, 0
    %p96 = por %p94, %p95
    %s97 = ssub.s32 %s16, %s28
    %s98 = ssub.s32 %s17, %s24
    %s99 = sor.u32 %s97, %s98
    %p100 = scmp.eq.s32.totalorder %s99, 0
    %s102 = sadd.s32 %s101, 1
    %s103 = scalar_select %p100, %s101, %s102
    %p106 = pneg %p100
    %p107 = scmp.eq.s32.totalorder %s9, 1
    %p108 = por %p106, %p107
    %p109 = scmp.ne.s32.totalorder %s101, %s104
    %p110 = scmp.eq.s32.totalorder %s9, 0
    %p111 = por %p109, %p110
    %p112 = scmp.ne.s32.totalorder %s101, %s104
    %p113 = scmp.eq.s32.totalorder %s14, 1
    %p114 = por %p112, %p113
    %p115 = scmp.ne.s32.totalorder %s104, %s105
    %p116 = scmp.eq.s32.totalorder %s14, 0
    %p117 = por %p115, %p116
    %p118 = scmp.ne.s32.totalorder %s104, %s105
    %p119 = scmp.eq.s32.totalorder %s15, 1
    %p120 = por %p118, %p119
    %p122 = scmp.ne.s32.totalorder %s105, %s121
    %p123 = scmp.eq.s32.totalorder %s15, 0
    %p124 = por %p122, %p123
    %p125 = scmp.le.s32.totalorder 1, %s9
    %p126 = scmp.lt.s32.totalorder %s9, 3
    %p127 = pnand %p125, %p126
    %p128 = pneg %p127
    // Predicated region
    $region9: #{timm_backbone_forward.9} parent=5 // pred_check
      _
    $region10: #{timm_backbone_forward.9} parent=5 // pred_check_branch
      %130 = sbr.rel (%p127) target = $region12
    $region11: #{timm_backbone_forward.9} parent=5 // pred_region
      %s131 = ssub.s32 %s9, 1
      // Predicated region
      $region13: #{timm_backbone_forward.9} parent=11 // pred_check
        %p132 = pneg %p47
      $region14: #{timm_backbone_forward.9} parent=11 // pred_check_branch
        %134 = sbr.rel (%p132) target = $region16
      $region15: #{timm_backbone_forward.9} parent=11 // pred_region
        %p135 = scmp.lt.s32.totalorder %s18, 1
        %s136 = scalar_select %p135, %s18, 1
        %s137 = smul.addr %s136, 12
        %s138 = smul.addr %s137, 4
        %s139 = scalar_lea.vmem %s0, %s138
      $region16: #{timm_backbone_forward.9} parent=11 // pred_fallthru
        _
      // Predicated region
      $region17: #{timm_backbone_forward.9} parent=11 // pred_check
        %p140 = pneg %p68
      $region18: #{timm_backbone_forward.9} parent=11 // pred_check_branch
        %142 = sbr.rel (%p140) target = $region20
      $region19: #{timm_backbone_forward.9} parent=11 // pred_region
        _
      $region20: #{timm_backbone_forward.9} parent=11 // pred_fallthru
        _
      // Predicated region
      $region21: #{timm_backbone_forward.9} parent=11 // pred_check
        %p143 = pneg %p89
      $region22: #{timm_backbone_forward.9} parent=11 // pred_check_branch
        %145 = sbr.rel (%p143) target = $region24
      $region23: #{timm_backbone_forward.9} parent=11 // pred_region
        _
      $region24: #{timm_backbone_forward.9} parent=11 // pred_fallthru
        _
    $region12: #{timm_backbone_forward.9} parent=5 // pred_fallthru
      _
    %p146 = scmp.lt.s32.totalorder %s9, 2
    // Predicated region
    $region25: #{timm_backbone_forward.9} parent=5 // pred_check
      %p147 = pneg %p146
    $region26: #{timm_backbone_forward.9} parent=5 // pred_check_branch
      %149 = sbr.rel (%p147) target = $region28
    $region27: #{timm_backbone_forward.9} parent=5 // pred_region
      _
    $region28: #{timm_backbone_forward.9} parent=5 // pred_fallthru
      _
    %p150 = scmp.le.s32.totalorder 1, %s9
    %p151 = scmp.lt.s32.totalorder %s9, 3
    %p152 = pnand %p150, %p151
    %p153 = pneg %p152
    // Predicated region
    $region29: #{timm_backbone_forward.9} parent=5 // pred_check
      _
    $region30: #{timm_backbone_forward.9} parent=5 // pred_check_branch
      %155 = sbr.rel (%p152) target = $region32
    $region31: #{timm_backbone_forward.9} parent=5 // pred_region
      %s156 = ssub.s32 %s9, 1
      %p157 = scmp.lt.s32.totalorder %s18, 1
      %s158 = scalar_select %p157, %s18, 1
      %s159 = smul.addr %s158, 12
      %s160 = smul.addr %s159, 4
      %s161 = scalar_lea.vmem %s0, %s160
      %p162 = pneg %p47
      %p163 = pneg %p44
      %p164 = pneg %p68
      %p165 = pneg %p65
      %p166 = pneg %p89
      %p167 = pneg %p86
      %p168 = pneg %p117
      %p169 = pneg %p114
      %p170 = scmp.lt.s32.totalorder %s18, 1
      %s171 = scalar_select %p170, %s18, 1
      %p172 = scmp.lt.s32.totalorder %s19, 0
      %s173 = scalar_select %p172, %s19, 0
      %s174 = sadd.s32 %s173, %s171
      %s175 = smul.addr %s174, 4
      %s176 = scalar_lea.vmem %s3, %s175
      %p177 = scmp.lt.s32.totalorder %s18, 1
      %s178 = scalar_select %p177, %s18, 1
      %s179 = smul.addr %s178, 12
      %s180 = smul.addr %s179, 4
      %s181 = scalar_lea.vmem %s0, %s180
      %p182 = scmp.lt.s32.totalorder %s18, 1
      %s183 = scalar_select %p182, %s18, 1
      %p184 = scmp.lt.s32.totalorder %s19, 0
      %s185 = scalar_select %p184, %s19, 0
      %s186 = sadd.s32 %s185, %s183
      %s187 = smul.addr %s186, 4
      %s188 = scalar_lea.vmem %s3, %s187
      %s190 = smul.u32 %s19, 3
      %s191 = smul.addr %s190, 4
      %s192 = scalar_lea.vmem %s181, %s191
      %v193 = vld [vmem:[%s192] sm:$0xff]
      %v194 = vld [vmem:[%s192 + $0x8] sm:$0xf]
      %v195 = vld [vmem:[%s192 + $0xc] sm:$0xff]
      %v196 = vld [vmem:[%s192 + $0x14] sm:$0xf]
      %v197 = vld [vmem:[%s1] sm:$0xff]
      %v198 = vld [vmem:[%s1 + $0x8] sm:$0xff]
      %v199 = vld [vmem:[%s1 + $0x10] sm:$0xff]
      %v200 = vld [vmem:[%s1 + $0x18] sm:$0xff]
      %v201 = vld [vmem:[%s1 + $0x20] sm:$0xff]
      %v202 = vld [vmem:[%s1 + $0x28] sm:$0xff]
      %v203 = vld [vmem:[%s1 + $0x30] sm:$0xff]
      %v204 = vld [vmem:[%s1 + $0x38] sm:$0xff]
      %v205 = vld [vmem:[%s1 + $0x40] sm:$0xff]
      %v206 = vld [vmem:[%s1 + $0x48] sm:$0xff]
      %v207 = vld [vmem:[%s1 + $0x50] sm:$0xff]
      %v208 = vld [vmem:[%s1 + $0x58] sm:$0xff]
      %v209 = vld [vmem:[%s1 + $0x60] sm:$0xff]
      %v210 = vld [vmem:[%s1 + $0x68] sm:$0xff]
      %v211 = vld [vmem:[%s1 + $0x70] sm:$0xff]
      %v212 = vld [vmem:[%s1 + $0x78] sm:$0xff]
      %v213 = vld [vmem:[%s1 + $0x80] sm:$0xff]
      %v214 = vld [vmem:[%s1 + $0x88] sm:$0xff]
      %v215 = vld [vmem:[%s1 + $0x90] sm:$0xff]
      %v216 = vld [vmem:[%s1 + $0x98] sm:$0xff]
      %v217 = vld [vmem:[%s1 + $0xa0] sm:$0xff]
      %v218 = vld [vmem:[%s1 + $0xa8] sm:$0xff]
      %v219 = vld [vmem:[%s1 + $0xb0] sm:$0xff]
      %v220 = vld [vmem:[%s1 + $0xb8] sm:$0xff]
      %v221 = vld [vmem:[%s1 + $0xc0] sm:$0xff]
      %v222 = vld [vmem:[%s1 + $0xc8] sm:$0xff]
      %v223 = vld [vmem:[%s1 + $0xd0] sm:$0xff]
      %v224 = vld [vmem:[%s1 + $0xd8] sm:$0xff]
      %v225 = vld [vmem:[%s1 + $0xe0] sm:$0xff]
      %v226 = vld [vmem:[%s1 + $0xe8] sm:$0xff]
      %v227 = vld [vmem:[%s1 + $0xf0] sm:$0xff]
      %v228 = vld [vmem:[%s1 + $0xf8] sm:$0xff]
      %v229 = vld [vmem:[%s1 + $0x100] sm:$0xff]
      %v230 = vld [vmem:[%s1 + $0x108] sm:$0xff]
      %v231 = vld [vmem:[%s1 + $0x110] sm:$0xff]
      %v232 = vld [vmem:[%s1 + $0x118] sm:$0xff]
      %v233 = vld [vmem:[%s1 + $0x120] sm:$0xff]
      %v234 = vld [vmem:[%s1 + $0x128] sm:$0xff]
      %v235 = vld [vmem:[%s1 + $0x130] sm:$0xff]
      %v236 = vld [vmem:[%s1 + $0x138] sm:$0xff]
      %v237 = vld [vmem:[%s1 + $0x140] sm:$0xff]
      %v238 = vld [vmem:[%s1 + $0x148] sm:$0xff]
      %v239 = vld [vmem:[%s1 + $0x150] sm:$0xff]
      %v240 = vld [vmem:[%s1 + $0x158] sm:$0xff]
      %v241 = vld [vmem:[%s1 + $0x160] sm:$0xff]
      %v242 = vld [vmem:[%s1 + $0x168] sm:$0xff]
      %v243 = vld [vmem:[%s1 + $0x170] sm:$0xff]
      %v244 = vld [vmem:[%s1 + $0x178] sm:$0xff]
      %v249 = vunpack.c.l.b16 %v193
      %v250 = vunpack.c.h.b16 %v193
      %v251 = vunpack.c.l.b16 %v194
      %v252 = vunpack.c.l.b16 %v195
      %v253 = vunpack.c.h.b16 %v195
      %v254 = vunpack.c.l.b16 %v196
      %v255 = vpack.c.b16 %v252, %v249
      %v256 = vpack.c.b16 %v253, %v250
      %v257 = vpack.c.b16 %v254, %v251
      %v309 = vunpack.c.l.b16 %v197
      %v310 = vunpack.c.h.b16 %v197
      %v311 = vunpack.c.l.b16 %v198
      %v312 = vunpack.c.h.b16 %v198
      %v313 = vunpack.c.l.b16 %v199
      %v314 = vunpack.c.h.b16 %v199
      %v315 = vunpack.c.l.b16 %v200
      %v316 = vunpack.c.h.b16 %v200
      %v317 = vunpack.c.l.b16 %v201
      %v318 = vunpack.c.h.b16 %v201
      %v319 = vunpack.c.l.b16 %v202
      %v320 = vunpack.c.h.b16 %v202
      %v321 = vunpack.c.l.b16 %v203
      %v322 = vunpack.c.h.b16 %v203
      %v323 = vunpack.c.l.b16 %v204
      %v324 = vunpack.c.h.b16 %v204
      %v325 = vunpack.c.l.b16 %v205
      %v326 = vunpack.c.h.b16 %v205
      %v327 = vunpack.c.l.b16 %v206
      %v328 = vunpack.c.h.b16 %v206
      %v329 = vunpack.c.l.b16 %v207
      %v330 = vunpack.c.h.b16 %v207
      %v331 = vunpack.c.l.b16 %v208
      %v332 = vunpack.c.h.b16 %v208
      %v333 = vunpack.c.l.b16 %v209
      %v334 = vunpack.c.h.b16 %v209
      %v335 = vunpack.c.l.b16 %v210
      %v336 = vunpack.c.h.b16 %v210
      %v337 = vunpack.c.l.b16 %v211
      %v338 = vunpack.c.h.b16 %v211
      %v339 = vunpack.c.l.b16 %v212
      %v340 = vunpack.c.h.b16 %v212
      %v341 = vunpack.c.l.b16 %v213
      %v342 = vunpack.c.h.b16 %v213
      %v343 = vunpack.c.l.b16 %v214
      %v344 = vunpack.c.h.b16 %v214
      %v345 = vunpack.c.l.b16 %v215
      %v346 = vunpack.c.h.b16 %v215
      %v347 = vunpack.c.l.b16 %v216
      %v348 = vunpack.c.h.b16 %v216
      %v349 = vunpack.c.l.b16 %v217
      %v350 = vunpack.c.h.b16 %v217
      %v351 = vunpack.c.l.b16 %v218
      %v352 = vunpack.c.h.b16 %v218
      %v353 = vunpack.c.l.b16 %v219
      %v354 = vunpack.c.h.b16 %v219
      %v355 = vunpack.c.l.b16 %v220
      %v356 = vunpack.c.h.b16 %v220
      %v357 = vunpack.c.l.b16 %v221
      %v358 = vunpack.c.h.b16 %v221
      %v359 = vunpack.c.l.b16 %v222
      %v360 = vunpack.c.h.b16 %v222
      %v361 = vunpack.c.l.b16 %v223
      %v362 = vunpack.c.h.b16 %v223
      %v363 = vunpack.c.l.b16 %v224
      %v364 = vunpack.c.h.b16 %v224
      %v365 = vunpack.c.l.b16 %v225
      %v366 = vunpack.c.h.b16 %v225
      %v367 = vunpack.c.l.b16 %v226
      %v368 = vunpack.c.h.b16 %v226
      %v369 = vunpack.c.l.b16 %v227
      %v370 = vunpack.c.h.b16 %v227
      %v371 = vunpack.c.l.b16 %v228
      %v372 = vunpack.c.h.b16 %v228
      %v373 = vunpack.c.l.b16 %v229
      %v374 = vunpack.c.h.b16 %v229
      %v375 = vunpack.c.l.b16 %v230
      %v376 = vunpack.c.h.b16 %v230
      %v377 = vunpack.c.l.b16 %v231
      %v378 = vunpack.c.h.b16 %v231
      %v379 = vunpack.c.l.b16 %v232
      %v380 = vunpack.c.h.b16 %v232
      %v381 = vunpack.c.l.b16 %v233
      %v382 = vunpack.c.h.b16 %v233
      %v383 = vunpack.c.l.b16 %v234
      %v384 = vunpack.c.h.b16 %v234
      %v385 = vunpack.c.l.b16 %v235
      %v386 = vunpack.c.h.b16 %v235
      %v387 = vunpack.c.l.b16 %v236
      %v388 = vunpack.c.h.b16 %v236
      %v389 = vunpack.c.l.b16 %v237
      %v390 = vunpack.c.h.b16 %v237
      %v391 = vunpack.c.l.b16 %v238
      %v392 = vunpack.c.h.b16 %v238
      %v393 = vunpack.c.l.b16 %v239
      %v394 = vunpack.c.h.b16 %v239
      %v395 = vunpack.c.l.b16 %v240
      %v396 = vunpack.c.h.b16 %v240
      %v397 = vunpack.c.l.b16 %v241
      %v398 = vunpack.c.h.b16 %v241
      %v399 = vunpack.c.l.b16 %v242
      %v400 = vunpack.c.h.b16 %v242
      %v401 = vunpack.c.l.b16 %v243
      %v402 = vunpack.c.h.b16 %v243
      %v403 = vunpack.c.l.b16 %v244
      %v404 = vunpack.c.h.b16 %v244
      %v405 = vpack.c.b16 %v311, %v309
      %v406 = vpack.c.b16 %v312, %v310
      %v407 = vpack.c.b16 %v315, %v313
      %v408 = vpack.c.b16 %v316, %v314
      %v409 = vpack.c.b16 %v319, %v317
      %v410 = vpack.c.b16 %v320, %v318
      %v411 = vpack.c.b16 %v323, %v321
      %v412 = vpack.c.b16 %v324, %v322
      %v413 = vpack.c.b16 %v327, %v325
      %v414 = vpack.c.b16 %v328, %v326
      %v415 = vpack.c.b16 %v331, %v329
      %v416 = vpack.c.b16 %v332, %v330
      %v417 = vpack.c.b16 %v335, %v333
      %v418 = vpack.c.b16 %v336, %v334
      %v419 = vpack.c.b16 %v339, %v337
      %v420 = vpack.c.b16 %v340, %v338
      %v421 = vpack.c.b16 %v343, %v341
      %v422 = vpack.c.b16 %v344, %v342
      %v423 = vpack.c.b16 %v347, %v345
      %v424 = vpack.c.b16 %v348, %v346
      %v425 = vpack.c.b16 %v351, %v349
      %v426 = vpack.c.b16 %v352, %v350
      %v427 = vpack.c.b16 %v355, %v353
      %v428 = vpack.c.b16 %v356, %v354
      %v429 = vpack.c.b16 %v359, %v357
      %v430 = vpack.c.b16 %v360, %v358
      %v431 = vpack.c.b16 %v363, %v361
      %v432 = vpack.c.b16 %v364, %v362
      %v433 = vpack.c.b16 %v367, %v365
      %v434 = vpack.c.b16 %v368, %v366
      %v435 = vpack.c.b16 %v371, %v369
      %v436 = vpack.c.b16 %v372, %v370
      %v437 = vpack.c.b16 %v375, %v373
      %v438 = vpack.c.b16 %v376, %v374
      %v439 = vpack.c.b16 %v379, %v377
      %v440 = vpack.c.b16 %v380, %v378
      %v441 = vpack.c.b16 %v383, %v381
      %v442 = vpack.c.b16 %v384, %v382
      %v443 = vpack.c.b16 %v387, %v385
      %v444 = vpack.c.b16 %v388, %v386
      %v445 = vpack.c.b16 %v391, %v389
      %v446 = vpack.c.b16 %v392, %v390
      %v447 = vpack.c.b16 %v395, %v393
      %v448 = vpack.c.b16 %v396, %v394
      %v449 = vpack.c.b16 %v399, %v397
      %v450 = vpack.c.b16 %v400, %v398
      %v451 = vpack.c.b16 %v403, %v401
      %v452 = vpack.c.b16 %v404, %v402
      %501 = vmatprep.subr.bf16.mxu0 %v406
      %502 = vmatpush1.bf16.msra.mxu0 %v405
      %503 = vmatprep.subr.bf16.mxu0 %v408
      %504 = vmatpush1.bf16.msra.mxu0 %v407
      %505 = vmatprep.subr.bf16.mxu0 %v410
      %506 = vmatpush1.bf16.msra.mxu0 %v409
      %507 = vmatprep.subr.bf16.mxu0 %v412
      %508 = vmatpush1.bf16.msra.mxu0 %v411
      %509 = vmatprep.subr.bf16.mxu0 %v414
      %510 = vmatpush1.bf16.msra.mxu0 %v413
      %511 = vmatprep.subr.bf16.mxu0 %v416
      %512 = vmatpush1.bf16.msra.mxu0 %v415
      %513 = vmatprep.subr.bf16.mxu0 %v418
      %514 = vmatpush1.bf16.msra.mxu0 %v417
      %515 = vmatprep.subr.bf16.mxu0 %v420
      %516 = vmatpush1.bf16.msra.mxu0 %v419
      %517 = vmatprep.subr.bf16.mxu0 %v422
      %518 = vmatpush1.bf16.msra.mxu0 %v421
      %519 = vmatprep.subr.bf16.mxu0 %v424
      %520 = vmatpush1.bf16.msra.mxu0 %v423
      %521 = vmatprep.subr.bf16.mxu0 %v426
      %522 = vmatpush1.bf16.msra.mxu0 %v425
      %523 = vmatprep.subr.bf16.mxu0 %v428
      %524 = vmatpush1.bf16.msra.mxu0 %v427
      %525 = vmatprep.subr.bf16.mxu0 %v430
      %526 = vmatpush1.bf16.msra.mxu0 %v429
      %527 = vmatprep.subr.bf16.mxu0 %v432
      %528 = vmatpush1.bf16.msra.mxu0 %v431
      %529 = vmatprep.subr.bf16.mxu0 %v434
      %530 = vmatpush1.bf16.msra.mxu0 %v433
      %531 = vmatprep.subr.bf16.mxu0 %v436
      %532 = vmatpush1.bf16.msra.mxu0 %v435
      %533 = vmatprep.mubr.bf16.mxu0 %v256
      %534 = vmatmul.mubr.bf16.gmra.mrb[0].mxu0 %v255
      %v535 = vpop.f32.mrb[0].mxu0
      %v536 = vadd.f32 0.0, %v535
      %v537 = vpop.f32.mrb[0].mxu0
      %v538 = vpop.f32.mrb[0].mxu0
      %v539 = vpop.f32.mrb[0].mxu0
      %v540 = vadd.f32 0.0, %v539
      %541 = vdwg.mxu0
      %542 = vmatprep.subr.bf16.mxu0 %v438
      %543 = vmatpush1.bf16.msra.mxu0 %v437
      %544 = vmatprep.subr.bf16.mxu0 %v440
      %545 = vmatpush1.bf16.msra.mxu0 %v439
      %546 = vmatprep.subr.bf16.mxu0 %v442
      %547 = vmatpush1.bf16.msra.mxu0 %v441
      %548 = vmatprep.subr.bf16.mxu0 %v444
      %549 = vmatpush1.bf16.msra.mxu0 %v443
      %550 = vmatprep.subr.bf16.mxu0 %v446
      %551 = vmatpush1.bf16.msra.mxu0 %v445
      %552 = vmatprep.subr.bf16.mxu0 %v448
      %553 = vmatpush1.bf16.msra.mxu0 %v447
      %554 = vmatprep.subr.bf16.mxu0 %v450
      %555 = vmatpush1.bf16.msra.mxu0 %v449
      %556 = vmatprep.subr.bf16.mxu0 %v452
      %557 = vmatpush1.bf16.msra.mxu0 %v451
      %558 = vmatprep.subr.bf16.mxu0 0
      %559 = vmatpush1.bf16.msra.mxu0 0
      %560 = vmatprep.subr.bf16.mxu0 0
      %561 = vmatpush1.bf16.msra.mxu0 0
      %562 = vmatprep.subr.bf16.mxu0 0
      %563 = vmatpush1.bf16.msra.mxu0 0
      %564 = vmatprep.subr.bf16.mxu0 0
      %565 = vmatpush1.bf16.msra.mxu0 0
      %566 = vmatprep.subr.bf16.mxu0 0
      %567 = vmatpush1.bf16.msra.mxu0 0
      %568 = vmatprep.subr.bf16.mxu0 0
      %569 = vmatpush1.bf16.msra.mxu0 0
      %570 = vmatprep.subr.bf16.mxu0 0
      %571 = vmatpush1.bf16.msra.mxu0 0
      %572 = vmatprep.subr.bf16.mxu0 0
      %573 = vmatpush1.bf16.msra.mxu0 0
      %574 = vmatprep.mubr.bf16.mxu0 0
      %575 = vmatmul.mubr.bf16.gmra.mrb[0].mxu0 %v257
      %v576 = vpop.f32.mrb[0].mxu0
      %v577 = vadd.f32 %v536, %v576
      %v578 = vpop.f32.mrb[0].mxu0
      %v579 = vpop.f32.mrb[0].mxu0
      %v580 = vpop.f32.mrb[0].mxu0
      %v581 = vadd.f32 %v540, %v580
      %582 = vdwg.mxu0
      %v583 = vadd.f32 %v577, %v581
      %s584 = sadd.s32 %s190, 6
      %s585 = smul.addr %s584, 4
      %s586 = scalar_lea.vmem %s181, %s585
      %v587 = vld [vmem:[%s586] sm:$0xff]
      %v588 = vld [vmem:[%s586 + $0x8] sm:$0xf]
      %v589 = vld [vmem:[%s586 + $0xc] sm:$0xff]
      %v590 = vld [vmem:[%s586 + $0x14] sm:$0xf]
      %s591 = scalar_lea.vmem %s1, 384
      %v592 = vld [vmem:[%s591] sm:$0xff]
      %v593 = vld [vmem:[%s591 + $0x8] sm:$0xff]
      %v594 = vld [vmem:[%s591 + $0x10] sm:$0xff]
      %v595 = vld [vmem:[%s591 + $0x18] sm:$0xff]
      %v596 = vld [vmem:[%s591 + $0x20] sm:$0xff]
      %v597 = vld [vmem:[%s591 + $0x28] sm:$0xff]
      %v598 = vld [vmem:[%s591 + $0x30] sm:$0xff]
      %v599 = vld [vmem:[%s591 + $0x38] sm:$0xff]
      %v600 = vld [vmem:[%s591 + $0x40] sm:$0xff]
      %v601 = vld [vmem:[%s591 + $0x48] sm:$0xff]
      %v602 = vld [vmem:[%s591 + $0x50] sm:$0xff]
      %v603 = vld [vmem:[%s591 + $0x58] sm:$0xff]
      %v604 = vld [vmem:[%s591 + $0x60] sm:$0xff]
      %v605 = vld [vmem:[%s591 + $0x68] sm:$0xff]
      %v606 = vld [vmem:[%s591 + $0x70] sm:$0xff]
      %v607 = vld [vmem:[%s591 + $0x78] sm:$0xff]
      %v608 = vld [vmem:[%s591 + $0x80] sm:$0xff]
      %v609 = vld [vmem:[%s591 + $0x88] sm:$0xff]
      %v610 = vld [vmem:[%s591 + $0x90] sm:$0xff]
      %v611 = vld [vmem:[%s591 + $0x98] sm:$0xff]
      %v612 = vld [vmem:[%s591 + $0xa0] sm:$0xff]
      %v613 = vld [vmem:[%s591 + $0xa8] sm:$0xff]
      %v614 = vld [vmem:[%s591 + $0xb0] sm:$0xff]
      %v615 = vld [vmem:[%s591 + $0xb8] sm:$0xff]
      %v616 = vld [vmem:[%s591 + $0xc0] sm:$0xff]
      %v617 = vld [vmem:[%s591 + $0xc8] sm:$0xff]
      %v618 = vld [vmem:[%s591 + $0xd0] sm:$0xff]
      %v619 = vld [vmem:[%s591 + $0xd8] sm:$0xff]
      %v620 = vld [vmem:[%s591 + $0xe0] sm:$0xff]
      %v621 = vld [vmem:[%s591 + $0xe8] sm:$0xff]
      %v622 = vld [vmem:[%s591 + $0xf0] sm:$0xff]
      %v623 = vld [vmem:[%s591 + $0xf8] sm:$0xff]
      %v624 = vld [vmem:[%s591 + $0x100] sm:$0xff]
      %v625 = vld [vmem:[%s591 + $0x108] sm:$0xff]
      %v626 = vld [vmem:[%s591 + $0x110] sm:$0xff]
      %v627 = vld [vmem:[%s591 + $0x118] sm:$0xff]
      %v628 = vld [vmem:[%s591 + $0x120] sm:$0xff]
      %v629 = vld [vmem:[%s591 + $0x128] sm:$0xff]
      %v630 = vld [vmem:[%s591 + $0x130] sm:$0xff]
      %v631 = vld [vmem:[%s591 + $0x138] sm:$0xff]
      %v632 = vld [vmem:[%s591 + $0x140] sm:$0xff]
      %v633 = vld [vmem:[%s591 + $0x148] sm:$0xff]
      %v634 = vld [vmem:[%s591 + $0x150] sm:$0xff]
      %v635 = vld [vmem:[%s591 + $0x158] sm:$0xff]
      %v636 = vld [vmem:[%s591 + $0x160] sm:$0xff]
      %v637 = vld [vmem:[%s591 + $0x168] sm:$0xff]
      %v638 = vld [vmem:[%s591 + $0x170] sm:$0xff]
      %v639 = vld [vmem:[%s591 + $0x178] sm:$0xff]
      %v644 = vunpack.c.l.b16 %v587
      %v645 = vunpack.c.h.b16 %v587
      %v646 = vunpack.c.l.b16 %v588
      %v647 = vunpack.c.l.b16 %v589
      %v648 = vunpack.c.h.b16 %v589
      %v649 = vunpack.c.l.b16 %v590
      %v650 = vpack.c.b16 %v647, %v644
      %v651 = vpack.c.b16 %v648, %v645
      %v652 = vpack.c.b16 %v649, %v646
      %v704 = vunpack.c.l.b16 %v592
      %v705 = vunpack.c.h.b16 %v592
      %v706 = vunpack.c.l.b16 %v593
      %v707 = vunpack.c.h.b16 %v593
      %v708 = vunpack.c.l.b16 %v594
      %v709 = vunpack.c.h.b16 %v594
      %v710 = vunpack.c.l.b16 %v595
      %v711 = vunpack.c.h.b16 %v595
      %v712 = vunpack.c.l.b16 %v596
      %v713 = vunpack.c.h.b16 %v596
      %v714 = vunpack.c.l.b16 %v597
      %v715 = vunpack.c.h.b16 %v597
      %v716 = vunpack.c.l.b16 %v598
      %v717 = vunpack.c.h.b16 %v598
      %v718 = vunpack.c.l.b16 %v599
      %v719 = vunpack.c.h.b16 %v599
      %v720 = vunpack.c.l.b16 %v600
      %v721 = vunpack.c.h.b16 %v600
      %v722 = vunpack.c.l.b16 %v601
      %v723 = vunpack.c.h.b16 %v601
      %v724 = vunpack.c.l.b16 %v602
      %v725 = vunpack.c.h.b16 %v602
      %v726 = vunpack.c.l.b16 %v603
      %v727 = vunpack.c.h.b16 %v603
      %v728 = vunpack.c.l.b16 %v604
      %v729 = vunpack.c.h.b16 %v604
      %v730 = vunpack.c.l.b16 %v605
      %v731 = vunpack.c.h.b16 %v605
      %v732 = vunpack.c.l.b16 %v606
      %v733 = vunpack.c.h.b16 %v606
      %v734 = vunpack.c.l.b16 %v607
      %v735 = vunpack.c.h.b16 %v607
      %v736 = vunpack.c.l.b16 %v608
      %v737 = vunpack.c.h.b16 %v608
      %v738 = vunpack.c.l.b16 %v609
      %v739 = vunpack.c.h.b16 %v609
      %v740 = vunpack.c.l.b16 %v610
      %v741 = vunpack.c.h.b16 %v610
      %v742 = vunpack.c.l.b16 %v611
      %v743 = vunpack.c.h.b16 %v611
      %v744 = vunpack.c.l.b16 %v612
      %v745 = vunpack.c.h.b16 %v612
      %v746 = vunpack.c.l.b16 %v613
      %v747 = vunpack.c.h.b16 %v613
      %v748 = vunpack.c.l.b16 %v614
      %v749 = vunpack.c.h.b16 %v614
      %v750 = vunpack.c.l.b16 %v615
      %v751 = vunpack.c.h.b16 %v615
      %v752 = vunpack.c.l.b16 %v616
      %v753 = vunpack.c.h.b16 %v616
      %v754 = vunpack.c.l.b16 %v617
      %v755 = vunpack.c.h.b16 %v617
      %v756 = vunpack.c.l.b16 %v618
      %v757 = vunpack.c.h.b16 %v618
      %v758 = vunpack.c.l.b16 %v619
      %v759 = vunpack.c.h.b16 %v619
      %v760 = vunpack.c.l.b16 %v620
      %v761 = vunpack.c.h.b16 %v620
      %v762 = vunpack.c.l.b16 %v621
      %v763 = vunpack.c.h.b16 %v621
      %v764 = vunpack.c.l.b16 %v622
      %v765 = vunpack.c.h.b16 %v622
      %v766 = vunpack.c.l.b16 %v623
      %v767 = vunpack.c.h.b16 %v623
      %v768 = vunpack.c.l.b16 %v624
      %v769 = vunpack.c.h.b16 %v624
      %v770 = vunpack.c.l.b16 %v625
      %v771 = vunpack.c.h.b16 %v625
      %v772 = vunpack.c.l.b16 %v626
      %v773 = vunpack.c.h.b16 %v626
      %v774 = vunpack.c.l.b16 %v627
      %v775 = vunpack.c.h.b16 %v627
      %v776 = vunpack.c.l.b16 %v628
      %v777 = vunpack.c.h.b16 %v628
      %v778 = vunpack.c.l.b16 %v629
      %v779 = vunpack.c.h.b16 %v629
      %v780 = vunpack.c.l.b16 %v630
      %v781 = vunpack.c.h.b16 %v630
      %v782 = vunpack.c.l.b16 %v631
      %v783 = vunpack.c.h.b16 %v631
      %v784 = vunpack.c.l.b16 %v632
      %v785 = vunpack.c.h.b16 %v632
      %v786 = vunpack.c.l.b16 %v633
      %v787 = vunpack.c.h.b16 %v633
      %v788 = vunpack.c.l.b16 %v634
      %v789 = vunpack.c.h.b16 %v634
      %v790 = vunpack.c.l.b16 %v635
      %v791 = vunpack.c.h.b16 %v635
      %v792 = vunpack.c.l.b16 %v636
      %v793 = vunpack.c.h.b16 %v636
      %v794 = vunpack.c.l.b16 %v637
      %v795 = vunpack.c.h.b16 %v637
      %v796 = vunpack.c.l.b16 %v638
      %v797 = vunpack.c.h.b16 %v638
      %v798 = vunpack.c.l.b16 %v639
      %v799 = vunpack.c.h.b16 %v639
      %v800 = vpack.c.b16 %v706, %v704
      %v801 = vpack.c.b16 %v707, %v705
      %v802 = vpack.c.b16 %v710, %v708
      %v803 = vpack.c.b16 %v711, %v709
      %v804 = vpack.c.b16 %v714, %v712
      %v805 = vpack.c.b16 %v715, %v713
      %v806 = vpack.c.b16 %v718, %v716
      %v807 = vpack.c.b16 %v719, %v717
      %v808 = vpack.c.b16 %v722, %v720
      %v809 = vpack.c.b16 %v723, %v721
      %v810 = vpack.c.b16 %v726, %v724
      %v811 = vpack.c.b16 %v727, %v725
      %v812 = vpack.c.b16 %v730, %v728
      %v813 = vpack.c.b16 %v731, %v729
      %v814 = vpack.c.b16 %v734, %v732
      %v815 = vpack.c.b16 %v735, %v733
      %v816 = vpack.c.b16 %v738, %v736
      %v817 = vpack.c.b16 %v739, %v737
      %v818 = vpack.c.b16 %v742, %v740
      %v819 = vpack.c.b16 %v743, %v741
      %v820 = vpack.c.b16 %v746, %v744
      %v821 = vpack.c.b16 %v747, %v745
      %v822 = vpack.c.b16 %v750, %v748
      %v823 = vpack.c.b16 %v751, %v749
      %v824 = vpack.c.b16 %v754, %v752
      %v825 = vpack.c.b16 %v755, %v753
      %v826 = vpack.c.b16 %v758, %v756
      %v827 = vpack.c.b16 %v759, %v757
      %v828 = vpack.c.b16 %v762, %v760
      %v829 = vpack.c.b16 %v763, %v761
      %v830 = vpack.c.b16 %v766, %v764
      %v831 = vpack.c.b16 %v767, %v765
      %v832 = vpack.c.b16 %v770, %v768
      %v833 = vpack.c.b16 %v771, %v769
      %v834 = vpack.c.b16 %v774, %v772
      %v835 = vpack.c.b16 %v775, %v773
      %v836 = vpack.c.b16 %v778, %v776
      %v837 = vpack.c.b16 %v779, %v777
      %v838 = vpack.c.b16 %v782, %v780
      %v839 = vpack.c.b16 %v783, %v781
      %v840 = vpack.c.b16 %v786, %v784
      %v841 = vpack.c.b16 %v787, %v785
      %v842 = vpack.c.b16 %v790, %v788
      %v843 = vpack.c.b16 %v791, %v789
      %v844 = vpack.c.b16 %v794, %v792
      %v845 = vpack.c.b16 %v795, %v793
      %v846 = vpack.c.b16 %v798, %v796
      %v847 = vpack.c.b16 %v799, %v797
      %896 = vmatprep.subr.bf16.mxu0 %v801
      %897 = vmatpush1.bf16.msra.mxu0 %v800
      %898 = vmatprep.subr.bf16.mxu0 %v803
      %899 = vmatpush1.bf16.msra.mxu0 %v802
      %900 = vmatprep.subr.bf16.mxu0 %v805
      %901 = vmatpush1.bf16.msra.mxu0 %v804
      %902 = vmatprep.subr.bf16.mxu0 %v807
      %903 = vmatpush1.bf16.msra.mxu0 %v806
      %904 = vmatprep.subr.bf16.mxu0 %v809
      %905 = vmatpush1.bf16.msra.mxu0 %v808
      %906 = vmatprep.subr.bf16.mxu0 %v811
      %907 = vmatpush1.bf16.msra.mxu0 %v810
      %908 = vmatprep.subr.bf16.mxu0 %v813
      %909 = vmatpush1.bf16.msra.mxu0 %v812
      %910 = vmatprep.subr.bf16.mxu0 %v815
      %911 = vmatpush1.bf16.msra.mxu0 %v814
      %912 = vmatprep.subr.bf16.mxu0 %v817
      %913 = vmatpush1.bf16.msra.mxu0 %v816
      %914 = vmatprep.subr.bf16.mxu0 %v819
      %915 = vmatpush1.bf16.msra.mxu0 %v818
      %916 = vmatprep.subr.bf16.mxu0 %v821
      %917 = vmatpush1.bf16.msra.mxu0 %v820
      %918 = vmatprep.subr.bf16.mxu0 %v823
      %919 = vmatpush1.bf16.msra.mxu0 %v822
      %920 = vmatprep.subr.bf16.mxu0 %v825
      %921 = vmatpush1.bf16.msra.mxu0 %v824
      %922 = vmatprep.subr.bf16.mxu0 %v827
      %923 = vmatpush1.bf16.msra.mxu0 %v826
      %924 = vmatprep.subr.bf16.mxu0 %v829
      %925 = vmatpush1.bf16.msra.mxu0 %v828
      %926 = vmatprep.subr.bf16.mxu0 %v831
      %927 = vmatpush1.bf16.msra.mxu0 %v830
      %928 = vmatprep.mubr.bf16.mxu0 %v651
      %929 = vmatmul.mubr.bf16.gmra.mrb[0].mxu0 %v650
      %v930 = vpop.f32.mrb[0].mxu0
      %v931 = vadd.f32 0.0, %v930
      %v932 = vpop.f32.mrb[0].mxu0
      %v933 = vpop.f32.mrb[0].mxu0
      %v934 = vpop.f32.mrb[0].mxu0
      %v935 = vadd.f32 0.0, %v934
      %936 = vdwg.mxu0
      %937 = vmatprep.subr.bf16.mxu0 %v833
      %938 = vmatpush1.bf16.msra.mxu0 %v832
      %939 = vmatprep.subr.bf16.mxu0 %v835
      %940 = vmatpush1.bf16.msra.mxu0 %v834
      %941 = vmatprep.subr.bf16.mxu0 %v837
      %942 = vmatpush1.bf16.msra.mxu0 %v836
      %943 = vmatprep.subr.bf16.mxu0 %v839
      %944 = vmatpush1.bf16.msra.mxu0 %v838
      %945 = vmatprep.subr.bf16.mxu0 %v841
      %946 = vmatpush1.bf16.msra.mxu0 %v840
      %947 = vmatprep.subr.bf16.mxu0 %v843
      %948 = vmatpush1.bf16.msra.mxu0 %v842
      %949 = vmatprep.subr.bf16.mxu0 %v845
      %950 = vmatpush1.bf16.msra.mxu0 %v844
      %951 = vmatprep.subr.bf16.mxu0 %v847
      %952 = vmatpush1.bf16.msra.mxu0 %v846
      %953 = vmatprep.subr.bf16.mxu0 0
      %954 = vmatpush1.bf16.msra.mxu0 0
      %955 = vmatprep.subr.bf16.mxu0 0
      %956 = vmatpush1.bf16.msra.mxu0 0
      %957 = vmatprep.subr.bf16.mxu0 0
      %958 = vmatpush1.bf16.msra.mxu0 0
      %959 = vmatprep.subr.bf16.mxu0 0
      %960 = vmatpush1.bf16.msra.mxu0 0
      %961 = vmatprep.subr.bf16.mxu0 0
      %962 = vmatpush1.bf16.msra.mxu0 0
      %963 = vmatprep.subr.bf16.mxu0 0
      %964 = vmatpush1.bf16.msra.mxu0 0
      %965 = vmatprep.subr.bf16.mxu0 0
      %966 = vmatpush1.bf16.msra.mxu0 0
      %967 = vmatprep.subr.bf16.mxu0 0
      %968 = vmatpush1.bf16.msra.mxu0 0
      %969 = vmatprep.mubr.bf16.mxu0 0
      %970 = vmatmul.mubr.bf16.gmra.mrb[0].mxu0 %v652
      %v971 = vpop.f32.mrb[0].mxu0
      %v972 = vadd.f32 %v931, %v971
      %v973 = vpop.f32.mrb[0].mxu0
      %v974 = vpop.f32.mrb[0].mxu0
      %v975 = vpop.f32.mrb[0].mxu0
      %v976 = vadd.f32 %v935, %v975
      %977 = vdwg.mxu0
      %v978 = vadd.f32 %v972, %v976
      %v979 = vadd.f32 %v583, %v978
      %v980 = vld [vmem:[%s2] sm:$0x1]
      %v982 = vlaneseq
      %v983 = vshrl.u32 %v982, 7
      %v984 = vsub.s32 0, %v983
      %v985 = vrot.slane %v980, %v984
      %v987 = vadd.f32 %v979, %v985
      %v988 = vmax.f32 %v987, 0.0
      %v989 = vpack.c.bf16 %v988, %v988
      %990 = vst [vmem:[%s188] sm:$0xf] %v989
      %p991 = scmp.lt.s32.totalorder %s18, 1
      %s992 = scalar_select %p991, %s18, 1
      %p993 = scmp.lt.s32.totalorder %s19, 0
      %s994 = scalar_select %p993, %s19, 0
      %s995 = sadd.s32 %s994, %s992
      %s996 = smul.addr %s995, 4
      %s997 = scalar_lea.vmem %s3, %s996
      // Predicated region
      $region33: #{timm_backbone_forward.9} parent=31 // pred_check
        %p998 = pneg %p114
      $region34: #{timm_backbone_forward.9} parent=31 // pred_check_branch
        %1000 = sbr.rel (%p998) target = $region36
      $region35: #{timm_backbone_forward.9} parent=31 // pred_region
        _
      $region36: #{timm_backbone_forward.9} parent=31 // pred_fallthru
        _
    $region32: #{timm_backbone_forward.9} parent=5 // pred_fallthru
      _
    %p1001 = scmp.le.s32.totalorder 2, %s9
    // Predicated region
    $region37: #{timm_backbone_forward.9} parent=5 // pred_check
      %p1002 = pneg %p1001
    $region38: #{timm_backbone_forward.9} parent=5 // pred_check_branch
      %1004 = sbr.rel (%p1002) target = $region40
    $region39: #{timm_backbone_forward.9} parent=5 // pred_region
      %s1005 = ssub.s32 %s9, 2
      // Predicated region
      $region41: #{timm_backbone_forward.9} parent=39 // pred_check
        %p1006 = pneg %p120
      $region42: #{timm_backbone_forward.9} parent=39 // pred_check_branch
        %1008 = sbr.rel (%p1006) target = $region44
      $region43: #{timm_backbone_forward.9} parent=39 // pred_region
        %p1009 = scmp.lt.s32.totalorder %s20, 1
        %s1010 = scalar_select %p1009, %s20, 1
        %p1011 = scmp.lt.s32.totalorder %s21, 0
        %s1012 = scalar_select %p1011, %s21, 0
        %s1013 = sadd.s32 %s1012, %s1010
        %s1014 = smul.addr %s1013, 4
        %s1015 = scalar_lea.vmem %s3, %s1014
      $region44: #{timm_backbone_forward.9} parent=39 // pred_fallthru
        _
    $region40: #{timm_backbone_forward.9} parent=5 // pred_fallthru
      _
  $region6: #{timm_backbone_forward.9} parent=0 // loop_footer
    %s13 = sadd.s32 1, %s9
  $region7: #{timm_backbone_forward.9} parent=0 // loop_footer_branch
    %8 = sbr.rel target = $region3
  $region8: #{timm_backbone_forward.9} parent=0 // loop_exit
    _

// kernel: timm_backbone_forward.5
$region0: #{timm_backbone_forward.5}
  #allocation0 [shape = 'u32[]', space=smem, size = 0x4, offset = 0x4, fixed_abs, tag = 'smem constant byte address 0x4 - core index']
  #allocation1 [shape = 'u32[144,128]{1,0:T(1,128)}', space=vmem, size = 0x12000, scoped, tag = 'internal scratch']
  %s0 = inlined_call_operand.vmem [shape: bf16[2,2,17,16,12], index: 0, kind: input, shape index: {}]
  %s1 = inlined_call_operand.vmem [shape: bf16[2,12,256], index: 1, kind: input, shape index: {}]
  %s2 = inlined_call_operand.vmem [shape: f32[1,128], index: 2, kind: input, shape index: {}]
  %s3 = inlined_call_operand.vmem [shape: bf16[2,16,16,128], index: 3, kind: output, shape index: {}]
  %s4 = sld [smem:[#allocation0]]
  $region45: #{timm_backbone_forward.5} parent=0
    _
  %s6 = ssub.s32 1, %s4
  %s7 = scalar_select 0, %s6, %s4
  loop: start=0, step=1, limit=4
  $region2: #{timm_backbone_forward.5} parent=0 // loop_pre_header
    _
  $region3: #{timm_backbone_forward.5} parent=0 // loop_header
    %s9 = sphi 0, %s13
    %p10 = scmp.ge.s32.totalorder %s9, 4
    %s16 = sphi 0, %s28
    %s17 = sphi 0, %s24
    %s18 = sphi 0, %s16
    %s19 = sphi 0, %s17
    %s20 = sphi 0, %s18
    %s21 = sphi 0, %s19
    %s31 = sphi 0, %s33
    %s34 = sphi 0, %s31
    %s35 = sphi 0, %s34
    %s51 = sphi 0, %s35
    %s55 = sphi 0, %s55
    %s57 = sphi 0, %s55
    %s58 = sphi 0, %s57
    %s72 = sphi 0, %s58
    %s76 = sphi 0, %s76
    %s78 = sphi 0, %s76
    %s79 = sphi 0, %s78
    %s93 = sphi 0, %s79
    %s101 = sphi 0, %s103
    %s104 = sphi 0, %s101
    %s105 = sphi 0, %s104
    %s121 = sphi 0, %s105
  $region4: #{timm_backbone_forward.5} parent=0 // loop_header_branch
    %12 = sbr.rel (%p10) target = $region8
  $region5: #{timm_backbone_forward.5} parent=0 // loop_body
    %s14 = ssub.s32 %s9, 1
    %s15 = ssub.s32 %s9, 2
    %s22 = sadd.s32 1, %s17
    %p23 = scmp.ge.s32.totalorder %s22, 1
    %s24 = scalar_select %p23, 0, %s22
    %s25 = sadd.s32 1, %s16
    %s26 = scalar_select %p23, %s25, %s16
    %p27 = scmp.ge.s32.totalorder %s26, 2
    %s28 = scalar_select %p27, 0, %s26
    %s29 = ssub.s32 %s16, %s28
    %p30 = scmp.eq.s32.totalorder %s29, 0
    %s32 = sadd.s32 %s31, 1
    %s33 = scalar_select %p30, %s31, %s32
    %p36 = pneg %p30
    %p37 = scmp.eq.s32.totalorder %s9, 1
    %p38 = por %p36, %p37
    %p39 = scmp.ne.s32.totalorder %s31, %s34
    %p40 = scmp.eq.s32.totalorder %s9, 0
    %p41 = por %p39, %p40
    %p42 = scmp.ne.s32.totalorder %s31, %s34
    %p43 = scmp.eq.s32.totalorder %s14, 1
    %p44 = por %p42, %p43
    %p45 = scmp.ne.s32.totalorder %s34, %s35
    %p46 = scmp.eq.s32.totalorder %s14, 0
    %p47 = por %p45, %p46
    %p48 = scmp.ne.s32.totalorder %s34, %s35
    %p49 = scmp.eq.s32.totalorder %s15, 1
    %p50 = por %p48, %p49
    %p52 = scmp.ne.s32.totalorder %s35, %s51
    %p53 = scmp.eq.s32.totalorder %s15, 0
    %p54 = por %p52, %p53
    %s56 = sadd.s32 %s55, 1
    %p59 = scmp.eq.s32.totalorder %s9, 1
    %p60 = scmp.ne.s32.totalorder %s55, %s57
    %p61 = scmp.eq.s32.totalorder %s9, 0
    %p62 = por %p60, %p61
    %p63 = scmp.ne.s32.totalorder %s55, %s57
    %p64 = scmp.eq.s32.totalorder %s14, 1
    %p65 = por %p63, %p64
    %p66 = scmp.ne.s32.totalorder %s57, %s58
    %p67 = scmp.eq.s32.totalorder %s14, 0
    %p68 = por %p66, %p67
    %p69 = scmp.ne.s32.totalorder %s57, %s58
    %p70 = scmp.eq.s32.totalorder %s15, 1
    %p71 = por %p69, %p70
    %p73 = scmp.ne.s32.totalorder %s58, %s72
    %p74 = scmp.eq.s32.totalorder %s15, 0
    %p75 = por %p73, %p74
    %s77 = sadd.s32 %s76, 1
    %p80 = scmp.eq.s32.totalorder %s9, 1
    %p81 = scmp.ne.s32.totalorder %s76, %s78
    %p82 = scmp.eq.s32.totalorder %s9, 0
    %p83 = por %p81, %p82
    %p84 = scmp.ne.s32.totalorder %s76, %s78
    %p85 = scmp.eq.s32.totalorder %s14, 1
    %p86 = por %p84, %p85
    %p87 = scmp.ne.s32.totalorder %s78, %s79
    %p88 = scmp.eq.s32.totalorder %s14, 0
    %p89 = por %p87, %p88
    %p90 = scmp.ne.s32.totalorder %s78, %s79
    %p91 = scmp.eq.s32.totalorder %s15, 1
    %p92 = por %p90, %p91
    %p94 = scmp.ne.s32.totalorder %s79, %s93
    %p95 = scmp.eq.s32.totalorder %s15, 0
    %p96 = por %p94, %p95
    %s97 = ssub.s32 %s16, %s28
    %s98 = ssub.s32 %s17, %s24
    %s99 = sor.u32 %s97, %s98
    %p100 = scmp.eq.s32.totalorder %s99, 0
    %s102 = sadd.s32 %s101, 1
    %s103 = scalar_select %p100, %s101, %s102
    %p106 = pneg %p100
    %p107 = scmp.eq.s32.totalorder %s9, 1
    %p108 = por %p106, %p107
    %p109 = scmp.ne.s32.totalorder %s101, %s104
    %p110 = scmp.eq.s32.totalorder %s9, 0
    %p111 = por %p109, %p110
    %p112 = scmp.ne.s32.totalorder %s101, %s104
    %p113 = scmp.eq.s32.totalorder %s14, 1
    %p114 = por %p112, %p113
    %p115 = scmp.ne.s32.totalorder %s104, %s105
    %p116 = scmp.eq.s32.totalorder %s14, 0
    %p117 = por %p115, %p116
    %p118 = scmp.ne.s32.totalorder %s104, %s105
    %p119 = scmp.eq.s32.totalorder %s15, 1
    %p120 = por %p118, %p119
    %p122 = scmp.ne.s32.totalorder %s105, %s121
    %p123 = scmp.eq.s32.totalorder %s15, 0
    %p124 = por %p122, %p123
    %p125 = scmp.le.s32.totalorder 1, %s9
    %p126 = scmp.lt.s32.totalorder %s9, 3
    %p127 = pnand %p125, %p126
    %p128 = pneg %p127
    // Predicated region
    $region9: #{timm_backbone_forward.5} parent=5 // pred_check
      _
    $region10: #{timm_backbone_forward.5} parent=5 // pred_check_branch
      %130 = sbr.rel (%p127) target = $region12
    $region11: #{timm_backbone_forward.5} parent=5 // pred_region
      %s131 = ssub.s32 %s9, 1
      // Predicated region
      $region13: #{timm_backbone_forward.5} parent=11 // pred_check
        %p132 = pneg %p68
      $region14: #{timm_backbone_forward.5} parent=11 // pred_check_branch
        %134 = sbr.rel (%p132) target = $region16
      $region15: #{timm_backbone_forward.5} parent=11 // pred_region
        _
      $region16: #{timm_backbone_forward.5} parent=11 // pred_fallthru
        _
      // Predicated region
      $region17: #{timm_backbone_forward.5} parent=11 // pred_check
        %p135 = pneg %p89
      $region18: #{timm_backbone_forward.5} parent=11 // pred_check_branch
        %137 = sbr.rel (%p135) target = $region20
      $region19: #{timm_backbone_forward.5} parent=11 // pred_region
        _
      $region20: #{timm_backbone_forward.5} parent=11 // pred_fallthru
        _
    $region12: #{timm_backbone_forward.5} parent=5 // pred_fallthru
      _
    %p138 = scmp.lt.s32.totalorder %s9, 2
    // Predicated region
    $region21: #{timm_backbone_forward.5} parent=5 // pred_check
      %p139 = pneg %p138
    $region22: #{timm_backbone_forward.5} parent=5 // pred_check_branch
      %141 = sbr.rel (%p139) target = $region24
    $region23: #{timm_backbone_forward.5} parent=5 // pred_region
      // Predicated region
      $region25: #{timm_backbone_forward.5} parent=23 // pred_check
        %p142 = pneg %p41
      $region26: #{timm_backbone_forward.5} parent=23 // pred_check_branch
        %144 = sbr.rel (%p142) target = $region28
      $region27: #{timm_backbone_forward.5} parent=23 // pred_region
        %p145 = scmp.lt.s32.totalorder %s16, 1
        %s146 = scalar_select %p145, %s16, 1
        %s147 = smul.addr %s146, 68
        %s148 = smul.addr %s147, 4
        %s149 = scalar_lea.vmem %s0, %s148
      $region28: #{timm_backbone_forward.5} parent=23 // pred_fallthru
        _
    $region24: #{timm_backbone_forward.5} parent=5 // pred_fallthru
      _
    %p150 = scmp.le.s32.totalorder 1, %s9
    %p151 = scmp.lt.s32.totalorder %s9, 3
    %p152 = pnand %p150, %p151
    %p153 = pneg %p152
    // Predicated region
    $region29: #{timm_backbone_forward.5} parent=5 // pred_check
      _
    $region30: #{timm_backbone_forward.5} parent=5 // pred_check_branch
      %155 = sbr.rel (%p152) target = $region32
    $region31: #{timm_backbone_forward.5} parent=5 // pred_region
      %s156 = ssub.s32 %s9, 1
      %p157 = scmp.lt.s32.totalorder %s18, 1
      %s158 = scalar_select %p157, %s18, 1
      %s159 = smul.addr %s158, 68
      %s160 = smul.addr %s159, 4
      %s161 = scalar_lea.vmem %s0, %s160
      %p162 = pneg %p47
      %p163 = pneg %p44
      %p164 = pneg %p68
      %p165 = pneg %p65
      %p166 = pneg %p89
      %p167 = pneg %p86
      %p168 = pneg %p117
      %p169 = pneg %p114
      %s170 = smul.u32 16, %s19
      %p171 = scmp.lt.s32.totalorder %s18, 1
      %s172 = scalar_select %p171, %s18, 1
      %p173 = scmp.lt.s32.totalorder %s170, 15
      %s174 = scalar_select %p173, %s170, 15
      %s175 = smul.addr %s174, 2
      %s176 = smul.addr %s172, 32
      %s177 = sadd.s32 %s175, %s176
      %s178 = smul.addr %s177, 4
      %s179 = scalar_lea.vmem %s3, %s178
      %p180 = scmp.lt.s32.totalorder %s18, 1
      %s181 = scalar_select %p180, %s18, 1
      %s182 = smul.addr %s181, 68
      %s183 = smul.addr %s182, 4
      %s184 = scalar_lea.vmem %s0, %s183
      %s185 = smul.u32 16, %s19
      %p186 = scmp.lt.s32.totalorder %s18, 1
      %s187 = scalar_select %p186, %s18, 1
      %p188 = scmp.lt.s32.totalorder %s185, 15
      %s189 = scalar_select %p188, %s185, 15
      %s190 = smul.addr %s189, 2
      %s191 = smul.addr %s187, 32
      %s192 = sadd.s32 %s190, %s191
      %s193 = smul.addr %s192, 4
      %s194 = scalar_lea.vmem %s3, %s193
      %s195 = smul.u32 16, %s19
      %s197 = smul.u32 %s19, 16
      %s198 = smul.u32 %s197, 2
      %s199 = smul.addr %s198, 4
      %s200 = scalar_lea.vmem %s184, %s199
      %v201 = vld [vmem:[%s200] sm:$0xf]
      %v202 = vld [vmem:[%s200 + $0x4] sm:$0xf]
      %v203 = vld [vmem:[%s200 + $0x8] sm:$0xf]
      %v204 = vld [vmem:[%s200 + $0xc] sm:$0xf]
      %v205 = vld [vmem:[%s200 + $0x10] sm:$0xf]
      %v206 = vld [vmem:[%s200 + $0x14] sm:$0xf]
      %v207 = vld [vmem:[%s200 + $0x18] sm:$0xf]
      %v208 = vld [vmem:[%s200 + $0x1c] sm:$0xf]
      %v209 = vld [vmem:[%s200 + $0x20] sm:$0xf]
      %v210 = vld [vmem:[%s200 + $0x24] sm:$0xf]
      %v211 = vld [vmem:[%s200 + $0x28] sm:$0xf]
      %v212 = vld [vmem:[%s200 + $0x2c] sm:$0xf]
      %v213 = vld [vmem:[%s200 + $0x30] sm:$0xf]
      %v214 = vld [vmem:[%s200 + $0x34] sm:$0xf]
      %v215 = vld [vmem:[%s200 + $0x38] sm:$0xf]
      %v216 = vld [vmem:[%s200 + $0x3c] sm:$0xf]
      %v217 = vld [vmem:[%s200 + $0x40] sm:$0xf]
      %v218 = vld [vmem:[%s200 + $0x44] sm:$0xf]
      %v219 = vld [vmem:[%s200 + $0x48] sm:$0xf]
      %v220 = vld [vmem:[%s200 + $0x4c] sm:$0xf]
      %v221 = vld [vmem:[%s200 + $0x50] sm:$0xf]
      %v222 = vld [vmem:[%s200 + $0x54] sm:$0xf]
      %v223 = vld [vmem:[%s200 + $0x58] sm:$0xf]
      %v224 = vld [vmem:[%s200 + $0x5c] sm:$0xf]
      %v225 = vld [vmem:[%s200 + $0x60] sm:$0xf]
      %v226 = vld [vmem:[%s200 + $0x64] sm:$0xf]
      %v227 = vld [vmem:[%s200 + $0x68] sm:$0xf]
      %v228 = vld [vmem:[%s200 + $0x6c] sm:$0xf]
      %v229 = vld [vmem:[%s200 + $0x70] sm:$0xf]
      %v230 = vld [vmem:[%s200 + $0x74] sm:$0xf]
      %v231 = vld [vmem:[%s200 + $0x78] sm:$0xf]
      %v232 = vld [vmem:[%s200 + $0x7c] sm:$0xf]
      %v233 = vld [vmem:[%s200 + $0x80] sm:$0xf]
      %v234 = vld [vmem:[%s200 + $0x84] sm:$0xf]
      %v235 = vld [vmem:[%s1] sm:$0xff]
      %v236 = vld [vmem:[%s1 + $0x8] sm:$0x33]
      %v271 = vunpack.c.l.b16 %v201
      %v272 = vunpack.c.l.b16 %v202
      %v273 = vunpack.c.l.b16 %v203
      %v274 = vunpack.c.l.b16 %v204
      %v275 = vunpack.c.l.b16 %v205
      %v276 = vunpack.c.l.b16 %v206
      %v277 = vunpack.c.l.b16 %v207
      %v278 = vunpack.c.l.b16 %v208
      %v279 = vunpack.c.l.b16 %v209
      %v280 = vunpack.c.l.b16 %v210
      %v281 = vunpack.c.l.b16 %v211
      %v282 = vunpack.c.l.b16 %v212
      %v283 = vunpack.c.l.b16 %v213
      %v284 = vunpack.c.l.b16 %v214
      %v285 = vunpack.c.l.b16 %v215
      %v286 = vunpack.c.l.b16 %v216
      %v287 = vunpack.c.l.b16 %v217
      %v288 = vunpack.c.l.b16 %v218
      %v289 = vunpack.c.l.b16 %v219
      %v290 = vunpack.c.l.b16 %v220
      %v291 = vunpack.c.l.b16 %v221
      %v292 = vunpack.c.l.b16 %v222
      %v293 = vunpack.c.l.b16 %v223
      %v294 = vunpack.c.l.b16 %v224
      %v295 = vunpack.c.l.b16 %v225
      %v296 = vunpack.c.l.b16 %v226
      %v297 = vunpack.c.l.b16 %v227
      %v298 = vunpack.c.l.b16 %v228
      %v299 = vunpack.c.l.b16 %v229
      %v300 = vunpack.c.l.b16 %v230
      %v301 = vunpack.c.l.b16 %v231
      %v302 = vunpack.c.l.b16 %v232
      %v303 = vunpack.c.l.b16 %v233
      %v304 = vunpack.c.l.b16 %v234
      %v305 = vpack.c.b16 %v272, %v271
      %v306 = vpack.c.b16 %v274, %v273
      %v307 = vpack.c.b16 %v276, %v275
      %v308 = vpack.c.b16 %v278, %v277
      %v309 = vpack.c.b16 %v280, %v279
      %v310 = vpack.c.b16 %v282, %v281
      %v311 = vpack.c.b16 %v284, %v283
      %v312 = vpack.c.b16 %v286, %v285
      %v313 = vpack.c.b16 %v288, %v287
      %v314 = vpack.c.b16 %v290, %v289
      %v315 = vpack.c.b16 %v292, %v291
      %v316 = vpack.c.b16 %v294, %v293
      %v317 = vpack.c.b16 %v296, %v295
      %v318 = vpack.c.b16 %v298, %v297
      %v319 = vpack.c.b16 %v300, %v299
      %v320 = vpack.c.b16 %v302, %v301
      %v321 = vpack.c.b16 %v304, %v303
      %v324 = vunpack.c.l.b16 %v235
      %v325 = vunpack.c.h.b16 %v235
      %v326 = vunpack.c.l.b16 %v236
      %v327 = vunpack.c.h.b16 %v236
      %v328 = vpack.c.b16 %v326, %v324
      %v329 = vpack.c.b16 %v327, %v325
      %vm330 = vcmask 97280
      %v332 = vsel %vm330, %v305, 0
      %v335 = vsel %vm330, %v306, 0
      %v338 = vsel %vm330, %v307, 0
      %v341 = vsel %vm330, %v308, 0
      %v344 = vsel %vm330, %v309, 0
      %v347 = vsel %vm330, %v310, 0
      %v350 = vsel %vm330, %v311, 0
      %v353 = vsel %vm330, %v312, 0
      %v356 = vsel %vm330, %v313, 0
      %v359 = vsel %vm330, %v314, 0
      %v362 = vsel %vm330, %v315, 0
      %v365 = vsel %vm330, %v316, 0
      %v368 = vsel %vm330, %v317, 0
      %v371 = vsel %vm330, %v318, 0
      %v374 = vsel %vm330, %v319, 0
      %v377 = vsel %vm330, %v320, 0
      %v380 = vsel %vm330, %v321, 0
      %vm382 = vcmask 1045504
      %v384 = vsel %vm382, %v328, 0
      %v387 = vsel %vm382, %v329, 0
      %389 = vmatprep.subr.bf16.mxu0 %v387
      %390 = vmatpush1.bf16.msra.mxu0 %v384
      %391 = vmatprep.subr.bf16.mxu0 0
      %392 = vmatpush1.bf16.msra.mxu0 0
      %393 = vmatprep.subr.bf16.mxu0 0
      %394 = vmatpush1.bf16.msra.mxu0 0
      %395 = vmatprep.subr.bf16.mxu0 0
      %396 = vmatpush1.bf16.msra.mxu0 0
      %397 = vmatprep.subr.bf16.mxu0 0
      %398 = vmatpush1.bf16.msra.mxu0 0
      %399 = vmatprep.subr.bf16.mxu0 0
      %400 = vmatpush1.bf16.msra.mxu0 0
      %401 = vmatprep.subr.bf16.mxu0 0
      %402 = vmatpush1.bf16.msra.mxu0 0
      %403 = vmatprep.subr.bf16.mxu0 0
      %404 = vmatpush1.bf16.msra.mxu0 0
      %405 = vmatprep.subr.bf16.mxu0 0
      %406 = vmatpush1.bf16.msra.mxu0 0
      %407 = vmatprep.subr.bf16.mxu0 0
      %408 = vmatpush1.bf16.msra.mxu0 0
      %409 = vmatprep.subr.bf16.mxu0 0
      %410 = vmatpush1.bf16.msra.mxu0 0
      %411 = vmatprep.subr.bf16.mxu0 0
      %412 = vmatpush1.bf16.msra.mxu0 0
      %413 = vmatprep.subr.bf16.mxu0 0
      %414 = vmatpush1.bf16.msra.mxu0 0
      %415 = vmatprep.subr.bf16.mxu0 0
      %416 = vmatpush1.bf16.msra.mxu0 0
      %417 = vmatprep.subr.bf16.mxu0 0
      %418 = vmatpush1.bf16.msra.mxu0 0
      %419 = vmatprep.subr.bf16.mxu0 0
      %420 = vmatpush1.bf16.msra.mxu0 0
      %421 = vmatprep.mubr.bf16.mxu0 0
      %422 = vmatmul.mubr.bf16.gmra.mrb[0].mxu0 %v332
      %v423 = vpop.f32.mrb[0].mxu0
      %v424 = vadd.f32 0.0, %v423
      %v425 = vpop.f32.mrb[0].mxu0
      %v426 = vpop.f32.mrb[0].mxu0
      %v427 = vadd.f32 0.0, %v426
      %v428 = vpop.f32.mrb[0].mxu0
      %429 = vmatprep.mubr.bf16.mxu0 0
      %430 = vmatmul.mubr.bf16.gmra.mrb[0].mxu0 %v335
      %v431 = vpop.f32.mrb[0].mxu0
      %v432 = vadd.f32 0.0, %v431
      %v433 = vpop.f32.mrb[0].mxu0
      %v434 = vadd.f32 0.0, %v433
      %v435 = vpop.f32.mrb[0].mxu0
      %v436 = vadd.f32 0.0, %v435
      %v437 = vpop.f32.mrb[0].mxu0
      %v438 = vadd.f32 0.0, %v437
      %439 = vmatprep.mubr.bf16.mxu0 0
      %440 = vmatmul.mubr.bf16.gmra.mrb[0].mxu0 %v338
      %v441 = vpop.f32.mrb[0].mxu0
      %v442 = vadd.f32 0.0, %v441
      %v443 = vpop.f32.mrb[0].mxu0
      %v444 = vadd.f32 0.0, %v443
      %v445 = vpop.f32.mrb[0].mxu0
      %v446 = vadd.f32 0.0, %v445
      %v447 = vpop.f32.mrb[0].mxu0
      %v448 = vadd.f32 0.0, %v447
      %449 = vmatprep.mubr.bf16.mxu0 0
      %450 = vmatmul.mubr.bf16.gmra.mrb[0].mxu0 %v341
      %v451 = vpop.f32.mrb[0].mxu0
      %v452 = vadd.f32 0.0, %v451
      %v453 = vpop.f32.mrb[0].mxu0
      %v454 = vadd.f32 0.0, %v453
      %v455 = vpop.f32.mrb[0].mxu0
      %v456 = vadd.f32 0.0, %v455
      %v457 = vpop.f32.mrb[0].mxu0
      %v458 = vadd.f32 0.0, %v457
      %459 = vmatprep.mubr.bf16.mxu0 0
      %460 = vmatmul.mubr.bf16.gmra.mrb[0].mxu0 %v344
      %v461 = vpop.f32.mrb[0].mxu0
      %v462 = vadd.f32 0.0, %v461
      %v463 = vpop.f32.mrb[0].mxu0
      %v464 = vadd.f32 0.0, %v463
      %v465 = vpop.f32.mrb[0].mxu0
      %v466 = vadd.f32 0.0, %v465
      %v467 = vpop.f32.mrb[0].mxu0
      %v468 = vadd.f32 0.0, %v467
      %469 = vmatprep.mubr.bf16.mxu0 0
      %470 = vmatmul.mubr.bf16.gmra.mrb[0].mxu0 %v347
      %v471 = vpop.f32.mrb[0].mxu0
      %v472 = vadd.f32 0.0, %v471
      %v473 = vpop.f32.mrb[0].mxu0
      %v474 = vadd.f32 0.0, %v473
      %v475 = vpop.f32.mrb[0].mxu0
      %v476 = vadd.f32 0.0, %v475
      %v477 = vpop.f32.mrb[0].mxu0
      %v478 = vadd.f32 0.0, %v477
      %479 = vmatprep.mubr.bf16.mxu0 0
      %480 = vmatmul.mubr.bf16.gmra.mrb[0].mxu0 %v350
      %v481 = vpop.f32.mrb[0].mxu0
      %v482 = vadd.f32 0.0, %v481
      %v483 = vpop.f32.mrb[0].mxu0
      %v484 = vadd.f32 0.0, %v483
      %v485 = vpop.f32.mrb[0].mxu0
      %v486 = vadd.f32 0.0, %v485
      %v487 = vpop.f32.mrb[0].mxu0
      %v488 = vadd.f32 0.0, %v487
      %489 = vmatprep.mubr.bf16.mxu0 0
      %490 = vmatmul.mubr.bf16.gmra.mrb[0].mxu0 %v353
      %v491 = vpop.f32.mrb[0].mxu0
      %v492 = vadd.f32 0.0, %v491
      %v493 = vpop.f32.mrb[0].mxu0
      %v494 = vadd.f32 0.0, %v493
      %v495 = vpop.f32.mrb[0].mxu0
      %v496 = vadd.f32 0.0, %v495
      %v497 = vpop.f32.mrb[0].mxu0
      %v498 = vadd.f32 0.0, %v497
      %499 = vmatprep.mubr.bf16.mxu0 0
      %500 = vmatmul.mubr.bf16.gmra.mrb[0].mxu0 %v356
      %v501 = vpop.f32.mrb[0].mxu0
      %v502 = vadd.f32 0.0, %v501
      %v503 = vpop.f32.mrb[0].mxu0
      %v504 = vadd.f32 0.0, %v503
      %v505 = vpop.f32.mrb[0].mxu0
      %v506 = vadd.f32 0.0, %v505
      %v507 = vpop.f32.mrb[0].mxu0
      %v508 = vadd.f32 0.0, %v507
      %509 = vmatprep.mubr.bf16.mxu0 0
      %510 = vmatmul.mubr.bf16.gmra.mrb[0].mxu0 %v359
      %v511 = vpop.f32.mrb[0].mxu0
      %v512 = vadd.f32 0.0, %v511
      %v513 = vpop.f32.mrb[0].mxu0
      %v514 = vadd.f32 0.0, %v513
      %v515 = vpop.f32.mrb[0].mxu0
      %v516 = vadd.f32 0.0, %v515
      %v517 = vpop.f32.mrb[0].mxu0
      %v518 = vadd.f32 0.0, %v517
      %519 = vmatprep.mubr.bf16.mxu0 0
      %520 = vmatmul.mubr.bf16.gmra.mrb[0].mxu0 %v362
      %v521 = vpop.f32.mrb[0].mxu0
      %v522 = vadd.f32 0.0, %v521
      %v523 = vpop.f32.mrb[0].mxu0
      %v524 = vadd.f32 0.0, %v523
      %v525 = vpop.f32.mrb[0].mxu0
      %v526 = vadd.f32 0.0, %v525
      %v527 = vpop.f32.mrb[0].mxu0
      %v528 = vadd.f32 0.0, %v527
      %529 = vmatprep.mubr.bf16.mxu0 0
      %530 = vmatmul.mubr.bf16.gmra.mrb[0].mxu0 %v365
      %v531 = vpop.f32.mrb[0].mxu0
      %v532 = vadd.f32 0.0, %v531
      %v533 = vpop.f32.mrb[0].mxu0
      %v534 = vadd.f32 0.0, %v533
      %v535 = vpop.f32.mrb[0].mxu0
      %v536 = vadd.f32 0.0, %v535
      %v537 = vpop.f32.mrb[0].mxu0
      %v538 = vadd.f32 0.0, %v537
      %539 = vmatprep.mubr.bf16.mxu0 0
      %540 = vmatmul.mubr.bf16.gmra.mrb[0].mxu0 %v368
      %v541 = vpop.f32.mrb[0].mxu0
      %v542 = vadd.f32 0.0, %v541
      %v543 = vpop.f32.mrb[0].mxu0
      %v544 = vadd.f32 0.0, %v543
      %v545 = vpop.f32.mrb[0].mxu0
      %v546 = vadd.f32 0.0, %v545
      %v547 = vpop.f32.mrb[0].mxu0
      %v548 = vadd.f32 0.0, %v547
      %549 = vmatprep.mubr.bf16.mxu0 0
      %550 = vmatmul.mubr.bf16.gmra.mrb[0].mxu0 %v371
      %v551 = vpop.f32.mrb[0].mxu0
      %v552 = vadd.f32 0.0, %v551
      %v553 = vpop.f32.mrb[0].mxu0
      %v554 = vadd.f32 0.0, %v553
      %v555 = vpop.f32.mrb[0].mxu0
      %v556 = vadd.f32 0.0, %v555
      %v557 = vpop.f32.mrb[0].mxu0
      %v558 = vadd.f32 0.0, %v557
      %559 = vmatprep.mubr.bf16.mxu0 0
      %560 = vmatmul.mubr.bf16.gmra.mrb[0].mxu0 %v374
      %v561 = vpop.f32.mrb[0].mxu0
      %v562 = vadd.f32 0.0, %v561
      %v563 = vpop.f32.mrb[0].mxu0
      %v564 = vadd.f32 0.0, %v563
      %v565 = vpop.f32.mrb[0].mxu0
      %v566 = vadd.f32 0.0, %v565
      %v567 = vpop.f32.mrb[0].mxu0
      %v568 = vadd.f32 0.0, %v567
      %569 = vmatprep.mubr.bf16.mxu0 0
      %570 = vmatmul.mubr.bf16.gmra.mrb[0].mxu0 %v377
      %v571 = vpop.f32.mrb[0].mxu0
      %v572 = vadd.f32 0.0, %v571
      %v573 = vpop.f32.mrb[0].mxu0
      %v574 = vadd.f32 0.0, %v573
      %v575 = vpop.f32.mrb[0].mxu0
      %v576 = vadd.f32 0.0, %v575
      %v577 = vpop.f32.mrb[0].mxu0
      %v578 = vadd.f32 0.0, %v577
      %579 = vmatprep.mubr.bf16.mxu0 0
      %580 = vmatmul.mubr.bf16.gmra.mrb[0].mxu0 %v380
      %v581 = vpop.f32.mrb[0].mxu0
      %v582 = vpop.f32.mrb[0].mxu0
      %v583 = vadd.f32 0.0, %v582
      %v584 = vpop.f32.mrb[0].mxu0
      %v585 = vpop.f32.mrb[0].mxu0
      %v586 = vadd.f32 0.0, %v585
      %587 = vdwg.mxu0
      %v588 = vadd.f32 %v424, %v434
      %v589 = vadd.f32 %v427, %v438
      %v590 = vadd.f32 %v432, %v444
      %v591 = vadd.f32 %v436, %v448
      %v592 = vadd.f32 %v442, %v454
      %v593 = vadd.f32 %v446, %v458
      %v594 = vadd.f32 %v452, %v464
      %v595 = vadd.f32 %v456, %v468
      %v596 = vadd.f32 %v462, %v474
      %v597 = vadd.f32 %v466, %v478
      %v598 = vadd.f32 %v472, %v484
      %v599 = vadd.f32 %v476, %v488
      %v600 = vadd.f32 %v482, %v494
      %v601 = vadd.f32 %v486, %v498
      %v602 = vadd.f32 %v492, %v504
      %v603 = vadd.f32 %v496, %v508
      %v604 = vadd.f32 %v502, %v514
      %v605 = vadd.f32 %v506, %v518
      %v606 = vadd.f32 %v512, %v524
      %v607 = vadd.f32 %v516, %v528
      %v608 = vadd.f32 %v522, %v534
      %v609 = vadd.f32 %v526, %v538
      %v610 = vadd.f32 %v532, %v544
      %v611 = vadd.f32 %v536, %v548
      %v612 = vadd.f32 %v542, %v554
      %v613 = vadd.f32 %v546, %v558
      %v614 = vadd.f32 %v552, %v564
      %v615 = vadd.f32 %v556, %v568
      %v616 = vadd.f32 %v562, %v574
      %v617 = vadd.f32 %v566, %v578
      %v618 = vadd.f32 %v572, %v583
      %v619 = vadd.f32 %v576, %v586
      %s620 = sadd.s32 %s198, 34
      %s621 = smul.addr %s620, 4
      %s622 = scalar_lea.vmem %s184, %s621
      %v623 = vld [vmem:[%s622] sm:$0xf]
      %v624 = vld [vmem:[%s622 + $0x4] sm:$0xf]
      %v625 = vld [vmem:[%s622 + $0x8] sm:$0xf]
      %v626 = vld [vmem:[%s622 + $0xc] sm:$0xf]
      %v627 = vld [vmem:[%s622 + $0x10] sm:$0xf]
      %v628 = vld [vmem:[%s622 + $0x14] sm:$0xf]
      %v629 = vld [vmem:[%s622 + $0x18] sm:$0xf]
      %v630 = vld [vmem:[%s622 + $0x1c] sm:$0xf]
      %v631 = vld [vmem:[%s622 + $0x20] sm:$0xf]
      %v632 = vld [vmem:[%s622 + $0x24] sm:$0xf]
      %v633 = vld [vmem:[%s622 + $0x28] sm:$0xf]
      %v634 = vld [vmem:[%s622 + $0x2c] sm:$0xf]
      %v635 = vld [vmem:[%s622 + $0x30] sm:$0xf]
      %v636 = vld [vmem:[%s622 + $0x34] sm:$0xf]
      %v637 = vld [vmem:[%s622 + $0x38] sm:$0xf]
      %v638 = vld [vmem:[%s622 + $0x3c] sm:$0xf]
      %v639 = vld [vmem:[%s622 + $0x40] sm:$0xf]
      %v640 = vld [vmem:[%s622 + $0x44] sm:$0xf]
      %v641 = vld [vmem:[%s622 + $0x48] sm:$0xf]
      %v642 = vld [vmem:[%s622 + $0x4c] sm:$0xf]
      %v643 = vld [vmem:[%s622 + $0x50] sm:$0xf]
      %v644 = vld [vmem:[%s622 + $0x54] sm:$0xf]
      %v645 = vld [vmem:[%s622 + $0x58] sm:$0xf]
      %v646 = vld [vmem:[%s622 + $0x5c] sm:$0xf]
      %v647 = vld [vmem:[%s622 + $0x60] sm:$0xf]
      %v648 = vld [vmem:[%s622 + $0x64] sm:$0xf]
      %v649 = vld [vmem:[%s622 + $0x68] sm:$0xf]
      %v650 = vld [vmem:[%s622 + $0x6c] sm:$0xf]
      %v651 = vld [vmem:[%s622 + $0x70] sm:$0xf]
      %v652 = vld [vmem:[%s622 + $0x74] sm:$0xf]
      %v653 = vld [vmem:[%s622 + $0x78] sm:$0xf]
      %v654 = vld [vmem:[%s622 + $0x7c] sm:$0xf]
      %v655 = vld [vmem:[%s622 + $0x80] sm:$0xf]
      %v656 = vld [vmem:[%s622 + $0x84] sm:$0xf]
      %s657 = scalar_lea.vmem %s1, 16
      %v658 = vld [vmem:[%s657] sm:$0xff]
      %v659 = vld [vmem:[%s657 + $0x8] sm:$0x33]
      %v694 = vunpack.c.l.b16 %v623
      %v695 = vunpack.c.l.b16 %v624
      %v696 = vunpack.c.l.b16 %v625
      %v697 = vunpack.c.l.b16 %v626
      %v698 = vunpack.c.l.b16 %v627
      %v699 = vunpack.c.l.b16 %v628
      %v700 = vunpack.c.l.b16 %v629
      %v701 = vunpack.c.l.b16 %v630
      %v702 = vunpack.c.l.b16 %v631
      %v703 = vunpack.c.l.b16 %v632
      %v704 = vunpack.c.l.b16 %v633
      %v705 = vunpack.c.l.b16 %v634
      %v706 = vunpack.c.l.b16 %v635
      %v707 = vunpack.c.l.b16 %v636
      %v708 = vunpack.c.l.b16 %v637
      %v709 = vunpack.c.l.b16 %v638
      %v710 = vunpack.c.l.b16 %v639
      %v711 = vunpack.c.l.b16 %v640
      %v712 = vunpack.c.l.b16 %v641
      %v713 = vunpack.c.l.b16 %v642
      %v714 = vunpack.c.l.b16 %v643
      %v715 = vunpack.c.l.b16 %v644
      %v716 = vunpack.c.l.b16 %v645
      %v717 = vunpack.c.l.b16 %v646
      %v718 = vunpack.c.l.b16 %v647
      %v719 = vunpack.c.l.b16 %v648
      %v720 = vunpack.c.l.b16 %v649
      %v721 = vunpack.c.l.b16 %v650
      %v722 = vunpack.c.l.b16 %v651
      %v723 = vunpack.c.l.b16 %v652
      %v724 = vunpack.c.l.b16 %v653
      %v725 = vunpack.c.l.b16 %v654
      %v726 = vunpack.c.l.b16 %v655
      %v727 = vunpack.c.l.b16 %v656
      %v728 = vpack.c.b16 %v695, %v694
      %v729 = vpack.c.b16 %v697, %v696
      %v730 = vpack.c.b16 %v699, %v698
      %v731 = vpack.c.b16 %v701, %v700
      %v732 = vpack.c.b16 %v703, %v702
      %v733 = vpack.c.b16 %v705, %v704
      %v734 = vpack.c.b16 %v707, %v706
      %v735 = vpack.c.b16 %v709, %v708
      %v736 = vpack.c.b16 %v711, %v710
      %v737 = vpack.c.b16 %v713, %v712
      %v738 = vpack.c.b16 %v715, %v714
      %v739 = vpack.c.b16 %v717, %v716
      %v740 = vpack.c.b16 %v719, %v718
      %v741 = vpack.c.b16 %v721, %v720
      %v742 = vpack.c.b16 %v723, %v722
      %v743 = vpack.c.b16 %v725, %v724
      %v744 = vpack.c.b16 %v727, %v726
      %v747 = vunpack.c.l.b16 %v658
      %v748 = vunpack.c.h.b16 %v658
      %v749 = vunpack.c.l.b16 %v659
      %v750 = vunpack.c.h.b16 %v659
      %v751 = vpack.c.b16 %v749, %v747
      %v752 = vpack.c.b16 %v750, %v748
      %v754 = vsel %vm330, %v728, 0
      %v757 = vsel %vm330, %v729, 0
      %v760 = vsel %vm330, %v730, 0
      %v763 = vsel %vm330, %v731, 0
      %v766 = vsel %vm330, %v732, 0
      %v769 = vsel %vm330, %v733, 0
      %v772 = vsel %vm330, %v734, 0
      %v775 = vsel %vm330, %v735, 0
      %v778 = vsel %vm330, %v736, 0
      %v781 = vsel %vm330, %v737, 0
      %v784 = vsel %vm330, %v738, 0
      %v787 = vsel %vm330, %v739, 0
      %v790 = vsel %vm330, %v740, 0
      %v793 = vsel %vm330, %v741, 0
      %v796 = vsel %vm330, %v742, 0
      %v799 = vsel %vm330, %v743, 0
      %v802 = vsel %vm330, %v744, 0
      %v805 = vsel %vm382, %v751, 0
      %v808 = vsel %vm382, %v752, 0
      %810 = vmatprep.subr.bf16.mxu0 %v808
      %811 = vmatpush1.bf16.msra.mxu0 %v805
      %812 = vmatprep.subr.bf16.mxu0 0
      %813 = vmatpush1.bf16.msra.mxu0 0
      %814 = vmatprep.subr.bf16.mxu0 0
      %815 = vmatpush1.bf16.msra.mxu0 0
      %816 = vmatprep.subr.bf16.mxu0 0
      %817 = vmatpush1.bf16.msra.mxu0 0
      %818 = vmatprep.subr.bf16.mxu0 0
      %819 = vmatpush1.bf16.msra.mxu0 0
      %820 = vmatprep.subr.bf16.mxu0 0
      %821 = vmatpush1.bf16.msra.mxu0 0
      %822 = vmatprep.subr.bf16.mxu0 0
      %823 = vmatpush1.bf16.msra.mxu0 0
      %824 = vmatprep.subr.bf16.mxu0 0
      %825 = vmatpush1.bf16.msra.mxu0 0
      %826 = vmatprep.subr.bf16.mxu0 0
      %827 = vmatpush1.bf16.msra.mxu0 0
      %828 = vmatprep.subr.bf16.mxu0 0
      %829 = vmatpush1.bf16.msra.mxu0 0
      %830 = vmatprep.subr.bf16.mxu0 0
      %831 = vmatpush1.bf16.msra.mxu0 0
      %832 = vmatprep.subr.bf16.mxu0 0
      %833 = vmatpush1.bf16.msra.mxu0 0
      %834 = vmatprep.subr.bf16.mxu0 0
      %835 = vmatpush1.bf16.msra.mxu0 0
      %836 = vmatprep.subr.bf16.mxu0 0
      %837 = vmatpush1.bf16.msra.mxu0 0
      %838 = vmatprep.subr.bf16.mxu0 0
      %839 = vmatpush1.bf16.msra.mxu0 0
      %840 = vmatprep.subr.bf16.mxu0 0
      %841 = vmatpush1.bf16.msra.mxu0 0
      %842 = vmatprep.mubr.bf16.mxu0 0
      %843 = vmatmul.mubr.bf16.gmra.mrb[0].mxu0 %v754
      %v844 = vpop.f32.mrb[0].mxu0
      %v845 = vadd.f32 0.0, %v844
      %v846 = vpop.f32.mrb[0].mxu0
      %v847 = vpop.f32.mrb[0].mxu0
      %v848 = vadd.f32 0.0, %v847
      %v849 = vpop.f32.mrb[0].mxu0
      %850 = vmatprep.mubr.bf16.mxu0 0
      %851 = vmatmul.mubr.bf16.gmra.mrb[0].mxu0 %v757
      %v852 = vpop.f32.mrb[0].mxu0
      %v853 = vadd.f32 0.0, %v852
      %v854 = vpop.f32.mrb[0].mxu0
      %v855 = vadd.f32 0.0, %v854
      %v856 = vpop.f32.mrb[0].mxu0
      %v857 = vadd.f32 0.0, %v856
      %v858 = vpop.f32.mrb[0].mxu0
      %v859 = vadd.f32 0.0, %v858
      %860 = vmatprep.mubr.bf16.mxu0 0
      %861 = vmatmul.mubr.bf16.gmra.mrb[0].mxu0 %v760
      %v862 = vpop.f32.mrb[0].mxu0
      %v863 = vadd.f32 0.0, %v862
      %v864 = vpop.f32.mrb[0].mxu0
      %v865 = vadd.f32 0.0, %v864
      %v866 = vpop.f32.mrb[0].mxu0
      %v867 = vadd.f32 0.0, %v866
      %v868 = vpop.f32.mrb[0].mxu0
      %v869 = vadd.f32 0.0, %v868
      %870 = vmatprep.mubr.bf16.mxu0 0
      %871 = vmatmul.mubr.bf16.gmra.mrb[0].mxu0 %v763
      %v872 = vpop.f32.mrb[0].mxu0
      %v873 = vadd.f32 0.0, %v872
      %v874 = vpop.f32.mrb[0].mxu0
      %v875 = vadd.f32 0.0, %v874
      %v876 = vpop.f32.mrb[0].mxu0
      %v877 = vadd.f32 0.0, %v876
      %v878 = vpop.f32.mrb[0].mxu0
      %v879 = vadd.f32 0.0, %v878
      %880 = vmatprep.mubr.bf16.mxu0 0
      %881 = vmatmul.mubr.bf16.gmra.mrb[0].mxu0 %v766
      %v882 = vpop.f32.mrb[0].mxu0
      %v883 = vadd.f32 0.0, %v882
      %v884 = vpop.f32.mrb[0].mxu0
      %v885 = vadd.f32 0.0, %v884
      %v886 = vpop.f32.mrb[0].mxu0
      %v887 = vadd.f32 0.0, %v886
      %v888 = vpop.f32.mrb[0].mxu0
      %v889 = vadd.f32 0.0, %v888
      %890 = vmatprep.mubr.bf16.mxu0 0
      %891 = vmatmul.mubr.bf16.gmra.mrb[0].mxu0 %v769
      %v892 = vpop.f32.mrb[0].mxu0
      %v893 = vadd.f32 0.0, %v892
      %v894 = vpop.f32.mrb[0].mxu0
      %v895 = vadd.f32 0.0, %v894
      %v896 = vpop.f32.mrb[0].mxu0
      %v897 = vadd.f32 0.0, %v896
      %v898 = vpop.f32.mrb[0].mxu0
      %v899 = vadd.f32 0.0, %v898
      %900 = vmatprep.mubr.bf16.mxu0 0
      %901 = vmatmul.mubr.bf16.gmra.mrb[0].mxu0 %v772
      %v902 = vpop.f32.mrb[0].mxu0
      %v903 = vadd.f32 0.0, %v902
      %v904 = vpop.f32.mrb[0].mxu0
      %v905 = vadd.f32 0.0, %v904
      %v906 = vpop.f32.mrb[0].mxu0
      %v907 = vadd.f32 0.0, %v906
      %v908 = vpop.f32.mrb[0].mxu0
      %v909 = vadd.f32 0.0, %v908
      %910 = vmatprep.mubr.bf16.mxu0 0
      %911 = vmatmul.mubr.bf16.gmra.mrb[0].mxu0 %v775
      %v912 = vpop.f32.mrb[0].mxu0
      %v913 = vadd.f32 0.0, %v912
      %v914 = vpop.f32.mrb[0].mxu0
      %v915 = vadd.f32 0.0, %v914
      %v916 = vpop.f32.mrb[0].mxu0
      %v917 = vadd.f32 0.0, %v916
      %v918 = vpop.f32.mrb[0].mxu0
      %v919 = vadd.f32 0.0, %v918
      %920 = vmatprep.mubr.bf16.mxu0 0
      %921 = vmatmul.mubr.bf16.gmra.mrb[0].mxu0 %v778
      %v922 = vpop.f32.mrb[0].mxu0
      %v923 = vadd.f32 0.0, %v922
      %v924 = vpop.f32.mrb[0].mxu0
      %v925 = vadd.f32 0.0, %v924
      %v926 = vpop.f32.mrb[0].mxu0
      %v927 = vadd.f32 0.0, %v926
      %v928 = vpop.f32.mrb[0].mxu0
      %v929 = vadd.f32 0.0, %v928
      %930 = vmatprep.mubr.bf16.mxu0 0
      %931 = vmatmul.mubr.bf16.gmra.mrb[0].mxu0 %v781
      %v932 = vpop.f32.mrb[0].mxu0
      %v933 = vadd.f32 0.0, %v932
      %v934 = vpop.f32.mrb[0].mxu0
      %v935 = vadd.f32 0.0, %v934
      %v936 = vpop.f32.mrb[0].mxu0
      %v937 = vadd.f32 0.0, %v936
      %v938 = vpop.f32.mrb[0].mxu0
      %v939 = vadd.f32 0.0, %v938
      %940 = vmatprep.mubr.bf16.mxu0 0
      %941 = vmatmul.mubr.bf16.gmra.mrb[0].mxu0 %v784
      %v942 = vpop.f32.mrb[0].mxu0
      %v943 = vadd.f32 0.0, %v942
      %v944 = vpop.f32.mrb[0].mxu0
      %v945 = vadd.f32 0.0, %v944
      %v946 = vpop.f32.mrb[0].mxu0
      %v947 = vadd.f32 0.0, %v946
      %v948 = vpop.f32.mrb[0].mxu0
      %v949 = vadd.f32 0.0, %v948
      %950 = vmatprep.mubr.bf16.mxu0 0
      %951 = vmatmul.mubr.bf16.gmra.mrb[0].mxu0 %v787
      %v952 = vpop.f32.mrb[0].mxu0
      %v953 = vadd.f32 0.0, %v952
      %v954 = vpop.f32.mrb[0].mxu0
      %v955 = vadd.f32 0.0, %v954
      %v956 = vpop.f32.mrb[0].mxu0
      %v957 = vadd.f32 0.0, %v956
      %v958 = vpop.f32.mrb[0].mxu0
      %v959 = vadd.f32 0.0, %v958
      %960 = vmatprep.mubr.bf16.mxu0 0
      %961 = vmatmul.mubr.bf16.gmra.mrb[0].mxu0 %v790
      %v962 = vpop.f32.mrb[0].mxu0
      %v963 = vadd.f32 0.0, %v962
      %v964 = vpop.f32.mrb[0].mxu0
      %v965 = vadd.f32 0.0, %v964
      %v966 = vpop.f32.mrb[0].mxu0
      %v967 = vadd.f32 0.0, %v966
      %v968 = vpop.f32.mrb[0].mxu0
      %v969 = vadd.f32 0.0, %v968
      %970 = vmatprep.mubr.bf16.mxu0 0
      %971 = vmatmul.mubr.bf16.gmra.mrb[0].mxu0 %v793
      %v972 = vpop.f32.mrb[0].mxu0
      %v973 = vadd.f32 0.0, %v972
      %v974 = vpop.f32.mrb[0].mxu0
      %v975 = vadd.f32 0.0, %v974
      %v976 = vpop.f32.mrb[0].mxu0
      %v977 = vadd.f32 0.0, %v976
      %v978 = vpop.f32.mrb[0].mxu0
      %v979 = vadd.f32 0.0, %v978
      %980 = vmatprep.mubr.bf16.mxu0 0
      %981 = vmatmul.mubr.bf16.gmra.mrb[0].mxu0 %v796
      %v982 = vpop.f32.mrb[0].mxu0
      %v983 = vadd.f32 0.0, %v982
      %v984 = vpop.f32.mrb[0].mxu0
      %v985 = vadd.f32 0.0, %v984
      %v986 = vpop.f32.mrb[0].mxu0
      %v987 = vadd.f32 0.0, %v986
      %v988 = vpop.f32.mrb[0].mxu0
      %v989 = vadd.f32 0.0, %v988
      %990 = vmatprep.mubr.bf16.mxu0 0
      %991 = vmatmul.mubr.bf16.gmra.mrb[0].mxu0 %v799
      %v992 = vpop.f32.mrb[0].mxu0
      %v993 = vadd.f32 0.0, %v992
      %v994 = vpop.f32.mrb[0].mxu0
      %v995 = vadd.f32 0.0, %v994
      %v996 = vpop.f32.mrb[0].mxu0
      %v997 = vadd.f32 0.0, %v996
      %v998 = vpop.f32.mrb[0].mxu0
      %v999 = vadd.f32 0.0, %v998
      %1000 = vmatprep.mubr.bf16.mxu0 0
      %1001 = vmatmul.mubr.bf16.gmra.mrb[0].mxu0 %v802
      %v1002 = vpop.f32.mrb[0].mxu0
      %v1003 = vpop.f32.mrb[0].mxu0
      %v1004 = vadd.f32 0.0, %v1003
      %v1005 = vpop.f32.mrb[0].mxu0
      %v1006 = vpop.f32.mrb[0].mxu0
      %v1007 = vadd.f32 0.0, %v1006
      %1008 = vdwg.mxu0
      %v1009 = vadd.f32 %v845, %v855
      %v1010 = vadd.f32 %v848, %v859
      %v1011 = vadd.f32 %v853, %v865
      %v1012 = vadd.f32 %v857, %v869
      %v1013 = vadd.f32 %v863, %v875
      %v1014 = vadd.f32 %v867, %v879
      %v1015 = vadd.f32 %v873, %v885
      %v1016 = vadd.f32 %v877, %v889
      %v1017 = vadd.f32 %v883, %v895
      %v1018 = vadd.f32 %v887, %v899
      %v1019 = vadd.f32 %v893, %v905
      %v1020 = vadd.f32 %v897, %v909
      %v1021 = vadd.f32 %v903, %v915
      %v1022 = vadd.f32 %v907, %v919
      %v1023 = vadd.f32 %v913, %v925
      %v1024 = vadd.f32 %v917, %v929
      %v1025 = vadd.f32 %v923, %v935
      %v1026 = vadd.f32 %v927, %v939
      %v1027 = vadd.f32 %v933, %v945
      %v1028 = vadd.f32 %v937, %v949
      %v1029 = vadd.f32 %v943, %v955
      %v1030 = vadd.f32 %v947, %v959
      %v1031 = vadd.f32 %v953, %v965
      %v1032 = vadd.f32 %v957, %v969
      %v1033 = vadd.f32 %v963, %v975
      %v1034 = vadd.f32 %v967, %v979
      %v1035 = vadd.f32 %v973, %v985
      %v1036 = vadd.f32 %v977, %v989
      %v1037 = vadd.f32 %v983, %v995
      %v1038 = vadd.f32 %v987, %v999
      %v1039 = vadd.f32 %v993, %v1004
      %v1040 = vadd.f32 %v997, %v1007
      %v1041 = vadd.f32 %v588, %v1009
      %v1042 = vadd.f32 %v589, %v1010
      %v1043 = vadd.f32 %v590, %v1011
      %v1044 = vadd.f32 %v591, %v1012
      %v1045 = vadd.f32 %v592, %v1013
      %v1046 = vadd.f32 %v593, %v1014
      %v1047 = vadd.f32 %v594, %v1015
      %v1048 = vadd.f32 %v595, %v1016
      %v1049 = vadd.f32 %v596, %v1017
      %v1050 = vadd.f32 %v597, %v1018
      %v1051 = vadd.f32 %v598, %v1019
      %v1052 = vadd.f32 %v599, %v1020
      %v1053 = vadd.f32 %v600, %v1021
      %v1054 = vadd.f32 %v601, %v1022
      %v1055 = vadd.f32 %v602, %v1023
      %v1056 = vadd.f32 %v603, %v1024
      %v1057 = vadd.f32 %v604, %v1025
      %v1058 = vadd.f32 %v605, %v1026
      %v1059 = vadd.f32 %v606, %v1027
      %v1060 = vadd.f32 %v607, %v1028
      %v1061 = vadd.f32 %v608, %v1029
      %v1062 = vadd.f32 %v609, %v1030
      %v1063 = vadd.f32 %v610, %v1031
      %v1064 = vadd.f32 %v611, %v1032
      %v1065 = vadd.f32 %v612, %v1033
      %v1066 = vadd.f32 %v613, %v1034
      %v1067 = vadd.f32 %v614, %v1035
      %v1068 = vadd.f32 %v615, %v1036
      %v1069 = vadd.f32 %v616, %v1037
      %v1070 = vadd.f32 %v617, %v1038
      %v1071 = vadd.f32 %v618, %v1039
      %v1072 = vadd.f32 %v619, %v1040
      %v1073 = vld [vmem:[%s2] sm:$0x1]
      %v1075 = vlaneseq
      %v1076 = vshrl.u32 %v1075, 7
      %v1077 = vsub.s32 0, %v1076
      %v1078 = vrot.slane %v1073, %v1077
      %v1080 = vadd.f32 %v1041, %v1078
      %v1081 = vadd.f32 %v1042, %v1078
      %v1082 = vadd.f32 %v1043, %v1078
      %v1083 = vadd.f32 %v1044, %v1078
      %v1084 = vadd.f32 %v1045, %v1078
      %v1085 = vadd.f32 %v1046, %v1078
      %v1086 = vadd.f32 %v1047, %v1078
      %v1087 = vadd.f32 %v1048, %v1078
      %v1088 = vadd.f32 %v1049, %v1078
      %v1089 = vadd.f32 %v1050, %v1078
      %v1090 = vadd.f32 %v1051, %v1078
      %v1091 = vadd.f32 %v1052, %v1078
      %v1092 = vadd.f32 %v1053, %v1078
      %v1093 = vadd.f32 %v1054, %v1078
      %v1094 = vadd.f32 %v1055, %v1078
      %v1095 = vadd.f32 %v1056, %v1078
      %v1096 = vadd.f32 %v1057, %v1078
      %v1097 = vadd.f32 %v1058, %v1078
      %v1098 = vadd.f32 %v1059, %v1078
      %v1099 = vadd.f32 %v1060, %v1078
      %v1100 = vadd.f32 %v1061, %v1078
      %v1101 = vadd.f32 %v1062, %v1078
      %v1102 = vadd.f32 %v1063, %v1078
      %v1103 = vadd.f32 %v1064, %v1078
      %v1104 = vadd.f32 %v1065, %v1078
      %v1105 = vadd.f32 %v1066, %v1078
      %v1106 = vadd.f32 %v1067, %v1078
      %v1107 = vadd.f32 %v1068, %v1078
      %v1108 = vadd.f32 %v1069, %v1078
      %v1109 = vadd.f32 %v1070, %v1078
      %v1110 = vadd.f32 %v1071, %v1078
      %v1111 = vadd.f32 %v1072, %v1078
      %v1112 = vmax.f32 %v1080, 0.0
      %v1113 = vmax.f32 %v1081, 0.0
      %v1114 = vmax.f32 %v1082, 0.0
      %v1115 = vmax.f32 %v1083, 0.0
      %v1116 = vmax.f32 %v1084, 0.0
      %v1117 = vmax.f32 %v1085, 0.0
      %v1118 = vmax.f32 %v1086, 0.0
      %v1119 = vmax.f32 %v1087, 0.0
      %v1120 = vmax.f32 %v1088, 0.0
      %v1121 = vmax.f32 %v1089, 0.0
      %v1122 = vmax.f32 %v1090, 0.0
      %v1123 = vmax.f32 %v1091, 0.0
      %v1124 = vmax.f32 %v1092, 0.0
      %v1125 = vmax.f32 %v1093, 0.0
      %v1126 = vmax.f32 %v1094, 0.0
      %v1127 = vmax.f32 %v1095, 0.0
      %v1128 = vmax.f32 %v1096, 0.0
      %v1129 = vmax.f32 %v1097, 0.0
      %v1130 = vmax.f32 %v1098, 0.0
      %v1131 = vmax.f32 %v1099, 0.0
      %v1132 = vmax.f32 %v1100, 0.0
      %v1133 = vmax.f32 %v1101, 0.0
      %v1134 = vmax.f32 %v1102, 0.0
      %v1135 = vmax.f32 %v1103, 0.0
      %v1136 = vmax.f32 %v1104, 0.0
      %v1137 = vmax.f32 %v1105, 0.0
      %v1138 = vmax.f32 %v1106, 0.0
      %v1139 = vmax.f32 %v1107, 0.0
      %v1140 = vmax.f32 %v1108, 0.0
      %v1141 = vmax.f32 %v1109, 0.0
      %v1142 = vmax.f32 %v1110, 0.0
      %v1143 = vmax.f32 %v1111, 0.0
      %v1144 = vpack.c.bf16 %v1113, %v1112
      %v1145 = vpack.c.bf16 %v1115, %v1114
      %v1146 = vpack.c.bf16 %v1117, %v1116
      %v1147 = vpack.c.bf16 %v1119, %v1118
      %v1148 = vpack.c.bf16 %v1121, %v1120
      %v1149 = vpack.c.bf16 %v1123, %v1122
      %v1150 = vpack.c.bf16 %v1125, %v1124
      %v1151 = vpack.c.bf16 %v1127, %v1126
      %v1152 = vpack.c.bf16 %v1129, %v1128
      %v1153 = vpack.c.bf16 %v1131, %v1130
      %v1154 = vpack.c.bf16 %v1133, %v1132
      %v1155 = vpack.c.bf16 %v1135, %v1134
      %v1156 = vpack.c.bf16 %v1137, %v1136
      %v1157 = vpack.c.bf16 %v1139, %v1138
      %v1158 = vpack.c.bf16 %v1141, %v1140
      %v1159 = vpack.c.bf16 %v1143, %v1142
      %v1176 = vunpack.c.l.b16 %v1144
      %v1177 = vunpack.c.h.b16 %v1144
      %v1178 = vunpack.c.l.b16 %v1145
      %v1179 = vunpack.c.h.b16 %v1145
      %v1180 = vunpack.c.l.b16 %v1146
      %v1181 = vunpack.c.h.b16 %v1146
      %v1182 = vunpack.c.l.b16 %v1147
      %v1183 = vunpack.c.h.b16 %v1147
      %v1184 = vunpack.c.l.b16 %v1148
      %v1185 = vunpack.c.h.b16 %v1148
      %v1186 = vunpack.c.l.b16 %v1149
      %v1187 = vunpack.c.h.b16 %v1149
      %v1188 = vunpack.c.l.b16 %v1150
      %v1189 = vunpack.c.h.b16 %v1150
      %v1190 = vunpack.c.l.b16 %v1151
      %v1191 = vunpack.c.h.b16 %v1151
      %v1192 = vunpack.c.l.b16 %v1152
      %v1193 = vunpack.c.h.b16 %v1152
      %v1194 = vunpack.c.l.b16 %v1153
      %v1195 = vunpack.c.h.b16 %v1153
      %v1196 = vunpack.c.l.b16 %v1154
      %v1197 = vunpack.c.h.b16 %v1154
      %v1198 = vunpack.c.l.b16 %v1155
      %v1199 = vunpack.c.h.b16 %v1155
      %v1200 = vunpack.c.l.b16 %v1156
      %v1201 = vunpack.c.h.b16 %v1156
      %v1202 = vunpack.c.l.b16 %v1157
      %v1203 = vunpack.c.h.b16 %v1157
      %v1204 = vunpack.c.l.b16 %v1158
      %v1205 = vunpack.c.h.b16 %v1158
      %v1206 = vunpack.c.l.b16 %v1159
      %v1207 = vunpack.c.h.b16 %v1159
      %v1208 = vpack.c.b16 %v1176, %v1176
      %v1209 = vpack.c.b16 %v1177, %v1177
      %v1210 = vpack.c.b16 %v1178, %v1178
      %v1211 = vpack.c.b16 %v1179, %v1179
      %v1212 = vpack.c.b16 %v1180, %v1180
      %v1213 = vpack.c.b16 %v1181, %v1181
      %v1214 = vpack.c.b16 %v1182, %v1182
      %v1215 = vpack.c.b16 %v1183, %v1183
      %v1216 = vpack.c.b16 %v1184, %v1184
      %v1217 = vpack.c.b16 %v1185, %v1185
      %v1218 = vpack.c.b16 %v1186, %v1186
      %v1219 = vpack.c.b16 %v1187, %v1187
      %v1220 = vpack.c.b16 %v1188, %v1188
      %v1221 = vpack.c.b16 %v1189, %v1189
      %v1222 = vpack.c.b16 %v1190, %v1190
      %v1223 = vpack.c.b16 %v1191, %v1191
      %v1224 = vpack.c.b16 %v1192, %v1192
      %v1225 = vpack.c.b16 %v1193, %v1193
      %v1226 = vpack.c.b16 %v1194, %v1194
      %v1227 = vpack.c.b16 %v1195, %v1195
      %v1228 = vpack.c.b16 %v1196, %v1196
      %v1229 = vpack.c.b16 %v1197, %v1197
      %v1230 = vpack.c.b16 %v1198, %v1198
      %v1231 = vpack.c.b16 %v1199, %v1199
      %v1232 = vpack.c.b16 %v1200, %v1200
      %v1233 = vpack.c.b16 %v1201, %v1201
      %v1234 = vpack.c.b16 %v1202, %v1202
      %v1235 = vpack.c.b16 %v1203, %v1203
      %v1236 = vpack.c.b16 %v1204, %v1204
      %v1237 = vpack.c.b16 %v1205, %v1205
      %v1238 = vpack.c.b16 %v1206, %v1206
      %v1239 = vpack.c.b16 %v1207, %v1207
      %1272 = vst [vmem:[%s194] sm:$0xf] %v1208
      %1273 = vst [vmem:[%s194 + $0x4] sm:$0xf] %v1209
      %1274 = vst [vmem:[%s194 + $0x8] sm:$0xf] %v1210
      %1275 = vst [vmem:[%s194 + $0xc] sm:$0xf] %v1211
      %1276 = vst [vmem:[%s194 + $0x10] sm:$0xf] %v1212
      %1277 = vst [vmem:[%s194 + $0x14] sm:$0xf] %v1213
      %1278 = vst [vmem:[%s194 + $0x18] sm:$0xf] %v1214
      %1279 = vst [vmem:[%s194 + $0x1c] sm:$0xf] %v1215
      %1280 = vst [vmem:[%s194 + $0x20] sm:$0xf] %v1216
      %1281 = vst [vmem:[%s194 + $0x24] sm:$0xf] %v1217
      %1282 = vst [vmem:[%s194 + $0x28] sm:$0xf] %v1218
      %1283 = vst [vmem:[%s194 + $0x2c] sm:$0xf] %v1219
      %1284 = vst [vmem:[%s194 + $0x30] sm:$0xf] %v1220
      %1285 = vst [vmem:[%s194 + $0x34] sm:$0xf] %v1221
      %1286 = vst [vmem:[%s194 + $0x38] sm:$0xf] %v1222
      %1287 = vst [vmem:[%s194 + $0x3c] sm:$0xf] %v1223
      %1288 = vst [vmem:[%s194 + $0x40] sm:$0xf] %v1224
      %1289 = vst [vmem:[%s194 + $0x44] sm:$0xf] %v1225
      %1290 = vst [vmem:[%s194 + $0x48] sm:$0xf] %v1226
      %1291 = vst [vmem:[%s194 + $0x4c] sm:$0xf] %v1227
      %1292 = vst [vmem:[%s194 + $0x50] sm:$0xf] %v1228
      %1293 = vst [vmem:[%s194 + $0x54] sm:$0xf] %v1229
      %1294 = vst [vmem:[%s194 + $0x58] sm:$0xf] %v1230
      %1295 = vst [vmem:[%s194 + $0x5c] sm:$0xf] %v1231
      %1296 = vst [vmem:[%s194 + $0x60] sm:$0xf] %v1232
      %1297 = vst [vmem:[%s194 + $0x64] sm:$0xf] %v1233
      %1298 = vst [vmem:[%s194 + $0x68] sm:$0xf] %v1234
      %1299 = vst [vmem:[%s194 + $0x6c] sm:$0xf] %v1235
      %1300 = vst [vmem:[%s194 + $0x70] sm:$0xf] %v1236
      %1301 = vst [vmem:[%s194 + $0x74] sm:$0xf] %v1237
      %1302 = vst [vmem:[%s194 + $0x78] sm:$0xf] %v1238
      %1303 = vst [vmem:[%s194 + $0x7c] sm:$0xf] %v1239
      %s1304 = smul.u32 16, %s19
      %p1305 = scmp.lt.s32.totalorder %s18, 1
      %s1306 = scalar_select %p1305, %s18, 1
      %p1307 = scmp.lt.s32.totalorder %s1304, 15
      %s1308 = scalar_select %p1307, %s1304, 15
      %s1309 = smul.addr %s1308, 2
      %s1310 = smul.addr %s1306, 32
      %s1311 = sadd.s32 %s1309, %s1310
      %s1312 = smul.addr %s1311, 4
      %s1313 = scalar_lea.vmem %s3, %s1312
      // Predicated region
      $region33: #{timm_backbone_forward.5} parent=31 // pred_check
        %p1314 = pneg %p114
      $region34: #{timm_backbone_forward.5} parent=31 // pred_check_branch
        %1316 = sbr.rel (%p1314) target = $region36
      $region35: #{timm_backbone_forward.5} parent=31 // pred_region
        %s1317 = smul.u32 16, %s19
      $region36: #{timm_backbone_forward.5} parent=31 // pred_fallthru
        _
    $region32: #{timm_backbone_forward.5} parent=5 // pred_fallthru
      _
    %p1318 = scmp.le.s32.totalorder 2, %s9
    // Predicated region
    $region37: #{timm_backbone_forward.5} parent=5 // pred_check
      %p1319 = pneg %p1318
    $region38: #{timm_backbone_forward.5} parent=5 // pred_check_branch
      %1321 = sbr.rel (%p1319) target = $region40
    $region39: #{timm_backbone_forward.5} parent=5 // pred_region
      %s1322 = ssub.s32 %s9, 2
      // Predicated region
      $region41: #{timm_backbone_forward.5} parent=39 // pred_check
        %p1323 = pneg %p120
      $region42: #{timm_backbone_forward.5} parent=39 // pred_check_branch
        %1325 = sbr.rel (%p1323) target = $region44
      $region43: #{timm_backbone_forward.5} parent=39 // pred_region
        %s1326 = smul.u32 16, %s21
        %p1327 = scmp.lt.s32.totalorder %s20, 1
        %s1328 = scalar_select %p1327, %s20, 1
        %p1329 = scmp.lt.s32.totalorder %s1326, 15
        %s1330 = scalar_select %p1329, %s1326, 15
        %s1331 = smul.addr %s1330, 2
        %s1332 = smul.addr %s1328, 32
        %s1333 = sadd.s32 %s1331, %s1332
        %s1334 = smul.addr %s1333, 4
        %s1335 = scalar_lea.vmem %s3, %s1334
      $region44: #{timm_backbone_forward.5} parent=39 // pred_fallthru
        _
    $region40: #{timm_backbone_forward.5} parent=5 // pred_fallthru
      _
  $region6: #{timm_backbone_forward.5} parent=0 // loop_footer
    %s13 = sadd.s32 1, %s9
  $region7: #{timm_backbone_forward.5} parent=0 // loop_footer_branch
    %8 = sbr.rel target = $region3
  $region8: #{timm_backbone_forward.5} parent=0 // loop_exit
    _

// kernel: timm_backbone_forward.6
$region0: #{timm_backbone_forward.6}
  #allocation0 [shape = 'u32[]', space=smem, size = 0x4, offset = 0x4, fixed_abs, tag = 'smem constant byte address 0x4 - core index']
  #allocation1 [shape = 'u32[144,128]{1,0:T(1,128)}', space=vmem, size = 0x12000, scoped, tag = 'internal scratch']
  %s0 = inlined_call_operand.vmem [shape: bf16[2,2,9,8,64], index: 0, kind: input, shape index: {}]
  %s1 = inlined_call_operand.vmem [shape: bf16[2,64,256], index: 1, kind: input, shape index: {}]
  %s2 = inlined_call_operand.vmem [shape: f32[1,128], index: 2, kind: input, shape index: {}]
  %s3 = inlined_call_operand.vmem [shape: bf16[2,8,8,128], index: 3, kind: output, shape index: {}]
  %s4 = sld [smem:[#allocation0]]
  $region45: #{timm_backbone_forward.6} parent=0
    _
  %s6 = ssub.s32 1, %s4
  %s7 = scalar_select 0, %s6, %s4
  loop: start=0, step=1, limit=4
  $region2: #{timm_backbone_forward.6} parent=0 // loop_pre_header
    _
  $region3: #{timm_backbone_forward.6} parent=0 // loop_header
    %s9 = sphi 0, %s13
    %p10 = scmp.ge.s32.totalorder %s9, 4
    %s16 = sphi 0, %s28
    %s17 = sphi 0, %s24
    %s18 = sphi 0, %s16
    %s19 = sphi 0, %s17
    %s20 = sphi 0, %s18
    %s21 = sphi 0, %s19
    %s31 = sphi 0, %s33
    %s34 = sphi 0, %s31
    %s35 = sphi 0, %s34
    %s51 = sphi 0, %s35
    %s55 = sphi 0, %s55
    %s57 = sphi 0, %s55
    %s58 = sphi 0, %s57
    %s72 = sphi 0, %s58
    %s76 = sphi 0, %s76
    %s78 = sphi 0, %s76
    %s79 = sphi 0, %s78
    %s93 = sphi 0, %s79
    %s101 = sphi 0, %s103
    %s104 = sphi 0, %s101
    %s105 = sphi 0, %s104
    %s121 = sphi 0, %s105
  $region4: #{timm_backbone_forward.6} parent=0 // loop_header_branch
    %12 = sbr.rel (%p10) target = $region8
  $region5: #{timm_backbone_forward.6} parent=0 // loop_body
    %s14 = ssub.s32 %s9, 1
    %s15 = ssub.s32 %s9, 2
    %s22 = sadd.s32 1, %s17
    %p23 = scmp.ge.s32.totalorder %s22, 1
    %s24 = scalar_select %p23, 0, %s22
    %s25 = sadd.s32 1, %s16
    %s26 = scalar_select %p23, %s25, %s16
    %p27 = scmp.ge.s32.totalorder %s26, 2
    %s28 = scalar_select %p27, 0, %s26
    %s29 = ssub.s32 %s16, %s28
    %p30 = scmp.eq.s32.totalorder %s29, 0
    %s32 = sadd.s32 %s31, 1
    %s33 = scalar_select %p30, %s31, %s32
    %p36 = pneg %p30
    %p37 = scmp.eq.s32.totalorder %s9, 1
    %p38 = por %p36, %p37
    %p39 = scmp.ne.s32.totalorder %s31, %s34
    %p40 = scmp.eq.s32.totalorder %s9, 0
    %p41 = por %p39, %p40
    %p42 = scmp.ne.s32.totalorder %s31, %s34
    %p43 = scmp.eq.s32.totalorder %s14, 1
    %p44 = por %p42, %p43
    %p45 = scmp.ne.s32.totalorder %s34, %s35
    %p46 = scmp.eq.s32.totalorder %s14, 0
    %p47 = por %p45, %p46
    %p48 = scmp.ne.s32.totalorder %s34, %s35
    %p49 = scmp.eq.s32.totalorder %s15, 1
    %p50 = por %p48, %p49
    %p52 = scmp.ne.s32.totalorder %s35, %s51
    %p53 = scmp.eq.s32.totalorder %s15, 0
    %p54 = por %p52, %p53
    %s56 = sadd.s32 %s55, 1
    %p59 = scmp.eq.s32.totalorder %s9, 1
    %p60 = scmp.ne.s32.totalorder %s55, %s57
    %p61 = scmp.eq.s32.totalorder %s9, 0
    %p62 = por %p60, %p61
    %p63 = scmp.ne.s32.totalorder %s55, %s57
    %p64 = scmp.eq.s32.totalorder %s14, 1
    %p65 = por %p63, %p64
    %p66 = scmp.ne.s32.totalorder %s57, %s58
    %p67 = scmp.eq.s32.totalorder %s14, 0
    %p68 = por %p66, %p67
    %p69 = scmp.ne.s32.totalorder %s57, %s58
    %p70 = scmp.eq.s32.totalorder %s15, 1
    %p71 = por %p69, %p70
    %p73 = scmp.ne.s32.totalorder %s58, %s72
    %p74 = scmp.eq.s32.totalorder %s15, 0
    %p75 = por %p73, %p74
    %s77 = sadd.s32 %s76, 1
    %p80 = scmp.eq.s32.totalorder %s9, 1
    %p81 = scmp.ne.s32.totalorder %s76, %s78
    %p82 = scmp.eq.s32.totalorder %s9, 0
    %p83 = por %p81, %p82
    %p84 = scmp.ne.s32.totalorder %s76, %s78
    %p85 = scmp.eq.s32.totalorder %s14, 1
    %p86 = por %p84, %p85
    %p87 = scmp.ne.s32.totalorder %s78, %s79
    %p88 = scmp.eq.s32.totalorder %s14, 0
    %p89 = por %p87, %p88
    %p90 = scmp.ne.s32.totalorder %s78, %s79
    %p91 = scmp.eq.s32.totalorder %s15, 1
    %p92 = por %p90, %p91
    %p94 = scmp.ne.s32.totalorder %s79, %s93
    %p95 = scmp.eq.s32.totalorder %s15, 0
    %p96 = por %p94, %p95
    %s97 = ssub.s32 %s16, %s28
    %s98 = ssub.s32 %s17, %s24
    %s99 = sor.u32 %s97, %s98
    %p100 = scmp.eq.s32.totalorder %s99, 0
    %s102 = sadd.s32 %s101, 1
    %s103 = scalar_select %p100, %s101, %s102
    %p106 = pneg %p100
    %p107 = scmp.eq.s32.totalorder %s9, 1
    %p108 = por %p106, %p107
    %p109 = scmp.ne.s32.totalorder %s101, %s104
    %p110 = scmp.eq.s32.totalorder %s9, 0
    %p111 = por %p109, %p110
    %p112 = scmp.ne.s32.totalorder %s101, %s104
    %p113 = scmp.eq.s32.totalorder %s14, 1
    %p114 = por %p112, %p113
    %p115 = scmp.ne.s32.totalorder %s104, %s105
    %p116 = scmp.eq.s32.totalorder %s14, 0
    %p117 = por %p115, %p116
    %p118 = scmp.ne.s32.totalorder %s104, %s105
    %p119 = scmp.eq.s32.totalorder %s15, 1
    %p120 = por %p118, %p119
    %p122 = scmp.ne.s32.totalorder %s105, %s121
    %p123 = scmp.eq.s32.totalorder %s15, 0
    %p124 = por %p122, %p123
    %p125 = scmp.le.s32.totalorder 1, %s9
    %p126 = scmp.lt.s32.totalorder %s9, 3
    %p127 = pnand %p125, %p126
    %p128 = pneg %p127
    // Predicated region
    $region9: #{timm_backbone_forward.6} parent=5 // pred_check
      _
    $region10: #{timm_backbone_forward.6} parent=5 // pred_check_branch
      %130 = sbr.rel (%p127) target = $region12
    $region11: #{timm_backbone_forward.6} parent=5 // pred_region
      %s131 = ssub.s32 %s9, 1
      // Predicated region
      $region13: #{timm_backbone_forward.6} parent=11 // pred_check
        %p132 = pneg %p68
      $region14: #{timm_backbone_forward.6} parent=11 // pred_check_branch
        %134 = sbr.rel (%p132) target = $region16
      $region15: #{timm_backbone_forward.6} parent=11 // pred_region
        _
      $region16: #{timm_backbone_forward.6} parent=11 // pred_fallthru
        _
      // Predicated region
      $region17: #{timm_backbone_forward.6} parent=11 // pred_check
        %p135 = pneg %p89
      $region18: #{timm_backbone_forward.6} parent=11 // pred_check_branch
        %137 = sbr.rel (%p135) target = $region20
      $region19: #{timm_backbone_forward.6} parent=11 // pred_region
        _
      $region20: #{timm_backbone_forward.6} parent=11 // pred_fallthru
        _
    $region12: #{timm_backbone_forward.6} parent=5 // pred_fallthru
      _
    %p138 = scmp.lt.s32.totalorder %s9, 2
    // Predicated region
    $region21: #{timm_backbone_forward.6} parent=5 // pred_check
      %p139 = pneg %p138
    $region22: #{timm_backbone_forward.6} parent=5 // pred_check_branch
      %141 = sbr.rel (%p139) target = $region24
    $region23: #{timm_backbone_forward.6} parent=5 // pred_region
      // Predicated region
      $region25: #{timm_backbone_forward.6} parent=23 // pred_check
        %p142 = pneg %p41
      $region26: #{timm_backbone_forward.6} parent=23 // pred_check_branch
        %144 = sbr.rel (%p142) target = $region28
      $region27: #{timm_backbone_forward.6} parent=23 // pred_region
        %p145 = scmp.lt.s32.totalorder %s16, 1
        %s146 = scalar_select %p145, %s16, 1
        %s147 = smul.addr %s146, 18
        %s148 = smul.addr %s147, 4
        %s149 = scalar_lea.vmem %s0, %s148
      $region28: #{timm_backbone_forward.6} parent=23 // pred_fallthru
        _
    $region24: #{timm_backbone_forward.6} parent=5 // pred_fallthru
      _
    %p150 = scmp.le.s32.totalorder 1, %s9
    %p151 = scmp.lt.s32.totalorder %s9, 3
    %p152 = pnand %p150, %p151
    %p153 = pneg %p152
    // Predicated region
    $region29: #{timm_backbone_forward.6} parent=5 // pred_check
      _
    $region30: #{timm_backbone_forward.6} parent=5 // pred_check_branch
      %155 = sbr.rel (%p152) target = $region32
    $region31: #{timm_backbone_forward.6} parent=5 // pred_region
      %s156 = ssub.s32 %s9, 1
      %p157 = scmp.lt.s32.totalorder %s18, 1
      %s158 = scalar_select %p157, %s18, 1
      %s159 = smul.addr %s158, 18
      %s160 = smul.addr %s159, 4
      %s161 = scalar_lea.vmem %s0, %s160
      %p162 = pneg %p47
      %p163 = pneg %p44
      %p164 = pneg %p68
      %p165 = pneg %p65
      %p166 = pneg %p89
      %p167 = pneg %p86
      %p168 = pneg %p117
      %p169 = pneg %p114
      %s170 = smul.u32 8, %s19
      %p171 = scmp.lt.s32.totalorder %s18, 1
      %s172 = scalar_select %p171, %s18, 1
      %p173 = scmp.lt.s32.totalorder %s170, 7
      %s174 = scalar_select %p173, %s170, 7
      %s175 = smul.addr %s172, 8
      %s176 = sadd.s32 %s174, %s175
      %s177 = smul.addr %s176, 4
      %s178 = scalar_lea.vmem %s3, %s177
      %p179 = scmp.lt.s32.totalorder %s18, 1
      %s180 = scalar_select %p179, %s18, 1
      %s181 = smul.addr %s180, 18
      %s182 = smul.addr %s181, 4
      %s183 = scalar_lea.vmem %s0, %s182
      %s184 = smul.u32 8, %s19
      %p185 = scmp.lt.s32.totalorder %s18, 1
      %s186 = scalar_select %p185, %s18, 1
      %p187 = scmp.lt.s32.totalorder %s184, 7
      %s188 = scalar_select %p187, %s184, 7
      %s189 = smul.addr %s186, 8
      %s190 = sadd.s32 %s188, %s189
      %s191 = smul.addr %s190, 4
      %s192 = scalar_lea.vmem %s3, %s191
      %s193 = smul.u32 8, %s19
      %s195 = smul.u32 %s19, 8
      %s196 = smul.addr %s195, 4
      %s197 = scalar_lea.vmem %s183, %s196
      %v198 = vld [vmem:[%s197] sm:$0xf]
      %v199 = vld [vmem:[%s197 + $0x4] sm:$0xf]
      %v200 = vld [vmem:[%s197 + $0x8] sm:$0xf]
      %v201 = vld [vmem:[%s197 + $0xc] sm:$0xf]
      %v202 = vld [vmem:[%s197 + $0x10] sm:$0xf]
      %v203 = vld [vmem:[%s197 + $0x14] sm:$0xf]
      %v204 = vld [vmem:[%s197 + $0x18] sm:$0xf]
      %v205 = vld [vmem:[%s197 + $0x1c] sm:$0xf]
      %v206 = vld [vmem:[%s197 + $0x20] sm:$0xf]
      %v207 = vld [vmem:[%s1] sm:$0xff]
      %v208 = vld [vmem:[%s1 + $0x8] sm:$0xff]
      %v209 = vld [vmem:[%s1 + $0x10] sm:$0xff]
      %v210 = vld [vmem:[%s1 + $0x18] sm:$0xff]
      %v211 = vld [vmem:[%s1 + $0x20] sm:$0xff]
      %v212 = vld [vmem:[%s1 + $0x28] sm:$0xff]
      %v213 = vld [vmem:[%s1 + $0x30] sm:$0xff]
      %v214 = vld [vmem:[%s1 + $0x38] sm:$0xff]
      %v224 = vunpack.c.l.b16 %v198
      %v225 = vunpack.c.l.b16 %v199
      %v226 = vunpack.c.l.b16 %v200
      %v227 = vunpack.c.l.b16 %v201
      %v228 = vunpack.c.l.b16 %v202
      %v229 = vunpack.c.l.b16 %v203
      %v230 = vunpack.c.l.b16 %v204
      %v231 = vunpack.c.l.b16 %v205
      %v232 = vunpack.c.l.b16 %v206
      %v233 = vpack.c.b16 %v225, %v224
      %v234 = vpack.c.b16 %v227, %v226
      %v235 = vpack.c.b16 %v229, %v228
      %v236 = vpack.c.b16 %v231, %v230
      %v237 = vpack.c.b16 %v232, %v232
      %v246 = vunpack.c.l.b16 %v207
      %v247 = vunpack.c.h.b16 %v207
      %v248 = vunpack.c.l.b16 %v208
      %v249 = vunpack.c.h.b16 %v208
      %v250 = vunpack.c.l.b16 %v209
      %v251 = vunpack.c.h.b16 %v209
      %v252 = vunpack.c.l.b16 %v210
      %v253 = vunpack.c.h.b16 %v210
      %v254 = vunpack.c.l.b16 %v211
      %v255 = vunpack.c.h.b16 %v211
      %v256 = vunpack.c.l.b16 %v212
      %v257 = vunpack.c.h.b16 %v212
      %v258 = vunpack.c.l.b16 %v213
      %v259 = vunpack.c.h.b16 %v213
      %v260 = vunpack.c.l.b16 %v214
      %v261 = vunpack.c.h.b16 %v214
      %v262 = vpack.c.b16 %v248, %v246
      %v263 = vpack.c.b16 %v249, %v247
      %v264 = vpack.c.b16 %v252, %v250
      %v265 = vpack.c.b16 %v253, %v251
      %v266 = vpack.c.b16 %v256, %v254
      %v267 = vpack.c.b16 %v257, %v255
      %v268 = vpack.c.b16 %v260, %v258
      %v269 = vpack.c.b16 %v261, %v259
      %vm278 = vcmask 523264
      %v280 = vsel %vm278, %v233, 0
      %v283 = vsel %vm278, %v234, 0
      %v286 = vsel %vm278, %v235, 0
      %v289 = vsel %vm278, %v236, 0
      %v292 = vsel %vm278, %v237, 0
      %294 = vmatprep.subr.bf16.mxu0 %v263
      %295 = vmatpush1.bf16.msra.mxu0 %v262
      %296 = vmatprep.subr.bf16.mxu0 %v265
      %297 = vmatpush1.bf16.msra.mxu0 %v264
      %298 = vmatprep.subr.bf16.mxu0 %v267
      %299 = vmatpush1.bf16.msra.mxu0 %v266
      %300 = vmatprep.subr.bf16.mxu0 %v269
      %301 = vmatpush1.bf16.msra.mxu0 %v268
      %302 = vmatprep.subr.bf16.mxu0 0
      %303 = vmatpush1.bf16.msra.mxu0 0
      %304 = vmatprep.subr.bf16.mxu0 0
      %305 = vmatpush1.bf16.msra.mxu0 0
      %306 = vmatprep.subr.bf16.mxu0 0
      %307 = vmatpush1.bf16.msra.mxu0 0
      %308 = vmatprep.subr.bf16.mxu0 0
      %309 = vmatpush1.bf16.msra.mxu0 0
      %310 = vmatprep.subr.bf16.mxu0 0
      %311 = vmatpush1.bf16.msra.mxu0 0
      %312 = vmatprep.subr.bf16.mxu0 0
      %313 = vmatpush1.bf16.msra.mxu0 0
      %314 = vmatprep.subr.bf16.mxu0 0
      %315 = vmatpush1.bf16.msra.mxu0 0
      %316 = vmatprep.subr.bf16.mxu0 0
      %317 = vmatpush1.bf16.msra.mxu0 0
      %318 = vmatprep.subr.bf16.mxu0 0
      %319 = vmatpush1.bf16.msra.mxu0 0
      %320 = vmatprep.subr.bf16.mxu0 0
      %321 = vmatpush1.bf16.msra.mxu0 0
      %322 = vmatprep.subr.bf16.mxu0 0
      %323 = vmatpush1.bf16.msra.mxu0 0
      %324 = vmatprep.subr.bf16.mxu0 0
      %325 = vmatpush1.bf16.msra.mxu0 0
      %326 = vmatprep.mubr.bf16.mxu0 0
      %327 = vmatmul.mubr.bf16.gmra.mrb[0].mxu0 %v280
      %v328 = vpop.f32.mrb[0].mxu0
      %v329 = vadd.f32 0.0, %v328
      %v330 = vpop.f32.mrb[0].mxu0
      %v331 = vpop.f32.mrb[0].mxu0
      %v332 = vadd.f32 0.0, %v331
      %v333 = vpop.f32.mrb[0].mxu0
      %v334 = vadd.f32 0.0, %v333
      %335 = vmatprep.mubr.bf16.mxu0 0
      %336 = vmatmul.mubr.bf16.gmra.mrb[0].mxu0 %v283
      %v337 = vpop.f32.mrb[0].mxu0
      %v338 = vadd.f32 0.0, %v337
      %v339 = vpop.f32.mrb[0].mxu0
      %v340 = vadd.f32 0.0, %v339
      %v341 = vpop.f32.mrb[0].mxu0
      %v342 = vadd.f32 0.0, %v341
      %v343 = vpop.f32.mrb[0].mxu0
      %v344 = vadd.f32 0.0, %v343
      %345 = vmatprep.mubr.bf16.mxu0 0
      %346 = vmatmul.mubr.bf16.gmra.mrb[0].mxu0 %v286
      %v347 = vpop.f32.mrb[0].mxu0
      %v348 = vadd.f32 0.0, %v347
      %v349 = vpop.f32.mrb[0].mxu0
      %v350 = vadd.f32 0.0, %v349
      %v351 = vpop.f32.mrb[0].mxu0
      %v352 = vadd.f32 0.0, %v351
      %v353 = vpop.f32.mrb[0].mxu0
      %v354 = vadd.f32 0.0, %v353
      %355 = vmatprep.mubr.bf16.mxu0 0
      %356 = vmatmul.mubr.bf16.gmra.mrb[0].mxu0 %v289
      %v357 = vpop.f32.mrb[0].mxu0
      %v358 = vadd.f32 0.0, %v357
      %v359 = vpop.f32.mrb[0].mxu0
      %v360 = vadd.f32 0.0, %v359
      %v361 = vpop.f32.mrb[0].mxu0
      %v362 = vadd.f32 0.0, %v361
      %v363 = vpop.f32.mrb[0].mxu0
      %v364 = vadd.f32 0.0, %v363
      %365 = vmatprep.mubr.bf16.mxu0 0
      %366 = vmatmul.mubr.bf16.gmra.mrb[0].mxu0 %v292
      %v367 = vpop.f32.mrb[0].mxu0
      %v368 = vpop.f32.mrb[0].mxu0
      %v369 = vadd.f32 0.0, %v368
      %v370 = vpop.f32.mrb[0].mxu0
      %v371 = vpop.f32.mrb[0].mxu0
      %372 = vdwg.mxu0
      %v373 = vadd.f32 %v329, %v334
      %v374 = vadd.f32 %v332, %v340
      %v375 = vadd.f32 %v338, %v344
      %v376 = vadd.f32 %v342, %v350
      %v377 = vadd.f32 %v348, %v354
      %v378 = vadd.f32 %v352, %v360
      %v379 = vadd.f32 %v358, %v364
      %v380 = vadd.f32 %v362, %v369
      %s381 = sadd.s32 %s195, 9
      %s382 = smul.addr %s381, 4
      %s383 = scalar_lea.vmem %s183, %s382
      %v384 = vld [vmem:[%s383] sm:$0xf]
      %v385 = vld [vmem:[%s383 + $0x4] sm:$0xf]
      %v386 = vld [vmem:[%s383 + $0x8] sm:$0xf]
      %v387 = vld [vmem:[%s383 + $0xc] sm:$0xf]
      %v388 = vld [vmem:[%s383 + $0x10] sm:$0xf]
      %v389 = vld [vmem:[%s383 + $0x14] sm:$0xf]
      %v390 = vld [vmem:[%s383 + $0x18] sm:$0xf]
      %v391 = vld [vmem:[%s383 + $0x1c] sm:$0xf]
      %v392 = vld [vmem:[%s383 + $0x20] sm:$0xf]
      %s393 = scalar_lea.vmem %s1, 64
      %v394 = vld [vmem:[%s393] sm:$0xff]
      %v395 = vld [vmem:[%s393 + $0x8] sm:$0xff]
      %v396 = vld [vmem:[%s393 + $0x10] sm:$0xff]
      %v397 = vld [vmem:[%s393 + $0x18] sm:$0xff]
      %v398 = vld [vmem:[%s393 + $0x20] sm:$0xff]
      %v399 = vld [vmem:[%s393 + $0x28] sm:$0xff]
      %v400 = vld [vmem:[%s393 + $0x30] sm:$0xff]
      %v401 = vld [vmem:[%s393 + $0x38] sm:$0xff]
      %v411 = vunpack.c.l.b16 %v384
      %v412 = vunpack.c.l.b16 %v385
      %v413 = vunpack.c.l.b16 %v386
      %v414 = vunpack.c.l.b16 %v387
      %v415 = vunpack.c.l.b16 %v388
      %v416 = vunpack.c.l.b16 %v389
      %v417 = vunpack.c.l.b16 %v390
      %v418 = vunpack.c.l.b16 %v391
      %v419 = vunpack.c.l.b16 %v392
      %v420 = vpack.c.b16 %v412, %v411
      %v421 = vpack.c.b16 %v414, %v413
      %v422 = vpack.c.b16 %v416, %v415
      %v423 = vpack.c.b16 %v418, %v417
      %v424 = vpack.c.b16 %v419, %v419
      %v433 = vunpack.c.l.b16 %v394
      %v434 = vunpack.c.h.b16 %v394
      %v435 = vunpack.c.l.b16 %v395
      %v436 = vunpack.c.h.b16 %v395
      %v437 = vunpack.c.l.b16 %v396
      %v438 = vunpack.c.h.b16 %v396
      %v439 = vunpack.c.l.b16 %v397
      %v440 = vunpack.c.h.b16 %v397
      %v441 = vunpack.c.l.b16 %v398
      %v442 = vunpack.c.h.b16 %v398
      %v443 = vunpack.c.l.b16 %v399
      %v444 = vunpack.c.h.b16 %v399
      %v445 = vunpack.c.l.b16 %v400
      %v446 = vunpack.c.h.b16 %v400
      %v447 = vunpack.c.l.b16 %v401
      %v448 = vunpack.c.h.b16 %v401
      %v449 = vpack.c.b16 %v435, %v433
      %v450 = vpack.c.b16 %v436, %v434
      %v451 = vpack.c.b16 %v439, %v437
      %v452 = vpack.c.b16 %v440, %v438
      %v453 = vpack.c.b16 %v443, %v441
      %v454 = vpack.c.b16 %v444, %v442
      %v455 = vpack.c.b16 %v447, %v445
      %v456 = vpack.c.b16 %v448, %v446
      %v466 = vsel %vm278, %v420, 0
      %v469 = vsel %vm278, %v421, 0
      %v472 = vsel %vm278, %v422, 0
      %v475 = vsel %vm278, %v423, 0
      %v478 = vsel %vm278, %v424, 0
      %480 = vmatprep.subr.bf16.mxu0 %v450
      %481 = vmatpush1.bf16.msra.mxu0 %v449
      %482 = vmatprep.subr.bf16.mxu0 %v452
      %483 = vmatpush1.bf16.msra.mxu0 %v451
      %484 = vmatprep.subr.bf16.mxu0 %v454
      %485 = vmatpush1.bf16.msra.mxu0 %v453
      %486 = vmatprep.subr.bf16.mxu0 %v456
      %487 = vmatpush1.bf16.msra.mxu0 %v455
      %488 = vmatprep.subr.bf16.mxu0 0
      %489 = vmatpush1.bf16.msra.mxu0 0
      %490 = vmatprep.subr.bf16.mxu0 0
      %491 = vmatpush1.bf16.msra.mxu0 0
      %492 = vmatprep.subr.bf16.mxu0 0
      %493 = vmatpush1.bf16.msra.mxu0 0
      %494 = vmatprep.subr.bf16.mxu0 0
      %495 = vmatpush1.bf16.msra.mxu0 0
      %496 = vmatprep.subr.bf16.mxu0 0
      %497 = vmatpush1.bf16.msra.mxu0 0
      %498 = vmatprep.subr.bf16.mxu0 0
      %499 = vmatpush1.bf16.msra.mxu0 0
      %500 = vmatprep.subr.bf16.mxu0 0
      %501 = vmatpush1.bf16.msra.mxu0 0
      %502 = vmatprep.subr.bf16.mxu0 0
      %503 = vmatpush1.bf16.msra.mxu0 0
      %504 = vmatprep.subr.bf16.mxu0 0
      %505 = vmatpush1.bf16.msra.mxu0 0
      %506 = vmatprep.subr.bf16.mxu0 0
      %507 = vmatpush1.bf16.msra.mxu0 0
      %508 = vmatprep.subr.bf16.mxu0 0
      %509 = vmatpush1.bf16.msra.mxu0 0
      %510 = vmatprep.subr.bf16.mxu0 0
      %511 = vmatpush1.bf16.msra.mxu0 0
      %512 = vmatprep.mubr.bf16.mxu0 0
      %513 = vmatmul.mubr.bf16.gmra.mrb[0].mxu0 %v466
      %v514 = vpop.f32.mrb[0].mxu0
      %v515 = vadd.f32 0.0, %v514
      %v516 = vpop.f32.mrb[0].mxu0
      %v517 = vpop.f32.mrb[0].mxu0
      %v518 = vadd.f32 0.0, %v517
      %v519 = vpop.f32.mrb[0].mxu0
      %v520 = vadd.f32 0.0, %v519
      %521 = vmatprep.mubr.bf16.mxu0 0
      %522 = vmatmul.mubr.bf16.gmra.mrb[0].mxu0 %v469
      %v523 = vpop.f32.mrb[0].mxu0
      %v524 = vadd.f32 0.0, %v523
      %v525 = vpop.f32.mrb[0].mxu0
      %v526 = vadd.f32 0.0, %v525
      %v527 = vpop.f32.mrb[0].mxu0
      %v528 = vadd.f32 0.0, %v527
      %v529 = vpop.f32.mrb[0].mxu0
      %v530 = vadd.f32 0.0, %v529
      %531 = vmatprep.mubr.bf16.mxu0 0
      %532 = vmatmul.mubr.bf16.gmra.mrb[0].mxu0 %v472
      %v533 = vpop.f32.mrb[0].mxu0
      %v534 = vadd.f32 0.0, %v533
      %v535 = vpop.f32.mrb[0].mxu0
      %v536 = vadd.f32 0.0, %v535
      %v537 = vpop.f32.mrb[0].mxu0
      %v538 = vadd.f32 0.0, %v537
      %v539 = vpop.f32.mrb[0].mxu0
      %v540 = vadd.f32 0.0, %v539
      %541 = vmatprep.mubr.bf16.mxu0 0
      %542 = vmatmul.mubr.bf16.gmra.mrb[0].mxu0 %v475
      %v543 = vpop.f32.mrb[0].mxu0
      %v544 = vadd.f32 0.0, %v543
      %v545 = vpop.f32.mrb[0].mxu0
      %v546 = vadd.f32 0.0, %v545
      %v547 = vpop.f32.mrb[0].mxu0
      %v548 = vadd.f32 0.0, %v547
      %v549 = vpop.f32.mrb[0].mxu0
      %v550 = vadd.f32 0.0, %v549
      %551 = vmatprep.mubr.bf16.mxu0 0
      %552 = vmatmul.mubr.bf16.gmra.mrb[0].mxu0 %v478
      %v553 = vpop.f32.mrb[0].mxu0
      %v554 = vpop.f32.mrb[0].mxu0
      %v555 = vadd.f32 0.0, %v554
      %v556 = vpop.f32.mrb[0].mxu0
      %v557 = vpop.f32.mrb[0].mxu0
      %558 = vdwg.mxu0
      %v559 = vadd.f32 %v515, %v520
      %v560 = vadd.f32 %v518, %v526
      %v561 = vadd.f32 %v524, %v530
      %v562 = vadd.f32 %v528, %v536
      %v563 = vadd.f32 %v534, %v540
      %v564 = vadd.f32 %v538, %v546
      %v565 = vadd.f32 %v544, %v550
      %v566 = vadd.f32 %v548, %v555
      %v567 = vadd.f32 %v373, %v559
      %v568 = vadd.f32 %v374, %v560
      %v569 = vadd.f32 %v375, %v561
      %v570 = vadd.f32 %v376, %v562
      %v571 = vadd.f32 %v377, %v563
      %v572 = vadd.f32 %v378, %v564
      %v573 = vadd.f32 %v379, %v565
      %v574 = vadd.f32 %v380, %v566
      %v575 = vld [vmem:[%s2] sm:$0x1]
      %v577 = vlaneseq
      %v578 = vshrl.u32 %v577, 7
      %v579 = vsub.s32 0, %v578
      %v580 = vrot.slane %v575, %v579
      %v582 = vadd.f32 %v567, %v580
      %v583 = vadd.f32 %v568, %v580
      %v584 = vadd.f32 %v569, %v580
      %v585 = vadd.f32 %v570, %v580
      %v586 = vadd.f32 %v571, %v580
      %v587 = vadd.f32 %v572, %v580
      %v588 = vadd.f32 %v573, %v580
      %v589 = vadd.f32 %v574, %v580
      %v590 = vmax.f32 %v582, 0.0
      %v591 = vmax.f32 %v583, 0.0
      %v592 = vmax.f32 %v584, 0.0
      %v593 = vmax.f32 %v585, 0.0
      %v594 = vmax.f32 %v586, 0.0
      %v595 = vmax.f32 %v587, 0.0
      %v596 = vmax.f32 %v588, 0.0
      %v597 = vmax.f32 %v589, 0.0
      %v598 = vpack.c.bf16 %v590, %v590
      %v599 = vpack.c.bf16 %v591, %v591
      %v600 = vpack.c.bf16 %v592, %v592
      %v601 = vpack.c.bf16 %v593, %v593
      %v602 = vpack.c.bf16 %v594, %v594
      %v603 = vpack.c.bf16 %v595, %v595
      %v604 = vpack.c.bf16 %v596, %v596
      %v605 = vpack.c.bf16 %v597, %v597
      %606 = vst [vmem:[%s192] sm:$0xf] %v598
      %607 = vst [vmem:[%s192 + $0x4] sm:$0xf] %v599
      %608 = vst [vmem:[%s192 + $0x8] sm:$0xf] %v600
      %609 = vst [vmem:[%s192 + $0xc] sm:$0xf] %v601
      %610 = vst [vmem:[%s192 + $0x10] sm:$0xf] %v602
      %611 = vst [vmem:[%s192 + $0x14] sm:$0xf] %v603
      %612 = vst [vmem:[%s192 + $0x18] sm:$0xf] %v604
      %613 = vst [vmem:[%s192 + $0x1c] sm:$0xf] %v605
      %s614 = smul.u32 8, %s19
      %p615 = scmp.lt.s32.totalorder %s18, 1
      %s616 = scalar_select %p615, %s18, 1
      %p617 = scmp.lt.s32.totalorder %s614, 7
      %s618 = scalar_select %p617, %s614, 7
      %s619 = smul.addr %s616, 8
      %s620 = sadd.s32 %s618, %s619
      %s621 = smul.addr %s620, 4
      %s622 = scalar_lea.vmem %s3, %s621
      // Predicated region
      $region33: #{timm_backbone_forward.6} parent=31 // pred_check
        %p623 = pneg %p114
      $region34: #{timm_backbone_forward.6} parent=31 // pred_check_branch
        %625 = sbr.rel (%p623) target = $region36
      $region35: #{timm_backbone_forward.6} parent=31 // pred_region
        %s626 = smul.u32 8, %s19
      $region36: #{timm_backbone_forward.6} parent=31 // pred_fallthru
        _
    $region32: #{timm_backbone_forward.6} parent=5 // pred_fallthru
      _
    %p627 = scmp.le.s32.totalorder 2, %s9
    // Predicated region
    $region37: #{timm_backbone_forward.6} parent=5 // pred_check
      %p628 = pneg %p627
    $region38: #{timm_backbone_forward.6} parent=5 // pred_check_branch
      %630 = sbr.rel (%p628) target = $region40
    $region39: #{timm_backbone_forward.6} parent=5 // pred_region
      %s631 = ssub.s32 %s9, 2
      // Predicated region
      $region41: #{timm_backbone_forward.6} parent=39 // pred_check
        %p632 = pneg %p120
      $region42: #{timm_backbone_forward.6} parent=39 // pred_check_branch
        %634 = sbr.rel (%p632) target = $region44
      $region43: #{timm_backbone_forward.6} parent=39 // pred_region
        %s635 = smul.u32 8, %s21
        %p636 = scmp.lt.s32.totalorder %s20, 1
        %s637 = scalar_select %p636, %s20, 1
        %p638 = scmp.lt.s32.totalorder %s635, 7
        %s639 = scalar_select %p638, %s635, 7
        %s640 = smul.addr %s637, 8
        %s641 = sadd.s32 %s639, %s640
        %s642 = smul.addr %s641, 4
        %s643 = scalar_lea.vmem %s3, %s642
      $region44: #{timm_backbone_forward.6} parent=39 // pred_fallthru
        _
    $region40: #{timm_backbone_forward.6} parent=5 // pred_fallthru
      _
  $region6: #{timm_backbone_forward.6} parent=0 // loop_footer
    %s13 = sadd.s32 1, %s9
  $region7: #{timm_backbone_forward.6} parent=0 // loop_footer_branch
    %8 = sbr.rel target = $region3
  $region8: #{timm_backbone_forward.6} parent=0 // loop_exit
    _

// kernel: timm_backbone_forward.7
$region0: #{timm_backbone_forward.7}
  #allocation0 [shape = 'u32[]', space=smem, size = 0x4, offset = 0x4, fixed_abs, tag = 'smem constant byte address 0x4 - core index']
  #allocation1 [shape = 'u32[144,128]{1,0:T(1,128)}', space=vmem, size = 0x12000, scoped, tag = 'internal scratch']
  %s0 = inlined_call_operand.vmem [shape: bf16[2,2,5,8,128], index: 0, kind: input, shape index: {}]
  %s1 = inlined_call_operand.vmem [shape: bf16[2,128,256], index: 1, kind: input, shape index: {}]
  %s2 = inlined_call_operand.vmem [shape: f32[1,128], index: 2, kind: input, shape index: {}]
  %s3 = inlined_call_operand.vmem [shape: bf16[2,4,8,128], index: 3, kind: output, shape index: {}]
  %s4 = sld [smem:[#allocation0]]
  $region45: #{timm_backbone_forward.7} parent=0
    _
  %s6 = ssub.s32 1, %s4
  %s7 = scalar_select 0, %s6, %s4
  loop: start=0, step=1, limit=4
  $region2: #{timm_backbone_forward.7} parent=0 // loop_pre_header
    _
  $region3: #{timm_backbone_forward.7} parent=0 // loop_header
    %s9 = sphi 0, %s13
    %p10 = scmp.ge.s32.totalorder %s9, 4
    %s16 = sphi 0, %s28
    %s17 = sphi 0, %s24
    %s18 = sphi 0, %s16
    %s19 = sphi 0, %s17
    %s20 = sphi 0, %s18
    %s21 = sphi 0, %s19
    %s31 = sphi 0, %s33
    %s34 = sphi 0, %s31
    %s35 = sphi 0, %s34
    %s51 = sphi 0, %s35
    %s55 = sphi 0, %s55
    %s57 = sphi 0, %s55
    %s58 = sphi 0, %s57
    %s72 = sphi 0, %s58
    %s76 = sphi 0, %s76
    %s78 = sphi 0, %s76
    %s79 = sphi 0, %s78
    %s93 = sphi 0, %s79
    %s101 = sphi 0, %s103
    %s104 = sphi 0, %s101
    %s105 = sphi 0, %s104
    %s121 = sphi 0, %s105
  $region4: #{timm_backbone_forward.7} parent=0 // loop_header_branch
    %12 = sbr.rel (%p10) target = $region8
  $region5: #{timm_backbone_forward.7} parent=0 // loop_body
    %s14 = ssub.s32 %s9, 1
    %s15 = ssub.s32 %s9, 2
    %s22 = sadd.s32 1, %s17
    %p23 = scmp.ge.s32.totalorder %s22, 1
    %s24 = scalar_select %p23, 0, %s22
    %s25 = sadd.s32 1, %s16
    %s26 = scalar_select %p23, %s25, %s16
    %p27 = scmp.ge.s32.totalorder %s26, 2
    %s28 = scalar_select %p27, 0, %s26
    %s29 = ssub.s32 %s16, %s28
    %p30 = scmp.eq.s32.totalorder %s29, 0
    %s32 = sadd.s32 %s31, 1
    %s33 = scalar_select %p30, %s31, %s32
    %p36 = pneg %p30
    %p37 = scmp.eq.s32.totalorder %s9, 1
    %p38 = por %p36, %p37
    %p39 = scmp.ne.s32.totalorder %s31, %s34
    %p40 = scmp.eq.s32.totalorder %s9, 0
    %p41 = por %p39, %p40
    %p42 = scmp.ne.s32.totalorder %s31, %s34
    %p43 = scmp.eq.s32.totalorder %s14, 1
    %p44 = por %p42, %p43
    %p45 = scmp.ne.s32.totalorder %s34, %s35
    %p46 = scmp.eq.s32.totalorder %s14, 0
    %p47 = por %p45, %p46
    %p48 = scmp.ne.s32.totalorder %s34, %s35
    %p49 = scmp.eq.s32.totalorder %s15, 1
    %p50 = por %p48, %p49
    %p52 = scmp.ne.s32.totalorder %s35, %s51
    %p53 = scmp.eq.s32.totalorder %s15, 0
    %p54 = por %p52, %p53
    %s56 = sadd.s32 %s55, 1
    %p59 = scmp.eq.s32.totalorder %s9, 1
    %p60 = scmp.ne.s32.totalorder %s55, %s57
    %p61 = scmp.eq.s32.totalorder %s9, 0
    %p62 = por %p60, %p61
    %p63 = scmp.ne.s32.totalorder %s55, %s57
    %p64 = scmp.eq.s32.totalorder %s14, 1
    %p65 = por %p63, %p64
    %p66 = scmp.ne.s32.totalorder %s57, %s58
    %p67 = scmp.eq.s32.totalorder %s14, 0
    %p68 = por %p66, %p67
    %p69 = scmp.ne.s32.totalorder %s57, %s58
    %p70 = scmp.eq.s32.totalorder %s15, 1
    %p71 = por %p69, %p70
    %p73 = scmp.ne.s32.totalorder %s58, %s72
    %p74 = scmp.eq.s32.totalorder %s15, 0
    %p75 = por %p73, %p74
    %s77 = sadd.s32 %s76, 1
    %p80 = scmp.eq.s32.totalorder %s9, 1
    %p81 = scmp.ne.s32.totalorder %s76, %s78
    %p82 = scmp.eq.s32.totalorder %s9, 0
    %p83 = por %p81, %p82
    %p84 = scmp.ne.s32.totalorder %s76, %s78
    %p85 = scmp.eq.s32.totalorder %s14, 1
    %p86 = por %p84, %p85
    %p87 = scmp.ne.s32.totalorder %s78, %s79
    %p88 = scmp.eq.s32.totalorder %s14, 0
    %p89 = por %p87, %p88
    %p90 = scmp.ne.s32.totalorder %s78, %s79
    %p91 = scmp.eq.s32.totalorder %s15, 1
    %p92 = por %p90, %p91
    %p94 = scmp.ne.s32.totalorder %s79, %s93
    %p95 = scmp.eq.s32.totalorder %s15, 0
    %p96 = por %p94, %p95
    %s97 = ssub.s32 %s16, %s28
    %s98 = ssub.s32 %s17, %s24
    %s99 = sor.u32 %s97, %s98
    %p100 = scmp.eq.s32.totalorder %s99, 0
    %s102 = sadd.s32 %s101, 1
    %s103 = scalar_select %p100, %s101, %s102
    %p106 = pneg %p100
    %p107 = scmp.eq.s32.totalorder %s9, 1
    %p108 = por %p106, %p107
    %p109 = scmp.ne.s32.totalorder %s101, %s104
    %p110 = scmp.eq.s32.totalorder %s9, 0
    %p111 = por %p109, %p110
    %p112 = scmp.ne.s32.totalorder %s101, %s104
    %p113 = scmp.eq.s32.totalorder %s14, 1
    %p114 = por %p112, %p113
    %p115 = scmp.ne.s32.totalorder %s104, %s105
    %p116 = scmp.eq.s32.totalorder %s14, 0
    %p117 = por %p115, %p116
    %p118 = scmp.ne.s32.totalorder %s104, %s105
    %p119 = scmp.eq.s32.totalorder %s15, 1
    %p120 = por %p118, %p119
    %p122 = scmp.ne.s32.totalorder %s105, %s121
    %p123 = scmp.eq.s32.totalorder %s15, 0
    %p124 = por %p122, %p123
    %p125 = scmp.le.s32.totalorder 1, %s9
    %p126 = scmp.lt.s32.totalorder %s9, 3
    %p127 = pnand %p125, %p126
    %p128 = pneg %p127
    // Predicated region
    $region9: #{timm_backbone_forward.7} parent=5 // pred_check
      _
    $region10: #{timm_backbone_forward.7} parent=5 // pred_check_branch
      %130 = sbr.rel (%p127) target = $region12
    $region11: #{timm_backbone_forward.7} parent=5 // pred_region
      %s131 = ssub.s32 %s9, 1
      // Predicated region
      $region13: #{timm_backbone_forward.7} parent=11 // pred_check
        %p132 = pneg %p68
      $region14: #{timm_backbone_forward.7} parent=11 // pred_check_branch
        %134 = sbr.rel (%p132) target = $region16
      $region15: #{timm_backbone_forward.7} parent=11 // pred_region
        _
      $region16: #{timm_backbone_forward.7} parent=11 // pred_fallthru
        _
      // Predicated region
      $region17: #{timm_backbone_forward.7} parent=11 // pred_check
        %p135 = pneg %p89
      $region18: #{timm_backbone_forward.7} parent=11 // pred_check_branch
        %137 = sbr.rel (%p135) target = $region20
      $region19: #{timm_backbone_forward.7} parent=11 // pred_region
        _
      $region20: #{timm_backbone_forward.7} parent=11 // pred_fallthru
        _
    $region12: #{timm_backbone_forward.7} parent=5 // pred_fallthru
      _
    %p138 = scmp.lt.s32.totalorder %s9, 2
    // Predicated region
    $region21: #{timm_backbone_forward.7} parent=5 // pred_check
      %p139 = pneg %p138
    $region22: #{timm_backbone_forward.7} parent=5 // pred_check_branch
      %141 = sbr.rel (%p139) target = $region24
    $region23: #{timm_backbone_forward.7} parent=5 // pred_region
      // Predicated region
      $region25: #{timm_backbone_forward.7} parent=23 // pred_check
        %p142 = pneg %p41
      $region26: #{timm_backbone_forward.7} parent=23 // pred_check_branch
        %144 = sbr.rel (%p142) target = $region28
      $region27: #{timm_backbone_forward.7} parent=23 // pred_region
        %p145 = scmp.lt.s32.totalorder %s16, 1
        %s146 = scalar_select %p145, %s16, 1
        %s147 = smul.addr %s146, 10
        %s148 = smul.addr %s147, 4
        %s149 = scalar_lea.vmem %s0, %s148
      $region28: #{timm_backbone_forward.7} parent=23 // pred_fallthru
        _
    $region24: #{timm_backbone_forward.7} parent=5 // pred_fallthru
      _
    %p150 = scmp.le.s32.totalorder 1, %s9
    %p151 = scmp.lt.s32.totalorder %s9, 3
    %p152 = pnand %p150, %p151
    %p153 = pneg %p152
    // Predicated region
    $region29: #{timm_backbone_forward.7} parent=5 // pred_check
      _
    $region30: #{timm_backbone_forward.7} parent=5 // pred_check_branch
      %155 = sbr.rel (%p152) target = $region32
    $region31: #{timm_backbone_forward.7} parent=5 // pred_region
      %s156 = ssub.s32 %s9, 1
      %p157 = scmp.lt.s32.totalorder %s18, 1
      %s158 = scalar_select %p157, %s18, 1
      %s159 = smul.addr %s158, 10
      %s160 = smul.addr %s159, 4
      %s161 = scalar_lea.vmem %s0, %s160
      %p162 = pneg %p47
      %p163 = pneg %p44
      %p164 = pneg %p68
      %p165 = pneg %p65
      %p166 = pneg %p89
      %p167 = pneg %p86
      %p168 = pneg %p117
      %p169 = pneg %p114
      %s170 = smul.u32 4, %s19
      %p171 = scmp.lt.s32.totalorder %s18, 1
      %s172 = scalar_select %p171, %s18, 1
      %p173 = scmp.lt.s32.totalorder %s170, 3
      %s174 = scalar_select %p173, %s170, 3
      %s175 = smul.addr %s172, 4
      %s176 = sadd.s32 %s174, %s175
      %s177 = smul.addr %s176, 4
      %s178 = scalar_lea.vmem %s3, %s177
      %p179 = scmp.lt.s32.totalorder %s18, 1
      %s180 = scalar_select %p179, %s18, 1
      %s181 = smul.addr %s180, 10
      %s182 = smul.addr %s181, 4
      %s183 = scalar_lea.vmem %s0, %s182
      %s184 = smul.u32 4, %s19
      %p185 = scmp.lt.s32.totalorder %s18, 1
      %s186 = scalar_select %p185, %s18, 1
      %p187 = scmp.lt.s32.totalorder %s184, 3
      %s188 = scalar_select %p187, %s184, 3
      %s189 = smul.addr %s186, 4
      %s190 = sadd.s32 %s188, %s189
      %s191 = smul.addr %s190, 4
      %s192 = scalar_lea.vmem %s3, %s191
      %s193 = smul.u32 4, %s19
      %s195 = smul.u32 %s19, 4
      %s196 = smul.addr %s195, 4
      %s197 = scalar_lea.vmem %s183, %s196
      %v198 = vld [vmem:[%s197] sm:$0xf]
      %v199 = vld [vmem:[%s197 + $0x4] sm:$0xf]
      %v200 = vld [vmem:[%s197 + $0x8] sm:$0xf]
      %v201 = vld [vmem:[%s197 + $0xc] sm:$0xf]
      %v202 = vld [vmem:[%s197 + $0x10] sm:$0xf]
      %v203 = vld [vmem:[%s1] sm:$0xff]
      %v204 = vld [vmem:[%s1 + $0x8] sm:$0xff]
      %v205 = vld [vmem:[%s1 + $0x10] sm:$0xff]
      %v206 = vld [vmem:[%s1 + $0x18] sm:$0xff]
      %v207 = vld [vmem:[%s1 + $0x20] sm:$0xff]
      %v208 = vld [vmem:[%s1 + $0x28] sm:$0xff]
      %v209 = vld [vmem:[%s1 + $0x30] sm:$0xff]
      %v210 = vld [vmem:[%s1 + $0x38] sm:$0xff]
      %v211 = vld [vmem:[%s1 + $0x40] sm:$0xff]
      %v212 = vld [vmem:[%s1 + $0x48] sm:$0xff]
      %v213 = vld [vmem:[%s1 + $0x50] sm:$0xff]
      %v214 = vld [vmem:[%s1 + $0x58] sm:$0xff]
      %v215 = vld [vmem:[%s1 + $0x60] sm:$0xff]
      %v216 = vld [vmem:[%s1 + $0x68] sm:$0xff]
      %v217 = vld [vmem:[%s1 + $0x70] sm:$0xff]
      %v218 = vld [vmem:[%s1 + $0x78] sm:$0xff]
      %v224 = vunpack.c.l.b16 %v198
      %v225 = vunpack.c.l.b16 %v199
      %v226 = vunpack.c.l.b16 %v200
      %v227 = vunpack.c.l.b16 %v201
      %v228 = vunpack.c.l.b16 %v202
      %v229 = vpack.c.b16 %v225, %v224
      %v230 = vpack.c.b16 %v227, %v226
      %v231 = vpack.c.b16 %v228, %v228
      %v251 = vunpack.c.l.b16 %v203
      %v252 = vunpack.c.h.b16 %v203
      %v253 = vunpack.c.l.b16 %v204
      %v254 = vunpack.c.h.b16 %v204
      %v255 = vunpack.c.l.b16 %v205
      %v256 = vunpack.c.h.b16 %v205
      %v257 = vunpack.c.l.b16 %v206
      %v258 = vunpack.c.h.b16 %v206
      %v259 = vunpack.c.l.b16 %v207
      %v260 = vunpack.c.h.b16 %v207
      %v261 = vunpack.c.l.b16 %v208
      %v262 = vunpack.c.h.b16 %v208
      %v263 = vunpack.c.l.b16 %v209
      %v264 = vunpack.c.h.b16 %v209
      %v265 = vunpack.c.l.b16 %v210
      %v266 = vunpack.c.h.b16 %v210
      %v267 = vunpack.c.l.b16 %v211
      %v268 = vunpack.c.h.b16 %v211
      %v269 = vunpack.c.l.b16 %v212
      %v270 = vunpack.c.h.b16 %v212
      %v271 = vunpack.c.l.b16 %v213
      %v272 = vunpack.c.h.b16 %v213
      %v273 = vunpack.c.l.b16 %v214
      %v274 = vunpack.c.h.b16 %v214
      %v275 = vunpack.c.l.b16 %v215
      %v276 = vunpack.c.h.b16 %v215
      %v277 = vunpack.c.l.b16 %v216
      %v278 = vunpack.c.h.b16 %v216
      %v279 = vunpack.c.l.b16 %v217
      %v280 = vunpack.c.h.b16 %v217
      %v281 = vunpack.c.l.b16 %v218
      %v282 = vunpack.c.h.b16 %v218
      %v283 = vpack.c.b16 %v253, %v251
      %v284 = vpack.c.b16 %v254, %v252
      %v285 = vpack.c.b16 %v257, %v255
      %v286 = vpack.c.b16 %v258, %v256
      %v287 = vpack.c.b16 %v261, %v259
      %v288 = vpack.c.b16 %v262, %v260
      %v289 = vpack.c.b16 %v265, %v263
      %v290 = vpack.c.b16 %v266, %v264
      %v291 = vpack.c.b16 %v269, %v267
      %v292 = vpack.c.b16 %v270, %v268
      %v293 = vpack.c.b16 %v273, %v271
      %v294 = vpack.c.b16 %v274, %v272
      %v295 = vpack.c.b16 %v277, %v275
      %v296 = vpack.c.b16 %v278, %v276
      %v297 = vpack.c.b16 %v281, %v279
      %v298 = vpack.c.b16 %v282, %v280
      %315 = vmatprep.subr.bf16.mxu0 %v284
      %316 = vmatpush1.bf16.msra.mxu0 %v283
      %317 = vmatprep.subr.bf16.mxu0 %v286
      %318 = vmatpush1.bf16.msra.mxu0 %v285
      %319 = vmatprep.subr.bf16.mxu0 %v288
      %320 = vmatpush1.bf16.msra.mxu0 %v287
      %321 = vmatprep.subr.bf16.mxu0 %v290
      %322 = vmatpush1.bf16.msra.mxu0 %v289
      %323 = vmatprep.subr.bf16.mxu0 %v292
      %324 = vmatpush1.bf16.msra.mxu0 %v291
      %325 = vmatprep.subr.bf16.mxu0 %v294
      %326 = vmatpush1.bf16.msra.mxu0 %v293
      %327 = vmatprep.subr.bf16.mxu0 %v296
      %328 = vmatpush1.bf16.msra.mxu0 %v295
      %329 = vmatprep.subr.bf16.mxu0 %v298
      %330 = vmatpush1.bf16.msra.mxu0 %v297
      %331 = vmatprep.subr.bf16.mxu0 0
      %332 = vmatpush1.bf16.msra.mxu0 0
      %333 = vmatprep.subr.bf16.mxu0 0
      %334 = vmatpush1.bf16.msra.mxu0 0
      %335 = vmatprep.subr.bf16.mxu0 0
      %336 = vmatpush1.bf16.msra.mxu0 0
      %337 = vmatprep.subr.bf16.mxu0 0
      %338 = vmatpush1.bf16.msra.mxu0 0
      %339 = vmatprep.subr.bf16.mxu0 0
      %340 = vmatpush1.bf16.msra.mxu0 0
      %341 = vmatprep.subr.bf16.mxu0 0
      %342 = vmatpush1.bf16.msra.mxu0 0
      %343 = vmatprep.subr.bf16.mxu0 0
      %344 = vmatpush1.bf16.msra.mxu0 0
      %345 = vmatprep.subr.bf16.mxu0 0
      %346 = vmatpush1.bf16.msra.mxu0 0
      %347 = vmatprep.mubr.bf16.mxu0 0
      %348 = vmatmul.mubr.bf16.gmra.mrb[0].mxu0 %v229
      %v349 = vpop.f32.mrb[0].mxu0
      %v350 = vadd.f32 0.0, %v349
      %v351 = vpop.f32.mrb[0].mxu0
      %v352 = vpop.f32.mrb[0].mxu0
      %v353 = vadd.f32 0.0, %v352
      %v354 = vpop.f32.mrb[0].mxu0
      %v355 = vadd.f32 0.0, %v354
      %356 = vmatprep.mubr.bf16.mxu0 0
      %357 = vmatmul.mubr.bf16.gmra.mrb[0].mxu0 %v230
      %v358 = vpop.f32.mrb[0].mxu0
      %v359 = vadd.f32 0.0, %v358
      %v360 = vpop.f32.mrb[0].mxu0
      %v361 = vadd.f32 0.0, %v360
      %v362 = vpop.f32.mrb[0].mxu0
      %v363 = vadd.f32 0.0, %v362
      %v364 = vpop.f32.mrb[0].mxu0
      %v365 = vadd.f32 0.0, %v364
      %366 = vmatprep.mubr.bf16.mxu0 0
      %367 = vmatmul.mubr.bf16.gmra.mrb[0].mxu0 %v231
      %v368 = vpop.f32.mrb[0].mxu0
      %v369 = vpop.f32.mrb[0].mxu0
      %v370 = vadd.f32 0.0, %v369
      %v371 = vpop.f32.mrb[0].mxu0
      %v372 = vpop.f32.mrb[0].mxu0
      %373 = vdwg.mxu0
      %v374 = vadd.f32 %v350, %v355
      %v375 = vadd.f32 %v353, %v361
      %v376 = vadd.f32 %v359, %v365
      %v377 = vadd.f32 %v363, %v370
      %s378 = sadd.s32 %s195, 5
      %s379 = smul.addr %s378, 4
      %s380 = scalar_lea.vmem %s183, %s379
      %v381 = vld [vmem:[%s380] sm:$0xf]
      %v382 = vld [vmem:[%s380 + $0x4] sm:$0xf]
      %v383 = vld [vmem:[%s380 + $0x8] sm:$0xf]
      %v384 = vld [vmem:[%s380 + $0xc] sm:$0xf]
      %v385 = vld [vmem:[%s380 + $0x10] sm:$0xf]
      %s386 = scalar_lea.vmem %s1, 128
      %v387 = vld [vmem:[%s386] sm:$0xff]
      %v388 = vld [vmem:[%s386 + $0x8] sm:$0xff]
      %v389 = vld [vmem:[%s386 + $0x10] sm:$0xff]
      %v390 = vld [vmem:[%s386 + $0x18] sm:$0xff]
      %v391 = vld [vmem:[%s386 + $0x20] sm:$0xff]
      %v392 = vld [vmem:[%s386 + $0x28] sm:$0xff]
      %v393 = vld [vmem:[%s386 + $0x30] sm:$0xff]
      %v394 = vld [vmem:[%s386 + $0x38] sm:$0xff]
      %v395 = vld [vmem:[%s386 + $0x40] sm:$0xff]
      %v396 = vld [vmem:[%s386 + $0x48] sm:$0xff]
      %v397 = vld [vmem:[%s386 + $0x50] sm:$0xff]
      %v398 = vld [vmem:[%s386 + $0x58] sm:$0xff]
      %v399 = vld [vmem:[%s386 + $0x60] sm:$0xff]
      %v400 = vld [vmem:[%s386 + $0x68] sm:$0xff]
      %v401 = vld [vmem:[%s386 + $0x70] sm:$0xff]
      %v402 = vld [vmem:[%s386 + $0x78] sm:$0xff]
      %v408 = vunpack.c.l.b16 %v381
      %v409 = vunpack.c.l.b16 %v382
      %v410 = vunpack.c.l.b16 %v383
      %v411 = vunpack.c.l.b16 %v384
      %v412 = vunpack.c.l.b16 %v385
      %v413 = vpack.c.b16 %v409, %v408
      %v414 = vpack.c.b16 %v411, %v410
      %v415 = vpack.c.b16 %v412, %v412
      %v435 = vunpack.c.l.b16 %v387
      %v436 = vunpack.c.h.b16 %v387
      %v437 = vunpack.c.l.b16 %v388
      %v438 = vunpack.c.h.b16 %v388
      %v439 = vunpack.c.l.b16 %v389
      %v440 = vunpack.c.h.b16 %v389
      %v441 = vunpack.c.l.b16 %v390
      %v442 = vunpack.c.h.b16 %v390
      %v443 = vunpack.c.l.b16 %v391
      %v444 = vunpack.c.h.b16 %v391
      %v445 = vunpack.c.l.b16 %v392
      %v446 = vunpack.c.h.b16 %v392
      %v447 = vunpack.c.l.b16 %v393
      %v448 = vunpack.c.h.b16 %v393
      %v449 = vunpack.c.l.b16 %v394
      %v450 = vunpack.c.h.b16 %v394
      %v451 = vunpack.c.l.b16 %v395
      %v452 = vunpack.c.h.b16 %v395
      %v453 = vunpack.c.l.b16 %v396
      %v454 = vunpack.c.h.b16 %v396
      %v455 = vunpack.c.l.b16 %v397
      %v456 = vunpack.c.h.b16 %v397
      %v457 = vunpack.c.l.b16 %v398
      %v458 = vunpack.c.h.b16 %v398
      %v459 = vunpack.c.l.b16 %v399
      %v460 = vunpack.c.h.b16 %v399
      %v461 = vunpack.c.l.b16 %v400
      %v462 = vunpack.c.h.b16 %v400
      %v463 = vunpack.c.l.b16 %v401
      %v464 = vunpack.c.h.b16 %v401
      %v465 = vunpack.c.l.b16 %v402
      %v466 = vunpack.c.h.b16 %v402
      %v467 = vpack.c.b16 %v437, %v435
      %v468 = vpack.c.b16 %v438, %v436
      %v469 = vpack.c.b16 %v441, %v439
      %v470 = vpack.c.b16 %v442, %v440
      %v471 = vpack.c.b16 %v445, %v443
      %v472 = vpack.c.b16 %v446, %v444
      %v473 = vpack.c.b16 %v449, %v447
      %v474 = vpack.c.b16 %v450, %v448
      %v475 = vpack.c.b16 %v453, %v451
      %v476 = vpack.c.b16 %v454, %v452
      %v477 = vpack.c.b16 %v457, %v455
      %v478 = vpack.c.b16 %v458, %v456
      %v479 = vpack.c.b16 %v461, %v459
      %v480 = vpack.c.b16 %v462, %v460
      %v481 = vpack.c.b16 %v465, %v463
      %v482 = vpack.c.b16 %v466, %v464
      %499 = vmatprep.subr.bf16.mxu0 %v468
      %500 = vmatpush1.bf16.msra.mxu0 %v467
      %501 = vmatprep.subr.bf16.mxu0 %v470
      %502 = vmatpush1.bf16.msra.mxu0 %v469
      %503 = vmatprep.subr.bf16.mxu0 %v472
      %504 = vmatpush1.bf16.msra.mxu0 %v471
      %505 = vmatprep.subr.bf16.mxu0 %v474
      %506 = vmatpush1.bf16.msra.mxu0 %v473
      %507 = vmatprep.subr.bf16.mxu0 %v476
      %508 = vmatpush1.bf16.msra.mxu0 %v475
      %509 = vmatprep.subr.bf16.mxu0 %v478
      %510 = vmatpush1.bf16.msra.mxu0 %v477
      %511 = vmatprep.subr.bf16.mxu0 %v480
      %512 = vmatpush1.bf16.msra.mxu0 %v479
      %513 = vmatprep.subr.bf16.mxu0 %v482
      %514 = vmatpush1.bf16.msra.mxu0 %v481
      %515 = vmatprep.subr.bf16.mxu0 0
      %516 = vmatpush1.bf16.msra.mxu0 0
      %517 = vmatprep.subr.bf16.mxu0 0
      %518 = vmatpush1.bf16.msra.mxu0 0
      %519 = vmatprep.subr.bf16.mxu0 0
      %520 = vmatpush1.bf16.msra.mxu0 0
      %521 = vmatprep.subr.bf16.mxu0 0
      %522 = vmatpush1.bf16.msra.mxu0 0
      %523 = vmatprep.subr.bf16.mxu0 0
      %524 = vmatpush1.bf16.msra.mxu0 0
      %525 = vmatprep.subr.bf16.mxu0 0
      %526 = vmatpush1.bf16.msra.mxu0 0
      %527 = vmatprep.subr.bf16.mxu0 0
      %528 = vmatpush1.bf16.msra.mxu0 0
      %529 = vmatprep.subr.bf16.mxu0 0
      %530 = vmatpush1.bf16.msra.mxu0 0
      %531 = vmatprep.mubr.bf16.mxu0 0
      %532 = vmatmul.mubr.bf16.gmra.mrb[0].mxu0 %v413
      %v533 = vpop.f32.mrb[0].mxu0
      %v534 = vadd.f32 0.0, %v533
      %v535 = vpop.f32.mrb[0].mxu0
      %v536 = vpop.f32.mrb[0].mxu0
      %v537 = vadd.f32 0.0, %v536
      %v538 = vpop.f32.mrb[0].mxu0
      %v539 = vadd.f32 0.0, %v538
      %540 = vmatprep.mubr.bf16.mxu0 0
      %541 = vmatmul.mubr.bf16.gmra.mrb[0].mxu0 %v414
      %v542 = vpop.f32.mrb[0].mxu0
      %v543 = vadd.f32 0.0, %v542
      %v544 = vpop.f32.mrb[0].mxu0
      %v545 = vadd.f32 0.0, %v544
      %v546 = vpop.f32.mrb[0].mxu0
      %v547 = vadd.f32 0.0, %v546
      %v548 = vpop.f32.mrb[0].mxu0
      %v549 = vadd.f32 0.0, %v548
      %550 = vmatprep.mubr.bf16.mxu0 0
      %551 = vmatmul.mubr.bf16.gmra.mrb[0].mxu0 %v415
      %v552 = vpop.f32.mrb[0].mxu0
      %v553 = vpop.f32.mrb[0].mxu0
      %v554 = vadd.f32 0.0, %v553
      %v555 = vpop.f32.mrb[0].mxu0
      %v556 = vpop.f32.mrb[0].mxu0
      %557 = vdwg.mxu0
      %v558 = vadd.f32 %v534, %v539
      %v559 = vadd.f32 %v537, %v545
      %v560 = vadd.f32 %v543, %v549
      %v561 = vadd.f32 %v547, %v554
      %v562 = vadd.f32 %v374, %v558
      %v563 = vadd.f32 %v375, %v559
      %v564 = vadd.f32 %v376, %v560
      %v565 = vadd.f32 %v377, %v561
      %v566 = vld [vmem:[%s2] sm:$0x1]
      %v568 = vlaneseq
      %v569 = vshrl.u32 %v568, 7
      %v570 = vsub.s32 0, %v569
      %v571 = vrot.slane %v566, %v570
      %v573 = vadd.f32 %v562, %v571
      %v574 = vadd.f32 %v563, %v571
      %v575 = vadd.f32 %v564, %v571
      %v576 = vadd.f32 %v565, %v571
      %v577 = vmax.f32 %v573, 0.0
      %v578 = vmax.f32 %v574, 0.0
      %v579 = vmax.f32 %v575, 0.0
      %v580 = vmax.f32 %v576, 0.0
      %v581 = vpack.c.bf16 %v577, %v577
      %v582 = vpack.c.bf16 %v578, %v578
      %v583 = vpack.c.bf16 %v579, %v579
      %v584 = vpack.c.bf16 %v580, %v580
      %585 = vst [vmem:[%s192] sm:$0xf] %v581
      %586 = vst [vmem:[%s192 + $0x4] sm:$0xf] %v582
      %587 = vst [vmem:[%s192 + $0x8] sm:$0xf] %v583
      %588 = vst [vmem:[%s192 + $0xc] sm:$0xf] %v584
      %s589 = smul.u32 4, %s19
      %p590 = scmp.lt.s32.totalorder %s18, 1
      %s591 = scalar_select %p590, %s18, 1
      %p592 = scmp.lt.s32.totalorder %s589, 3
      %s593 = scalar_select %p592, %s589, 3
      %s594 = smul.addr %s591, 4
      %s595 = sadd.s32 %s593, %s594
      %s596 = smul.addr %s595, 4
      %s597 = scalar_lea.vmem %s3, %s596
      // Predicated region
      $region33: #{timm_backbone_forward.7} parent=31 // pred_check
        %p598 = pneg %p114
      $region34: #{timm_backbone_forward.7} parent=31 // pred_check_branch
        %600 = sbr.rel (%p598) target = $region36
      $region35: #{timm_backbone_forward.7} parent=31 // pred_region
        %s601 = smul.u32 4, %s19
      $region36: #{timm_backbone_forward.7} parent=31 // pred_fallthru
        _
    $region32: #{timm_backbone_forward.7} parent=5 // pred_fallthru
      _
    %p602 = scmp.le.s32.totalorder 2, %s9
    // Predicated region
    $region37: #{timm_backbone_forward.7} parent=5 // pred_check
      %p603 = pneg %p602
    $region38: #{timm_backbone_forward.7} parent=5 // pred_check_branch
      %605 = sbr.rel (%p603) target = $region40
    $region39: #{timm_backbone_forward.7} parent=5 // pred_region
      %s606 = ssub.s32 %s9, 2
      // Predicated region
      $region41: #{timm_backbone_forward.7} parent=39 // pred_check
        %p607 = pneg %p120
      $region42: #{timm_backbone_forward.7} parent=39 // pred_check_branch
        %609 = sbr.rel (%p607) target = $region44
      $region43: #{timm_backbone_forward.7} parent=39 // pred_region
        %s610 = smul.u32 4, %s21
        %p611 = scmp.lt.s32.totalorder %s20, 1
        %s612 = scalar_select %p611, %s20, 1
        %p613 = scmp.lt.s32.totalorder %s610, 3
        %s614 = scalar_select %p613, %s610, 3
        %s615 = smul.addr %s612, 4
        %s616 = sadd.s32 %s614, %s615
        %s617 = smul.addr %s616, 4
        %s618 = scalar_lea.vmem %s3, %s617
      $region44: #{timm_backbone_forward.7} parent=39 // pred_fallthru
        _
    $region40: #{timm_backbone_forward.7} parent=5 // pred_fallthru
      _
  $region6: #{timm_backbone_forward.7} parent=0 // loop_footer
    %s13 = sadd.s32 1, %s9
  $region7: #{timm_backbone_forward.7} parent=0 // loop_footer_branch
    %8 = sbr.rel target = $region3
  $region8: #{timm_backbone_forward.7} parent=0 // loop_exit
    _

// kernel: timm_backbone_forward.8
$region0: #{timm_backbone_forward.8}
  #allocation0 [shape = 'u32[]', space=smem, size = 0x4, offset = 0x4, fixed_abs, tag = 'smem constant byte address 0x4 - core index']
  #allocation1 [shape = 'u32[144,128]{1,0:T(1,128)}', space=vmem, size = 0x12000, scoped, tag = 'internal scratch']
  %s0 = inlined_call_operand.vmem [shape: bf16[2,2,3,8,256], index: 0, kind: input, shape index: {}]
  %s1 = inlined_call_operand.vmem [shape: bf16[2,256,256], index: 1, kind: input, shape index: {}]
  %s2 = inlined_call_operand.vmem [shape: f32[1,128], index: 2, kind: input, shape index: {}]
  %s3 = inlined_call_operand.vmem [shape: bf16[2,2,8,128], index: 3, kind: output, shape index: {}]
  %s4 = sld [smem:[#allocation0]]
  $region45: #{timm_backbone_forward.8} parent=0
    _
  %s6 = ssub.s32 1, %s4
  %s7 = scalar_select 0, %s6, %s4
  loop: start=0, step=1, limit=4
  $region2: #{timm_backbone_forward.8} parent=0 // loop_pre_header
    _
  $region3: #{timm_backbone_forward.8} parent=0 // loop_header
    %s9 = sphi 0, %s13
    %p10 = scmp.ge.s32.totalorder %s9, 4
    %s16 = sphi 0, %s28
    %s17 = sphi 0, %s24
    %s18 = sphi 0, %s16
    %s19 = sphi 0, %s17
    %s20 = sphi 0, %s18
    %s21 = sphi 0, %s19
    %s31 = sphi 0, %s33
    %s34 = sphi 0, %s31
    %s35 = sphi 0, %s34
    %s51 = sphi 0, %s35
    %s55 = sphi 0, %s55
    %s57 = sphi 0, %s55
    %s58 = sphi 0, %s57
    %s72 = sphi 0, %s58
    %s76 = sphi 0, %s76
    %s78 = sphi 0, %s76
    %s79 = sphi 0, %s78
    %s93 = sphi 0, %s79
    %s101 = sphi 0, %s103
    %s104 = sphi 0, %s101
    %s105 = sphi 0, %s104
    %s121 = sphi 0, %s105
  $region4: #{timm_backbone_forward.8} parent=0 // loop_header_branch
    %12 = sbr.rel (%p10) target = $region8
  $region5: #{timm_backbone_forward.8} parent=0 // loop_body
    %s14 = ssub.s32 %s9, 1
    %s15 = ssub.s32 %s9, 2
    %s22 = sadd.s32 1, %s17
    %p23 = scmp.ge.s32.totalorder %s22, 1
    %s24 = scalar_select %p23, 0, %s22
    %s25 = sadd.s32 1, %s16
    %s26 = scalar_select %p23, %s25, %s16
    %p27 = scmp.ge.s32.totalorder %s26, 2
    %s28 = scalar_select %p27, 0, %s26
    %s29 = ssub.s32 %s16, %s28
    %p30 = scmp.eq.s32.totalorder %s29, 0
    %s32 = sadd.s32 %s31, 1
    %s33 = scalar_select %p30, %s31, %s32
    %p36 = pneg %p30
    %p37 = scmp.eq.s32.totalorder %s9, 1
    %p38 = por %p36, %p37
    %p39 = scmp.ne.s32.totalorder %s31, %s34
    %p40 = scmp.eq.s32.totalorder %s9, 0
    %p41 = por %p39, %p40
    %p42 = scmp.ne.s32.totalorder %s31, %s34
    %p43 = scmp.eq.s32.totalorder %s14, 1
    %p44 = por %p42, %p43
    %p45 = scmp.ne.s32.totalorder %s34, %s35
    %p46 = scmp.eq.s32.totalorder %s14, 0
    %p47 = por %p45, %p46
    %p48 = scmp.ne.s32.totalorder %s34, %s35
    %p49 = scmp.eq.s32.totalorder %s15, 1
    %p50 = por %p48, %p49
    %p52 = scmp.ne.s32.totalorder %s35, %s51
    %p53 = scmp.eq.s32.totalorder %s15, 0
    %p54 = por %p52, %p53
    %s56 = sadd.s32 %s55, 1
    %p59 = scmp.eq.s32.totalorder %s9, 1
    %p60 = scmp.ne.s32.totalorder %s55, %s57
    %p61 = scmp.eq.s32.totalorder %s9, 0
    %p62 = por %p60, %p61
    %p63 = scmp.ne.s32.totalorder %s55, %s57
    %p64 = scmp.eq.s32.totalorder %s14, 1
    %p65 = por %p63, %p64
    %p66 = scmp.ne.s32.totalorder %s57, %s58
    %p67 = scmp.eq.s32.totalorder %s14, 0
    %p68 = por %p66, %p67
    %p69 = scmp.ne.s32.totalorder %s57, %s58
    %p70 = scmp.eq.s32.totalorder %s15, 1
    %p71 = por %p69, %p70
    %p73 = scmp.ne.s32.totalorder %s58, %s72
    %p74 = scmp.eq.s32.totalorder %s15, 0
    %p75 = por %p73, %p74
    %s77 = sadd.s32 %s76, 1
    %p80 = scmp.eq.s32.totalorder %s9, 1
    %p81 = scmp.ne.s32.totalorder %s76, %s78
    %p82 = scmp.eq.s32.totalorder %s9, 0
    %p83 = por %p81, %p82
    %p84 = scmp.ne.s32.totalorder %s76, %s78
    %p85 = scmp.eq.s32.totalorder %s14, 1
    %p86 = por %p84, %p85
    %p87 = scmp.ne.s32.totalorder %s78, %s79
    %p88 = scmp.eq.s32.totalorder %s14, 0
    %p89 = por %p87, %p88
    %p90 = scmp.ne.s32.totalorder %s78, %s79
    %p91 = scmp.eq.s32.totalorder %s15, 1
    %p92 = por %p90, %p91
    %p94 = scmp.ne.s32.totalorder %s79, %s93
    %p95 = scmp.eq.s32.totalorder %s15, 0
    %p96 = por %p94, %p95
    %s97 = ssub.s32 %s16, %s28
    %s98 = ssub.s32 %s17, %s24
    %s99 = sor.u32 %s97, %s98
    %p100 = scmp.eq.s32.totalorder %s99, 0
    %s102 = sadd.s32 %s101, 1
    %s103 = scalar_select %p100, %s101, %s102
    %p106 = pneg %p100
    %p107 = scmp.eq.s32.totalorder %s9, 1
    %p108 = por %p106, %p107
    %p109 = scmp.ne.s32.totalorder %s101, %s104
    %p110 = scmp.eq.s32.totalorder %s9, 0
    %p111 = por %p109, %p110
    %p112 = scmp.ne.s32.totalorder %s101, %s104
    %p113 = scmp.eq.s32.totalorder %s14, 1
    %p114 = por %p112, %p113
    %p115 = scmp.ne.s32.totalorder %s104, %s105
    %p116 = scmp.eq.s32.totalorder %s14, 0
    %p117 = por %p115, %p116
    %p118 = scmp.ne.s32.totalorder %s104, %s105
    %p119 = scmp.eq.s32.totalorder %s15, 1
    %p120 = por %p118, %p119
    %p122 = scmp.ne.s32.totalorder %s105, %s121
    %p123 = scmp.eq.s32.totalorder %s15, 0
    %p124 = por %p122, %p123
    %p125 = scmp.le.s32.totalorder 1, %s9
    %p126 = scmp.lt.s32.totalorder %s9, 3
    %p127 = pnand %p125, %p126
    %p128 = pneg %p127
    // Predicated region
    $region9: #{timm_backbone_forward.8} parent=5 // pred_check
      _
    $region10: #{timm_backbone_forward.8} parent=5 // pred_check_branch
      %130 = sbr.rel (%p127) target = $region12
    $region11: #{timm_backbone_forward.8} parent=5 // pred_region
      %s131 = ssub.s32 %s9, 1
      // Predicated region
      $region13: #{timm_backbone_forward.8} parent=11 // pred_check
        %p132 = pneg %p68
      $region14: #{timm_backbone_forward.8} parent=11 // pred_check_branch
        %134 = sbr.rel (%p132) target = $region16
      $region15: #{timm_backbone_forward.8} parent=11 // pred_region
        _
      $region16: #{timm_backbone_forward.8} parent=11 // pred_fallthru
        _
      // Predicated region
      $region17: #{timm_backbone_forward.8} parent=11 // pred_check
        %p135 = pneg %p89
      $region18: #{timm_backbone_forward.8} parent=11 // pred_check_branch
        %137 = sbr.rel (%p135) target = $region20
      $region19: #{timm_backbone_forward.8} parent=11 // pred_region
        _
      $region20: #{timm_backbone_forward.8} parent=11 // pred_fallthru
        _
    $region12: #{timm_backbone_forward.8} parent=5 // pred_fallthru
      _
    %p138 = scmp.lt.s32.totalorder %s9, 2
    // Predicated region
    $region21: #{timm_backbone_forward.8} parent=5 // pred_check
      %p139 = pneg %p138
    $region22: #{timm_backbone_forward.8} parent=5 // pred_check_branch
      %141 = sbr.rel (%p139) target = $region24
    $region23: #{timm_backbone_forward.8} parent=5 // pred_region
      // Predicated region
      $region25: #{timm_backbone_forward.8} parent=23 // pred_check
        %p142 = pneg %p41
      $region26: #{timm_backbone_forward.8} parent=23 // pred_check_branch
        %144 = sbr.rel (%p142) target = $region28
      $region27: #{timm_backbone_forward.8} parent=23 // pred_region
        %p145 = scmp.lt.s32.totalorder %s16, 1
        %s146 = scalar_select %p145, %s16, 1
        %s147 = smul.addr %s146, 12
        %s148 = smul.addr %s147, 4
        %s149 = scalar_lea.vmem %s0, %s148
      $region28: #{timm_backbone_forward.8} parent=23 // pred_fallthru
        _
    $region24: #{timm_backbone_forward.8} parent=5 // pred_fallthru
      _
    %p150 = scmp.le.s32.totalorder 1, %s9
    %p151 = scmp.lt.s32.totalorder %s9, 3
    %p152 = pnand %p150, %p151
    %p153 = pneg %p152
    // Predicated region
    $region29: #{timm_backbone_forward.8} parent=5 // pred_check
      _
    $region30: #{timm_backbone_forward.8} parent=5 // pred_check_branch
      %155 = sbr.rel (%p152) target = $region32
    $region31: #{timm_backbone_forward.8} parent=5 // pred_region
      %s156 = ssub.s32 %s9, 1
      %p157 = scmp.lt.s32.totalorder %s18, 1
      %s158 = scalar_select %p157, %s18, 1
      %s159 = smul.addr %s158, 12
      %s160 = smul.addr %s159, 4
      %s161 = scalar_lea.vmem %s0, %s160
      %p162 = pneg %p47
      %p163 = pneg %p44
      %p164 = pneg %p68
      %p165 = pneg %p65
      %p166 = pneg %p89
      %p167 = pneg %p86
      %p168 = pneg %p117
      %p169 = pneg %p114
      %s170 = smul.u32 2, %s19
      %p171 = scmp.lt.s32.totalorder %s18, 1
      %s172 = scalar_select %p171, %s18, 1
      %p173 = scmp.lt.s32.totalorder %s170, 1
      %s174 = scalar_select %p173, %s170, 1
      %s175 = smul.addr %s172, 2
      %s176 = sadd.s32 %s174, %s175
      %s177 = smul.addr %s176, 4
      %s178 = scalar_lea.vmem %s3, %s177
      %p179 = scmp.lt.s32.totalorder %s18, 1
      %s180 = scalar_select %p179, %s18, 1
      %s181 = smul.addr %s180, 12
      %s182 = smul.addr %s181, 4
      %s183 = scalar_lea.vmem %s0, %s182
      %s184 = smul.u32 2, %s19
      %p185 = scmp.lt.s32.totalorder %s18, 1
      %s186 = scalar_select %p185, %s18, 1
      %p187 = scmp.lt.s32.totalorder %s184, 1
      %s188 = scalar_select %p187, %s184, 1
      %s189 = smul.addr %s186, 2
      %s190 = sadd.s32 %s188, %s189
      %s191 = smul.addr %s190, 4
      %s192 = scalar_lea.vmem %s3, %s191
      %s193 = smul.u32 2, %s19
      %s194 = smul.u32 %s19, 2
      %s195 = smul.u32 %s194, 2
      %s196 = smul.addr %s195, 4
      %s197 = scalar_lea.vmem %s183, %s196
      %v198 = vld [vmem:[%s197] sm:$0xff]
      %v199 = vld [vmem:[%s197 + $0x8] sm:$0xff]
      %v200 = vld [vmem:[%s197 + $0x10] sm:$0xff]
      %v201 = vld [vmem:[%s1] sm:$0xff]
      %v202 = vld [vmem:[%s1 + $0x8] sm:$0xff]
      %v203 = vld [vmem:[%s1 + $0x10] sm:$0xff]
      %v204 = vld [vmem:[%s1 + $0x18] sm:$0xff]
      %v205 = vld [vmem:[%s1 + $0x20] sm:$0xff]
      %v206 = vld [vmem:[%s1 + $0x28] sm:$0xff]
      %v207 = vld [vmem:[%s1 + $0x30] sm:$0xff]
      %v208 = vld [vmem:[%s1 + $0x38] sm:$0xff]
      %v209 = vld [vmem:[%s1 + $0x40] sm:$0xff]
      %v210 = vld [vmem:[%s1 + $0x48] sm:$0xff]
      %v211 = vld [vmem:[%s1 + $0x50] sm:$0xff]
      %v212 = vld [vmem:[%s1 + $0x58] sm:$0xff]
      %v213 = vld [vmem:[%s1 + $0x60] sm:$0xff]
      %v214 = vld [vmem:[%s1 + $0x68] sm:$0xff]
      %v215 = vld [vmem:[%s1 + $0x70] sm:$0xff]
      %v216 = vld [vmem:[%s1 + $0x78] sm:$0xff]
      %v217 = vld [vmem:[%s1 + $0x80] sm:$0xff]
      %v218 = vld [vmem:[%s1 + $0x88] sm:$0xff]
      %v219 = vld [vmem:[%s1 + $0x90] sm:$0xff]
      %v220 = vld [vmem:[%s1 + $0x98] sm:$0xff]
      %v221 = vld [vmem:[%s1 + $0xa0] sm:$0xff]
      %v222 = vld [vmem:[%s1 + $0xa8] sm:$0xff]
      %v223 = vld [vmem:[%s1 + $0xb0] sm:$0xff]
      %v224 = vld [vmem:[%s1 + $0xb8] sm:$0xff]
      %v225 = vld [vmem:[%s1 + $0xc0] sm:$0xff]
      %v226 = vld [vmem:[%s1 + $0xc8] sm:$0xff]
      %v227 = vld [vmem:[%s1 + $0xd0] sm:$0xff]
      %v228 = vld [vmem:[%s1 + $0xd8] sm:$0xff]
      %v229 = vld [vmem:[%s1 + $0xe0] sm:$0xff]
      %v230 = vld [vmem:[%s1 + $0xe8] sm:$0xff]
      %v231 = vld [vmem:[%s1 + $0xf0] sm:$0xff]
      %v232 = vld [vmem:[%s1 + $0xf8] sm:$0xff]
      %v236 = vunpack.c.l.b16 %v198
      %v237 = vunpack.c.h.b16 %v198
      %v238 = vunpack.c.l.b16 %v199
      %v239 = vunpack.c.h.b16 %v199
      %v240 = vunpack.c.l.b16 %v200
      %v241 = vunpack.c.h.b16 %v200
      %v242 = vpack.c.b16 %v238, %v236
      %v243 = vpack.c.b16 %v239, %v237
      %v244 = vpack.c.b16 %v240, %v240
      %v245 = vpack.c.b16 %v241, %v241
      %v282 = vunpack.c.l.b16 %v201
      %v283 = vunpack.c.h.b16 %v201
      %v284 = vunpack.c.l.b16 %v202
      %v285 = vunpack.c.h.b16 %v202
      %v286 = vunpack.c.l.b16 %v203
      %v287 = vunpack.c.h.b16 %v203
      %v288 = vunpack.c.l.b16 %v204
      %v289 = vunpack.c.h.b16 %v204
      %v290 = vunpack.c.l.b16 %v205
      %v291 = vunpack.c.h.b16 %v205
      %v292 = vunpack.c.l.b16 %v206
      %v293 = vunpack.c.h.b16 %v206
      %v294 = vunpack.c.l.b16 %v207
      %v295 = vunpack.c.h.b16 %v207
      %v296 = vunpack.c.l.b16 %v208
      %v297 = vunpack.c.h.b16 %v208
      %v298 = vunpack.c.l.b16 %v209
      %v299 = vunpack.c.h.b16 %v209
      %v300 = vunpack.c.l.b16 %v210
      %v301 = vunpack.c.h.b16 %v210
      %v302 = vunpack.c.l.b16 %v211
      %v303 = vunpack.c.h.b16 %v211
      %v304 = vunpack.c.l.b16 %v212
      %v305 = vunpack.c.h.b16 %v212
      %v306 = vunpack.c.l.b16 %v213
      %v307 = vunpack.c.h.b16 %v213
      %v308 = vunpack.c.l.b16 %v214
      %v309 = vunpack.c.h.b16 %v214
      %v310 = vunpack.c.l.b16 %v215
      %v311 = vunpack.c.h.b16 %v215
      %v312 = vunpack.c.l.b16 %v216
      %v313 = vunpack.c.h.b16 %v216
      %v314 = vunpack.c.l.b16 %v217
      %v315 = vunpack.c.h.b16 %v217
      %v316 = vunpack.c.l.b16 %v218
      %v317 = vunpack.c.h.b16 %v218
      %v318 = vunpack.c.l.b16 %v219
      %v319 = vunpack.c.h.b16 %v219
      %v320 = vunpack.c.l.b16 %v220
      %v321 = vunpack.c.h.b16 %v220
      %v322 = vunpack.c.l.b16 %v221
      %v323 = vunpack.c.h.b16 %v221
      %v324 = vunpack.c.l.b16 %v222
      %v325 = vunpack.c.h.b16 %v222
      %v326 = vunpack.c.l.b16 %v223
      %v327 = vunpack.c.h.b16 %v223
      %v328 = vunpack.c.l.b16 %v224
      %v329 = vunpack.c.h.b16 %v224
      %v330 = vunpack.c.l.b16 %v225
      %v331 = vunpack.c.h.b16 %v225
      %v332 = vunpack.c.l.b16 %v226
      %v333 = vunpack.c.h.b16 %v226
      %v334 = vunpack.c.l.b16 %v227
      %v335 = vunpack.c.h.b16 %v227
      %v336 = vunpack.c.l.b16 %v228
      %v337 = vunpack.c.h.b16 %v228
      %v338 = vunpack.c.l.b16 %v229
      %v339 = vunpack.c.h.b16 %v229
      %v340 = vunpack.c.l.b16 %v230
      %v341 = vunpack.c.h.b16 %v230
      %v342 = vunpack.c.l.b16 %v231
      %v343 = vunpack.c.h.b16 %v231
      %v344 = vunpack.c.l.b16 %v232
      %v345 = vunpack.c.h.b16 %v232
      %v346 = vpack.c.b16 %v284, %v282
      %v347 = vpack.c.b16 %v285, %v283
      %v348 = vpack.c.b16 %v288, %v286
      %v349 = vpack.c.b16 %v289, %v287
      %v350 = vpack.c.b16 %v292, %v290
      %v351 = vpack.c.b16 %v293, %v291
      %v352 = vpack.c.b16 %v296, %v294
      %v353 = vpack.c.b16 %v297, %v295
      %v354 = vpack.c.b16 %v300, %v298
      %v355 = vpack.c.b16 %v301, %v299
      %v356 = vpack.c.b16 %v304, %v302
      %v357 = vpack.c.b16 %v305, %v303
      %v358 = vpack.c.b16 %v308, %v306
      %v359 = vpack.c.b16 %v309, %v307
      %v360 = vpack.c.b16 %v312, %v310
      %v361 = vpack.c.b16 %v313, %v311
      %v362 = vpack.c.b16 %v316, %v314
      %v363 = vpack.c.b16 %v317, %v315
      %v364 = vpack.c.b16 %v320, %v318
      %v365 = vpack.c.b16 %v321, %v319
      %v366 = vpack.c.b16 %v324, %v322
      %v367 = vpack.c.b16 %v325, %v323
      %v368 = vpack.c.b16 %v328, %v326
      %v369 = vpack.c.b16 %v329, %v327
      %v370 = vpack.c.b16 %v332, %v330
      %v371 = vpack.c.b16 %v333, %v331
      %v372 = vpack.c.b16 %v336, %v334
      %v373 = vpack.c.b16 %v337, %v335
      %v374 = vpack.c.b16 %v340, %v338
      %v375 = vpack.c.b16 %v341, %v339
      %v376 = vpack.c.b16 %v344, %v342
      %v377 = vpack.c.b16 %v345, %v343
      %410 = vmatprep.subr.bf16.mxu0 %v347
      %411 = vmatpush1.bf16.msra.mxu0 %v346
      %412 = vmatprep.subr.bf16.mxu0 %v349
      %413 = vmatpush1.bf16.msra.mxu0 %v348
      %414 = vmatprep.subr.bf16.mxu0 %v351
      %415 = vmatpush1.bf16.msra.mxu0 %v350
      %416 = vmatprep.subr.bf16.mxu0 %v353
      %417 = vmatpush1.bf16.msra.mxu0 %v352
      %418 = vmatprep.subr.bf16.mxu0 %v355
      %419 = vmatpush1.bf16.msra.mxu0 %v354
      %420 = vmatprep.subr.bf16.mxu0 %v357
      %421 = vmatpush1.bf16.msra.mxu0 %v356
      %422 = vmatprep.subr.bf16.mxu0 %v359
      %423 = vmatpush1.bf16.msra.mxu0 %v358
      %424 = vmatprep.subr.bf16.mxu0 %v361
      %425 = vmatpush1.bf16.msra.mxu0 %v360
      %426 = vmatprep.subr.bf16.mxu0 %v363
      %427 = vmatpush1.bf16.msra.mxu0 %v362
      %428 = vmatprep.subr.bf16.mxu0 %v365
      %429 = vmatpush1.bf16.msra.mxu0 %v364
      %430 = vmatprep.subr.bf16.mxu0 %v367
      %431 = vmatpush1.bf16.msra.mxu0 %v366
      %432 = vmatprep.subr.bf16.mxu0 %v369
      %433 = vmatpush1.bf16.msra.mxu0 %v368
      %434 = vmatprep.subr.bf16.mxu0 %v371
      %435 = vmatpush1.bf16.msra.mxu0 %v370
      %436 = vmatprep.subr.bf16.mxu0 %v373
      %437 = vmatpush1.bf16.msra.mxu0 %v372
      %438 = vmatprep.subr.bf16.mxu0 %v375
      %439 = vmatpush1.bf16.msra.mxu0 %v374
      %440 = vmatprep.subr.bf16.mxu0 %v377
      %441 = vmatpush1.bf16.msra.mxu0 %v376
      %442 = vmatprep.mubr.bf16.mxu0 %v243
      %443 = vmatmul.mubr.bf16.gmra.mrb[0].mxu0 %v242
      %v444 = vpop.f32.mrb[0].mxu0
      %v445 = vadd.f32 0.0, %v444
      %v446 = vpop.f32.mrb[0].mxu0
      %v447 = vpop.f32.mrb[0].mxu0
      %v448 = vadd.f32 0.0, %v447
      %v449 = vpop.f32.mrb[0].mxu0
      %v450 = vadd.f32 0.0, %v449
      %451 = vmatprep.mubr.bf16.mxu0 %v245
      %452 = vmatmul.mubr.bf16.gmra.mrb[0].mxu0 %v244
      %v453 = vpop.f32.mrb[0].mxu0
      %v454 = vpop.f32.mrb[0].mxu0
      %v455 = vadd.f32 0.0, %v454
      %v456 = vpop.f32.mrb[0].mxu0
      %v457 = vpop.f32.mrb[0].mxu0
      %458 = vdwg.mxu0
      %v459 = vadd.f32 %v445, %v450
      %v460 = vadd.f32 %v448, %v455
      %s461 = sadd.s32 %s195, 6
      %s462 = smul.addr %s461, 4
      %s463 = scalar_lea.vmem %s183, %s462
      %v464 = vld [vmem:[%s463] sm:$0xff]
      %v465 = vld [vmem:[%s463 + $0x8] sm:$0xff]
      %v466 = vld [vmem:[%s463 + $0x10] sm:$0xff]
      %s467 = scalar_lea.vmem %s1, 256
      %v468 = vld [vmem:[%s467] sm:$0xff]
      %v469 = vld [vmem:[%s467 + $0x8] sm:$0xff]
      %v470 = vld [vmem:[%s467 + $0x10] sm:$0xff]
      %v471 = vld [vmem:[%s467 + $0x18] sm:$0xff]
      %v472 = vld [vmem:[%s467 + $0x20] sm:$0xff]
      %v473 = vld [vmem:[%s467 + $0x28] sm:$0xff]
      %v474 = vld [vmem:[%s467 + $0x30] sm:$0xff]
      %v475 = vld [vmem:[%s467 + $0x38] sm:$0xff]
      %v476 = vld [vmem:[%s467 + $0x40] sm:$0xff]
      %v477 = vld [vmem:[%s467 + $0x48] sm:$0xff]
      %v478 = vld [vmem:[%s467 + $0x50] sm:$0xff]
      %v479 = vld [vmem:[%s467 + $0x58] sm:$0xff]
      %v480 = vld [vmem:[%s467 + $0x60] sm:$0xff]
      %v481 = vld [vmem:[%s467 + $0x68] sm:$0xff]
      %v482 = vld [vmem:[%s467 + $0x70] sm:$0xff]
      %v483 = vld [vmem:[%s467 + $0x78] sm:$0xff]
      %v484 = vld [vmem:[%s467 + $0x80] sm:$0xff]
      %v485 = vld [vmem:[%s467 + $0x88] sm:$0xff]
      %v486 = vld [vmem:[%s467 + $0x90] sm:$0xff]
      %v487 = vld [vmem:[%s467 + $0x98] sm:$0xff]
      %v488 = vld [vmem:[%s467 + $0xa0] sm:$0xff]
      %v489 = vld [vmem:[%s467 + $0xa8] sm:$0xff]
      %v490 = vld [vmem:[%s467 + $0xb0] sm:$0xff]
      %v491 = vld [vmem:[%s467 + $0xb8] sm:$0xff]
      %v492 = vld [vmem:[%s467 + $0xc0] sm:$0xff]
      %v493 = vld [vmem:[%s467 + $0xc8] sm:$0xff]
      %v494 = vld [vmem:[%s467 + $0xd0] sm:$0xff]
      %v495 = vld [vmem:[%s467 + $0xd8] sm:$0xff]
      %v496 = vld [vmem:[%s467 + $0xe0] sm:$0xff]
      %v497 = vld [vmem:[%s467 + $0xe8] sm:$0xff]
      %v498 = vld [vmem:[%s467 + $0xf0] sm:$0xff]
      %v499 = vld [vmem:[%s467 + $0xf8] sm:$0xff]
      %v503 = vunpack.c.l.b16 %v464
      %v504 = vunpack.c.h.b16 %v464
      %v505 = vunpack.c.l.b16 %v465
      %v506 = vunpack.c.h.b16 %v465
      %v507 = vunpack.c.l.b16 %v466
      %v508 = vunpack.c.h.b16 %v466
      %v509 = vpack.c.b16 %v505, %v503
      %v510 = vpack.c.b16 %v506, %v504
      %v511 = vpack.c.b16 %v507, %v507
      %v512 = vpack.c.b16 %v508, %v508
      %v549 = vunpack.c.l.b16 %v468
      %v550 = vunpack.c.h.b16 %v468
      %v551 = vunpack.c.l.b16 %v469
      %v552 = vunpack.c.h.b16 %v469
      %v553 = vunpack.c.l.b16 %v470
      %v554 = vunpack.c.h.b16 %v470
      %v555 = vunpack.c.l.b16 %v471
      %v556 = vunpack.c.h.b16 %v471
      %v557 = vunpack.c.l.b16 %v472
      %v558 = vunpack.c.h.b16 %v472
      %v559 = vunpack.c.l.b16 %v473
      %v560 = vunpack.c.h.b16 %v473
      %v561 = vunpack.c.l.b16 %v474
      %v562 = vunpack.c.h.b16 %v474
      %v563 = vunpack.c.l.b16 %v475
      %v564 = vunpack.c.h.b16 %v475
      %v565 = vunpack.c.l.b16 %v476
      %v566 = vunpack.c.h.b16 %v476
      %v567 = vunpack.c.l.b16 %v477
      %v568 = vunpack.c.h.b16 %v477
      %v569 = vunpack.c.l.b16 %v478
      %v570 = vunpack.c.h.b16 %v478
      %v571 = vunpack.c.l.b16 %v479
      %v572 = vunpack.c.h.b16 %v479
      %v573 = vunpack.c.l.b16 %v480
      %v574 = vunpack.c.h.b16 %v480
      %v575 = vunpack.c.l.b16 %v481
      %v576 = vunpack.c.h.b16 %v481
      %v577 = vunpack.c.l.b16 %v482
      %v578 = vunpack.c.h.b16 %v482
      %v579 = vunpack.c.l.b16 %v483
      %v580 = vunpack.c.h.b16 %v483
      %v581 = vunpack.c.l.b16 %v484
      %v582 = vunpack.c.h.b16 %v484
      %v583 = vunpack.c.l.b16 %v485
      %v584 = vunpack.c.h.b16 %v485
      %v585 = vunpack.c.l.b16 %v486
      %v586 = vunpack.c.h.b16 %v486
      %v587 = vunpack.c.l.b16 %v487
      %v588 = vunpack.c.h.b16 %v487
      %v589 = vunpack.c.l.b16 %v488
      %v590 = vunpack.c.h.b16 %v488
      %v591 = vunpack.c.l.b16 %v489
      %v592 = vunpack.c.h.b16 %v489
      %v593 = vunpack.c.l.b16 %v490
      %v594 = vunpack.c.h.b16 %v490
      %v595 = vunpack.c.l.b16 %v491
      %v596 = vunpack.c.h.b16 %v491
      %v597 = vunpack.c.l.b16 %v492
      %v598 = vunpack.c.h.b16 %v492
      %v599 = vunpack.c.l.b16 %v493
      %v600 = vunpack.c.h.b16 %v493
      %v601 = vunpack.c.l.b16 %v494
      %v602 = vunpack.c.h.b16 %v494
      %v603 = vunpack.c.l.b16 %v495
      %v604 = vunpack.c.h.b16 %v495
      %v605 = vunpack.c.l.b16 %v496
      %v606 = vunpack.c.h.b16 %v496
      %v607 = vunpack.c.l.b16 %v497
      %v608 = vunpack.c.h.b16 %v497
      %v609 = vunpack.c.l.b16 %v498
      %v610 = vunpack.c.h.b16 %v498
      %v611 = vunpack.c.l.b16 %v499
      %v612 = vunpack.c.h.b16 %v499
      %v613 = vpack.c.b16 %v551, %v549
      %v614 = vpack.c.b16 %v552, %v550
      %v615 = vpack.c.b16 %v555, %v553
      %v616 = vpack.c.b16 %v556, %v554
      %v617 = vpack.c.b16 %v559, %v557
      %v618 = vpack.c.b16 %v560, %v558
      %v619 = vpack.c.b16 %v563, %v561
      %v620 = vpack.c.b16 %v564, %v562
      %v621 = vpack.c.b16 %v567, %v565
      %v622 = vpack.c.b16 %v568, %v566
      %v623 = vpack.c.b16 %v571, %v569
      %v624 = vpack.c.b16 %v572, %v570
      %v625 = vpack.c.b16 %v575, %v573
      %v626 = vpack.c.b16 %v576, %v574
      %v627 = vpack.c.b16 %v579, %v577
      %v628 = vpack.c.b16 %v580, %v578
      %v629 = vpack.c.b16 %v583, %v581
      %v630 = vpack.c.b16 %v584, %v582
      %v631 = vpack.c.b16 %v587, %v585
      %v632 = vpack.c.b16 %v588, %v586
      %v633 = vpack.c.b16 %v591, %v589
      %v634 = vpack.c.b16 %v592, %v590
      %v635 = vpack.c.b16 %v595, %v593
      %v636 = vpack.c.b16 %v596, %v594
      %v637 = vpack.c.b16 %v599, %v597
      %v638 = vpack.c.b16 %v600, %v598
      %v639 = vpack.c.b16 %v603, %v601
      %v640 = vpack.c.b16 %v604, %v602
      %v641 = vpack.c.b16 %v607, %v605
      %v642 = vpack.c.b16 %v608, %v606
      %v643 = vpack.c.b16 %v611, %v609
      %v644 = vpack.c.b16 %v612, %v610
      %677 = vmatprep.subr.bf16.mxu0 %v614
      %678 = vmatpush1.bf16.msra.mxu0 %v613
      %679 = vmatprep.subr.bf16.mxu0 %v616
      %680 = vmatpush1.bf16.msra.mxu0 %v615
      %681 = vmatprep.subr.bf16.mxu0 %v618
      %682 = vmatpush1.bf16.msra.mxu0 %v617
      %683 = vmatprep.subr.bf16.mxu0 %v620
      %684 = vmatpush1.bf16.msra.mxu0 %v619
      %685 = vmatprep.subr.bf16.mxu0 %v622
      %686 = vmatpush1.bf16.msra.mxu0 %v621
      %687 = vmatprep.subr.bf16.mxu0 %v624
      %688 = vmatpush1.bf16.msra.mxu0 %v623
      %689 = vmatprep.subr.bf16.mxu0 %v626
      %690 = vmatpush1.bf16.msra.mxu0 %v625
      %691 = vmatprep.subr.bf16.mxu0 %v628
      %692 = vmatpush1.bf16.msra.mxu0 %v627
      %693 = vmatprep.subr.bf16.mxu0 %v630
      %694 = vmatpush1.bf16.msra.mxu0 %v629
      %695 = vmatprep.subr.bf16.mxu0 %v632
      %696 = vmatpush1.bf16.msra.mxu0 %v631
      %697 = vmatprep.subr.bf16.mxu0 %v634
      %698 = vmatpush1.bf16.msra.mxu0 %v633
      %699 = vmatprep.subr.bf16.mxu0 %v636
      %700 = vmatpush1.bf16.msra.mxu0 %v635
      %701 = vmatprep.subr.bf16.mxu0 %v638
      %702 = vmatpush1.bf16.msra.mxu0 %v637
      %703 = vmatprep.subr.bf16.mxu0 %v640
      %704 = vmatpush1.bf16.msra.mxu0 %v639
      %705 = vmatprep.subr.bf16.mxu0 %v642
      %706 = vmatpush1.bf16.msra.mxu0 %v641
      %707 = vmatprep.subr.bf16.mxu0 %v644
      %708 = vmatpush1.bf16.msra.mxu0 %v643
      %709 = vmatprep.mubr.bf16.mxu0 %v510
      %710 = vmatmul.mubr.bf16.gmra.mrb[0].mxu0 %v509
      %v711 = vpop.f32.mrb[0].mxu0
      %v712 = vadd.f32 0.0, %v711
      %v713 = vpop.f32.mrb[0].mxu0
      %v714 = vpop.f32.mrb[0].mxu0
      %v715 = vadd.f32 0.0, %v714
      %v716 = vpop.f32.mrb[0].mxu0
      %v717 = vadd.f32 0.0, %v716
      %718 = vmatprep.mubr.bf16.mxu0 %v512
      %719 = vmatmul.mubr.bf16.gmra.mrb[0].mxu0 %v511
      %v720 = vpop.f32.mrb[0].mxu0
      %v721 = vpop.f32.mrb[0].mxu0
      %v722 = vadd.f32 0.0, %v721
      %v723 = vpop.f32.mrb[0].mxu0
      %v724 = vpop.f32.mrb[0].mxu0
      %725 = vdwg.mxu0
      %v726 = vadd.f32 %v712, %v717
      %v727 = vadd.f32 %v715, %v722
      %v728 = vadd.f32 %v459, %v726
      %v729 = vadd.f32 %v460, %v727
      %v730 = vld [vmem:[%s2] sm:$0x1]
      %v732 = vlaneseq
      %v733 = vshrl.u32 %v732, 7
      %v734 = vsub.s32 0, %v733
      %v735 = vrot.slane %v730, %v734
      %v737 = vadd.f32 %v728, %v735
      %v738 = vadd.f32 %v729, %v735
      %v739 = vmax.f32 %v737, 0.0
      %v740 = vmax.f32 %v738, 0.0
      %v741 = vpack.c.bf16 %v739, %v739
      %v742 = vpack.c.bf16 %v740, %v740
      %743 = vst [vmem:[%s192] sm:$0xf] %v741
      %744 = vst [vmem:[%s192 + $0x4] sm:$0xf] %v742
      %s745 = smul.u32 2, %s19
      %p746 = scmp.lt.s32.totalorder %s18, 1
      %s747 = scalar_select %p746, %s18, 1
      %p748 = scmp.lt.s32.totalorder %s745, 1
      %s749 = scalar_select %p748, %s745, 1
      %s750 = smul.addr %s747, 2
      %s751 = sadd.s32 %s749, %s750
      %s752 = smul.addr %s751, 4
      %s753 = scalar_lea.vmem %s3, %s752
      // Predicated region
      $region33: #{timm_backbone_forward.8} parent=31 // pred_check
        %p754 = pneg %p114
      $region34: #{timm_backbone_forward.8} parent=31 // pred_check_branch
        %756 = sbr.rel (%p754) target = $region36
      $region35: #{timm_backbone_forward.8} parent=31 // pred_region
        %s757 = smul.u32 2, %s19
      $region36: #{timm_backbone_forward.8} parent=31 // pred_fallthru
        _
    $region32: #{timm_backbone_forward.8} parent=5 // pred_fallthru
      _
    %p758 = scmp.le.s32.totalorder 2, %s9
    // Predicated region
    $region37: #{timm_backbone_forward.8} parent=5 // pred_check
      %p759 = pneg %p758
    $region38: #{timm_backbone_forward.8} parent=5 // pred_check_branch
      %761 = sbr.rel (%p759) target = $region40
    $region39: #{timm_backbone_forward.8} parent=5 // pred_region
      %s762 = ssub.s32 %s9, 2
      // Predicated region
      $region41: #{timm_backbone_forward.8} parent=39 // pred_check
        %p763 = pneg %p120
      $region42: #{timm_backbone_forward.8} parent=39 // pred_check_branch
        %765 = sbr.rel (%p763) target = $region44
      $region43: #{timm_backbone_forward.8} parent=39 // pred_region
        %s766 = smul.u32 2, %s21
        %p767 = scmp.lt.s32.totalorder %s20, 1
        %s768 = scalar_select %p767, %s20, 1
        %p769 = scmp.lt.s32.totalorder %s766, 1
        %s770 = scalar_select %p769, %s766, 1
        %s771 = smul.addr %s768, 2
        %s772 = sadd.s32 %s770, %s771
        %s773 = smul.addr %s772, 4
        %s774 = scalar_lea.vmem %s3, %s773
      $region44: #{timm_backbone_forward.8} parent=39 // pred_fallthru
        _
    $region40: #{timm_backbone_forward.8} parent=5 // pred_fallthru
      _
  $region6: #{timm_backbone_forward.8} parent=0 // loop_footer
    %s13 = sadd.s32 1, %s9
  $region7: #{timm_backbone_forward.8} parent=0 // loop_footer_branch
    %8 = sbr.rel target = $region3
  $region8: #{timm_backbone_forward.8} parent=0 // loop_exit
    _

// kernel: timm_backbone_forward.9
$region0: #{timm_backbone_forward.9}
  #allocation0 [shape = 'u32[]', space=smem, size = 0x4, offset = 0x4, fixed_abs, tag = 'smem constant byte address 0x4 - core index']
  #allocation1 [shape = 'u32[144,128]{1,0:T(1,128)}', space=vmem, size = 0x12000, scoped, tag = 'internal scratch']
  %s0 = inlined_call_operand.vmem [shape: bf16[2,2,2,8,384], index: 0, kind: input, shape index: {}]
  %s1 = inlined_call_operand.vmem [shape: bf16[2,384,256], index: 1, kind: input, shape index: {}]
  %s2 = inlined_call_operand.vmem [shape: f32[1,128], index: 2, kind: input, shape index: {}]
  %s3 = inlined_call_operand.vmem [shape: bf16[2,1,8,128], index: 3, kind: output, shape index: {}]
  %s4 = sld [smem:[#allocation0]]
  $region45: #{timm_backbone_forward.9} parent=0
    _
  %s6 = ssub.s32 1, %s4
  %s7 = scalar_select 0, %s6, %s4
  loop: start=0, step=1, limit=4
  $region2: #{timm_backbone_forward.9} parent=0 // loop_pre_header
    _
  $region3: #{timm_backbone_forward.9} parent=0 // loop_header
    %s9 = sphi 0, %s13
    %p10 = scmp.ge.s32.totalorder %s9, 4
    %s16 = sphi 0, %s28
    %s17 = sphi 0, %s24
    %s18 = sphi 0, %s16
    %s19 = sphi 0, %s17
    %s20 = sphi 0, %s18
    %s21 = sphi 0, %s19
    %s31 = sphi 0, %s33
    %s34 = sphi 0, %s31
    %s35 = sphi 0, %s34
    %s51 = sphi 0, %s35
    %s55 = sphi 0, %s55
    %s57 = sphi 0, %s55
    %s58 = sphi 0, %s57
    %s72 = sphi 0, %s58
    %s76 = sphi 0, %s76
    %s78 = sphi 0, %s76
    %s79 = sphi 0, %s78
    %s93 = sphi 0, %s79
    %s101 = sphi 0, %s103
    %s104 = sphi 0, %s101
    %s105 = sphi 0, %s104
    %s121 = sphi 0, %s105
  $region4: #{timm_backbone_forward.9} parent=0 // loop_header_branch
    %12 = sbr.rel (%p10) target = $region8
  $region5: #{timm_backbone_forward.9} parent=0 // loop_body
    %s14 = ssub.s32 %s9, 1
    %s15 = ssub.s32 %s9, 2
    %s22 = sadd.s32 1, %s17
    %p23 = scmp.ge.s32.totalorder %s22, 1
    %s24 = scalar_select %p23, 0, %s22
    %s25 = sadd.s32 1, %s16
    %s26 = scalar_select %p23, %s25, %s16
    %p27 = scmp.ge.s32.totalorder %s26, 2
    %s28 = scalar_select %p27, 0, %s26
    %s29 = ssub.s32 %s16, %s28
    %p30 = scmp.eq.s32.totalorder %s29, 0
    %s32 = sadd.s32 %s31, 1
    %s33 = scalar_select %p30, %s31, %s32
    %p36 = pneg %p30
    %p37 = scmp.eq.s32.totalorder %s9, 1
    %p38 = por %p36, %p37
    %p39 = scmp.ne.s32.totalorder %s31, %s34
    %p40 = scmp.eq.s32.totalorder %s9, 0
    %p41 = por %p39, %p40
    %p42 = scmp.ne.s32.totalorder %s31, %s34
    %p43 = scmp.eq.s32.totalorder %s14, 1
    %p44 = por %p42, %p43
    %p45 = scmp.ne.s32.totalorder %s34, %s35
    %p46 = scmp.eq.s32.totalorder %s14, 0
    %p47 = por %p45, %p46
    %p48 = scmp.ne.s32.totalorder %s34, %s35
    %p49 = scmp.eq.s32.totalorder %s15, 1
    %p50 = por %p48, %p49
    %p52 = scmp.ne.s32.totalorder %s35, %s51
    %p53 = scmp.eq.s32.totalorder %s15, 0
    %p54 = por %p52, %p53
    %s56 = sadd.s32 %s55, 1
    %p59 = scmp.eq.s32.totalorder %s9, 1
    %p60 = scmp.ne.s32.totalorder %s55, %s57
    %p61 = scmp.eq.s32.totalorder %s9, 0
    %p62 = por %p60, %p61
    %p63 = scmp.ne.s32.totalorder %s55, %s57
    %p64 = scmp.eq.s32.totalorder %s14, 1
    %p65 = por %p63, %p64
    %p66 = scmp.ne.s32.totalorder %s57, %s58
    %p67 = scmp.eq.s32.totalorder %s14, 0
    %p68 = por %p66, %p67
    %p69 = scmp.ne.s32.totalorder %s57, %s58
    %p70 = scmp.eq.s32.totalorder %s15, 1
    %p71 = por %p69, %p70
    %p73 = scmp.ne.s32.totalorder %s58, %s72
    %p74 = scmp.eq.s32.totalorder %s15, 0
    %p75 = por %p73, %p74
    %s77 = sadd.s32 %s76, 1
    %p80 = scmp.eq.s32.totalorder %s9, 1
    %p81 = scmp.ne.s32.totalorder %s76, %s78
    %p82 = scmp.eq.s32.totalorder %s9, 0
    %p83 = por %p81, %p82
    %p84 = scmp.ne.s32.totalorder %s76, %s78
    %p85 = scmp.eq.s32.totalorder %s14, 1
    %p86 = por %p84, %p85
    %p87 = scmp.ne.s32.totalorder %s78, %s79
    %p88 = scmp.eq.s32.totalorder %s14, 0
    %p89 = por %p87, %p88
    %p90 = scmp.ne.s32.totalorder %s78, %s79
    %p91 = scmp.eq.s32.totalorder %s15, 1
    %p92 = por %p90, %p91
    %p94 = scmp.ne.s32.totalorder %s79, %s93
    %p95 = scmp.eq.s32.totalorder %s15, 0
    %p96 = por %p94, %p95
    %s97 = ssub.s32 %s16, %s28
    %s98 = ssub.s32 %s17, %s24
    %s99 = sor.u32 %s97, %s98
    %p100 = scmp.eq.s32.totalorder %s99, 0
    %s102 = sadd.s32 %s101, 1
    %s103 = scalar_select %p100, %s101, %s102
    %p106 = pneg %p100
    %p107 = scmp.eq.s32.totalorder %s9, 1
    %p108 = por %p106, %p107
    %p109 = scmp.ne.s32.totalorder %s101, %s104
    %p110 = scmp.eq.s32.totalorder %s9, 0
    %p111 = por %p109, %p110
    %p112 = scmp.ne.s32.totalorder %s101, %s104
    %p113 = scmp.eq.s32.totalorder %s14, 1
    %p114 = por %p112, %p113
    %p115 = scmp.ne.s32.totalorder %s104, %s105
    %p116 = scmp.eq.s32.totalorder %s14, 0
    %p117 = por %p115, %p116
    %p118 = scmp.ne.s32.totalorder %s104, %s105
    %p119 = scmp.eq.s32.totalorder %s15, 1
    %p120 = por %p118, %p119
    %p122 = scmp.ne.s32.totalorder %s105, %s121
    %p123 = scmp.eq.s32.totalorder %s15, 0
    %p124 = por %p122, %p123
    %p125 = scmp.le.s32.totalorder 1, %s9
    %p126 = scmp.lt.s32.totalorder %s9, 3
    %p127 = pnand %p125, %p126
    %p128 = pneg %p127
    // Predicated region
    $region9: #{timm_backbone_forward.9} parent=5 // pred_check
      _
    $region10: #{timm_backbone_forward.9} parent=5 // pred_check_branch
      %130 = sbr.rel (%p127) target = $region12
    $region11: #{timm_backbone_forward.9} parent=5 // pred_region
      %s131 = ssub.s32 %s9, 1
      // Predicated region
      $region13: #{timm_backbone_forward.9} parent=11 // pred_check
        %p132 = pneg %p68
      $region14: #{timm_backbone_forward.9} parent=11 // pred_check_branch
        %134 = sbr.rel (%p132) target = $region16
      $region15: #{timm_backbone_forward.9} parent=11 // pred_region
        _
      $region16: #{timm_backbone_forward.9} parent=11 // pred_fallthru
        _
      // Predicated region
      $region17: #{timm_backbone_forward.9} parent=11 // pred_check
        %p135 = pneg %p89
      $region18: #{timm_backbone_forward.9} parent=11 // pred_check_branch
        %137 = sbr.rel (%p135) target = $region20
      $region19: #{timm_backbone_forward.9} parent=11 // pred_region
        _
      $region20: #{timm_backbone_forward.9} parent=11 // pred_fallthru
        _
    $region12: #{timm_backbone_forward.9} parent=5 // pred_fallthru
      _
    %p138 = scmp.lt.s32.totalorder %s9, 2
    // Predicated region
    $region21: #{timm_backbone_forward.9} parent=5 // pred_check
      %p139 = pneg %p138
    $region22: #{timm_backbone_forward.9} parent=5 // pred_check_branch
      %141 = sbr.rel (%p139) target = $region24
    $region23: #{timm_backbone_forward.9} parent=5 // pred_region
      // Predicated region
      $region25: #{timm_backbone_forward.9} parent=23 // pred_check
        %p142 = pneg %p41
      $region26: #{timm_backbone_forward.9} parent=23 // pred_check_branch
        %144 = sbr.rel (%p142) target = $region28
      $region27: #{timm_backbone_forward.9} parent=23 // pred_region
        %p145 = scmp.lt.s32.totalorder %s16, 1
        %s146 = scalar_select %p145, %s16, 1
        %s147 = smul.addr %s146, 12
        %s148 = smul.addr %s147, 4
        %s149 = scalar_lea.vmem %s0, %s148
      $region28: #{timm_backbone_forward.9} parent=23 // pred_fallthru
        _
    $region24: #{timm_backbone_forward.9} parent=5 // pred_fallthru
      _
    %p150 = scmp.le.s32.totalorder 1, %s9
    %p151 = scmp.lt.s32.totalorder %s9, 3
    %p152 = pnand %p150, %p151
    %p153 = pneg %p152
    // Predicated region
    $region29: #{timm_backbone_forward.9} parent=5 // pred_check
      _
    $region30: #{timm_backbone_forward.9} parent=5 // pred_check_branch
      %155 = sbr.rel (%p152) target = $region32
    $region31: #{timm_backbone_forward.9} parent=5 // pred_region
      %s156 = ssub.s32 %s9, 1
      %p157 = scmp.lt.s32.totalorder %s18, 1
      %s158 = scalar_select %p157, %s18, 1
      %s159 = smul.addr %s158, 12
      %s160 = smul.addr %s159, 4
      %s161 = scalar_lea.vmem %s0, %s160
      %p162 = pneg %p47
      %p163 = pneg %p44
      %p164 = pneg %p68
      %p165 = pneg %p65
      %p166 = pneg %p89
      %p167 = pneg %p86
      %p168 = pneg %p117
      %p169 = pneg %p114
      %p170 = scmp.lt.s32.totalorder %s18, 1
      %s171 = scalar_select %p170, %s18, 1
      %p172 = scmp.lt.s32.totalorder %s19, 0
      %s173 = scalar_select %p172, %s19, 0
      %s174 = sadd.s32 %s173, %s171
      %s175 = smul.addr %s174, 4
      %s176 = scalar_lea.vmem %s3, %s175
      %p177 = scmp.lt.s32.totalorder %s18, 1
      %s178 = scalar_select %p177, %s18, 1
      %s179 = smul.addr %s178, 12
      %s180 = smul.addr %s179, 4
      %s181 = scalar_lea.vmem %s0, %s180
      %p182 = scmp.lt.s32.totalorder %s18, 1
      %s183 = scalar_select %p182, %s18, 1
      %p184 = scmp.lt.s32.totalorder %s19, 0
      %s185 = scalar_select %p184, %s19, 0
      %s186 = sadd.s32 %s185, %s183
      %s187 = smul.addr %s186, 4
      %s188 = scalar_lea.vmem %s3, %s187
      %s190 = smul.u32 %s19, 3
      %s191 = smul.addr %s190, 4
      %s192 = scalar_lea.vmem %s181, %s191
      %v193 = vld [vmem:[%s192] sm:$0xff]
      %v194 = vld [vmem:[%s192 + $0x8] sm:$0xf]
      %v195 = vld [vmem:[%s192 + $0xc] sm:$0xff]
      %v196 = vld [vmem:[%s192 + $0x14] sm:$0xf]
      %v197 = vld [vmem:[%s1] sm:$0xff]
      %v198 = vld [vmem:[%s1 + $0x8] sm:$0xff]
      %v199 = vld [vmem:[%s1 + $0x10] sm:$0xff]
      %v200 = vld [vmem:[%s1 + $0x18] sm:$0xff]
      %v201 = vld [vmem:[%s1 + $0x20] sm:$0xff]
      %v202 = vld [vmem:[%s1 + $0x28] sm:$0xff]
      %v203 = vld [vmem:[%s1 + $0x30] sm:$0xff]
      %v204 = vld [vmem:[%s1 + $0x38] sm:$0xff]
      %v205 = vld [vmem:[%s1 + $0x40] sm:$0xff]
      %v206 = vld [vmem:[%s1 + $0x48] sm:$0xff]
      %v207 = vld [vmem:[%s1 + $0x50] sm:$0xff]
      %v208 = vld [vmem:[%s1 + $0x58] sm:$0xff]
      %v209 = vld [vmem:[%s1 + $0x60] sm:$0xff]
      %v210 = vld [vmem:[%s1 + $0x68] sm:$0xff]
      %v211 = vld [vmem:[%s1 + $0x70] sm:$0xff]
      %v212 = vld [vmem:[%s1 + $0x78] sm:$0xff]
      %v213 = vld [vmem:[%s1 + $0x80] sm:$0xff]
      %v214 = vld [vmem:[%s1 + $0x88] sm:$0xff]
      %v215 = vld [vmem:[%s1 + $0x90] sm:$0xff]
      %v216 = vld [vmem:[%s1 + $0x98] sm:$0xff]
      %v217 = vld [vmem:[%s1 + $0xa0] sm:$0xff]
      %v218 = vld [vmem:[%s1 + $0xa8] sm:$0xff]
      %v219 = vld [vmem:[%s1 + $0xb0] sm:$0xff]
      %v220 = vld [vmem:[%s1 + $0xb8] sm:$0xff]
      %v221 = vld [vmem:[%s1 + $0xc0] sm:$0xff]
      %v222 = vld [vmem:[%s1 + $0xc8] sm:$0xff]
      %v223 = vld [vmem:[%s1 + $0xd0] sm:$0xff]
      %v224 = vld [vmem:[%s1 + $0xd8] sm:$0xff]
      %v225 = vld [vmem:[%s1 + $0xe0] sm:$0xff]
      %v226 = vld [vmem:[%s1 + $0xe8] sm:$0xff]
      %v227 = vld [vmem:[%s1 + $0xf0] sm:$0xff]
      %v228 = vld [vmem:[%s1 + $0xf8] sm:$0xff]
      %v229 = vld [vmem:[%s1 + $0x100] sm:$0xff]
      %v230 = vld [vmem:[%s1 + $0x108] sm:$0xff]
      %v231 = vld [vmem:[%s1 + $0x110] sm:$0xff]
      %v232 = vld [vmem:[%s1 + $0x118] sm:$0xff]
      %v233 = vld [vmem:[%s1 + $0x120] sm:$0xff]
      %v234 = vld [vmem:[%s1 + $0x128] sm:$0xff]
      %v235 = vld [vmem:[%s1 + $0x130] sm:$0xff]
      %v236 = vld [vmem:[%s1 + $0x138] sm:$0xff]
      %v237 = vld [vmem:[%s1 + $0x140] sm:$0xff]
      %v238 = vld [vmem:[%s1 + $0x148] sm:$0xff]
      %v239 = vld [vmem:[%s1 + $0x150] sm:$0xff]
      %v240 = vld [vmem:[%s1 + $0x158] sm:$0xff]
      %v241 = vld [vmem:[%s1 + $0x160] sm:$0xff]
      %v242 = vld [vmem:[%s1 + $0x168] sm:$0xff]
      %v243 = vld [vmem:[%s1 + $0x170] sm:$0xff]
      %v244 = vld [vmem:[%s1 + $0x178] sm:$0xff]
      %v249 = vunpack.c.l.b16 %v193
      %v250 = vunpack.c.h.b16 %v193
      %v251 = vunpack.c.l.b16 %v194
      %v252 = vunpack.c.l.b16 %v195
      %v253 = vunpack.c.h.b16 %v195
      %v254 = vunpack.c.l.b16 %v196
      %v255 = vpack.c.b16 %v252, %v249
      %v256 = vpack.c.b16 %v253, %v250
      %v257 = vpack.c.b16 %v254, %v251
      %v309 = vunpack.c.l.b16 %v197
      %v310 = vunpack.c.h.b16 %v197
      %v311 = vunpack.c.l.b16 %v198
      %v312 = vunpack.c.h.b16 %v198
      %v313 = vunpack.c.l.b16 %v199
      %v314 = vunpack.c.h.b16 %v199
      %v315 = vunpack.c.l.b16 %v200
      %v316 = vunpack.c.h.b16 %v200
      %v317 = vunpack.c.l.b16 %v201
      %v318 = vunpack.c.h.b16 %v201
      %v319 = vunpack.c.l.b16 %v202
      %v320 = vunpack.c.h.b16 %v202
      %v321 = vunpack.c.l.b16 %v203
      %v322 = vunpack.c.h.b16 %v203
      %v323 = vunpack.c.l.b16 %v204
      %v324 = vunpack.c.h.b16 %v204
      %v325 = vunpack.c.l.b16 %v205
      %v326 = vunpack.c.h.b16 %v205
      %v327 = vunpack.c.l.b16 %v206
      %v328 = vunpack.c.h.b16 %v206
      %v329 = vunpack.c.l.b16 %v207
      %v330 = vunpack.c.h.b16 %v207
      %v331 = vunpack.c.l.b16 %v208
      %v332 = vunpack.c.h.b16 %v208
      %v333 = vunpack.c.l.b16 %v209
      %v334 = vunpack.c.h.b16 %v209
      %v335 = vunpack.c.l.b16 %v210
      %v336 = vunpack.c.h.b16 %v210
      %v337 = vunpack.c.l.b16 %v211
      %v338 = vunpack.c.h.b16 %v211
      %v339 = vunpack.c.l.b16 %v212
      %v340 = vunpack.c.h.b16 %v212
      %v341 = vunpack.c.l.b16 %v213
      %v342 = vunpack.c.h.b16 %v213
      %v343 = vunpack.c.l.b16 %v214
      %v344 = vunpack.c.h.b16 %v214
      %v345 = vunpack.c.l.b16 %v215
      %v346 = vunpack.c.h.b16 %v215
      %v347 = vunpack.c.l.b16 %v216
      %v348 = vunpack.c.h.b16 %v216
      %v349 = vunpack.c.l.b16 %v217
      %v350 = vunpack.c.h.b16 %v217
      %v351 = vunpack.c.l.b16 %v218
      %v352 = vunpack.c.h.b16 %v218
      %v353 = vunpack.c.l.b16 %v219
      %v354 = vunpack.c.h.b16 %v219
      %v355 = vunpack.c.l.b16 %v220
      %v356 = vunpack.c.h.b16 %v220
      %v357 = vunpack.c.l.b16 %v221
      %v358 = vunpack.c.h.b16 %v221
      %v359 = vunpack.c.l.b16 %v222
      %v360 = vunpack.c.h.b16 %v222
      %v361 = vunpack.c.l.b16 %v223
      %v362 = vunpack.c.h.b16 %v223
      %v363 = vunpack.c.l.b16 %v224
      %v364 = vunpack.c.h.b16 %v224
      %v365 = vunpack.c.l.b16 %v225
      %v366 = vunpack.c.h.b16 %v225
      %v367 = vunpack.c.l.b16 %v226
      %v368 = vunpack.c.h.b16 %v226
      %v369 = vunpack.c.l.b16 %v227
      %v370 = vunpack.c.h.b16 %v227
      %v371 = vunpack.c.l.b16 %v228
      %v372 = vunpack.c.h.b16 %v228
      %v373 = vunpack.c.l.b16 %v229
      %v374 = vunpack.c.h.b16 %v229
      %v375 = vunpack.c.l.b16 %v230
      %v376 = vunpack.c.h.b16 %v230
      %v377 = vunpack.c.l.b16 %v231
      %v378 = vunpack.c.h.b16 %v231
      %v379 = vunpack.c.l.b16 %v232
      %v380 = vunpack.c.h.b16 %v232
      %v381 = vunpack.c.l.b16 %v233
      %v382 = vunpack.c.h.b16 %v233
      %v383 = vunpack.c.l.b16 %v234
      %v384 = vunpack.c.h.b16 %v234
      %v385 = vunpack.c.l.b16 %v235
      %v386 = vunpack.c.h.b16 %v235
      %v387 = vunpack.c.l.b16 %v236
      %v388 = vunpack.c.h.b16 %v236
      %v389 = vunpack.c.l.b16 %v237
      %v390 = vunpack.c.h.b16 %v237
      %v391 = vunpack.c.l.b16 %v238
      %v392 = vunpack.c.h.b16 %v238
      %v393 = vunpack.c.l.b16 %v239
      %v394 = vunpack.c.h.b16 %v239
      %v395 = vunpack.c.l.b16 %v240
      %v396 = vunpack.c.h.b16 %v240
      %v397 = vunpack.c.l.b16 %v241
      %v398 = vunpack.c.h.b16 %v241
      %v399 = vunpack.c.l.b16 %v242
      %v400 = vunpack.c.h.b16 %v242
      %v401 = vunpack.c.l.b16 %v243
      %v402 = vunpack.c.h.b16 %v243
      %v403 = vunpack.c.l.b16 %v244
      %v404 = vunpack.c.h.b16 %v244
      %v405 = vpack.c.b16 %v311, %v309
      %v406 = vpack.c.b16 %v312, %v310
      %v407 = vpack.c.b16 %v315, %v313
      %v408 = vpack.c.b16 %v316, %v314
      %v409 = vpack.c.b16 %v319, %v317
      %v410 = vpack.c.b16 %v320, %v318
      %v411 = vpack.c.b16 %v323, %v321
      %v412 = vpack.c.b16 %v324, %v322
      %v413 = vpack.c.b16 %v327, %v325
      %v414 = vpack.c.b16 %v328, %v326
      %v415 = vpack.c.b16 %v331, %v329
      %v416 = vpack.c.b16 %v332, %v330
      %v417 = vpack.c.b16 %v335, %v333
      %v418 = vpack.c.b16 %v336, %v334
      %v419 = vpack.c.b16 %v339, %v337
      %v420 = vpack.c.b16 %v340, %v338
      %v421 = vpack.c.b16 %v343, %v341
      %v422 = vpack.c.b16 %v344, %v342
      %v423 = vpack.c.b16 %v347, %v345
      %v424 = vpack.c.b16 %v348, %v346
      %v425 = vpack.c.b16 %v351, %v349
      %v426 = vpack.c.b16 %v352, %v350
      %v427 = vpack.c.b16 %v355, %v353
      %v428 = vpack.c.b16 %v356, %v354
      %v429 = vpack.c.b16 %v359, %v357
      %v430 = vpack.c.b16 %v360, %v358
      %v431 = vpack.c.b16 %v363, %v361
      %v432 = vpack.c.b16 %v364, %v362
      %v433 = vpack.c.b16 %v367, %v365
      %v434 = vpack.c.b16 %v368, %v366
      %v435 = vpack.c.b16 %v371, %v369
      %v436 = vpack.c.b16 %v372, %v370
      %v437 = vpack.c.b16 %v375, %v373
      %v438 = vpack.c.b16 %v376, %v374
      %v439 = vpack.c.b16 %v379, %v377
      %v440 = vpack.c.b16 %v380, %v378
      %v441 = vpack.c.b16 %v383, %v381
      %v442 = vpack.c.b16 %v384, %v382
      %v443 = vpack.c.b16 %v387, %v385
      %v444 = vpack.c.b16 %v388, %v386
      %v445 = vpack.c.b16 %v391, %v389
      %v446 = vpack.c.b16 %v392, %v390
      %v447 = vpack.c.b16 %v395, %v393
      %v448 = vpack.c.b16 %v396, %v394
      %v449 = vpack.c.b16 %v399, %v397
      %v450 = vpack.c.b16 %v400, %v398
      %v451 = vpack.c.b16 %v403, %v401
      %v452 = vpack.c.b16 %v404, %v402
      %501 = vmatprep.subr.bf16.mxu0 %v406
      %502 = vmatpush1.bf16.msra.mxu0 %v405
      %503 = vmatprep.subr.bf16.mxu0 %v408
      %504 = vmatpush1.bf16.msra.mxu0 %v407
      %505 = vmatprep.subr.bf16.mxu0 %v410
      %506 = vmatpush1.bf16.msra.mxu0 %v409
      %507 = vmatprep.subr.bf16.mxu0 %v412
      %508 = vmatpush1.bf16.msra.mxu0 %v411
      %509 = vmatprep.subr.bf16.mxu0 %v414
      %510 = vmatpush1.bf16.msra.mxu0 %v413
      %511 = vmatprep.subr.bf16.mxu0 %v416
      %512 = vmatpush1.bf16.msra.mxu0 %v415
      %513 = vmatprep.subr.bf16.mxu0 %v418
      %514 = vmatpush1.bf16.msra.mxu0 %v417
      %515 = vmatprep.subr.bf16.mxu0 %v420
      %516 = vmatpush1.bf16.msra.mxu0 %v419
      %517 = vmatprep.subr.bf16.mxu0 %v422
      %518 = vmatpush1.bf16.msra.mxu0 %v421
      %519 = vmatprep.subr.bf16.mxu0 %v424
      %520 = vmatpush1.bf16.msra.mxu0 %v423
      %521 = vmatprep.subr.bf16.mxu0 %v426
      %522 = vmatpush1.bf16.msra.mxu0 %v425
      %523 = vmatprep.subr.bf16.mxu0 %v428
      %524 = vmatpush1.bf16.msra.mxu0 %v427
      %525 = vmatprep.subr.bf16.mxu0 %v430
      %526 = vmatpush1.bf16.msra.mxu0 %v429
      %527 = vmatprep.subr.bf16.mxu0 %v432
      %528 = vmatpush1.bf16.msra.mxu0 %v431
      %529 = vmatprep.subr.bf16.mxu0 %v434
      %530 = vmatpush1.bf16.msra.mxu0 %v433
      %531 = vmatprep.subr.bf16.mxu0 %v436
      %532 = vmatpush1.bf16.msra.mxu0 %v435
      %533 = vmatprep.mubr.bf16.mxu0 %v256
      %534 = vmatmul.mubr.bf16.gmra.mrb[0].mxu0 %v255
      %v535 = vpop.f32.mrb[0].mxu0
      %v536 = vadd.f32 0.0, %v535
      %v537 = vpop.f32.mrb[0].mxu0
      %v538 = vpop.f32.mrb[0].mxu0
      %v539 = vpop.f32.mrb[0].mxu0
      %v540 = vadd.f32 0.0, %v539
      %541 = vdwg.mxu0
      %542 = vmatprep.subr.bf16.mxu0 %v438
      %543 = vmatpush1.bf16.msra.mxu0 %v437
      %544 = vmatprep.subr.bf16.mxu0 %v440
      %545 = vmatpush1.bf16.msra.mxu0 %v439
      %546 = vmatprep.subr.bf16.mxu0 %v442
      %547 = vmatpush1.bf16.msra.mxu0 %v441
      %548 = vmatprep.subr.bf16.mxu0 %v444
      %549 = vmatpush1.bf16.msra.mxu0 %v443
      %550 = vmatprep.subr.bf16.mxu0 %v446
      %551 = vmatpush1.bf16.msra.mxu0 %v445
      %552 = vmatprep.subr.bf16.mxu0 %v448
      %553 = vmatpush1.bf16.msra.mxu0 %v447
      %554 = vmatprep.subr.bf16.mxu0 %v450
      %555 = vmatpush1.bf16.msra.mxu0 %v449
      %556 = vmatprep.subr.bf16.mxu0 %v452
      %557 = vmatpush1.bf16.msra.mxu0 %v451
      %558 = vmatprep.subr.bf16.mxu0 0
      %559 = vmatpush1.bf16.msra.mxu0 0
      %560 = vmatprep.subr.bf16.mxu0 0
      %561 = vmatpush1.bf16.msra.mxu0 0
      %562 = vmatprep.subr.bf16.mxu0 0
      %563 = vmatpush1.bf16.msra.mxu0 0
      %564 = vmatprep.subr.bf16.mxu0 0
      %565 = vmatpush1.bf16.msra.mxu0 0
      %566 = vmatprep.subr.bf16.mxu0 0
      %567 = vmatpush1.bf16.msra.mxu0 0
      %568 = vmatprep.subr.bf16.mxu0 0
      %569 = vmatpush1.bf16.msra.mxu0 0
      %570 = vmatprep.subr.bf16.mxu0 0
      %571 = vmatpush1.bf16.msra.mxu0 0
      %572 = vmatprep.subr.bf16.mxu0 0
      %573 = vmatpush1.bf16.msra.mxu0 0
      %574 = vmatprep.mubr.bf16.mxu0 0
      %575 = vmatmul.mubr.bf16.gmra.mrb[0].mxu0 %v257
      %v576 = vpop.f32.mrb[0].mxu0
      %v577 = vadd.f32 %v536, %v576
      %v578 = vpop.f32.mrb[0].mxu0
      %v579 = vpop.f32.mrb[0].mxu0
      %v580 = vpop.f32.mrb[0].mxu0
      %v581 = vadd.f32 %v540, %v580
      %582 = vdwg.mxu0
      %v583 = vadd.f32 %v577, %v581
      %s584 = sadd.s32 %s190, 6
      %s585 = smul.addr %s584, 4
      %s586 = scalar_lea.vmem %s181, %s585
      %v587 = vld [vmem:[%s586] sm:$0xff]
      %v588 = vld [vmem:[%s586 + $0x8] sm:$0xf]
      %v589 = vld [vmem:[%s586 + $0xc] sm:$0xff]
      %v590 = vld [vmem:[%s586 + $0x14] sm:$0xf]
      %s591 = scalar_lea.vmem %s1, 384
      %v592 = vld [vmem:[%s591] sm:$0xff]
      %v593 = vld [vmem:[%s591 + $0x8] sm:$0xff]
      %v594 = vld [vmem:[%s591 + $0x10] sm:$0xff]
      %v595 = vld [vmem:[%s591 + $0x18] sm:$0xff]
      %v596 = vld [vmem:[%s591 + $0x20] sm:$0xff]
      %v597 = vld [vmem:[%s591 + $0x28] sm:$0xff]
      %v598 = vld [vmem:[%s591 + $0x30] sm:$0xff]
      %v599 = vld [vmem:[%s591 + $0x38] sm:$0xff]
      %v600 = vld [vmem:[%s591 + $0x40] sm:$0xff]
      %v601 = vld [vmem:[%s591 + $0x48] sm:$0xff]
      %v602 = vld [vmem:[%s591 + $0x50] sm:$0xff]
      %v603 = vld [vmem:[%s591 + $0x58] sm:$0xff]
      %v604 = vld [vmem:[%s591 + $0x60] sm:$0xff]
      %v605 = vld [vmem:[%s591 + $0x68] sm:$0xff]
      %v606 = vld [vmem:[%s591 + $0x70] sm:$0xff]
      %v607 = vld [vmem:[%s591 + $0x78] sm:$0xff]
      %v608 = vld [vmem:[%s591 + $0x80] sm:$0xff]
      %v609 = vld [vmem:[%s591 + $0x88] sm:$0xff]
      %v610 = vld [vmem:[%s591 + $0x90] sm:$0xff]
      %v611 = vld [vmem:[%s591 + $0x98] sm:$0xff]
      %v612 = vld [vmem:[%s591 + $0xa0] sm:$0xff]
      %v613 = vld [vmem:[%s591 + $0xa8] sm:$0xff]
      %v614 = vld [vmem:[%s591 + $0xb0] sm:$0xff]
      %v615 = vld [vmem:[%s591 + $0xb8] sm:$0xff]
      %v616 = vld [vmem:[%s591 + $0xc0] sm:$0xff]
      %v617 = vld [vmem:[%s591 + $0xc8] sm:$0xff]
      %v618 = vld [vmem:[%s591 + $0xd0] sm:$0xff]
      %v619 = vld [vmem:[%s591 + $0xd8] sm:$0xff]
      %v620 = vld [vmem:[%s591 + $0xe0] sm:$0xff]
      %v621 = vld [vmem:[%s591 + $0xe8] sm:$0xff]
      %v622 = vld [vmem:[%s591 + $0xf0] sm:$0xff]
      %v623 = vld [vmem:[%s591 + $0xf8] sm:$0xff]
      %v624 = vld [vmem:[%s591 + $0x100] sm:$0xff]
      %v625 = vld [vmem:[%s591 + $0x108] sm:$0xff]
      %v626 = vld [vmem:[%s591 + $0x110] sm:$0xff]
      %v627 = vld [vmem:[%s591 + $0x118] sm:$0xff]
      %v628 = vld [vmem:[%s591 + $0x120] sm:$0xff]
      %v629 = vld [vmem:[%s591 + $0x128] sm:$0xff]
      %v630 = vld [vmem:[%s591 + $0x130] sm:$0xff]
      %v631 = vld [vmem:[%s591 + $0x138] sm:$0xff]
      %v632 = vld [vmem:[%s591 + $0x140] sm:$0xff]
      %v633 = vld [vmem:[%s591 + $0x148] sm:$0xff]
      %v634 = vld [vmem:[%s591 + $0x150] sm:$0xff]
      %v635 = vld [vmem:[%s591 + $0x158] sm:$0xff]
      %v636 = vld [vmem:[%s591 + $0x160] sm:$0xff]
      %v637 = vld [vmem:[%s591 + $0x168] sm:$0xff]
      %v638 = vld [vmem:[%s591 + $0x170] sm:$0xff]
      %v639 = vld [vmem:[%s591 + $0x178] sm:$0xff]
      %v644 = vunpack.c.l.b16 %v587
      %v645 = vunpack.c.h.b16 %v587
      %v646 = vunpack.c.l.b16 %v588
      %v647 = vunpack.c.l.b16 %v589
      %v648 = vunpack.c.h.b16 %v589
      %v649 = vunpack.c.l.b16 %v590
      %v650 = vpack.c.b16 %v647, %v644
      %v651 = vpack.c.b16 %v648, %v645
      %v652 = vpack.c.b16 %v649, %v646
      %v704 = vunpack.c.l.b16 %v592
      %v705 = vunpack.c.h.b16 %v592
      %v706 = vunpack.c.l.b16 %v593
      %v707 = vunpack.c.h.b16 %v593
      %v708 = vunpack.c.l.b16 %v594
      %v709 = vunpack.c.h.b16 %v594
      %v710 = vunpack.c.l.b16 %v595
      %v711 = vunpack.c.h.b16 %v595
      %v712 = vunpack.c.l.b16 %v596
      %v713 = vunpack.c.h.b16 %v596
      %v714 = vunpack.c.l.b16 %v597
      %v715 = vunpack.c.h.b16 %v597
      %v716 = vunpack.c.l.b16 %v598
      %v717 = vunpack.c.h.b16 %v598
      %v718 = vunpack.c.l.b16 %v599
      %v719 = vunpack.c.h.b16 %v599
      %v720 = vunpack.c.l.b16 %v600
      %v721 = vunpack.c.h.b16 %v600
      %v722 = vunpack.c.l.b16 %v601
      %v723 = vunpack.c.h.b16 %v601
      %v724 = vunpack.c.l.b16 %v602
      %v725 = vunpack.c.h.b16 %v602
      %v726 = vunpack.c.l.b16 %v603
      %v727 = vunpack.c.h.b16 %v603
      %v728 = vunpack.c.l.b16 %v604
      %v729 = vunpack.c.h.b16 %v604
      %v730 = vunpack.c.l.b16 %v605
      %v731 = vunpack.c.h.b16 %v605
      %v732 = vunpack.c.l.b16 %v606
      %v733 = vunpack.c.h.b16 %v606
      %v734 = vunpack.c.l.b16 %v607
      %v735 = vunpack.c.h.b16 %v607
      %v736 = vunpack.c.l.b16 %v608
      %v737 = vunpack.c.h.b16 %v608
      %v738 = vunpack.c.l.b16 %v609
      %v739 = vunpack.c.h.b16 %v609
      %v740 = vunpack.c.l.b16 %v610
      %v741 = vunpack.c.h.b16 %v610
      %v742 = vunpack.c.l.b16 %v611
      %v743 = vunpack.c.h.b16 %v611
      %v744 = vunpack.c.l.b16 %v612
      %v745 = vunpack.c.h.b16 %v612
      %v746 = vunpack.c.l.b16 %v613
      %v747 = vunpack.c.h.b16 %v613
      %v748 = vunpack.c.l.b16 %v614
      %v749 = vunpack.c.h.b16 %v614
      %v750 = vunpack.c.l.b16 %v615
      %v751 = vunpack.c.h.b16 %v615
      %v752 = vunpack.c.l.b16 %v616
      %v753 = vunpack.c.h.b16 %v616
      %v754 = vunpack.c.l.b16 %v617
      %v755 = vunpack.c.h.b16 %v617
      %v756 = vunpack.c.l.b16 %v618
      %v757 = vunpack.c.h.b16 %v618
      %v758 = vunpack.c.l.b16 %v619
      %v759 = vunpack.c.h.b16 %v619
      %v760 = vunpack.c.l.b16 %v620
      %v761 = vunpack.c.h.b16 %v620
      %v762 = vunpack.c.l.b16 %v621
      %v763 = vunpack.c.h.b16 %v621
      %v764 = vunpack.c.l.b16 %v622
      %v765 = vunpack.c.h.b16 %v622
      %v766 = vunpack.c.l.b16 %v623
      %v767 = vunpack.c.h.b16 %v623
      %v768 = vunpack.c.l.b16 %v624
      %v769 = vunpack.c.h.b16 %v624
      %v770 = vunpack.c.l.b16 %v625
      %v771 = vunpack.c.h.b16 %v625
      %v772 = vunpack.c.l.b16 %v626
      %v773 = vunpack.c.h.b16 %v626
      %v774 = vunpack.c.l.b16 %v627
      %v775 = vunpack.c.h.b16 %v627
      %v776 = vunpack.c.l.b16 %v628
      %v777 = vunpack.c.h.b16 %v628
      %v778 = vunpack.c.l.b16 %v629
      %v779 = vunpack.c.h.b16 %v629
      %v780 = vunpack.c.l.b16 %v630
      %v781 = vunpack.c.h.b16 %v630
      %v782 = vunpack.c.l.b16 %v631
      %v783 = vunpack.c.h.b16 %v631
      %v784 = vunpack.c.l.b16 %v632
      %v785 = vunpack.c.h.b16 %v632
      %v786 = vunpack.c.l.b16 %v633
      %v787 = vunpack.c.h.b16 %v633
      %v788 = vunpack.c.l.b16 %v634
      %v789 = vunpack.c.h.b16 %v634
      %v790 = vunpack.c.l.b16 %v635
      %v791 = vunpack.c.h.b16 %v635
      %v792 = vunpack.c.l.b16 %v636
      %v793 = vunpack.c.h.b16 %v636
      %v794 = vunpack.c.l.b16 %v637
      %v795 = vunpack.c.h.b16 %v637
      %v796 = vunpack.c.l.b16 %v638
      %v797 = vunpack.c.h.b16 %v638
      %v798 = vunpack.c.l.b16 %v639
      %v799 = vunpack.c.h.b16 %v639
      %v800 = vpack.c.b16 %v706, %v704
      %v801 = vpack.c.b16 %v707, %v705
      %v802 = vpack.c.b16 %v710, %v708
      %v803 = vpack.c.b16 %v711, %v709
      %v804 = vpack.c.b16 %v714, %v712
      %v805 = vpack.c.b16 %v715, %v713
      %v806 = vpack.c.b16 %v718, %v716
      %v807 = vpack.c.b16 %v719, %v717
      %v808 = vpack.c.b16 %v722, %v720
      %v809 = vpack.c.b16 %v723, %v721
      %v810 = vpack.c.b16 %v726, %v724
      %v811 = vpack.c.b16 %v727, %v725
      %v812 = vpack.c.b16 %v730, %v728
      %v813 = vpack.c.b16 %v731, %v729
      %v814 = vpack.c.b16 %v734, %v732
      %v815 = vpack.c.b16 %v735, %v733
      %v816 = vpack.c.b16 %v738, %v736
      %v817 = vpack.c.b16 %v739, %v737
      %v818 = vpack.c.b16 %v742, %v740
      %v819 = vpack.c.b16 %v743, %v741
      %v820 = vpack.c.b16 %v746, %v744
      %v821 = vpack.c.b16 %v747, %v745
      %v822 = vpack.c.b16 %v750, %v748
      %v823 = vpack.c.b16 %v751, %v749
      %v824 = vpack.c.b16 %v754, %v752
      %v825 = vpack.c.b16 %v755, %v753
      %v826 = vpack.c.b16 %v758, %v756
      %v827 = vpack.c.b16 %v759, %v757
      %v828 = vpack.c.b16 %v762, %v760
      %v829 = vpack.c.b16 %v763, %v761
      %v830 = vpack.c.b16 %v766, %v764
      %v831 = vpack.c.b16 %v767, %v765
      %v832 = vpack.c.b16 %v770, %v768
      %v833 = vpack.c.b16 %v771, %v769
      %v834 = vpack.c.b16 %v774, %v772
      %v835 = vpack.c.b16 %v775, %v773
      %v836 = vpack.c.b16 %v778, %v776
      %v837 = vpack.c.b16 %v779, %v777
      %v838 = vpack.c.b16 %v782, %v780
      %v839 = vpack.c.b16 %v783, %v781
      %v840 = vpack.c.b16 %v786, %v784
      %v841 = vpack.c.b16 %v787, %v785
      %v842 = vpack.c.b16 %v790, %v788
      %v843 = vpack.c.b16 %v791, %v789
      %v844 = vpack.c.b16 %v794, %v792
      %v845 = vpack.c.b16 %v795, %v793
      %v846 = vpack.c.b16 %v798, %v796
      %v847 = vpack.c.b16 %v799, %v797
      %896 = vmatprep.subr.bf16.mxu0 %v801
      %897 = vmatpush1.bf16.msra.mxu0 %v800
      %898 = vmatprep.subr.bf16.mxu0 %v803
      %899 = vmatpush1.bf16.msra.mxu0 %v802
      %900 = vmatprep.subr.bf16.mxu0 %v805
      %901 = vmatpush1.bf16.msra.mxu0 %v804
      %902 = vmatprep.subr.bf16.mxu0 %v807
      %903 = vmatpush1.bf16.msra.mxu0 %v806
      %904 = vmatprep.subr.bf16.mxu0 %v809
      %905 = vmatpush1.bf16.msra.mxu0 %v808
      %906 = vmatprep.subr.bf16.mxu0 %v811
      %907 = vmatpush1.bf16.msra.mxu0 %v810
      %908 = vmatprep.subr.bf16.mxu0 %v813
      %909 = vmatpush1.bf16.msra.mxu0 %v812
      %910 = vmatprep.subr.bf16.mxu0 %v815
      %911 = vmatpush1.bf16.msra.mxu0 %v814
      %912 = vmatprep.subr.bf16.mxu0 %v817
      %913 = vmatpush1.bf16.msra.mxu0 %v816
      %914 = vmatprep.subr.bf16.mxu0 %v819
      %915 = vmatpush1.bf16.msra.mxu0 %v818
      %916 = vmatprep.subr.bf16.mxu0 %v821
      %917 = vmatpush1.bf16.msra.mxu0 %v820
      %918 = vmatprep.subr.bf16.mxu0 %v823
      %919 = vmatpush1.bf16.msra.mxu0 %v822
      %920 = vmatprep.subr.bf16.mxu0 %v825
      %921 = vmatpush1.bf16.msra.mxu0 %v824
      %922 = vmatprep.subr.bf16.mxu0 %v827
      %923 = vmatpush1.bf16.msra.mxu0 %v826
      %924 = vmatprep.subr.bf16.mxu0 %v829
      %925 = vmatpush1.bf16.msra.mxu0 %v828
      %926 = vmatprep.subr.bf16.mxu0 %v831
      %927 = vmatpush1.bf16.msra.mxu0 %v830
      %928 = vmatprep.mubr.bf16.mxu0 %v651
      %929 = vmatmul.mubr.bf16.gmra.mrb[0].mxu0 %v650
      %v930 = vpop.f32.mrb[0].mxu0
      %v931 = vadd.f32 0.0, %v930
      %v932 = vpop.f32.mrb[0].mxu0
      %v933 = vpop.f32.mrb[0].mxu0
      %v934 = vpop.f32.mrb[0].mxu0
      %v935 = vadd.f32 0.0, %v934
      %936 = vdwg.mxu0
      %937 = vmatprep.subr.bf16.mxu0 %v833
      %938 = vmatpush1.bf16.msra.mxu0 %v832
      %939 = vmatprep.subr.bf16.mxu0 %v835
      %940 = vmatpush1.bf16.msra.mxu0 %v834
      %941 = vmatprep.subr.bf16.mxu0 %v837
      %942 = vmatpush1.bf16.msra.mxu0 %v836
      %943 = vmatprep.subr.bf16.mxu0 %v839
      %944 = vmatpush1.bf16.msra.mxu0 %v838
      %945 = vmatprep.subr.bf16.mxu0 %v841
      %946 = vmatpush1.bf16.msra.mxu0 %v840
      %947 = vmatprep.subr.bf16.mxu0 %v843
      %948 = vmatpush1.bf16.msra.mxu0 %v842
      %949 = vmatprep.subr.bf16.mxu0 %v845
      %950 = vmatpush1.bf16.msra.mxu0 %v844
      %951 = vmatprep.subr.bf16.mxu0 %v847
      %952 = vmatpush1.bf16.msra.mxu0 %v846
      %953 = vmatprep.subr.bf16.mxu0 0
      %954 = vmatpush1.bf16.msra.mxu0 0
      %955 = vmatprep.subr.bf16.mxu0 0
      %956 = vmatpush1.bf16.msra.mxu0 0
      %957 = vmatprep.subr.bf16.mxu0 0
      %958 = vmatpush1.bf16.msra.mxu0 0
      %959 = vmatprep.subr.bf16.mxu0 0
      %960 = vmatpush1.bf16.msra.mxu0 0
      %961 = vmatprep.subr.bf16.mxu0 0
      %962 = vmatpush1.bf16.msra.mxu0 0
      %963 = vmatprep.subr.bf16.mxu0 0
      %964 = vmatpush1.bf16.msra.mxu0 0
      %965 = vmatprep.subr.bf16.mxu0 0
      %966 = vmatpush1.bf16.msra.mxu0 0
      %967 = vmatprep.subr.bf16.mxu0 0
      %968 = vmatpush1.bf16.msra.mxu0 0
      %969 = vmatprep.mubr.bf16.mxu0 0
      %970 = vmatmul.mubr.bf16.gmra.mrb[0].mxu0 %v652
      %v971 = vpop.f32.mrb[0].mxu0
      %v972 = vadd.f32 %v931, %v971
      %v973 = vpop.f32.mrb[0].mxu0
      %v974 = vpop.f32.mrb[0].mxu0
      %v975 = vpop.f32.mrb[0].mxu0
      %v976 = vadd.f32 %v935, %v975
      %977 = vdwg.mxu0
      %v978 = vadd.f32 %v972, %v976
      %v979 = vadd.f32 %v583, %v978
      %v980 = vld [vmem:[%s2] sm:$0x1]
      %v982 = vlaneseq
      %v983 = vshrl.u32 %v982, 7
      %v984 = vsub.s32 0, %v983
      %v985 = vrot.slane %v980, %v984
      %v987 = vadd.f32 %v979, %v985
      %v988 = vmax.f32 %v987, 0.0
      %v989 = vpack.c.bf16 %v988, %v988
      %990 = vst [vmem:[%s188] sm:$0xf] %v989
      %p991 = scmp.lt.s32.totalorder %s18, 1
      %s992 = scalar_select %p991, %s18, 1
      %p993 = scmp.lt.s32.totalorder %s19, 0
      %s994 = scalar_select %p993, %s19, 0
      %s995 = sadd.s32 %s994, %s992
      %s996 = smul.addr %s995, 4
      %s997 = scalar_lea.vmem %s3, %s996
      // Predicated region
      $region33: #{timm_backbone_forward.9} parent=31 // pred_check
        %p998 = pneg %p114
      $region34: #{timm_backbone_forward.9} parent=31 // pred_check_branch
        %1000 = sbr.rel (%p998) target = $region36
      $region35: #{timm_backbone_forward.9} parent=31 // pred_region
        _
      $region36: #{timm_backbone_forward.9} parent=31 // pred_fallthru
        _
    $region32: #{timm_backbone_forward.9} parent=5 // pred_fallthru
      _
    %p1001 = scmp.le.s32.totalorder 2, %s9
    // Predicated region
    $region37: #{timm_backbone_forward.9} parent=5 // pred_check
      %p1002 = pneg %p1001
    $region38: #{timm_backbone_forward.9} parent=5 // pred_check_branch
      %1004 = sbr.rel (%p1002) target = $region40
    $region39: #{timm_backbone_forward.9} parent=5 // pred_region
      %s1005 = ssub.s32 %s9, 2
      // Predicated region
      $region41: #{timm_backbone_forward.9} parent=39 // pred_check
        %p1006 = pneg %p120
      $region42: #{timm_backbone_forward.9} parent=39 // pred_check_branch
        %1008 = sbr.rel (%p1006) target = $region44
      $region43: #{timm_backbone_forward.9} parent=39 // pred_region
        %p1009 = scmp.lt.s32.totalorder %s20, 1
        %s1010 = scalar_select %p1009, %s20, 1
        %p1011 = scmp.lt.s32.totalorder %s21, 0
        %s1012 = scalar_select %p1011, %s21, 0
        %s1013 = sadd.s32 %s1012, %s1010
        %s1014 = smul.addr %s1013, 4
        %s1015 = scalar_lea.vmem %s3, %s1014
      $region44: #{timm_backbone_forward.9} parent=39 // pred_fallthru
        _
    $region40: #{timm_backbone_forward.9} parent=5 // pred_fallthru
      _
  $region6: #{timm_backbone_forward.9} parent=0 // loop_footer
    %s13 = sadd.s32 1, %s9
  $region7: #{timm_backbone_forward.9} parent=0 // loop_footer_branch
    %8 = sbr.rel target = $region3
  $region8: #{timm_backbone_forward.9} parent=0 // loop_exit
    _

</llo_original>
